<compile_context>
chip_gen: v7x
topology: tpu7x:2x2x1
jax: 0.10.0
libtpu: 0.0.40
codegen_flags: <defaults>
</compile_context>

<pallas_src>
import jax
import jax.numpy as jnp
from jax.experimental import pallas as pl
from jax.experimental.pallas import tpu as pltpu

NEG_SLOPE = 0.01   # nn.LeakyReLU() default
EPS = 1e-5         # nn.InstanceNorm2d default


def _leaky_relu(v):
    return jnp.where(v >= 0, v, NEG_SLOPE * v)


def resnet_block_kernel(x_ref, w1_ref, w2_ref, w3_ref, b3_ref,
                        out_ref, pad_scratch):
    """One grid step = one batch element.

    x_ref:       (1, H, W, C) f32   unpadded input (aligned residual read)
    w*_ref:      (9*C, C)     bf16  im2col-reshaped conv weights (ky,kx,ci | co)
    b3_ref:      (1, C)       f32   bias of the last conv only
    out_ref:     (1, H, W, C) f32
    pad_scratch: (H+2, W+2, C) bf16 zero-halo activation buffer
    """
    H = out_ref.shape[1]
    W = out_ref.shape[2]
    C = out_ref.shape[3]
    HW = H * W
    inv_hw = 1.0 / float(HW)

    # --- zero only the halo border, once per grid step --------------------
    # (interior is fully rewritten by every repad(); doing it per-step keeps
    # the "parallel" batch axis safe on multi-TensorCore chips)
    zrow = jnp.zeros((1, W + 2, C), jnp.bfloat16)
    zcol = jnp.zeros((H + 2, 1, C), jnp.bfloat16)
    pad_scratch[0:1, :, :] = zrow
    pad_scratch[H + 1:H + 2, :, :] = zrow
    pad_scratch[:, 0:1, :] = zcol
    pad_scratch[:, W + 1:W + 2, :] = zcol

    def repad(act_flat_f32):
        # (H*W, C) f32 -> bf16 interior of the padded scratch
        pad_scratch[1:H + 1, 1:W + 1, :] = (
            act_flat_f32.reshape(H, W, C).astype(jnp.bfloat16))

    def conv3x3(w_ref):
        # im2col: 9 shifted taps concatenated along channels -> one matmul
        # (H*W, 9C) bf16 @ (9C, C) bf16 -> (H*W, C) f32 on the MXU.
        taps = [pad_scratch[ky:ky + H, kx:kx + W, :]
                for ky in range(3) for kx in range(3)]
        pat = jnp.concatenate(taps, axis=-1).reshape(HW, 9 * C)
        return jnp.dot(pat, w_ref[...], preferred_element_type=jnp.float32)

    def inst_norm_lrelu(y):
        # single-pass biased instance norm over spatial dims, then LeakyReLU
        mean = jnp.sum(y, axis=0, keepdims=True) * inv_hw
        var = jnp.sum(y * y, axis=0, keepdims=True) * inv_hw - mean * mean
        yn = (y - mean) * jax.lax.rsqrt(var + EPS)
        return _leaky_relu(yn)

    x = x_ref[0]                         # (H, W, C) f32, aligned full block
    repad(x.reshape(HW, C))              # conv1 input (bf16 halo buffer)

    # conv1/conv2 biases omitted: InstanceNorm(affine=False) removes any
    # per-channel constant, so the result is bit-for-bit-equivalent in exact
    # arithmetic (and well within fp tolerance here).
    a1 = inst_norm_lrelu(conv3x3(w1_ref))
    repad(a1)
    a2 = inst_norm_lrelu(conv3x3(w2_ref))
    repad(a2)
    a3 = conv3x3(w3_ref) + b3_ref[...]   # (H*W, C) f32

    res = a3.reshape(H, W, C) + x        # residual add in f32
    out_ref[0] = _leaky_relu(res).astype(out_ref.dtype)


def resnet_block_pallas(x_nhwc, params):
    """x_nhwc: (N, H, W, C) float32; params: (w1, b1, w2, b2, w3, b3).

    Conv weights are HWIO (3, 3, C, C); biases are (1, C).
    """
    N, H, W, C = x_nhwc.shape
    w1, b1, w2, b2, w3, b3 = params
    del b1, b2  # exactly cancelled by InstanceNorm(affine=False)

    # im2col weight layout: (ky, kx, cin, cout) -> (9*C, C), bf16 MXU operands
    w1r = w1.reshape(9 * C, C).astype(jnp.bfloat16)
    w2r = w2.reshape(9 * C, C).astype(jnp.bfloat16)
    w3r = w3.reshape(9 * C, C).astype(jnp.bfloat16)
    b3r = b3.reshape(1, C).astype(jnp.float32)

    full_w = lambda b: (0, 0)

    return pl.pallas_call(
        resnet_block_kernel,
        out_shape=jax.ShapeDtypeStruct((N, H, W, C), x_nhwc.dtype),
        grid_spec=pltpu.PrefetchScalarGridSpec(
            num_scalar_prefetch=0,
            grid=(N,),
            in_specs=[
                pl.BlockSpec((1, H, W, C), lambda b: (b, 0, 0, 0)),
                pl.BlockSpec((9 * C, C), full_w),
                pl.BlockSpec((9 * C, C), full_w),
                pl.BlockSpec((9 * C, C), full_w),
                pl.BlockSpec((1, C), full_w),
            ],
            out_specs=pl.BlockSpec((1, H, W, C), lambda b: (b, 0, 0, 0)),
            scratch_shapes=[pltpu.VMEM((H + 2, W + 2, C), jnp.bfloat16)],
        ),
        compiler_params=pltpu.CompilerParams(
            dimension_semantics=("parallel",)),
    )(x_nhwc, w1r, w2r, w3r, b3r)


# ---------------------------------------------------------------------------
# Pure-JAX f32 reference (correctness check only)
# ---------------------------------------------------------------------------
def _ref_instance_norm(x):
    mean = jnp.mean(x, axis=(1, 2), keepdims=True)
    var = jnp.mean((x - mean) ** 2, axis=(1, 2), keepdims=True)
    return (x - mean) * jax.lax.rsqrt(var + EPS)


def resnet_block_ref(x_nhwc, params):
    w1, b1, w2, b2, w3, b3 = params

    def conv(x, w, b):
        y = jax.lax.conv_general_dilated(
            x, w, (1, 1), ((1, 1), (1, 1)),
            dimension_numbers=("NHWC", "HWIO", "NHWC"),
            precision=jax.lax.Precision.HIGHEST)
        return y + b.reshape(1, 1, 1, -1)

    h = _leaky_relu(_ref_instance_norm(conv(x_nhwc, w1, b1)))
    h = _leaky_relu(_ref_instance_norm(conv(h, w2, b2)))
    h = conv(h, w3, b3)
    return _leaky_relu(h + x_nhwc)


if __name__ == "__main__":
    # input_features == nb_features (required by the residual add in forward)
    N, C, H, W = 2, 64, 16, 16

    key = jax.random.PRNGKey(0)
    k = jax.random.split(key, 7)
    x_nchw = jax.random.normal(k[0], (N, C, H, W), jnp.float32)  # PyTorch NCHW

    scale = 0.05
    w1 = jax.random.normal(k[1], (3, 3, C, C), jnp.float32) * scale
    b1 = jax.random.normal(k[2], (1, C), jnp.float32) * scale
    w2 = jax.random.normal(k[3], (3, 3, C, C), jnp.float32) * scale
    b2 = jax.random.normal(k[4], (1, C), jnp.float32) * scale
    w3 = jax.random.normal(k[5], (3, 3, C, C), jnp.float32) * scale
    b3 = jax.random.normal(k[6], (1, C), jnp.float32) * scale
    params = (w1, b1, w2, b2, w3, b3)

    # NCHW -> NHWC for the kernel, NHWC -> NCHW for the result.
    x_nhwc = jnp.transpose(x_nchw, (0, 2, 3, 1))
    out_nhwc = jax.block_until_ready(resnet_block_pallas(x_nhwc, params))
    out_nchw = jnp.transpose(out_nhwc, (0, 3, 1, 2))

    ref_nchw = jnp.transpose(resnet_block_ref(x_nhwc, params), (0, 3, 1, 2))
    assert out_nchw.shape == (N, C, H, W)
    # Tolerance sized for bf16 MXU operands propagated through three chained
    # 3x3 convs + instance norms (reference is pure f32).
    max_err = float(jnp.max(jnp.abs(out_nchw - ref_nchw)))
    assert jnp.allclose(out_nchw, ref_nchw, atol=3e-2, rtol=3e-2), max_err

    print("KERNEL_OK")
</pallas_src>

<mosaic_0001>
module attributes {stable_mosaic.version = 11 : i64} {
  func.func @resnet_block_kernel(%arg0: i32, %arg1: memref<1x16x16x64xf32, #tpu.memory_space<vmem>>, %arg2: memref<576x64xbf16, #tpu.memory_space<vmem>>, %arg3: memref<576x64xbf16, #tpu.memory_space<vmem>>, %arg4: memref<576x64xbf16, #tpu.memory_space<vmem>>, %arg5: memref<1x64xf32, #tpu.memory_space<vmem>>, %arg6: memref<1x16x16x64xf32, #tpu.memory_space<vmem>>, %arg7: memref<18x18x64xbf16, #tpu.memory_space<vmem>>) attributes {dimension_semantics = [#tpu.dimension_semantics<parallel>], iteration_bounds = array<i64: 2>, scalar_prefetch = 0 : i64, scratch_operands = 1 : i64, tpu.core_type = #tpu.core_type<tc>, window_params = [{transform_indices = @transform_0, window_bounds = array<i64: 1, 16, 16, 64>}, {pipeline_mode = #tpu.pipeline_mode<synchronous>, transform_indices = @transform_1, window_bounds = array<i64: 576, 64>}, {pipeline_mode = #tpu.pipeline_mode<synchronous>, transform_indices = @transform_2, window_bounds = array<i64: 576, 64>}, {pipeline_mode = #tpu.pipeline_mode<synchronous>, transform_indices = @transform_3, window_bounds = array<i64: 576, 64>}, {pipeline_mode = #tpu.pipeline_mode<synchronous>, transform_indices = @transform_4, window_bounds = array<i64: 1, 64>}, {transform_indices = @transform_5, window_bounds = array<i64: 1, 16, 16, 64>}]} {
    %cst = arith.constant 0.000000e+00 : bf16
    %0 = vector.broadcast %cst : bf16 to vector<1x18x64xbf16>
    %cst_0 = arith.constant 0.000000e+00 : bf16
    %1 = vector.broadcast %cst_0 : bf16 to vector<18x1x64xbf16>
    %c0 = arith.constant 0 : index
    %c0_1 = arith.constant 0 : index
    %c0_2 = arith.constant 0 : index
    %2 = vector.load %arg7[%c0, %c0_1, %c0_2] : memref<18x18x64xbf16, #tpu.memory_space<vmem>>, vector<1x18x64xbf16>
    tpu.vector_store %arg7[%c0, %c0_1, %c0_2], %0 {strides = array<i32>} : memref<18x18x64xbf16, #tpu.memory_space<vmem>>, vector<1x18x64xbf16>,
    %c17 = arith.constant 17 : index
    %c0_3 = arith.constant 0 : index
    %c0_4 = arith.constant 0 : index
    %3 = vector.load %arg7[%c17, %c0_3, %c0_4] : memref<18x18x64xbf16, #tpu.memory_space<vmem>>, vector<1x18x64xbf16>
    tpu.vector_store %arg7[%c17, %c0_3, %c0_4], %0 {strides = array<i32>} : memref<18x18x64xbf16, #tpu.memory_space<vmem>>, vector<1x18x64xbf16>,
    %c0_5 = arith.constant 0 : index
    %c0_6 = arith.constant 0 : index
    %c0_7 = arith.constant 0 : index
    %4 = vector.load %arg7[%c0_5, %c0_6, %c0_7] : memref<18x18x64xbf16, #tpu.memory_space<vmem>>, vector<18x1x64xbf16>
    tpu.vector_store %arg7[%c0_5, %c0_6, %c0_7], %1 {strides = array<i32>} : memref<18x18x64xbf16, #tpu.memory_space<vmem>>, vector<18x1x64xbf16>,
    %c0_8 = arith.constant 0 : index
    %c17_9 = arith.constant 17 : index
    %c0_10 = arith.constant 0 : index
    %5 = vector.load %arg7[%c0_8, %c17_9, %c0_10] : memref<18x18x64xbf16, #tpu.memory_space<vmem>>, vector<18x1x64xbf16>
    tpu.vector_store %arg7[%c0_8, %c17_9, %c0_10], %1 {strides = array<i32>} : memref<18x18x64xbf16, #tpu.memory_space<vmem>>, vector<18x1x64xbf16>,
    %c0_11 = arith.constant 0 : index
    %c0_12 = arith.constant 0 : index
    %c0_13 = arith.constant 0 : index
    %c0_14 = arith.constant 0 : index
    %6 = vector.load %arg1[%c0_11, %c0_12, %c0_13, %c0_14] : memref<1x16x16x64xf32, #tpu.memory_space<vmem>>, vector<1x16x16x64xf32>
    %7 = vector.shape_cast %6 : vector<1x16x16x64xf32> to vector<16x16x64xf32>
    %8 = vector.shape_cast %7 : vector<16x16x64xf32> to vector<256x64xf32>
    %9 = vector.shape_cast %8 : vector<256x64xf32> to vector<16x16x64xf32>
    %10 = arith.truncf %9 : vector<16x16x64xf32> to vector<16x16x64xbf16>
    %c1 = arith.constant 1 : index
    %c1_15 = arith.constant 1 : index
    %c0_16 = arith.constant 0 : index
    %11 = vector.load %arg7[%c1, %c1_15, %c0_16] : memref<18x18x64xbf16, #tpu.memory_space<vmem>>, vector<16x16x64xbf16>
    tpu.vector_store %arg7[%c1, %c1_15, %c0_16], %10 {strides = array<i32>} : memref<18x18x64xbf16, #tpu.memory_space<vmem>>, vector<16x16x64xbf16>,
    %c0_17 = arith.constant 0 : index
    %c0_18 = arith.constant 0 : index
    %c0_19 = arith.constant 0 : index
    %12 = vector.load %arg7[%c0_17, %c0_18, %c0_19] : memref<18x18x64xbf16, #tpu.memory_space<vmem>>, vector<16x16x64xbf16>
    %c0_20 = arith.constant 0 : index
    %c1_21 = arith.constant 1 : index
    %c0_22 = arith.constant 0 : index
    %13 = vector.load %arg7[%c0_20, %c1_21, %c0_22] : memref<18x18x64xbf16, #tpu.memory_space<vmem>>, vector<16x16x64xbf16>
    %c0_23 = arith.constant 0 : index
    %c2 = arith.constant 2 : index
    %c0_24 = arith.constant 0 : index
    %14 = vector.load %arg7[%c0_23, %c2, %c0_24] : memref<18x18x64xbf16, #tpu.memory_space<vmem>>, vector<16x16x64xbf16>
    %c1_25 = arith.constant 1 : index
    %c0_26 = arith.constant 0 : index
    %c0_27 = arith.constant 0 : index
    %15 = vector.load %arg7[%c1_25, %c0_26, %c0_27] : memref<18x18x64xbf16, #tpu.memory_space<vmem>>, vector<16x16x64xbf16>
    %c1_28 = arith.constant 1 : index
    %c1_29 = arith.constant 1 : index
    %c0_30 = arith.constant 0 : index
    %16 = vector.load %arg7[%c1_28, %c1_29, %c0_30] : memref<18x18x64xbf16, #tpu.memory_space<vmem>>, vector<16x16x64xbf16>
    %c1_31 = arith.constant 1 : index
    %c2_32 = arith.constant 2 : index
    %c0_33 = arith.constant 0 : index
    %17 = vector.load %arg7[%c1_31, %c2_32, %c0_33] : memref<18x18x64xbf16, #tpu.memory_space<vmem>>, vector<16x16x64xbf16>
    %c2_34 = arith.constant 2 : index
    %c0_35 = arith.constant 0 : index
    %c0_36 = arith.constant 0 : index
    %18 = vector.load %arg7[%c2_34, %c0_35, %c0_36] : memref<18x18x64xbf16, #tpu.memory_space<vmem>>, vector<16x16x64xbf16>
    %c2_37 = arith.constant 2 : index
    %c1_38 = arith.constant 1 : index
    %c0_39 = arith.constant 0 : index
    %19 = vector.load %arg7[%c2_37, %c1_38, %c0_39] : memref<18x18x64xbf16, #tpu.memory_space<vmem>>, vector<16x16x64xbf16>
    %c2_40 = arith.constant 2 : index
    %c2_41 = arith.constant 2 : index
    %c0_42 = arith.constant 0 : index
    %20 = vector.load %arg7[%c2_40, %c2_41, %c0_42] : memref<18x18x64xbf16, #tpu.memory_space<vmem>>, vector<16x16x64xbf16>
    %21 = tpu.concatenate %12, %13, %14, %15, %16, %17, %18, %19, %20 in 2 : vector<16x16x64xbf16>, vector<16x16x64xbf16>, vector<16x16x64xbf16>, vector<16x16x64xbf16>, vector<16x16x64xbf16>, vector<16x16x64xbf16>, vector<16x16x64xbf16>, vector<16x16x64xbf16>, vector<16x16x64xbf16> -> vector<16x16x576xbf16>
    %22 = vector.shape_cast %21 : vector<16x16x576xbf16> to vector<256x576xbf16>
    %c0_43 = arith.constant 0 : index
    %c0_44 = arith.constant 0 : index
    %23 = vector.load %arg2[%c0_43, %c0_44] : memref<576x64xbf16, #tpu.memory_space<vmem>>, vector<576x64xbf16>
    %cst_45 = arith.constant dense<0.000000e+00> : vector<256x64xf32>
    %24 = tpu.matmul %22, %23, %cst_45 {dimension_numbers = #tpu.dot_dimension_numbers<[1], [0], [0], [1], [0, 0, 1, 1], [], []>} : vector<256x576xbf16>, vector<576x64xbf16>, vector<256x64xf32> -> vector<256x64xf32>
    %cst_46 = arith.constant dense<0.000000e+00> : vector<64xf32>
    %25 = vector.multi_reduction <add>, %24, %cst_46 [0] : vector<256x64xf32> to vector<64xf32>
    %26 = vector.shape_cast %25 : vector<64xf32> to vector<1x64xf32>
    %cst_47 = arith.constant 3.906250e-03 : f32
    %27 = vector.broadcast %cst_47 : f32 to vector<1x64xf32>
    %28 = arith.mulf %26, %27 : vector<1x64xf32>
    %29 = arith.mulf %24, %24 : vector<256x64xf32>
    %cst_48 = arith.constant dense<0.000000e+00> : vector<64xf32>
    %30 = vector.multi_reduction <add>, %29, %cst_48 [0] : vector<256x64xf32> to vector<64xf32>
    %31 = vector.shape_cast %30 : vector<64xf32> to vector<1x64xf32>
    %cst_49 = arith.constant 3.906250e-03 : f32
    %32 = vector.broadcast %cst_49 : f32 to vector<1x64xf32>
    %33 = arith.mulf %31, %32 : vector<1x64xf32>
    %34 = arith.mulf %28, %28 : vector<1x64xf32>
    %35 = arith.subf %33, %34 : vector<1x64xf32>
    %36 = vector.broadcast %28 : vector<1x64xf32> to vector<256x64xf32>
    %37 = arith.subf %24, %36 : vector<256x64xf32>
    %cst_50 = arith.constant 9.99999974E-6 : f32
    %38 = vector.broadcast %cst_50 : f32 to vector<1x64xf32>
    %39 = arith.addf %35, %38 : vector<1x64xf32>
    %40 = math.rsqrt %39 : vector<1x64xf32>
    %41 = vector.broadcast %40 : vector<1x64xf32> to vector<256x64xf32>
    %42 = arith.mulf %37, %41 : vector<256x64xf32>
    %cst_51 = arith.constant 0.000000e+00 : f32
    %43 = vector.broadcast %cst_51 : f32 to vector<256x64xf32>
    %44 = arith.cmpf oge, %42, %43 : vector<256x64xf32>
    %cst_52 = arith.constant 0.00999999977 : f32
    %45 = vector.broadcast %cst_52 : f32 to vector<256x64xf32>
    %46 = arith.mulf %45, %42 : vector<256x64xf32>
    %47 = arith.select %44, %42, %46 : vector<256x64xi1>, vector<256x64xf32>
    %48 = vector.shape_cast %47 : vector<256x64xf32> to vector<16x16x64xf32>
    %49 = arith.truncf %48 : vector<16x16x64xf32> to vector<16x16x64xbf16>
    %c1_53 = arith.constant 1 : index
    %c1_54 = arith.constant 1 : index
    %c0_55 = arith.constant 0 : index
    %50 = vector.load %arg7[%c1_53, %c1_54, %c0_55] : memref<18x18x64xbf16, #tpu.memory_space<vmem>>, vector<16x16x64xbf16>
    tpu.vector_store %arg7[%c1_53, %c1_54, %c0_55], %49 {strides = array<i32>} : memref<18x18x64xbf16, #tpu.memory_space<vmem>>, vector<16x16x64xbf16>,
    %c0_56 = arith.constant 0 : index
    %c0_57 = arith.constant 0 : index
    %c0_58 = arith.constant 0 : index
    %51 = vector.load %arg7[%c0_56, %c0_57, %c0_58] : memref<18x18x64xbf16, #tpu.memory_space<vmem>>, vector<16x16x64xbf16>
    %c0_59 = arith.constant 0 : index
    %c1_60 = arith.constant 1 : index
    %c0_61 = arith.constant 0 : index
    %52 = vector.load %arg7[%c0_59, %c1_60, %c0_61] : memref<18x18x64xbf16, #tpu.memory_space<vmem>>, vector<16x16x64xbf16>
    %c0_62 = arith.constant 0 : index
    %c2_63 = arith.constant 2 : index
    %c0_64 = arith.constant 0 : index
    %53 = vector.load %arg7[%c0_62, %c2_63, %c0_64] : memref<18x18x64xbf16, #tpu.memory_space<vmem>>, vector<16x16x64xbf16>
    %c1_65 = arith.constant 1 : index
    %c0_66 = arith.constant 0 : index
    %c0_67 = arith.constant 0 : index
    %54 = vector.load %arg7[%c1_65, %c0_66, %c0_67] : memref<18x18x64xbf16, #tpu.memory_space<vmem>>, vector<16x16x64xbf16>
    %c1_68 = arith.constant 1 : index
    %c1_69 = arith.constant 1 : index
    %c0_70 = arith.constant 0 : index
    %55 = vector.load %arg7[%c1_68, %c1_69, %c0_70] : memref<18x18x64xbf16, #tpu.memory_space<vmem>>, vector<16x16x64xbf16>
    %c1_71 = arith.constant 1 : index
    %c2_72 = arith.constant 2 : index
    %c0_73 = arith.constant 0 : index
    %56 = vector.load %arg7[%c1_71, %c2_72, %c0_73] : memref<18x18x64xbf16, #tpu.memory_space<vmem>>, vector<16x16x64xbf16>
    %c2_74 = arith.constant 2 : index
    %c0_75 = arith.constant 0 : index
    %c0_76 = arith.constant 0 : index
    %57 = vector.load %arg7[%c2_74, %c0_75, %c0_76] : memref<18x18x64xbf16, #tpu.memory_space<vmem>>, vector<16x16x64xbf16>
    %c2_77 = arith.constant 2 : index
    %c1_78 = arith.constant 1 : index
    %c0_79 = arith.constant 0 : index
    %58 = vector.load %arg7[%c2_77, %c1_78, %c0_79] : memref<18x18x64xbf16, #tpu.memory_space<vmem>>, vector<16x16x64xbf16>
    %c2_80 = arith.constant 2 : index
    %c2_81 = arith.constant 2 : index
    %c0_82 = arith.constant 0 : index
    %59 = vector.load %arg7[%c2_80, %c2_81, %c0_82] : memref<18x18x64xbf16, #tpu.memory_space<vmem>>, vector<16x16x64xbf16>
    %60 = tpu.concatenate %51, %52, %53, %54, %55, %56, %57, %58, %59 in 2 : vector<16x16x64xbf16>, vector<16x16x64xbf16>, vector<16x16x64xbf16>, vector<16x16x64xbf16>, vector<16x16x64xbf16>, vector<16x16x64xbf16>, vector<16x16x64xbf16>, vector<16x16x64xbf16>, vector<16x16x64xbf16> -> vector<16x16x576xbf16>
    %61 = vector.shape_cast %60 : vector<16x16x576xbf16> to vector<256x576xbf16>
    %c0_83 = arith.constant 0 : index
    %c0_84 = arith.constant 0 : index
    %62 = vector.load %arg3[%c0_83, %c0_84] : memref<576x64xbf16, #tpu.memory_space<vmem>>, vector<576x64xbf16>
    %cst_85 = arith.constant dense<0.000000e+00> : vector<256x64xf32>
    %63 = tpu.matmul %61, %62, %cst_85 {dimension_numbers = #tpu.dot_dimension_numbers<[1], [0], [0], [1], [0, 0, 1, 1], [], []>} : vector<256x576xbf16>, vector<576x64xbf16>, vector<256x64xf32> -> vector<256x64xf32>
    %cst_86 = arith.constant dense<0.000000e+00> : vector<64xf32>
    %64 = vector.multi_reduction <add>, %63, %cst_86 [0] : vector<256x64xf32> to vector<64xf32>
    %65 = vector.shape_cast %64 : vector<64xf32> to vector<1x64xf32>
    %cst_87 = arith.constant 3.906250e-03 : f32
    %66 = vector.broadcast %cst_87 : f32 to vector<1x64xf32>
    %67 = arith.mulf %65, %66 : vector<1x64xf32>
    %68 = arith.mulf %63, %63 : vector<256x64xf32>
    %cst_88 = arith.constant dense<0.000000e+00> : vector<64xf32>
    %69 = vector.multi_reduction <add>, %68, %cst_88 [0] : vector<256x64xf32> to vector<64xf32>
    %70 = vector.shape_cast %69 : vector<64xf32> to vector<1x64xf32>
    %cst_89 = arith.constant 3.906250e-03 : f32
    %71 = vector.broadcast %cst_89 : f32 to vector<1x64xf32>
    %72 = arith.mulf %70, %71 : vector<1x64xf32>
    %73 = arith.mulf %67, %67 : vector<1x64xf32>
    %74 = arith.subf %72, %73 : vector<1x64xf32>
    %75 = vector.broadcast %67 : vector<1x64xf32> to vector<256x64xf32>
    %76 = arith.subf %63, %75 : vector<256x64xf32>
    %cst_90 = arith.constant 9.99999974E-6 : f32
    %77 = vector.broadcast %cst_90 : f32 to vector<1x64xf32>
    %78 = arith.addf %74, %77 : vector<1x64xf32>
    %79 = math.rsqrt %78 : vector<1x64xf32>
    %80 = vector.broadcast %79 : vector<1x64xf32> to vector<256x64xf32>
    %81 = arith.mulf %76, %80 : vector<256x64xf32>
    %cst_91 = arith.constant 0.000000e+00 : f32
    %82 = vector.broadcast %cst_91 : f32 to vector<256x64xf32>
    %83 = arith.cmpf oge, %81, %82 : vector<256x64xf32>
    %cst_92 = arith.constant 0.00999999977 : f32
    %84 = vector.broadcast %cst_92 : f32 to vector<256x64xf32>
    %85 = arith.mulf %84, %81 : vector<256x64xf32>
    %86 = arith.select %83, %81, %85 : vector<256x64xi1>, vector<256x64xf32>
    %87 = vector.shape_cast %86 : vector<256x64xf32> to vector<16x16x64xf32>
    %88 = arith.truncf %87 : vector<16x16x64xf32> to vector<16x16x64xbf16>
    %c1_93 = arith.constant 1 : index
    %c1_94 = arith.constant 1 : index
    %c0_95 = arith.constant 0 : index
    %89 = vector.load %arg7[%c1_93, %c1_94, %c0_95] : memref<18x18x64xbf16, #tpu.memory_space<vmem>>, vector<16x16x64xbf16>
    tpu.vector_store %arg7[%c1_93, %c1_94, %c0_95], %88 {strides = array<i32>} : memref<18x18x64xbf16, #tpu.memory_space<vmem>>, vector<16x16x64xbf16>,
    %c0_96 = arith.constant 0 : index
    %c0_97 = arith.constant 0 : index
    %c0_98 = arith.constant 0 : index
    %90 = vector.load %arg7[%c0_96, %c0_97, %c0_98] : memref<18x18x64xbf16, #tpu.memory_space<vmem>>, vector<16x16x64xbf16>
    %c0_99 = arith.constant 0 : index
    %c1_100 = arith.constant 1 : index
    %c0_101 = arith.constant 0 : index
    %91 = vector.load %arg7[%c0_99, %c1_100, %c0_101] : memref<18x18x64xbf16, #tpu.memory_space<vmem>>, vector<16x16x64xbf16>
    %c0_102 = arith.constant 0 : index
    %c2_103 = arith.constant 2 : index
    %c0_104 = arith.constant 0 : index
    %92 = vector.load %arg7[%c0_102, %c2_103, %c0_104] : memref<18x18x64xbf16, #tpu.memory_space<vmem>>, vector<16x16x64xbf16>
    %c1_105 = arith.constant 1 : index
    %c0_106 = arith.constant 0 : index
    %c0_107 = arith.constant 0 : index
    %93 = vector.load %arg7[%c1_105, %c0_106, %c0_107] : memref<18x18x64xbf16, #tpu.memory_space<vmem>>, vector<16x16x64xbf16>
    %c1_108 = arith.constant 1 : index
    %c1_109 = arith.constant 1 : index
    %c0_110 = arith.constant 0 : index
    %94 = vector.load %arg7[%c1_108, %c1_109, %c0_110] : memref<18x18x64xbf16, #tpu.memory_space<vmem>>, vector<16x16x64xbf16>
    %c1_111 = arith.constant 1 : index
    %c2_112 = arith.constant 2 : index
    %c0_113 = arith.constant 0 : index
    %95 = vector.load %arg7[%c1_111, %c2_112, %c0_113] : memref<18x18x64xbf16, #tpu.memory_space<vmem>>, vector<16x16x64xbf16>
    %c2_114 = arith.constant 2 : index
    %c0_115 = arith.constant 0 : index
    %c0_116 = arith.constant 0 : index
    %96 = vector.load %arg7[%c2_114, %c0_115, %c0_116] : memref<18x18x64xbf16, #tpu.memory_space<vmem>>, vector<16x16x64xbf16>
    %c2_117 = arith.constant 2 : index
    %c1_118 = arith.constant 1 : index
    %c0_119 = arith.constant 0 : index
    %97 = vector.load %arg7[%c2_117, %c1_118, %c0_119] : memref<18x18x64xbf16, #tpu.memory_space<vmem>>, vector<16x16x64xbf16>
    %c2_120 = arith.constant 2 : index
    %c2_121 = arith.constant 2 : index
    %c0_122 = arith.constant 0 : index
    %98 = vector.load %arg7[%c2_120, %c2_121, %c0_122] : memref<18x18x64xbf16, #tpu.memory_space<vmem>>, vector<16x16x64xbf16>
    %99 = tpu.concatenate %90, %91, %92, %93, %94, %95, %96, %97, %98 in 2 : vector<16x16x64xbf16>, vector<16x16x64xbf16>, vector<16x16x64xbf16>, vector<16x16x64xbf16>, vector<16x16x64xbf16>, vector<16x16x64xbf16>, vector<16x16x64xbf16>, vector<16x16x64xbf16>, vector<16x16x64xbf16> -> vector<16x16x576xbf16>
    %100 = vector.shape_cast %99 : vector<16x16x576xbf16> to vector<256x576xbf16>
    %c0_123 = arith.constant 0 : index
    %c0_124 = arith.constant 0 : index
    %101 = vector.load %arg4[%c0_123, %c0_124] : memref<576x64xbf16, #tpu.memory_space<vmem>>, vector<576x64xbf16>
    %cst_125 = arith.constant dense<0.000000e+00> : vector<256x64xf32>
    %102 = tpu.matmul %100, %101, %cst_125 {dimension_numbers = #tpu.dot_dimension_numbers<[1], [0], [0], [1], [0, 0, 1, 1], [], []>} : vector<256x576xbf16>, vector<576x64xbf16>, vector<256x64xf32> -> vector<256x64xf32>
    %c0_126 = arith.constant 0 : index
    %c0_127 = arith.constant 0 : index
    %103 = vector.load %arg5[%c0_126, %c0_127] : memref<1x64xf32, #tpu.memory_space<vmem>>, vector<1x64xf32>
    %104 = vector.broadcast %103 : vector<1x64xf32> to vector<256x64xf32>
    %105 = arith.addf %102, %104 : vector<256x64xf32>
    %106 = vector.shape_cast %105 : vector<256x64xf32> to vector<16x16x64xf32>
    %107 = arith.addf %106, %7 : vector<16x16x64xf32>
    %cst_128 = arith.constant 0.000000e+00 : f32
    %108 = vector.broadcast %cst_128 : f32 to vector<16x16x64xf32>
    %109 = arith.cmpf oge, %107, %108 : vector<16x16x64xf32>
    %cst_129 = arith.constant 0.00999999977 : f32
    %110 = vector.broadcast %cst_129 : f32 to vector<16x16x64xf32>
    %111 = arith.mulf %110, %107 : vector<16x16x64xf32>
    %112 = arith.select %109, %107, %111 : vector<16x16x64xi1>, vector<16x16x64xf32>
    %c0_130 = arith.constant 0 : index
    %c0_131 = arith.constant 0 : index
    %c0_132 = arith.constant 0 : index
    %c0_133 = arith.constant 0 : index
    %113 = vector.load %arg6[%c0_130, %c0_131, %c0_132, %c0_133] : memref<1x16x16x64xf32, #tpu.memory_space<vmem>>, vector<1x16x16x64xf32>
    %114 = vector.shape_cast %113 : vector<1x16x16x64xf32> to vector<16x16x64xf32>
    %115 = vector.shape_cast %112 : vector<16x16x64xf32> to vector<1x16x16x64xf32>
    tpu.vector_store %arg6[%c0_130, %c0_131, %c0_132, %c0_133], %115 {strides = array<i32>} : memref<1x16x16x64xf32, #tpu.memory_space<vmem>>, vector<1x16x16x64xf32>,
    return
  }
  func.func @transform_0(%arg0: i32) -> (i32, i32, i32, i32) {
    %c0_i32 = arith.constant 0 : i32
    %c0_i32_0 = arith.constant 0 : i32
    %c0_i32_1 = arith.constant 0 : i32
    %c0_i32_2 = arith.constant 0 : i32
    return %arg0, %c0_i32, %c0_i32_0, %c0_i32_1 : i32, i32, i32, i32
  }
  func.func @transform_1(%arg0: i32) -> (i32, i32) {
    %c0_i32 = arith.constant 0 : i32
    %c0_i32_0 = arith.constant 0 : i32
    %c0_i32_1 = arith.constant 0 : i32
    return %c0_i32, %c0_i32_0 : i32, i32
  }
  func.func @transform_2(%arg0: i32) -> (i32, i32) {
    %c0_i32 = arith.constant 0 : i32
    %c0_i32_0 = arith.constant 0 : i32
    %c0_i32_1 = arith.constant 0 : i32
    return %c0_i32, %c0_i32_0 : i32, i32
  }
  func.func @transform_3(%arg0: i32) -> (i32, i32) {
    %c0_i32 = arith.constant 0 : i32
    %c0_i32_0 = arith.constant 0 : i32
    %c0_i32_1 = arith.constant 0 : i32
    return %c0_i32, %c0_i32_0 : i32, i32
  }
  func.func @transform_4(%arg0: i32) -> (i32, i32) {
    %c0_i32 = arith.constant 0 : i32
    %c0_i32_0 = arith.constant 0 : i32
    %c0_i32_1 = arith.constant 0 : i32
    return %c0_i32, %c0_i32_0 : i32, i32
  }
  func.func @transform_5(%arg0: i32) -> (i32, i32, i32, i32) {
    %c0_i32 = arith.constant 0 : i32
    %c0_i32_0 = arith.constant 0 : i32
    %c0_i32_1 = arith.constant 0 : i32
    %c0_i32_2 = arith.constant 0 : i32
    return %arg0, %c0_i32, %c0_i32_0, %c0_i32_1 : i32, i32, i32, i32
  }
}

</mosaic_0001>

<llo_original>
// kernel: tpu_custom_call.1
$region0: #{tpu_custom_call.1}
  #allocation0 [shape = 'u32[]', space=smem, size = 0x4, offset = 0x4, fixed_abs, tag = 'smem constant byte address 0x4 - core index']
  #allocation1 [shape = 'u32[144,128]{1,0:T(1,128)}', space=vmem, size = 0x12000, scoped, tag = 'internal scratch']
  #allocation2 [shape = 'bf16[18,18,64]{2,1,0:T(8,128)(2,1)}', space=vmem, size = 0x1b000, scoped, tag = 'scratch operand']
  %s0 = inlined_call_operand.vmem [shape: f32[2,16,16,64], index: 0, kind: input, shape index: {}]
  %s1 = inlined_call_operand.vmem [shape: bf16[576,64], index: 1, kind: input, shape index: {}]
  %s2 = inlined_call_operand.vmem [shape: bf16[576,64], index: 2, kind: input, shape index: {}]
  %s3 = inlined_call_operand.vmem [shape: bf16[576,64], index: 3, kind: input, shape index: {}]
  %s4 = inlined_call_operand.vmem [shape: f32[1,64], index: 4, kind: input, shape index: {}]
  %s5 = inlined_call_operand.hbm [shape: f32[2,16,16,64], index: 5, kind: output, shape index: {}]
  %s6 = sld [smem:[#allocation0]]
  $region53: #{tpu_custom_call.1} parent=0
    _
  %s8 = ssub.s32 1, %s6
  %s9 = scalar_select 0, %s8, %s6
  $region1: #{tpu_custom_call.1} parent=0
    #allocation3 [shape = 'u8[262144]{0}', space=vmem, size = 0x40000, scoped, tag = 'output window, operand 0']
    #allocation4 [shape = 's32[2]{0}', space=sflag, size = 0x8, scoped, tag = 'scoped memory for tpu_custom_call.1']
    %10 = vsyncpa [#allocation4], 0
    %s11 = scalar_lea.sflag [#allocation4], 1
    %12 = vsyncpa %s11, 0
    loop: start=0, step=1, limit=4
    $region2: #{tpu_custom_call.1} parent=1 // loop_pre_header
      _
    $region3: #{tpu_custom_call.1} parent=1 // loop_header
      %s14 = sphi 0, %s18
      %p15 = scmp.ge.s32.totalorder %s14, 4
      %s24 = sphi 0, %s26
      %s27 = sphi 0, %s24
      %s28 = sphi 0, %s27
      %s44 = sphi 0, %s28
      %s48 = sphi 0, %s48
      %s50 = sphi 0, %s48
      %s51 = sphi 0, %s50
      %s65 = sphi 0, %s51
      %s69 = sphi 0, %s69
      %s71 = sphi 0, %s69
      %s72 = sphi 0, %s71
      %s86 = sphi 0, %s72
      %s90 = sphi 0, %s90
      %s92 = sphi 0, %s90
      %s93 = sphi 0, %s92
      %s107 = sphi 0, %s93
      %s111 = sphi 0, %s111
      %s113 = sphi 0, %s111
      %s114 = sphi 0, %s113
      %s128 = sphi 0, %s114
      %s134 = sphi 0, %s136
      %s137 = sphi 0, %s134
      %s138 = sphi 0, %s137
      %s154 = sphi 0, %s138
    $region4: #{tpu_custom_call.1} parent=1 // loop_header_branch
      %17 = sbr.rel (%p15) target = $region8
    $region5: #{tpu_custom_call.1} parent=1 // loop_body
      %s19 = ssub.s32 %s14, 1
      %s20 = ssub.s32 %s14, 2
      %s21 = sadd.s32 %s14, 1
      %s22 = ssub.s32 %s14, %s21
      %p23 = scmp.eq.s32.totalorder %s22, 0
      %s25 = sadd.s32 %s24, 1
      %s26 = scalar_select %p23, %s24, %s25
      %p29 = pneg %p23
      %p30 = scmp.eq.s32.totalorder %s14, 1
      %p31 = por %p29, %p30
      %p32 = scmp.ne.s32.totalorder %s24, %s27
      %p33 = scmp.eq.s32.totalorder %s14, 0
      %p34 = por %p32, %p33
      %p35 = scmp.ne.s32.totalorder %s24, %s27
      %p36 = scmp.eq.s32.totalorder %s19, 1
      %p37 = por %p35, %p36
      %p38 = scmp.ne.s32.totalorder %s27, %s28
      %p39 = scmp.eq.s32.totalorder %s19, 0
      %p40 = por %p38, %p39
      %p41 = scmp.ne.s32.totalorder %s27, %s28
      %p42 = scmp.eq.s32.totalorder %s20, 1
      %p43 = por %p41, %p42
      %p45 = scmp.ne.s32.totalorder %s28, %s44
      %p46 = scmp.eq.s32.totalorder %s20, 0
      %p47 = por %p45, %p46
      %s49 = sadd.s32 %s48, 1
      %p52 = scmp.eq.s32.totalorder %s14, 1
      %p53 = scmp.ne.s32.totalorder %s48, %s50
      %p54 = scmp.eq.s32.totalorder %s14, 0
      %p55 = por %p53, %p54
      %p56 = scmp.ne.s32.totalorder %s48, %s50
      %p57 = scmp.eq.s32.totalorder %s19, 1
      %p58 = por %p56, %p57
      %p59 = scmp.ne.s32.totalorder %s50, %s51
      %p60 = scmp.eq.s32.totalorder %s19, 0
      %p61 = por %p59, %p60
      %p62 = scmp.ne.s32.totalorder %s50, %s51
      %p63 = scmp.eq.s32.totalorder %s20, 1
      %p64 = por %p62, %p63
      %p66 = scmp.ne.s32.totalorder %s51, %s65
      %p67 = scmp.eq.s32.totalorder %s20, 0
      %p68 = por %p66, %p67
      %s70 = sadd.s32 %s69, 1
      %p73 = scmp.eq.s32.totalorder %s14, 1
      %p74 = scmp.ne.s32.totalorder %s69, %s71
      %p75 = scmp.eq.s32.totalorder %s14, 0
      %p76 = por %p74, %p75
      %p77 = scmp.ne.s32.totalorder %s69, %s71
      %p78 = scmp.eq.s32.totalorder %s19, 1
      %p79 = por %p77, %p78
      %p80 = scmp.ne.s32.totalorder %s71, %s72
      %p81 = scmp.eq.s32.totalorder %s19, 0
      %p82 = por %p80, %p81
      %p83 = scmp.ne.s32.totalorder %s71, %s72
      %p84 = scmp.eq.s32.totalorder %s20, 1
      %p85 = por %p83, %p84
      %p87 = scmp.ne.s32.totalorder %s72, %s86
      %p88 = scmp.eq.s32.totalorder %s20, 0
      %p89 = por %p87, %p88
      %s91 = sadd.s32 %s90, 1
      %p94 = scmp.eq.s32.totalorder %s14, 1
      %p95 = scmp.ne.s32.totalorder %s90, %s92
      %p96 = scmp.eq.s32.totalorder %s14, 0
      %p97 = por %p95, %p96
      %p98 = scmp.ne.s32.totalorder %s90, %s92
      %p99 = scmp.eq.s32.totalorder %s19, 1
      %p100 = por %p98, %p99
      %p101 = scmp.ne.s32.totalorder %s92, %s93
      %p102 = scmp.eq.s32.totalorder %s19, 0
      %p103 = por %p101, %p102
      %p104 = scmp.ne.s32.totalorder %s92, %s93
      %p105 = scmp.eq.s32.totalorder %s20, 1
      %p106 = por %p104, %p105
      %p108 = scmp.ne.s32.totalorder %s93, %s107
      %p109 = scmp.eq.s32.totalorder %s20, 0
      %p110 = por %p108, %p109
      %s112 = sadd.s32 %s111, 1
      %p115 = scmp.eq.s32.totalorder %s14, 1
      %p116 = scmp.ne.s32.totalorder %s111, %s113
      %p117 = scmp.eq.s32.totalorder %s14, 0
      %p118 = por %p116, %p117
      %p119 = scmp.ne.s32.totalorder %s111, %s113
      %p120 = scmp.eq.s32.totalorder %s19, 1
      %p121 = por %p119, %p120
      %p122 = scmp.ne.s32.totalorder %s113, %s114
      %p123 = scmp.eq.s32.totalorder %s19, 0
      %p124 = por %p122, %p123
      %p125 = scmp.ne.s32.totalorder %s113, %s114
      %p126 = scmp.eq.s32.totalorder %s20, 1
      %p127 = por %p125, %p126
      %p129 = scmp.ne.s32.totalorder %s114, %s128
      %p130 = scmp.eq.s32.totalorder %s20, 0
      %p131 = por %p129, %p130
      %s132 = ssub.s32 %s14, %s21
      %p133 = scmp.eq.s32.totalorder %s132, 0
      %s135 = sadd.s32 %s134, 1
      %s136 = scalar_select %p133, %s134, %s135
      %p139 = pneg %p133
      %p140 = scmp.eq.s32.totalorder %s14, 1
      %p141 = por %p139, %p140
      %p142 = scmp.ne.s32.totalorder %s134, %s137
      %p143 = scmp.eq.s32.totalorder %s14, 0
      %p144 = por %p142, %p143
      %p145 = scmp.ne.s32.totalorder %s134, %s137
      %p146 = scmp.eq.s32.totalorder %s19, 1
      %p147 = por %p145, %p146
      %p148 = scmp.ne.s32.totalorder %s137, %s138
      %p149 = scmp.eq.s32.totalorder %s19, 0
      %p150 = por %p148, %p149
      %p151 = scmp.ne.s32.totalorder %s137, %s138
      %p152 = scmp.eq.s32.totalorder %s20, 1
      %p153 = por %p151, %p152
      %p155 = scmp.ne.s32.totalorder %s138, %s154
      %p156 = scmp.eq.s32.totalorder %s20, 0
      %p157 = por %p155, %p156
      %p158 = scmp.le.s32.totalorder 1, %s14
      %p159 = scmp.lt.s32.totalorder %s14, 3
      %p160 = pnand %p158, %p159
      %p161 = pneg %p160
      // Predicated region
      $region9: #{tpu_custom_call.1} parent=5 // pred_check
        _
      $region10: #{tpu_custom_call.1} parent=5 // pred_check_branch
        %163 = sbr.rel (%p160) target = $region12
      $region11: #{tpu_custom_call.1} parent=5 // pred_region
        %s164 = ssub.s32 %s14, 1
        // Predicated region
        $region13: #{tpu_custom_call.1} parent=11 // pred_check
          %p165 = pneg %p61
        $region14: #{tpu_custom_call.1} parent=11 // pred_check_branch
          %167 = sbr.rel (%p165) target = $region16
        $region15: #{tpu_custom_call.1} parent=11 // pred_region
          _
        $region16: #{tpu_custom_call.1} parent=11 // pred_fallthru
          _
        // Predicated region
        $region17: #{tpu_custom_call.1} parent=11 // pred_check
          %p168 = pneg %p82
        $region18: #{tpu_custom_call.1} parent=11 // pred_check_branch
          %170 = sbr.rel (%p168) target = $region20
        $region19: #{tpu_custom_call.1} parent=11 // pred_region
          _
        $region20: #{tpu_custom_call.1} parent=11 // pred_fallthru
          _
        // Predicated region
        $region21: #{tpu_custom_call.1} parent=11 // pred_check
          %p171 = pneg %p103
        $region22: #{tpu_custom_call.1} parent=11 // pred_check_branch
          %173 = sbr.rel (%p171) target = $region24
        $region23: #{tpu_custom_call.1} parent=11 // pred_region
          _
        $region24: #{tpu_custom_call.1} parent=11 // pred_fallthru
          _
        // Predicated region
        $region25: #{tpu_custom_call.1} parent=11 // pred_check
          %p174 = pneg %p124
        $region26: #{tpu_custom_call.1} parent=11 // pred_check_branch
          %176 = sbr.rel (%p174) target = $region28
        $region27: #{tpu_custom_call.1} parent=11 // pred_region
          _
        $region28: #{tpu_custom_call.1} parent=11 // pred_fallthru
          _
      $region12: #{tpu_custom_call.1} parent=5 // pred_fallthru
        _
      %p177 = scmp.lt.s32.totalorder %s14, 2
      // Predicated region
      $region29: #{tpu_custom_call.1} parent=5 // pred_check
        %p178 = pneg %p177
      $region30: #{tpu_custom_call.1} parent=5 // pred_check_branch
        %180 = sbr.rel (%p178) target = $region32
      $region31: #{tpu_custom_call.1} parent=5 // pred_region
        // Predicated region
        $region33: #{tpu_custom_call.1} parent=31 // pred_check
          %p181 = pneg %p34
        $region34: #{tpu_custom_call.1} parent=31 // pred_check_branch
          %183 = sbr.rel (%p181) target = $region36
        $region35: #{tpu_custom_call.1} parent=31 // pred_region
          %p184 = scmp.lt.s32.totalorder %s14, 1
          %s185 = scalar_select %p184, %s14, 1
          %s186 = smul.addr %s185, 32
          %s187 = smul.addr %s186, 8
          %s188 = scalar_lea.vmem %s0, %s187
        $region36: #{tpu_custom_call.1} parent=31 // pred_fallthru
          _
      $region32: #{tpu_custom_call.1} parent=5 // pred_fallthru
        _
      %p189 = scmp.le.s32.totalorder 1, %s14
      %p190 = scmp.lt.s32.totalorder %s14, 3
      %p191 = pnand %p189, %p190
      %p192 = pneg %p191
      // Predicated region
      $region37: #{tpu_custom_call.1} parent=5 // pred_check
        _
      $region38: #{tpu_custom_call.1} parent=5 // pred_check_branch
        %194 = sbr.rel (%p191) target = $region40
      $region39: #{tpu_custom_call.1} parent=5 // pred_region
        %s195 = ssub.s32 %s14, 1
        %p196 = scmp.lt.s32.totalorder %s19, 1
        %s197 = scalar_select %p196, %s19, 1
        %s198 = smul.addr %s197, 32
        %s199 = smul.addr %s198, 8
        %s200 = scalar_lea.vmem %s0, %s199
        %p201 = pneg %p40
        %p202 = pneg %p37
        %p203 = pneg %p61
        %p204 = pneg %p58
        %p205 = pneg %p82
        %p206 = pneg %p79
        %p207 = pneg %p103
        %p208 = pneg %p100
        %p209 = pneg %p124
        %p210 = pneg %p121
        %p211 = pneg %p150
        %p212 = pneg %p147
        %s213 = sand.u32 %s137, 1
        %s214 = scalar_lea.sflag [#allocation4], %s213
        %s215 = sand.u32 %s137, 1
        %s216 = smul.addr %s215, 256
        %s217 = scalar_lea.vmem [#allocation3], %s216
        %p218 = scmp.lt.s32.totalorder %s19, 1
        %s219 = scalar_select %p218, %s19, 1
        %s220 = smul.addr %s219, 32
        %s221 = smul.addr %s220, 8
        %s222 = scalar_lea.vmem %s0, %s221
        %vm224 = vcmask 519168
        %225 = vst.msk [vmem:[#allocation2] sm:$0xf] %vm224, 0
        %226 = vst.msk [vmem:[#allocation2 + $0x4] sm:$0xf] %vm224, 0
        %vm227 = vcmask 516096
        %228 = vst.msk [vmem:[#allocation2 + $0x8] sm:$0x1] %vm227, 0
        %s229 = scalar_lea.vmem [#allocation2], 204
        %230 = vst.msk [vmem:[%s229] sm:$0xf] %vm224, 0
        %231 = vst.msk [vmem:[%s229 + $0x4] sm:$0xf] %vm224, 0
        %232 = vst.msk [vmem:[%s229 + $0x8] sm:$0x1] %vm227, 0
        %vm233 = vcmask 516096
        %vm234 = vsmask.f32 256
        %vm235 = vmand %vm233, %vm234
        %v236 = vld [vmem:[#allocation2] sm:$0x1]
        %v237 = vsel %vm235, 0, %v236
        %238 = vst [vmem:[#allocation2] sm:$0x1] %v237
        %v239 = vld [vmem:[#allocation2 + $0xc] sm:$0x1]
        %v240 = vsel %vm235, 0, %v239
        %241 = vst [vmem:[#allocation2 + $0xc] sm:$0x1] %v240
        %v242 = vld [vmem:[#allocation2 + $0x18] sm:$0x1]
        %v243 = vsel %vm235, 0, %v242
        %244 = vst [vmem:[#allocation2 + $0x18] sm:$0x1] %v243
        %v245 = vld [vmem:[#allocation2 + $0x24] sm:$0x1]
        %v246 = vsel %vm235, 0, %v245
        %247 = vst [vmem:[#allocation2 + $0x24] sm:$0x1] %v246
        %v248 = vld [vmem:[#allocation2 + $0x30] sm:$0x1]
        %v249 = vsel %vm235, 0, %v248
        %250 = vst [vmem:[#allocation2 + $0x30] sm:$0x1] %v249
        %v251 = vld [vmem:[#allocation2 + $0x3c] sm:$0x1]
        %v252 = vsel %vm235, 0, %v251
        %253 = vst [vmem:[#allocation2 + $0x3c] sm:$0x1] %v252
        %v254 = vld [vmem:[#allocation2 + $0x48] sm:$0x1]
        %v255 = vsel %vm235, 0, %v254
        %256 = vst [vmem:[#allocation2 + $0x48] sm:$0x1] %v255
        %v257 = vld [vmem:[#allocation2 + $0x54] sm:$0x1]
        %v258 = vsel %vm235, 0, %v257
        %259 = vst [vmem:[#allocation2 + $0x54] sm:$0x1] %v258
        %v260 = vld [vmem:[#allocation2 + $0x60] sm:$0x1]
        %v261 = vsel %vm235, 0, %v260
        %262 = vst [vmem:[#allocation2 + $0x60] sm:$0x1] %v261
        %v263 = vld [vmem:[#allocation2 + $0x6c] sm:$0x1]
        %v264 = vsel %vm235, 0, %v263
        %265 = vst [vmem:[#allocation2 + $0x6c] sm:$0x1] %v264
        %v266 = vld [vmem:[#allocation2 + $0x78] sm:$0x1]
        %v267 = vsel %vm235, 0, %v266
        %268 = vst [vmem:[#allocation2 + $0x78] sm:$0x1] %v267
        %v269 = vld [vmem:[#allocation2 + $0x84] sm:$0x1]
        %v270 = vsel %vm235, 0, %v269
        %271 = vst [vmem:[#allocation2 + $0x84] sm:$0x1] %v270
        %v272 = vld [vmem:[#allocation2 + $0x90] sm:$0x1]
        %v273 = vsel %vm235, 0, %v272
        %274 = vst [vmem:[#allocation2 + $0x90] sm:$0x1] %v273
        %v275 = vld [vmem:[#allocation2 + $0x9c] sm:$0x1]
        %v276 = vsel %vm235, 0, %v275
        %277 = vst [vmem:[#allocation2 + $0x9c] sm:$0x1] %v276
        %v278 = vld [vmem:[#allocation2 + $0xa8] sm:$0x1]
        %v279 = vsel %vm235, 0, %v278
        %280 = vst [vmem:[#allocation2 + $0xa8] sm:$0x1] %v279
        %v281 = vld [vmem:[#allocation2 + $0xb4] sm:$0x1]
        %v282 = vsel %vm235, 0, %v281
        %283 = vst [vmem:[#allocation2 + $0xb4] sm:$0x1] %v282
        %v284 = vld [vmem:[#allocation2 + $0xc0] sm:$0x1]
        %v285 = vsel %vm235, 0, %v284
        %286 = vst [vmem:[#allocation2 + $0xc0] sm:$0x1] %v285
        %v287 = vld [vmem:[#allocation2 + $0xcc] sm:$0x1]
        %v288 = vsel %vm235, 0, %v287
        %289 = vst [vmem:[#allocation2 + $0xcc] sm:$0x1] %v288
        %vm290 = vsmask.f32 7938
        %vm291 = vmand %vm233, %vm290
        %v292 = vld [vmem:[#allocation2 + $0x8] sm:$0x1]
        %v293 = vsel %vm291, 0, %v292
        %294 = vst [vmem:[#allocation2 + $0x8] sm:$0x1] %v293
        %v295 = vld [vmem:[#allocation2 + $0x14] sm:$0x1]
        %v296 = vsel %vm291, 0, %v295
        %297 = vst [vmem:[#allocation2 + $0x14] sm:$0x1] %v296
        %v298 = vld [vmem:[#allocation2 + $0x20] sm:$0x1]
        %v299 = vsel %vm291, 0, %v298
        %300 = vst [vmem:[#allocation2 + $0x20] sm:$0x1] %v299
        %v301 = vld [vmem:[#allocation2 + $0x2c] sm:$0x1]
        %v302 = vsel %vm291, 0, %v301
        %303 = vst [vmem:[#allocation2 + $0x2c] sm:$0x1] %v302
        %v304 = vld [vmem:[#allocation2 + $0x38] sm:$0x1]
        %v305 = vsel %vm291, 0, %v304
        %306 = vst [vmem:[#allocation2 + $0x38] sm:$0x1] %v305
        %v307 = vld [vmem:[#allocation2 + $0x44] sm:$0x1]
        %v308 = vsel %vm291, 0, %v307
        %309 = vst [vmem:[#allocation2 + $0x44] sm:$0x1] %v308
        %v310 = vld [vmem:[#allocation2 + $0x50] sm:$0x1]
        %v311 = vsel %vm291, 0, %v310
        %312 = vst [vmem:[#allocation2 + $0x50] sm:$0x1] %v311
        %v313 = vld [vmem:[#allocation2 + $0x5c] sm:$0x1]
        %v314 = vsel %vm291, 0, %v313
        %315 = vst [vmem:[#allocation2 + $0x5c] sm:$0x1] %v314
        %v316 = vld [vmem:[#allocation2 + $0x68] sm:$0x1]
        %v317 = vsel %vm291, 0, %v316
        %318 = vst [vmem:[#allocation2 + $0x68] sm:$0x1] %v317
        %v319 = vld [vmem:[#allocation2 + $0x74] sm:$0x1]
        %v320 = vsel %vm291, 0, %v319
        %321 = vst [vmem:[#allocation2 + $0x74] sm:$0x1] %v320
        %v322 = vld [vmem:[#allocation2 + $0x80] sm:$0x1]
        %v323 = vsel %vm291, 0, %v322
        %324 = vst [vmem:[#allocation2 + $0x80] sm:$0x1] %v323
        %v325 = vld [vmem:[#allocation2 + $0x8c] sm:$0x1]
        %v326 = vsel %vm291, 0, %v325
        %327 = vst [vmem:[#allocation2 + $0x8c] sm:$0x1] %v326
        %v328 = vld [vmem:[#allocation2 + $0x98] sm:$0x1]
        %v329 = vsel %vm291, 0, %v328
        %330 = vst [vmem:[#allocation2 + $0x98] sm:$0x1] %v329
        %v331 = vld [vmem:[#allocation2 + $0xa4] sm:$0x1]
        %v332 = vsel %vm291, 0, %v331
        %333 = vst [vmem:[#allocation2 + $0xa4] sm:$0x1] %v332
        %v334 = vld [vmem:[#allocation2 + $0xb0] sm:$0x1]
        %v335 = vsel %vm291, 0, %v334
        %336 = vst [vmem:[#allocation2 + $0xb0] sm:$0x1] %v335
        %v337 = vld [vmem:[#allocation2 + $0xbc] sm:$0x1]
        %v338 = vsel %vm291, 0, %v337
        %339 = vst [vmem:[#allocation2 + $0xbc] sm:$0x1] %v338
        %v340 = vld [vmem:[#allocation2 + $0xc8] sm:$0x1]
        %v341 = vsel %vm291, 0, %v340
        %342 = vst [vmem:[#allocation2 + $0xc8] sm:$0x1] %v341
        %v343 = vld [vmem:[#allocation2 + $0xd4] sm:$0x1]
        %v344 = vsel %vm291, 0, %v343
        %345 = vst [vmem:[#allocation2 + $0xd4] sm:$0x1] %v344
        %v346 = vld [vmem:[%s222] sm:$0xff]
        %v347 = vld [vmem:[%s222 + $0x8] sm:$0xff]
        %v348 = vld [vmem:[%s222 + $0x10] sm:$0xff]
        %v349 = vld [vmem:[%s222 + $0x18] sm:$0xff]
        %v350 = vld [vmem:[%s222 + $0x20] sm:$0xff]
        %v351 = vld [vmem:[%s222 + $0x28] sm:$0xff]
        %v352 = vld [vmem:[%s222 + $0x30] sm:$0xff]
        %v353 = vld [vmem:[%s222 + $0x38] sm:$0xff]
        %v354 = vld [vmem:[%s222 + $0x40] sm:$0xff]
        %v355 = vld [vmem:[%s222 + $0x48] sm:$0xff]
        %v356 = vld [vmem:[%s222 + $0x50] sm:$0xff]
        %v357 = vld [vmem:[%s222 + $0x58] sm:$0xff]
        %v358 = vld [vmem:[%s222 + $0x60] sm:$0xff]
        %v359 = vld [vmem:[%s222 + $0x68] sm:$0xff]
        %v360 = vld [vmem:[%s222 + $0x70] sm:$0xff]
        %v361 = vld [vmem:[%s222 + $0x78] sm:$0xff]
        %v362 = vld [vmem:[%s222 + $0x80] sm:$0xff]
        %v363 = vld [vmem:[%s222 + $0x88] sm:$0xff]
        %v364 = vld [vmem:[%s222 + $0x90] sm:$0xff]
        %v365 = vld [vmem:[%s222 + $0x98] sm:$0xff]
        %v366 = vld [vmem:[%s222 + $0xa0] sm:$0xff]
        %v367 = vld [vmem:[%s222 + $0xa8] sm:$0xff]
        %v368 = vld [vmem:[%s222 + $0xb0] sm:$0xff]
        %v369 = vld [vmem:[%s222 + $0xb8] sm:$0xff]
        %v370 = vld [vmem:[%s222 + $0xc0] sm:$0xff]
        %v371 = vld [vmem:[%s222 + $0xc8] sm:$0xff]
        %v372 = vld [vmem:[%s222 + $0xd0] sm:$0xff]
        %v373 = vld [vmem:[%s222 + $0xd8] sm:$0xff]
        %v374 = vld [vmem:[%s222 + $0xe0] sm:$0xff]
        %v375 = vld [vmem:[%s222 + $0xe8] sm:$0xff]
        %v376 = vld [vmem:[%s222 + $0xf0] sm:$0xff]
        %v377 = vld [vmem:[%s222 + $0xf8] sm:$0xff]
        %v378 = vpack.c.bf16 %v347, %v346
        %v379 = vpack.c.bf16 %v349, %v348
        %v380 = vpack.c.bf16 %v351, %v350
        %v381 = vpack.c.bf16 %v353, %v352
        %v382 = vpack.c.bf16 %v355, %v354
        %v383 = vpack.c.bf16 %v357, %v356
        %v384 = vpack.c.bf16 %v359, %v358
        %v385 = vpack.c.bf16 %v361, %v360
        %v386 = vpack.c.bf16 %v363, %v362
        %v387 = vpack.c.bf16 %v365, %v364
        %v388 = vpack.c.bf16 %v367, %v366
        %v389 = vpack.c.bf16 %v369, %v368
        %v390 = vpack.c.bf16 %v371, %v370
        %v391 = vpack.c.bf16 %v373, %v372
        %v392 = vpack.c.bf16 %v375, %v374
        %v393 = vpack.c.bf16 %v377, %v376
        %v410 = vunpack.c.l.b16 %v378
        %v411 = vunpack.c.h.b16 %v378
        %v412 = vunpack.c.l.b16 %v379
        %v413 = vunpack.c.h.b16 %v379
        %v414 = vunpack.c.l.b16 %v380
        %v415 = vunpack.c.h.b16 %v380
        %v416 = vunpack.c.l.b16 %v381
        %v417 = vunpack.c.h.b16 %v381
        %v418 = vunpack.c.l.b16 %v382
        %v419 = vunpack.c.h.b16 %v382
        %v420 = vunpack.c.l.b16 %v383
        %v421 = vunpack.c.h.b16 %v383
        %v422 = vunpack.c.l.b16 %v384
        %v423 = vunpack.c.h.b16 %v384
        %v424 = vunpack.c.l.b16 %v385
        %v425 = vunpack.c.h.b16 %v385
        %v426 = vunpack.c.l.b16 %v386
        %v427 = vunpack.c.h.b16 %v386
        %v428 = vunpack.c.l.b16 %v387
        %v429 = vunpack.c.h.b16 %v387
        %v430 = vunpack.c.l.b16 %v388
        %v431 = vunpack.c.h.b16 %v388
        %v432 = vunpack.c.l.b16 %v389
        %v433 = vunpack.c.h.b16 %v389
        %v434 = vunpack.c.l.b16 %v390
        %v435 = vunpack.c.h.b16 %v390
        %v436 = vunpack.c.l.b16 %v391
        %v437 = vunpack.c.h.b16 %v391
        %v438 = vunpack.c.l.b16 %v392
        %v439 = vunpack.c.h.b16 %v392
        %v440 = vunpack.c.l.b16 %v393
        %v441 = vunpack.c.h.b16 %v393
        %v442 = vpack.c.b16 %v410, %v410
        %v443 = vpack.c.b16 %v411, %v411
        %v444 = vpack.c.b16 %v412, %v412
        %v445 = vpack.c.b16 %v413, %v413
        %v446 = vpack.c.b16 %v414, %v414
        %v447 = vpack.c.b16 %v415, %v415
        %v448 = vpack.c.b16 %v416, %v416
        %v449 = vpack.c.b16 %v417, %v417
        %v450 = vpack.c.b16 %v418, %v418
        %v451 = vpack.c.b16 %v419, %v419
        %v452 = vpack.c.b16 %v420, %v420
        %v453 = vpack.c.b16 %v421, %v421
        %v454 = vpack.c.b16 %v422, %v422
        %v455 = vpack.c.b16 %v423, %v423
        %v456 = vpack.c.b16 %v424, %v424
        %v457 = vpack.c.b16 %v425, %v425
        %v458 = vpack.c.b16 %v426, %v426
        %v459 = vpack.c.b16 %v427, %v427
        %v460 = vpack.c.b16 %v428, %v428
        %v461 = vpack.c.b16 %v429, %v429
        %v462 = vpack.c.b16 %v430, %v430
        %v463 = vpack.c.b16 %v431, %v431
        %v464 = vpack.c.b16 %v432, %v432
        %v465 = vpack.c.b16 %v433, %v433
        %v466 = vpack.c.b16 %v434, %v434
        %v467 = vpack.c.b16 %v435, %v435
        %v468 = vpack.c.b16 %v436, %v436
        %v469 = vpack.c.b16 %v437, %v437
        %v470 = vpack.c.b16 %v438, %v438
        %v471 = vpack.c.b16 %v439, %v439
        %v472 = vpack.c.b16 %v440, %v440
        %v473 = vpack.c.b16 %v441, %v441
        %vm474 = vsmask.f32 4368
        %vm475 = vmor %vm234, %vm474
        %v477 = vshrl.u32 %v442, 16
        %v479 = vrot.slane %v477, 7
        %v480 = vshll.u32 %v442, 16
        %v482 = vor.u32 %v479, %v480
        %v483 = vrot.slane %v479, 4
        %v485 = vshrl.u32 %v443, 16
        %v487 = vrot.slane %v485, 7
        %v488 = vshll.u32 %v443, 16
        %v490 = vor.u32 %v487, %v488
        %v491 = vsel %vm475, %v483, %v490
        %v492 = vrot.slane %v487, 4
        %v494 = vshrl.u32 %v444, 16
        %v496 = vrot.slane %v494, 7
        %v497 = vshll.u32 %v444, 16
        %v499 = vor.u32 %v496, %v497
        %v500 = vrot.slane %v496, 4
        %v502 = vshrl.u32 %v445, 16
        %v504 = vrot.slane %v502, 7
        %v505 = vshll.u32 %v445, 16
        %v507 = vor.u32 %v504, %v505
        %v508 = vsel %vm475, %v500, %v507
        %v509 = vrot.slane %v504, 4
        %v511 = vshrl.u32 %v446, 16
        %v513 = vrot.slane %v511, 7
        %v514 = vshll.u32 %v446, 16
        %v516 = vor.u32 %v513, %v514
        %v517 = vrot.slane %v513, 4
        %v519 = vshrl.u32 %v447, 16
        %v521 = vrot.slane %v519, 7
        %v522 = vshll.u32 %v447, 16
        %v524 = vor.u32 %v521, %v522
        %v525 = vsel %vm475, %v517, %v524
        %v526 = vrot.slane %v521, 4
        %v528 = vshrl.u32 %v448, 16
        %v530 = vrot.slane %v528, 7
        %v531 = vshll.u32 %v448, 16
        %v533 = vor.u32 %v530, %v531
        %v534 = vrot.slane %v530, 4
        %v536 = vshrl.u32 %v449, 16
        %v538 = vrot.slane %v536, 7
        %v539 = vshll.u32 %v449, 16
        %v541 = vor.u32 %v538, %v539
        %v542 = vsel %vm475, %v534, %v541
        %v543 = vrot.slane %v538, 4
        %v545 = vshrl.u32 %v450, 16
        %v547 = vrot.slane %v545, 7
        %v548 = vshll.u32 %v450, 16
        %v550 = vor.u32 %v547, %v548
        %v551 = vrot.slane %v547, 4
        %v553 = vshrl.u32 %v451, 16
        %v555 = vrot.slane %v553, 7
        %v556 = vshll.u32 %v451, 16
        %v558 = vor.u32 %v555, %v556
        %v559 = vsel %vm475, %v551, %v558
        %v560 = vrot.slane %v555, 4
        %v562 = vshrl.u32 %v452, 16
        %v564 = vrot.slane %v562, 7
        %v565 = vshll.u32 %v452, 16
        %v567 = vor.u32 %v564, %v565
        %v568 = vrot.slane %v564, 4
        %v570 = vshrl.u32 %v453, 16
        %v572 = vrot.slane %v570, 7
        %v573 = vshll.u32 %v453, 16
        %v575 = vor.u32 %v572, %v573
        %v576 = vsel %vm475, %v568, %v575
        %v577 = vrot.slane %v572, 4
        %v579 = vshrl.u32 %v454, 16
        %v581 = vrot.slane %v579, 7
        %v582 = vshll.u32 %v454, 16
        %v584 = vor.u32 %v581, %v582
        %v585 = vrot.slane %v581, 4
        %v587 = vshrl.u32 %v455, 16
        %v589 = vrot.slane %v587, 7
        %v590 = vshll.u32 %v455, 16
        %v592 = vor.u32 %v589, %v590
        %v593 = vsel %vm475, %v585, %v592
        %v594 = vrot.slane %v589, 4
        %v596 = vshrl.u32 %v456, 16
        %v598 = vrot.slane %v596, 7
        %v599 = vshll.u32 %v456, 16
        %v601 = vor.u32 %v598, %v599
        %v602 = vrot.slane %v598, 4
        %v604 = vshrl.u32 %v457, 16
        %v606 = vrot.slane %v604, 7
        %v607 = vshll.u32 %v457, 16
        %v609 = vor.u32 %v606, %v607
        %v610 = vsel %vm475, %v602, %v609
        %v611 = vrot.slane %v606, 4
        %v613 = vshrl.u32 %v458, 16
        %v615 = vrot.slane %v613, 7
        %v616 = vshll.u32 %v458, 16
        %v618 = vor.u32 %v615, %v616
        %v619 = vrot.slane %v615, 4
        %v621 = vshrl.u32 %v459, 16
        %v623 = vrot.slane %v621, 7
        %v624 = vshll.u32 %v459, 16
        %v626 = vor.u32 %v623, %v624
        %v627 = vsel %vm475, %v619, %v626
        %v628 = vrot.slane %v623, 4
        %v630 = vshrl.u32 %v460, 16
        %v632 = vrot.slane %v630, 7
        %v633 = vshll.u32 %v460, 16
        %v635 = vor.u32 %v632, %v633
        %v636 = vrot.slane %v632, 4
        %v638 = vshrl.u32 %v461, 16
        %v640 = vrot.slane %v638, 7
        %v641 = vshll.u32 %v461, 16
        %v643 = vor.u32 %v640, %v641
        %v644 = vsel %vm475, %v636, %v643
        %v645 = vrot.slane %v640, 4
        %v647 = vshrl.u32 %v462, 16
        %v649 = vrot.slane %v647, 7
        %v650 = vshll.u32 %v462, 16
        %v652 = vor.u32 %v649, %v650
        %v653 = vrot.slane %v649, 4
        %v655 = vshrl.u32 %v463, 16
        %v657 = vrot.slane %v655, 7
        %v658 = vshll.u32 %v463, 16
        %v660 = vor.u32 %v657, %v658
        %v661 = vsel %vm475, %v653, %v660
        %v662 = vrot.slane %v657, 4
        %v664 = vshrl.u32 %v464, 16
        %v666 = vrot.slane %v664, 7
        %v667 = vshll.u32 %v464, 16
        %v669 = vor.u32 %v666, %v667
        %v670 = vrot.slane %v666, 4
        %v672 = vshrl.u32 %v465, 16
        %v674 = vrot.slane %v672, 7
        %v675 = vshll.u32 %v465, 16
        %v677 = vor.u32 %v674, %v675
        %v678 = vsel %vm475, %v670, %v677
        %v679 = vrot.slane %v674, 4
        %v681 = vshrl.u32 %v466, 16
        %v683 = vrot.slane %v681, 7
        %v684 = vshll.u32 %v466, 16
        %v686 = vor.u32 %v683, %v684
        %v687 = vrot.slane %v683, 4
        %v689 = vshrl.u32 %v467, 16
        %v691 = vrot.slane %v689, 7
        %v692 = vshll.u32 %v467, 16
        %v694 = vor.u32 %v691, %v692
        %v695 = vsel %vm475, %v687, %v694
        %v696 = vrot.slane %v691, 4
        %v698 = vshrl.u32 %v468, 16
        %v700 = vrot.slane %v698, 7
        %v701 = vshll.u32 %v468, 16
        %v703 = vor.u32 %v700, %v701
        %v704 = vrot.slane %v700, 4
        %v706 = vshrl.u32 %v469, 16
        %v708 = vrot.slane %v706, 7
        %v709 = vshll.u32 %v469, 16
        %v711 = vor.u32 %v708, %v709
        %v712 = vsel %vm475, %v704, %v711
        %v713 = vrot.slane %v708, 4
        %v715 = vshrl.u32 %v470, 16
        %v717 = vrot.slane %v715, 7
        %v718 = vshll.u32 %v470, 16
        %v720 = vor.u32 %v717, %v718
        %v721 = vrot.slane %v717, 4
        %v723 = vshrl.u32 %v471, 16
        %v725 = vrot.slane %v723, 7
        %v726 = vshll.u32 %v471, 16
        %v728 = vor.u32 %v725, %v726
        %v729 = vsel %vm475, %v721, %v728
        %v730 = vrot.slane %v725, 4
        %v732 = vshrl.u32 %v472, 16
        %v734 = vrot.slane %v732, 7
        %v735 = vshll.u32 %v472, 16
        %v737 = vor.u32 %v734, %v735
        %v738 = vrot.slane %v734, 4
        %v740 = vshrl.u32 %v473, 16
        %v742 = vrot.slane %v740, 7
        %v743 = vshll.u32 %v473, 16
        %v745 = vor.u32 %v742, %v743
        %v746 = vsel %vm475, %v738, %v745
        %v747 = vrot.slane %v742, 4
        %s796 = scalar_lea.vmem [#allocation2], 12
        %vm797 = vcmask 519168
        %vm798 = vmand %vm797, %vm290
        %v799 = vld [vmem:[%s796] sm:$0xf]
        %v800 = vsel %vm798, %v482, %v799
        %801 = vst [vmem:[%s796] sm:$0xf] %v800
        %802 = vst.msk [vmem:[%s796 + $0x4] sm:$0xf] %vm224, %v491
        %v803 = vld [vmem:[%s796 + $0x8] sm:$0x1]
        %v804 = vsel %vm235, %v492, %v803
        %805 = vst [vmem:[%s796 + $0x8] sm:$0x1] %v804
        %v806 = vld [vmem:[%s796 + $0xc] sm:$0xf]
        %v807 = vsel %vm798, %v499, %v806
        %808 = vst [vmem:[%s796 + $0xc] sm:$0xf] %v807
        %809 = vst.msk [vmem:[%s796 + $0x10] sm:$0xf] %vm224, %v508
        %v810 = vld [vmem:[%s796 + $0x14] sm:$0x1]
        %v811 = vsel %vm235, %v509, %v810
        %812 = vst [vmem:[%s796 + $0x14] sm:$0x1] %v811
        %v813 = vld [vmem:[%s796 + $0x18] sm:$0xf]
        %v814 = vsel %vm798, %v516, %v813
        %815 = vst [vmem:[%s796 + $0x18] sm:$0xf] %v814
        %816 = vst.msk [vmem:[%s796 + $0x1c] sm:$0xf] %vm224, %v525
        %v817 = vld [vmem:[%s796 + $0x20] sm:$0x1]
        %v818 = vsel %vm235, %v526, %v817
        %819 = vst [vmem:[%s796 + $0x20] sm:$0x1] %v818
        %v820 = vld [vmem:[%s796 + $0x24] sm:$0xf]
        %v821 = vsel %vm798, %v533, %v820
        %822 = vst [vmem:[%s796 + $0x24] sm:$0xf] %v821
        %823 = vst.msk [vmem:[%s796 + $0x28] sm:$0xf] %vm224, %v542
        %v824 = vld [vmem:[%s796 + $0x2c] sm:$0x1]
        %v825 = vsel %vm235, %v543, %v824
        %826 = vst [vmem:[%s796 + $0x2c] sm:$0x1] %v825
        %v827 = vld [vmem:[%s796 + $0x30] sm:$0xf]
        %v828 = vsel %vm798, %v550, %v827
        %829 = vst [vmem:[%s796 + $0x30] sm:$0xf] %v828
        %830 = vst.msk [vmem:[%s796 + $0x34] sm:$0xf] %vm224, %v559
        %v831 = vld [vmem:[%s796 + $0x38] sm:$0x1]
        %v832 = vsel %vm235, %v560, %v831
        %833 = vst [vmem:[%s796 + $0x38] sm:$0x1] %v832
        %v834 = vld [vmem:[%s796 + $0x3c] sm:$0xf]
        %v835 = vsel %vm798, %v567, %v834
        %836 = vst [vmem:[%s796 + $0x3c] sm:$0xf] %v835
        %837 = vst.msk [vmem:[%s796 + $0x40] sm:$0xf] %vm224, %v576
        %v838 = vld [vmem:[%s796 + $0x44] sm:$0x1]
        %v839 = vsel %vm235, %v577, %v838
        %840 = vst [vmem:[%s796 + $0x44] sm:$0x1] %v839
        %v841 = vld [vmem:[%s796 + $0x48] sm:$0xf]
        %v842 = vsel %vm798, %v584, %v841
        %843 = vst [vmem:[%s796 + $0x48] sm:$0xf] %v842
        %844 = vst.msk [vmem:[%s796 + $0x4c] sm:$0xf] %vm224, %v593
        %v845 = vld [vmem:[%s796 + $0x50] sm:$0x1]
        %v846 = vsel %vm235, %v594, %v845
        %847 = vst [vmem:[%s796 + $0x50] sm:$0x1] %v846
        %v848 = vld [vmem:[%s796 + $0x54] sm:$0xf]
        %v849 = vsel %vm798, %v601, %v848
        %850 = vst [vmem:[%s796 + $0x54] sm:$0xf] %v849
        %851 = vst.msk [vmem:[%s796 + $0x58] sm:$0xf] %vm224, %v610
        %v852 = vld [vmem:[%s796 + $0x5c] sm:$0x1]
        %v853 = vsel %vm235, %v611, %v852
        %854 = vst [vmem:[%s796 + $0x5c] sm:$0x1] %v853
        %v855 = vld [vmem:[%s796 + $0x60] sm:$0xf]
        %v856 = vsel %vm798, %v618, %v855
        %857 = vst [vmem:[%s796 + $0x60] sm:$0xf] %v856
        %858 = vst.msk [vmem:[%s796 + $0x64] sm:$0xf] %vm224, %v627
        %v859 = vld [vmem:[%s796 + $0x68] sm:$0x1]
        %v860 = vsel %vm235, %v628, %v859
        %861 = vst [vmem:[%s796 + $0x68] sm:$0x1] %v860
        %v862 = vld [vmem:[%s796 + $0x6c] sm:$0xf]
        %v863 = vsel %vm798, %v635, %v862
        %864 = vst [vmem:[%s796 + $0x6c] sm:$0xf] %v863
        %865 = vst.msk [vmem:[%s796 + $0x70] sm:$0xf] %vm224, %v644
        %v866 = vld [vmem:[%s796 + $0x74] sm:$0x1]
        %v867 = vsel %vm235, %v645, %v866
        %868 = vst [vmem:[%s796 + $0x74] sm:$0x1] %v867
        %v869 = vld [vmem:[%s796 + $0x78] sm:$0xf]
        %v870 = vsel %vm798, %v652, %v869
        %871 = vst [vmem:[%s796 + $0x78] sm:$0xf] %v870
        %872 = vst.msk [vmem:[%s796 + $0x7c] sm:$0xf] %vm224, %v661
        %v873 = vld [vmem:[%s796 + $0x80] sm:$0x1]
        %v874 = vsel %vm235, %v662, %v873
        %875 = vst [vmem:[%s796 + $0x80] sm:$0x1] %v874
        %v876 = vld [vmem:[%s796 + $0x84] sm:$0xf]
        %v877 = vsel %vm798, %v669, %v876
        %878 = vst [vmem:[%s796 + $0x84] sm:$0xf] %v877
        %879 = vst.msk [vmem:[%s796 + $0x88] sm:$0xf] %vm224, %v678
        %v880 = vld [vmem:[%s796 + $0x8c] sm:$0x1]
        %v881 = vsel %vm235, %v679, %v880
        %882 = vst [vmem:[%s796 + $0x8c] sm:$0x1] %v881
        %v883 = vld [vmem:[%s796 + $0x90] sm:$0xf]
        %v884 = vsel %vm798, %v686, %v883
        %885 = vst [vmem:[%s796 + $0x90] sm:$0xf] %v884
        %886 = vst.msk [vmem:[%s796 + $0x94] sm:$0xf] %vm224, %v695
        %v887 = vld [vmem:[%s796 + $0x98] sm:$0x1]
        %v888 = vsel %vm235, %v696, %v887
        %889 = vst [vmem:[%s796 + $0x98] sm:$0x1] %v888
        %v890 = vld [vmem:[%s796 + $0x9c] sm:$0xf]
        %v891 = vsel %vm798, %v703, %v890
        %892 = vst [vmem:[%s796 + $0x9c] sm:$0xf] %v891
        %893 = vst.msk [vmem:[%s796 + $0xa0] sm:$0xf] %vm224, %v712
        %v894 = vld [vmem:[%s796 + $0xa4] sm:$0x1]
        %v895 = vsel %vm235, %v713, %v894
        %896 = vst [vmem:[%s796 + $0xa4] sm:$0x1] %v895
        %v897 = vld [vmem:[%s796 + $0xa8] sm:$0xf]
        %v898 = vsel %vm798, %v720, %v897
        %899 = vst [vmem:[%s796 + $0xa8] sm:$0xf] %v898
        %900 = vst.msk [vmem:[%s796 + $0xac] sm:$0xf] %vm224, %v729
        %v901 = vld [vmem:[%s796 + $0xb0] sm:$0x1]
        %v902 = vsel %vm235, %v730, %v901
        %903 = vst [vmem:[%s796 + $0xb0] sm:$0x1] %v902
        %v904 = vld [vmem:[%s796 + $0xb4] sm:$0xf]
        %v905 = vsel %vm798, %v737, %v904
        %906 = vst [vmem:[%s796 + $0xb4] sm:$0xf] %v905
        %907 = vst.msk [vmem:[%s796 + $0xb8] sm:$0xf] %vm224, %v746
        %v908 = vld [vmem:[%s796 + $0xbc] sm:$0x1]
        %v909 = vsel %vm235, %v747, %v908
        %910 = vst [vmem:[%s796 + $0xbc] sm:$0x1] %v909
        %v911 = vld [vmem:[#allocation2] sm:$0xf]
        %v912 = vld [vmem:[#allocation2 + $0x4] sm:$0xf]
        %v913 = vld [vmem:[#allocation2 + $0xc] sm:$0xf]
        %v914 = vld [vmem:[#allocation2 + $0x10] sm:$0xf]
        %v915 = vld [vmem:[#allocation2 + $0x18] sm:$0xf]
        %v916 = vld [vmem:[#allocation2 + $0x1c] sm:$0xf]
        %v917 = vld [vmem:[#allocation2 + $0x24] sm:$0xf]
        %v918 = vld [vmem:[#allocation2 + $0x28] sm:$0xf]
        %v919 = vld [vmem:[#allocation2 + $0x30] sm:$0xf]
        %v920 = vld [vmem:[#allocation2 + $0x34] sm:$0xf]
        %v921 = vld [vmem:[#allocation2 + $0x3c] sm:$0xf]
        %v922 = vld [vmem:[#allocation2 + $0x40] sm:$0xf]
        %v923 = vld [vmem:[#allocation2 + $0x48] sm:$0xf]
        %v924 = vld [vmem:[#allocation2 + $0x4c] sm:$0xf]
        %v925 = vld [vmem:[#allocation2 + $0x54] sm:$0xf]
        %v926 = vld [vmem:[#allocation2 + $0x58] sm:$0xf]
        %v927 = vld [vmem:[#allocation2 + $0x60] sm:$0xf]
        %v928 = vld [vmem:[#allocation2 + $0x64] sm:$0xf]
        %v929 = vld [vmem:[#allocation2 + $0x6c] sm:$0xf]
        %v930 = vld [vmem:[#allocation2 + $0x70] sm:$0xf]
        %v931 = vld [vmem:[#allocation2 + $0x78] sm:$0xf]
        %v932 = vld [vmem:[#allocation2 + $0x7c] sm:$0xf]
        %v933 = vld [vmem:[#allocation2 + $0x84] sm:$0xf]
        %v934 = vld [vmem:[#allocation2 + $0x88] sm:$0xf]
        %v935 = vld [vmem:[#allocation2 + $0x90] sm:$0xf]
        %v936 = vld [vmem:[#allocation2 + $0x94] sm:$0xf]
        %v937 = vld [vmem:[#allocation2 + $0x9c] sm:$0xf]
        %v938 = vld [vmem:[#allocation2 + $0xa0] sm:$0xf]
        %v939 = vld [vmem:[#allocation2 + $0xa8] sm:$0xf]
        %v940 = vld [vmem:[#allocation2 + $0xac] sm:$0xf]
        %v941 = vld [vmem:[#allocation2 + $0xb4] sm:$0xf]
        %v942 = vld [vmem:[#allocation2 + $0xb8] sm:$0xf]
        %v943 = vld [vmem:[#allocation2 + $0x8] sm:$0x1]
        %v944 = vld [vmem:[#allocation2 + $0x14] sm:$0x1]
        %v945 = vld [vmem:[#allocation2 + $0x20] sm:$0x1]
        %v946 = vld [vmem:[#allocation2 + $0x2c] sm:$0x1]
        %v947 = vld [vmem:[#allocation2 + $0x38] sm:$0x1]
        %v948 = vld [vmem:[#allocation2 + $0x44] sm:$0x1]
        %v949 = vld [vmem:[#allocation2 + $0x50] sm:$0x1]
        %v950 = vld [vmem:[#allocation2 + $0x5c] sm:$0x1]
        %v951 = vld [vmem:[#allocation2 + $0x68] sm:$0x1]
        %v952 = vld [vmem:[#allocation2 + $0x74] sm:$0x1]
        %v953 = vld [vmem:[#allocation2 + $0x80] sm:$0x1]
        %v954 = vld [vmem:[#allocation2 + $0x8c] sm:$0x1]
        %v955 = vld [vmem:[#allocation2 + $0x98] sm:$0x1]
        %v956 = vld [vmem:[#allocation2 + $0xa4] sm:$0x1]
        %v957 = vld [vmem:[#allocation2 + $0xb0] sm:$0x1]
        %v958 = vld [vmem:[#allocation2 + $0xbc] sm:$0x1]
        %v959 = vld [vmem:[#allocation2] sm:$0xe]
        %v960 = vld [vmem:[#allocation2 + $0xc] sm:$0xe]
        %v961 = vld [vmem:[#allocation2 + $0x18] sm:$0xe]
        %v962 = vld [vmem:[#allocation2 + $0x24] sm:$0xe]
        %v963 = vld [vmem:[#allocation2 + $0x30] sm:$0xe]
        %v964 = vld [vmem:[#allocation2 + $0x3c] sm:$0xe]
        %v965 = vld [vmem:[#allocation2 + $0x48] sm:$0xe]
        %v966 = vld [vmem:[#allocation2 + $0x54] sm:$0xe]
        %v967 = vld [vmem:[#allocation2 + $0x60] sm:$0xe]
        %v968 = vld [vmem:[#allocation2 + $0x6c] sm:$0xe]
        %v969 = vld [vmem:[#allocation2 + $0x78] sm:$0xe]
        %v970 = vld [vmem:[#allocation2 + $0x84] sm:$0xe]
        %v971 = vld [vmem:[#allocation2 + $0x90] sm:$0xe]
        %v972 = vld [vmem:[#allocation2 + $0x9c] sm:$0xe]
        %v973 = vld [vmem:[#allocation2 + $0xa8] sm:$0xe]
        %v974 = vld [vmem:[#allocation2 + $0xb4] sm:$0xe]
        %v975 = vld [vmem:[%s796] sm:$0xf]
        %v976 = vld [vmem:[%s796 + $0x4] sm:$0xf]
        %v977 = vld [vmem:[%s796 + $0xc] sm:$0xf]
        %v978 = vld [vmem:[%s796 + $0x10] sm:$0xf]
        %v979 = vld [vmem:[%s796 + $0x18] sm:$0xf]
        %v980 = vld [vmem:[%s796 + $0x1c] sm:$0xf]
        %v981 = vld [vmem:[%s796 + $0x24] sm:$0xf]
        %v982 = vld [vmem:[%s796 + $0x28] sm:$0xf]
        %v983 = vld [vmem:[%s796 + $0x30] sm:$0xf]
        %v984 = vld [vmem:[%s796 + $0x34] sm:$0xf]
        %v985 = vld [vmem:[%s796 + $0x3c] sm:$0xf]
        %v986 = vld [vmem:[%s796 + $0x40] sm:$0xf]
        %v987 = vld [vmem:[%s796 + $0x48] sm:$0xf]
        %v988 = vld [vmem:[%s796 + $0x4c] sm:$0xf]
        %v989 = vld [vmem:[%s796 + $0x54] sm:$0xf]
        %v990 = vld [vmem:[%s796 + $0x58] sm:$0xf]
        %v991 = vld [vmem:[%s796 + $0x60] sm:$0xf]
        %v992 = vld [vmem:[%s796 + $0x64] sm:$0xf]
        %v993 = vld [vmem:[%s796 + $0x6c] sm:$0xf]
        %v994 = vld [vmem:[%s796 + $0x70] sm:$0xf]
        %v995 = vld [vmem:[%s796 + $0x78] sm:$0xf]
        %v996 = vld [vmem:[%s796 + $0x7c] sm:$0xf]
        %v997 = vld [vmem:[%s796 + $0x84] sm:$0xf]
        %v998 = vld [vmem:[%s796 + $0x88] sm:$0xf]
        %v999 = vld [vmem:[%s796 + $0x90] sm:$0xf]
        %v1000 = vld [vmem:[%s796 + $0x94] sm:$0xf]
        %v1001 = vld [vmem:[%s796 + $0x9c] sm:$0xf]
        %v1002 = vld [vmem:[%s796 + $0xa0] sm:$0xf]
        %v1003 = vld [vmem:[%s796 + $0xa8] sm:$0xf]
        %v1004 = vld [vmem:[%s796 + $0xac] sm:$0xf]
        %v1005 = vld [vmem:[%s796 + $0xb4] sm:$0xf]
        %v1006 = vld [vmem:[%s796 + $0xb8] sm:$0xf]
        %v1007 = vld [vmem:[%s796 + $0x8] sm:$0x1]
        %v1008 = vld [vmem:[%s796 + $0x14] sm:$0x1]
        %v1009 = vld [vmem:[%s796 + $0x20] sm:$0x1]
        %v1010 = vld [vmem:[%s796 + $0x2c] sm:$0x1]
        %v1011 = vld [vmem:[%s796 + $0x38] sm:$0x1]
        %v1012 = vld [vmem:[%s796 + $0x44] sm:$0x1]
        %v1013 = vld [vmem:[%s796 + $0x50] sm:$0x1]
        %v1014 = vld [vmem:[%s796 + $0x5c] sm:$0x1]
        %v1015 = vld [vmem:[%s796 + $0x68] sm:$0x1]
        %v1016 = vld [vmem:[%s796 + $0x74] sm:$0x1]
        %v1017 = vld [vmem:[%s796 + $0x80] sm:$0x1]
        %v1018 = vld [vmem:[%s796 + $0x8c] sm:$0x1]
        %v1019 = vld [vmem:[%s796 + $0x98] sm:$0x1]
        %v1020 = vld [vmem:[%s796 + $0xa4] sm:$0x1]
        %v1021 = vld [vmem:[%s796 + $0xb0] sm:$0x1]
        %v1022 = vld [vmem:[%s796 + $0xbc] sm:$0x1]
        %v1023 = vld [vmem:[%s796] sm:$0xe]
        %v1024 = vld [vmem:[%s796 + $0xc] sm:$0xe]
        %v1025 = vld [vmem:[%s796 + $0x18] sm:$0xe]
        %v1026 = vld [vmem:[%s796 + $0x24] sm:$0xe]
        %v1027 = vld [vmem:[%s796 + $0x30] sm:$0xe]
        %v1028 = vld [vmem:[%s796 + $0x3c] sm:$0xe]
        %v1029 = vld [vmem:[%s796 + $0x48] sm:$0xe]
        %v1030 = vld [vmem:[%s796 + $0x54] sm:$0xe]
        %v1031 = vld [vmem:[%s796 + $0x60] sm:$0xe]
        %v1032 = vld [vmem:[%s796 + $0x6c] sm:$0xe]
        %v1033 = vld [vmem:[%s796 + $0x78] sm:$0xe]
        %v1034 = vld [vmem:[%s796 + $0x84] sm:$0xe]
        %v1035 = vld [vmem:[%s796 + $0x90] sm:$0xe]
        %v1036 = vld [vmem:[%s796 + $0x9c] sm:$0xe]
        %v1037 = vld [vmem:[%s796 + $0xa8] sm:$0xe]
        %v1038 = vld [vmem:[%s796 + $0xb4] sm:$0xe]
        %s1039 = scalar_lea.vmem [#allocation2], 24
        %v1040 = vld [vmem:[%s1039] sm:$0xf]
        %v1041 = vld [vmem:[%s1039 + $0x4] sm:$0xf]
        %v1042 = vld [vmem:[%s1039 + $0xc] sm:$0xf]
        %v1043 = vld [vmem:[%s1039 + $0x10] sm:$0xf]
        %v1044 = vld [vmem:[%s1039 + $0x18] sm:$0xf]
        %v1045 = vld [vmem:[%s1039 + $0x1c] sm:$0xf]
        %v1046 = vld [vmem:[%s1039 + $0x24] sm:$0xf]
        %v1047 = vld [vmem:[%s1039 + $0x28] sm:$0xf]
        %v1048 = vld [vmem:[%s1039 + $0x30] sm:$0xf]
        %v1049 = vld [vmem:[%s1039 + $0x34] sm:$0xf]
        %v1050 = vld [vmem:[%s1039 + $0x3c] sm:$0xf]
        %v1051 = vld [vmem:[%s1039 + $0x40] sm:$0xf]
        %v1052 = vld [vmem:[%s1039 + $0x48] sm:$0xf]
        %v1053 = vld [vmem:[%s1039 + $0x4c] sm:$0xf]
        %v1054 = vld [vmem:[%s1039 + $0x54] sm:$0xf]
        %v1055 = vld [vmem:[%s1039 + $0x58] sm:$0xf]
        %v1056 = vld [vmem:[%s1039 + $0x60] sm:$0xf]
        %v1057 = vld [vmem:[%s1039 + $0x64] sm:$0xf]
        %v1058 = vld [vmem:[%s1039 + $0x6c] sm:$0xf]
        %v1059 = vld [vmem:[%s1039 + $0x70] sm:$0xf]
        %v1060 = vld [vmem:[%s1039 + $0x78] sm:$0xf]
        %v1061 = vld [vmem:[%s1039 + $0x7c] sm:$0xf]
        %v1062 = vld [vmem:[%s1039 + $0x84] sm:$0xf]
        %v1063 = vld [vmem:[%s1039 + $0x88] sm:$0xf]
        %v1064 = vld [vmem:[%s1039 + $0x90] sm:$0xf]
        %v1065 = vld [vmem:[%s1039 + $0x94] sm:$0xf]
        %v1066 = vld [vmem:[%s1039 + $0x9c] sm:$0xf]
        %v1067 = vld [vmem:[%s1039 + $0xa0] sm:$0xf]
        %v1068 = vld [vmem:[%s1039 + $0xa8] sm:$0xf]
        %v1069 = vld [vmem:[%s1039 + $0xac] sm:$0xf]
        %v1070 = vld [vmem:[%s1039 + $0xb4] sm:$0xf]
        %v1071 = vld [vmem:[%s1039 + $0xb8] sm:$0xf]
        %v1072 = vld [vmem:[%s1039 + $0x8] sm:$0x1]
        %v1073 = vld [vmem:[%s1039 + $0x14] sm:$0x1]
        %v1074 = vld [vmem:[%s1039 + $0x20] sm:$0x1]
        %v1075 = vld [vmem:[%s1039 + $0x2c] sm:$0x1]
        %v1076 = vld [vmem:[%s1039 + $0x38] sm:$0x1]
        %v1077 = vld [vmem:[%s1039 + $0x44] sm:$0x1]
        %v1078 = vld [vmem:[%s1039 + $0x50] sm:$0x1]
        %v1079 = vld [vmem:[%s1039 + $0x5c] sm:$0x1]
        %v1080 = vld [vmem:[%s1039 + $0x68] sm:$0x1]
        %v1081 = vld [vmem:[%s1039 + $0x74] sm:$0x1]
        %v1082 = vld [vmem:[%s1039 + $0x80] sm:$0x1]
        %v1083 = vld [vmem:[%s1039 + $0x8c] sm:$0x1]
        %v1084 = vld [vmem:[%s1039 + $0x98] sm:$0x1]
        %v1085 = vld [vmem:[%s1039 + $0xa4] sm:$0x1]
        %v1086 = vld [vmem:[%s1039 + $0xb0] sm:$0x1]
        %v1087 = vld [vmem:[%s1039 + $0xbc] sm:$0x1]
        %v1088 = vld [vmem:[%s1039] sm:$0xe]
        %v1089 = vld [vmem:[%s1039 + $0xc] sm:$0xe]
        %v1090 = vld [vmem:[%s1039 + $0x18] sm:$0xe]
        %v1091 = vld [vmem:[%s1039 + $0x24] sm:$0xe]
        %v1092 = vld [vmem:[%s1039 + $0x30] sm:$0xe]
        %v1093 = vld [vmem:[%s1039 + $0x3c] sm:$0xe]
        %v1094 = vld [vmem:[%s1039 + $0x48] sm:$0xe]
        %v1095 = vld [vmem:[%s1039 + $0x54] sm:$0xe]
        %v1096 = vld [vmem:[%s1039 + $0x60] sm:$0xe]
        %v1097 = vld [vmem:[%s1039 + $0x6c] sm:$0xe]
        %v1098 = vld [vmem:[%s1039 + $0x78] sm:$0xe]
        %v1099 = vld [vmem:[%s1039 + $0x84] sm:$0xe]
        %v1100 = vld [vmem:[%s1039 + $0x90] sm:$0xe]
        %v1101 = vld [vmem:[%s1039 + $0x9c] sm:$0xe]
        %v1102 = vld [vmem:[%s1039 + $0xa8] sm:$0xe]
        %v1103 = vld [vmem:[%s1039 + $0xb4] sm:$0xe]
        %v1136 = vunpack.c.l.b16 %v911
        %v1137 = vunpack.c.l.b16 %v912
        %v1138 = vunpack.c.l.b16 %v913
        %v1139 = vunpack.c.l.b16 %v914
        %v1140 = vunpack.c.l.b16 %v915
        %v1141 = vunpack.c.l.b16 %v916
        %v1142 = vunpack.c.l.b16 %v917
        %v1143 = vunpack.c.l.b16 %v918
        %v1144 = vunpack.c.l.b16 %v919
        %v1145 = vunpack.c.l.b16 %v920
        %v1146 = vunpack.c.l.b16 %v921
        %v1147 = vunpack.c.l.b16 %v922
        %v1148 = vunpack.c.l.b16 %v923
        %v1149 = vunpack.c.l.b16 %v924
        %v1150 = vunpack.c.l.b16 %v925
        %v1151 = vunpack.c.l.b16 %v926
        %v1152 = vunpack.c.l.b16 %v927
        %v1153 = vunpack.c.l.b16 %v928
        %v1154 = vunpack.c.l.b16 %v929
        %v1155 = vunpack.c.l.b16 %v930
        %v1156 = vunpack.c.l.b16 %v931
        %v1157 = vunpack.c.l.b16 %v932
        %v1158 = vunpack.c.l.b16 %v933
        %v1159 = vunpack.c.l.b16 %v934
        %v1160 = vunpack.c.l.b16 %v935
        %v1161 = vunpack.c.l.b16 %v936
        %v1162 = vunpack.c.l.b16 %v937
        %v1163 = vunpack.c.l.b16 %v938
        %v1164 = vunpack.c.l.b16 %v939
        %v1165 = vunpack.c.l.b16 %v940
        %v1166 = vunpack.c.l.b16 %v941
        %v1167 = vunpack.c.l.b16 %v942
        %v1168 = vpack.c.b16 %v1137, %v1136
        %v1169 = vpack.c.b16 %v1139, %v1138
        %v1170 = vpack.c.b16 %v1141, %v1140
        %v1171 = vpack.c.b16 %v1143, %v1142
        %v1172 = vpack.c.b16 %v1145, %v1144
        %v1173 = vpack.c.b16 %v1147, %v1146
        %v1174 = vpack.c.b16 %v1149, %v1148
        %v1175 = vpack.c.b16 %v1151, %v1150
        %v1176 = vpack.c.b16 %v1153, %v1152
        %v1177 = vpack.c.b16 %v1155, %v1154
        %v1178 = vpack.c.b16 %v1157, %v1156
        %v1179 = vpack.c.b16 %v1159, %v1158
        %v1180 = vpack.c.b16 %v1161, %v1160
        %v1181 = vpack.c.b16 %v1163, %v1162
        %v1182 = vpack.c.b16 %v1165, %v1164
        %v1183 = vpack.c.b16 %v1167, %v1166
        %v1200 = vunpack.c.l.b16 %v943
        %v1201 = vunpack.c.l.b16 %v944
        %v1202 = vunpack.c.l.b16 %v945
        %v1203 = vunpack.c.l.b16 %v946
        %v1204 = vunpack.c.l.b16 %v947
        %v1205 = vunpack.c.l.b16 %v948
        %v1206 = vunpack.c.l.b16 %v949
        %v1207 = vunpack.c.l.b16 %v950
        %v1208 = vunpack.c.l.b16 %v951
        %v1209 = vunpack.c.l.b16 %v952
        %v1210 = vunpack.c.l.b16 %v953
        %v1211 = vunpack.c.l.b16 %v954
        %v1212 = vunpack.c.l.b16 %v955
        %v1213 = vunpack.c.l.b16 %v956
        %v1214 = vunpack.c.l.b16 %v957
        %v1215 = vunpack.c.l.b16 %v958
        %v1216 = vpack.c.b16 %v1200, %v1200
        %v1217 = vpack.c.b16 %v1201, %v1201
        %v1218 = vpack.c.b16 %v1202, %v1202
        %v1219 = vpack.c.b16 %v1203, %v1203
        %v1220 = vpack.c.b16 %v1204, %v1204
        %v1221 = vpack.c.b16 %v1205, %v1205
        %v1222 = vpack.c.b16 %v1206, %v1206
        %v1223 = vpack.c.b16 %v1207, %v1207
        %v1224 = vpack.c.b16 %v1208, %v1208
        %v1225 = vpack.c.b16 %v1209, %v1209
        %v1226 = vpack.c.b16 %v1210, %v1210
        %v1227 = vpack.c.b16 %v1211, %v1211
        %v1228 = vpack.c.b16 %v1212, %v1212
        %v1229 = vpack.c.b16 %v1213, %v1213
        %v1230 = vpack.c.b16 %v1214, %v1214
        %v1231 = vpack.c.b16 %v1215, %v1215
        %vm1232 = vsmask.f32 7424
        %v1234 = vshrl.u32 %v1168, 16
        %v1236 = vshll.u32 %v1168, 16
        %v1238 = vrot.slane %v1236, 1
        %v1239 = vor.u32 %v1234, %v1238
        %v1241 = vshll.u32 %v1216, 16
        %v1243 = vrot.slane %v1241, 1
        %v1244 = vsel %vm1232, %v1239, %v1243
        %v1246 = vshrl.u32 %v1169, 16
        %v1248 = vshll.u32 %v1169, 16
        %v1250 = vrot.slane %v1248, 1
        %v1251 = vor.u32 %v1246, %v1250
        %v1253 = vshll.u32 %v1217, 16
        %v1255 = vrot.slane %v1253, 1
        %v1256 = vsel %vm1232, %v1251, %v1255
        %v1258 = vshrl.u32 %v1170, 16
        %v1260 = vshll.u32 %v1170, 16
        %v1262 = vrot.slane %v1260, 1
        %v1263 = vor.u32 %v1258, %v1262
        %v1265 = vshll.u32 %v1218, 16
        %v1267 = vrot.slane %v1265, 1
        %v1268 = vsel %vm1232, %v1263, %v1267
        %v1270 = vshrl.u32 %v1171, 16
        %v1272 = vshll.u32 %v1171, 16
        %v1274 = vrot.slane %v1272, 1
        %v1275 = vor.u32 %v1270, %v1274
        %v1277 = vshll.u32 %v1219, 16
        %v1279 = vrot.slane %v1277, 1
        %v1280 = vsel %vm1232, %v1275, %v1279
        %v1282 = vshrl.u32 %v1172, 16
        %v1284 = vshll.u32 %v1172, 16
        %v1286 = vrot.slane %v1284, 1
        %v1287 = vor.u32 %v1282, %v1286
        %v1289 = vshll.u32 %v1220, 16
        %v1291 = vrot.slane %v1289, 1
        %v1292 = vsel %vm1232, %v1287, %v1291
        %v1294 = vshrl.u32 %v1173, 16
        %v1296 = vshll.u32 %v1173, 16
        %v1298 = vrot.slane %v1296, 1
        %v1299 = vor.u32 %v1294, %v1298
        %v1301 = vshll.u32 %v1221, 16
        %v1303 = vrot.slane %v1301, 1
        %v1304 = vsel %vm1232, %v1299, %v1303
        %v1306 = vshrl.u32 %v1174, 16
        %v1308 = vshll.u32 %v1174, 16
        %v1310 = vrot.slane %v1308, 1
        %v1311 = vor.u32 %v1306, %v1310
        %v1313 = vshll.u32 %v1222, 16
        %v1315 = vrot.slane %v1313, 1
        %v1316 = vsel %vm1232, %v1311, %v1315
        %v1318 = vshrl.u32 %v1175, 16
        %v1320 = vshll.u32 %v1175, 16
        %v1322 = vrot.slane %v1320, 1
        %v1323 = vor.u32 %v1318, %v1322
        %v1325 = vshll.u32 %v1223, 16
        %v1327 = vrot.slane %v1325, 1
        %v1328 = vsel %vm1232, %v1323, %v1327
        %v1330 = vshrl.u32 %v1176, 16
        %v1332 = vshll.u32 %v1176, 16
        %v1334 = vrot.slane %v1332, 1
        %v1335 = vor.u32 %v1330, %v1334
        %v1337 = vshll.u32 %v1224, 16
        %v1339 = vrot.slane %v1337, 1
        %v1340 = vsel %vm1232, %v1335, %v1339
        %v1342 = vshrl.u32 %v1177, 16
        %v1344 = vshll.u32 %v1177, 16
        %v1346 = vrot.slane %v1344, 1
        %v1347 = vor.u32 %v1342, %v1346
        %v1349 = vshll.u32 %v1225, 16
        %v1351 = vrot.slane %v1349, 1
        %v1352 = vsel %vm1232, %v1347, %v1351
        %v1354 = vshrl.u32 %v1178, 16
        %v1356 = vshll.u32 %v1178, 16
        %v1358 = vrot.slane %v1356, 1
        %v1359 = vor.u32 %v1354, %v1358
        %v1361 = vshll.u32 %v1226, 16
        %v1363 = vrot.slane %v1361, 1
        %v1364 = vsel %vm1232, %v1359, %v1363
        %v1366 = vshrl.u32 %v1179, 16
        %v1368 = vshll.u32 %v1179, 16
        %v1370 = vrot.slane %v1368, 1
        %v1371 = vor.u32 %v1366, %v1370
        %v1373 = vshll.u32 %v1227, 16
        %v1375 = vrot.slane %v1373, 1
        %v1376 = vsel %vm1232, %v1371, %v1375
        %v1378 = vshrl.u32 %v1180, 16
        %v1380 = vshll.u32 %v1180, 16
        %v1382 = vrot.slane %v1380, 1
        %v1383 = vor.u32 %v1378, %v1382
        %v1385 = vshll.u32 %v1228, 16
        %v1387 = vrot.slane %v1385, 1
        %v1388 = vsel %vm1232, %v1383, %v1387
        %v1390 = vshrl.u32 %v1181, 16
        %v1392 = vshll.u32 %v1181, 16
        %v1394 = vrot.slane %v1392, 1
        %v1395 = vor.u32 %v1390, %v1394
        %v1397 = vshll.u32 %v1229, 16
        %v1399 = vrot.slane %v1397, 1
        %v1400 = vsel %vm1232, %v1395, %v1399
        %v1402 = vshrl.u32 %v1182, 16
        %v1404 = vshll.u32 %v1182, 16
        %v1406 = vrot.slane %v1404, 1
        %v1407 = vor.u32 %v1402, %v1406
        %v1409 = vshll.u32 %v1230, 16
        %v1411 = vrot.slane %v1409, 1
        %v1412 = vsel %vm1232, %v1407, %v1411
        %v1414 = vshrl.u32 %v1183, 16
        %v1416 = vshll.u32 %v1183, 16
        %v1418 = vrot.slane %v1416, 1
        %v1419 = vor.u32 %v1414, %v1418
        %v1421 = vshll.u32 %v1231, 16
        %v1423 = vrot.slane %v1421, 1
        %v1424 = vsel %vm1232, %v1419, %v1423
        %1425 = vrot.lane.b32.xlu0 %v1244, 64
        %v1426 = vpop.permute.xlu0 %1425
        %1427 = vrot.lane.b32.xlu0 %v1256, 64
        %v1428 = vpop.permute.xlu0 %1427
        %1429 = vrot.lane.b32.xlu0 %v1268, 64
        %v1430 = vpop.permute.xlu0 %1429
        %1431 = vrot.lane.b32.xlu0 %v1280, 64
        %v1432 = vpop.permute.xlu0 %1431
        %1433 = vrot.lane.b32.xlu0 %v1292, 64
        %v1434 = vpop.permute.xlu0 %1433
        %1435 = vrot.lane.b32.xlu0 %v1304, 64
        %v1436 = vpop.permute.xlu0 %1435
        %1437 = vrot.lane.b32.xlu0 %v1316, 64
        %v1438 = vpop.permute.xlu0 %1437
        %1439 = vrot.lane.b32.xlu0 %v1328, 64
        %v1440 = vpop.permute.xlu0 %1439
        %1441 = vrot.lane.b32.xlu0 %v1340, 64
        %v1442 = vpop.permute.xlu0 %1441
        %1443 = vrot.lane.b32.xlu0 %v1352, 64
        %v1444 = vpop.permute.xlu0 %1443
        %1445 = vrot.lane.b32.xlu0 %v1364, 64
        %v1446 = vpop.permute.xlu0 %1445
        %1447 = vrot.lane.b32.xlu0 %v1376, 64
        %v1448 = vpop.permute.xlu0 %1447
        %1449 = vrot.lane.b32.xlu0 %v1388, 64
        %v1450 = vpop.permute.xlu0 %1449
        %1451 = vrot.lane.b32.xlu0 %v1400, 64
        %v1452 = vpop.permute.xlu0 %1451
        %1453 = vrot.lane.b32.xlu0 %v1412, 64
        %v1454 = vpop.permute.xlu0 %1453
        %1455 = vrot.lane.b32.xlu0 %v1424, 64
        %v1456 = vpop.permute.xlu0 %1455
        %v1473 = vunpack.c.l.b16 %v959
        %v1474 = vunpack.c.l.b16 %v960
        %v1475 = vunpack.c.l.b16 %v961
        %v1476 = vunpack.c.l.b16 %v962
        %v1477 = vunpack.c.l.b16 %v963
        %v1478 = vunpack.c.l.b16 %v964
        %v1479 = vunpack.c.l.b16 %v965
        %v1480 = vunpack.c.l.b16 %v966
        %v1481 = vunpack.c.l.b16 %v967
        %v1482 = vunpack.c.l.b16 %v968
        %v1483 = vunpack.c.l.b16 %v969
        %v1484 = vunpack.c.l.b16 %v970
        %v1485 = vunpack.c.l.b16 %v971
        %v1486 = vunpack.c.l.b16 %v972
        %v1487 = vunpack.c.l.b16 %v973
        %v1488 = vunpack.c.l.b16 %v974
        %v1489 = vpack.c.b16 %v1137, %v1473
        %v1490 = vpack.c.b16 %v1139, %v1474
        %v1491 = vpack.c.b16 %v1141, %v1475
        %v1492 = vpack.c.b16 %v1143, %v1476
        %v1493 = vpack.c.b16 %v1145, %v1477
        %v1494 = vpack.c.b16 %v1147, %v1478
        %v1495 = vpack.c.b16 %v1149, %v1479
        %v1496 = vpack.c.b16 %v1151, %v1480
        %v1497 = vpack.c.b16 %v1153, %v1481
        %v1498 = vpack.c.b16 %v1155, %v1482
        %v1499 = vpack.c.b16 %v1157, %v1483
        %v1500 = vpack.c.b16 %v1159, %v1484
        %v1501 = vpack.c.b16 %v1161, %v1485
        %v1502 = vpack.c.b16 %v1163, %v1486
        %v1503 = vpack.c.b16 %v1165, %v1487
        %v1504 = vpack.c.b16 %v1167, %v1488
        %vm1505 = vcmask 1046528
        %v1506 = vrot.slane %v1489, 1
        %v1507 = vrot.slane %v1216, 1
        %v1508 = vsel %vm1505, %v1506, %v1507
        %v1509 = vrot.slane %v1490, 1
        %v1510 = vrot.slane %v1217, 1
        %v1511 = vsel %vm1505, %v1509, %v1510
        %v1512 = vrot.slane %v1491, 1
        %v1513 = vrot.slane %v1218, 1
        %v1514 = vsel %vm1505, %v1512, %v1513
        %v1515 = vrot.slane %v1492, 1
        %v1516 = vrot.slane %v1219, 1
        %v1517 = vsel %vm1505, %v1515, %v1516
        %v1518 = vrot.slane %v1493, 1
        %v1519 = vrot.slane %v1220, 1
        %v1520 = vsel %vm1505, %v1518, %v1519
        %v1521 = vrot.slane %v1494, 1
        %v1522 = vrot.slane %v1221, 1
        %v1523 = vsel %vm1505, %v1521, %v1522
        %v1524 = vrot.slane %v1495, 1
        %v1525 = vrot.slane %v1222, 1
        %v1526 = vsel %vm1505, %v1524, %v1525
        %v1527 = vrot.slane %v1496, 1
        %v1528 = vrot.slane %v1223, 1
        %v1529 = vsel %vm1505, %v1527, %v1528
        %v1530 = vrot.slane %v1497, 1
        %v1531 = vrot.slane %v1224, 1
        %v1532 = vsel %vm1505, %v1530, %v1531
        %v1533 = vrot.slane %v1498, 1
        %v1534 = vrot.slane %v1225, 1
        %v1535 = vsel %vm1505, %v1533, %v1534
        %v1536 = vrot.slane %v1499, 1
        %v1537 = vrot.slane %v1226, 1
        %v1538 = vsel %vm1505, %v1536, %v1537
        %v1539 = vrot.slane %v1500, 1
        %v1540 = vrot.slane %v1227, 1
        %v1541 = vsel %vm1505, %v1539, %v1540
        %v1542 = vrot.slane %v1501, 1
        %v1543 = vrot.slane %v1228, 1
        %v1544 = vsel %vm1505, %v1542, %v1543
        %v1545 = vrot.slane %v1502, 1
        %v1546 = vrot.slane %v1229, 1
        %v1547 = vsel %vm1505, %v1545, %v1546
        %v1548 = vrot.slane %v1503, 1
        %v1549 = vrot.slane %v1230, 1
        %v1550 = vsel %vm1505, %v1548, %v1549
        %v1551 = vrot.slane %v1504, 1
        %v1552 = vrot.slane %v1231, 1
        %v1553 = vsel %vm1505, %v1551, %v1552
        %v1586 = vunpack.c.l.b16 %v975
        %v1587 = vunpack.c.l.b16 %v976
        %v1588 = vunpack.c.l.b16 %v977
        %v1589 = vunpack.c.l.b16 %v978
        %v1590 = vunpack.c.l.b16 %v979
        %v1591 = vunpack.c.l.b16 %v980
        %v1592 = vunpack.c.l.b16 %v981
        %v1593 = vunpack.c.l.b16 %v982
        %v1594 = vunpack.c.l.b16 %v983
        %v1595 = vunpack.c.l.b16 %v984
        %v1596 = vunpack.c.l.b16 %v985
        %v1597 = vunpack.c.l.b16 %v986
        %v1598 = vunpack.c.l.b16 %v987
        %v1599 = vunpack.c.l.b16 %v988
        %v1600 = vunpack.c.l.b16 %v989
        %v1601 = vunpack.c.l.b16 %v990
        %v1602 = vunpack.c.l.b16 %v991
        %v1603 = vunpack.c.l.b16 %v992
        %v1604 = vunpack.c.l.b16 %v993
        %v1605 = vunpack.c.l.b16 %v994
        %v1606 = vunpack.c.l.b16 %v995
        %v1607 = vunpack.c.l.b16 %v996
        %v1608 = vunpack.c.l.b16 %v997
        %v1609 = vunpack.c.l.b16 %v998
        %v1610 = vunpack.c.l.b16 %v999
        %v1611 = vunpack.c.l.b16 %v1000
        %v1612 = vunpack.c.l.b16 %v1001
        %v1613 = vunpack.c.l.b16 %v1002
        %v1614 = vunpack.c.l.b16 %v1003
        %v1615 = vunpack.c.l.b16 %v1004
        %v1616 = vunpack.c.l.b16 %v1005
        %v1617 = vunpack.c.l.b16 %v1006
        %v1618 = vpack.c.b16 %v1587, %v1586
        %v1619 = vpack.c.b16 %v1589, %v1588
        %v1620 = vpack.c.b16 %v1591, %v1590
        %v1621 = vpack.c.b16 %v1593, %v1592
        %v1622 = vpack.c.b16 %v1595, %v1594
        %v1623 = vpack.c.b16 %v1597, %v1596
        %v1624 = vpack.c.b16 %v1599, %v1598
        %v1625 = vpack.c.b16 %v1601, %v1600
        %v1626 = vpack.c.b16 %v1603, %v1602
        %v1627 = vpack.c.b16 %v1605, %v1604
        %v1628 = vpack.c.b16 %v1607, %v1606
        %v1629 = vpack.c.b16 %v1609, %v1608
        %v1630 = vpack.c.b16 %v1611, %v1610
        %v1631 = vpack.c.b16 %v1613, %v1612
        %v1632 = vpack.c.b16 %v1615, %v1614
        %v1633 = vpack.c.b16 %v1617, %v1616
        %1634 = vrot.lane.b32.xlu0 %v1618, 64
        %v1635 = vpop.permute.xlu0 %1634
        %1636 = vrot.lane.b32.xlu0 %v1619, 64
        %v1637 = vpop.permute.xlu0 %1636
        %1638 = vrot.lane.b32.xlu0 %v1620, 64
        %v1639 = vpop.permute.xlu0 %1638
        %1640 = vrot.lane.b32.xlu0 %v1621, 64
        %v1641 = vpop.permute.xlu0 %1640
        %1642 = vrot.lane.b32.xlu0 %v1622, 64
        %v1643 = vpop.permute.xlu0 %1642
        %1644 = vrot.lane.b32.xlu0 %v1623, 64
        %v1645 = vpop.permute.xlu0 %1644
        %1646 = vrot.lane.b32.xlu0 %v1624, 64
        %v1647 = vpop.permute.xlu0 %1646
        %1648 = vrot.lane.b32.xlu0 %v1625, 64
        %v1649 = vpop.permute.xlu0 %1648
        %1650 = vrot.lane.b32.xlu0 %v1626, 64
        %v1651 = vpop.permute.xlu0 %1650
        %1652 = vrot.lane.b32.xlu0 %v1627, 64
        %v1653 = vpop.permute.xlu0 %1652
        %1654 = vrot.lane.b32.xlu0 %v1628, 64
        %v1655 = vpop.permute.xlu0 %1654
        %1656 = vrot.lane.b32.xlu0 %v1629, 64
        %v1657 = vpop.permute.xlu0 %1656
        %1658 = vrot.lane.b32.xlu0 %v1630, 64
        %v1659 = vpop.permute.xlu0 %1658
        %1660 = vrot.lane.b32.xlu0 %v1631, 64
        %v1661 = vpop.permute.xlu0 %1660
        %1662 = vrot.lane.b32.xlu0 %v1632, 64
        %v1663 = vpop.permute.xlu0 %1662
        %1664 = vrot.lane.b32.xlu0 %v1633, 64
        %v1665 = vpop.permute.xlu0 %1664
        %v1682 = vunpack.c.l.b16 %v1007
        %v1683 = vunpack.c.l.b16 %v1008
        %v1684 = vunpack.c.l.b16 %v1009
        %v1685 = vunpack.c.l.b16 %v1010
        %v1686 = vunpack.c.l.b16 %v1011
        %v1687 = vunpack.c.l.b16 %v1012
        %v1688 = vunpack.c.l.b16 %v1013
        %v1689 = vunpack.c.l.b16 %v1014
        %v1690 = vunpack.c.l.b16 %v1015
        %v1691 = vunpack.c.l.b16 %v1016
        %v1692 = vunpack.c.l.b16 %v1017
        %v1693 = vunpack.c.l.b16 %v1018
        %v1694 = vunpack.c.l.b16 %v1019
        %v1695 = vunpack.c.l.b16 %v1020
        %v1696 = vunpack.c.l.b16 %v1021
        %v1697 = vunpack.c.l.b16 %v1022
        %v1698 = vpack.c.b16 %v1682, %v1682
        %v1699 = vpack.c.b16 %v1683, %v1683
        %v1700 = vpack.c.b16 %v1684, %v1684
        %v1701 = vpack.c.b16 %v1685, %v1685
        %v1702 = vpack.c.b16 %v1686, %v1686
        %v1703 = vpack.c.b16 %v1687, %v1687
        %v1704 = vpack.c.b16 %v1688, %v1688
        %v1705 = vpack.c.b16 %v1689, %v1689
        %v1706 = vpack.c.b16 %v1690, %v1690
        %v1707 = vpack.c.b16 %v1691, %v1691
        %v1708 = vpack.c.b16 %v1692, %v1692
        %v1709 = vpack.c.b16 %v1693, %v1693
        %v1710 = vpack.c.b16 %v1694, %v1694
        %v1711 = vpack.c.b16 %v1695, %v1695
        %v1712 = vpack.c.b16 %v1696, %v1696
        %v1713 = vpack.c.b16 %v1697, %v1697
        %v1715 = vshrl.u32 %v1618, 16
        %v1717 = vshll.u32 %v1618, 16
        %v1719 = vrot.slane %v1717, 1
        %v1720 = vor.u32 %v1715, %v1719
        %v1722 = vshll.u32 %v1698, 16
        %v1724 = vrot.slane %v1722, 1
        %v1725 = vsel %vm1232, %v1720, %v1724
        %v1727 = vshrl.u32 %v1619, 16
        %v1729 = vshll.u32 %v1619, 16
        %v1731 = vrot.slane %v1729, 1
        %v1732 = vor.u32 %v1727, %v1731
        %v1734 = vshll.u32 %v1699, 16
        %v1736 = vrot.slane %v1734, 1
        %v1737 = vsel %vm1232, %v1732, %v1736
        %v1739 = vshrl.u32 %v1620, 16
        %v1741 = vshll.u32 %v1620, 16
        %v1743 = vrot.slane %v1741, 1
        %v1744 = vor.u32 %v1739, %v1743
        %v1746 = vshll.u32 %v1700, 16
        %v1748 = vrot.slane %v1746, 1
        %v1749 = vsel %vm1232, %v1744, %v1748
        %v1751 = vshrl.u32 %v1621, 16
        %v1753 = vshll.u32 %v1621, 16
        %v1755 = vrot.slane %v1753, 1
        %v1756 = vor.u32 %v1751, %v1755
        %v1758 = vshll.u32 %v1701, 16
        %v1760 = vrot.slane %v1758, 1
        %v1761 = vsel %vm1232, %v1756, %v1760
        %v1763 = vshrl.u32 %v1622, 16
        %v1765 = vshll.u32 %v1622, 16
        %v1767 = vrot.slane %v1765, 1
        %v1768 = vor.u32 %v1763, %v1767
        %v1770 = vshll.u32 %v1702, 16
        %v1772 = vrot.slane %v1770, 1
        %v1773 = vsel %vm1232, %v1768, %v1772
        %v1775 = vshrl.u32 %v1623, 16
        %v1777 = vshll.u32 %v1623, 16
        %v1779 = vrot.slane %v1777, 1
        %v1780 = vor.u32 %v1775, %v1779
        %v1782 = vshll.u32 %v1703, 16
        %v1784 = vrot.slane %v1782, 1
        %v1785 = vsel %vm1232, %v1780, %v1784
        %v1787 = vshrl.u32 %v1624, 16
        %v1789 = vshll.u32 %v1624, 16
        %v1791 = vrot.slane %v1789, 1
        %v1792 = vor.u32 %v1787, %v1791
        %v1794 = vshll.u32 %v1704, 16
        %v1796 = vrot.slane %v1794, 1
        %v1797 = vsel %vm1232, %v1792, %v1796
        %v1799 = vshrl.u32 %v1625, 16
        %v1801 = vshll.u32 %v1625, 16
        %v1803 = vrot.slane %v1801, 1
        %v1804 = vor.u32 %v1799, %v1803
        %v1806 = vshll.u32 %v1705, 16
        %v1808 = vrot.slane %v1806, 1
        %v1809 = vsel %vm1232, %v1804, %v1808
        %v1811 = vshrl.u32 %v1626, 16
        %v1813 = vshll.u32 %v1626, 16
        %v1815 = vrot.slane %v1813, 1
        %v1816 = vor.u32 %v1811, %v1815
        %v1818 = vshll.u32 %v1706, 16
        %v1820 = vrot.slane %v1818, 1
        %v1821 = vsel %vm1232, %v1816, %v1820
        %v1823 = vshrl.u32 %v1627, 16
        %v1825 = vshll.u32 %v1627, 16
        %v1827 = vrot.slane %v1825, 1
        %v1828 = vor.u32 %v1823, %v1827
        %v1830 = vshll.u32 %v1707, 16
        %v1832 = vrot.slane %v1830, 1
        %v1833 = vsel %vm1232, %v1828, %v1832
        %v1835 = vshrl.u32 %v1628, 16
        %v1837 = vshll.u32 %v1628, 16
        %v1839 = vrot.slane %v1837, 1
        %v1840 = vor.u32 %v1835, %v1839
        %v1842 = vshll.u32 %v1708, 16
        %v1844 = vrot.slane %v1842, 1
        %v1845 = vsel %vm1232, %v1840, %v1844
        %v1847 = vshrl.u32 %v1629, 16
        %v1849 = vshll.u32 %v1629, 16
        %v1851 = vrot.slane %v1849, 1
        %v1852 = vor.u32 %v1847, %v1851
        %v1854 = vshll.u32 %v1709, 16
        %v1856 = vrot.slane %v1854, 1
        %v1857 = vsel %vm1232, %v1852, %v1856
        %v1859 = vshrl.u32 %v1630, 16
        %v1861 = vshll.u32 %v1630, 16
        %v1863 = vrot.slane %v1861, 1
        %v1864 = vor.u32 %v1859, %v1863
        %v1866 = vshll.u32 %v1710, 16
        %v1868 = vrot.slane %v1866, 1
        %v1869 = vsel %vm1232, %v1864, %v1868
        %v1871 = vshrl.u32 %v1631, 16
        %v1873 = vshll.u32 %v1631, 16
        %v1875 = vrot.slane %v1873, 1
        %v1876 = vor.u32 %v1871, %v1875
        %v1878 = vshll.u32 %v1711, 16
        %v1880 = vrot.slane %v1878, 1
        %v1881 = vsel %vm1232, %v1876, %v1880
        %v1883 = vshrl.u32 %v1632, 16
        %v1885 = vshll.u32 %v1632, 16
        %v1887 = vrot.slane %v1885, 1
        %v1888 = vor.u32 %v1883, %v1887
        %v1890 = vshll.u32 %v1712, 16
        %v1892 = vrot.slane %v1890, 1
        %v1893 = vsel %vm1232, %v1888, %v1892
        %v1895 = vshrl.u32 %v1633, 16
        %v1897 = vshll.u32 %v1633, 16
        %v1899 = vrot.slane %v1897, 1
        %v1900 = vor.u32 %v1895, %v1899
        %v1902 = vshll.u32 %v1713, 16
        %v1904 = vrot.slane %v1902, 1
        %v1905 = vsel %vm1232, %v1900, %v1904
        %v1922 = vunpack.c.l.b16 %v1023
        %v1923 = vunpack.c.l.b16 %v1024
        %v1924 = vunpack.c.l.b16 %v1025
        %v1925 = vunpack.c.l.b16 %v1026
        %v1926 = vunpack.c.l.b16 %v1027
        %v1927 = vunpack.c.l.b16 %v1028
        %v1928 = vunpack.c.l.b16 %v1029
        %v1929 = vunpack.c.l.b16 %v1030
        %v1930 = vunpack.c.l.b16 %v1031
        %v1931 = vunpack.c.l.b16 %v1032
        %v1932 = vunpack.c.l.b16 %v1033
        %v1933 = vunpack.c.l.b16 %v1034
        %v1934 = vunpack.c.l.b16 %v1035
        %v1935 = vunpack.c.l.b16 %v1036
        %v1936 = vunpack.c.l.b16 %v1037
        %v1937 = vunpack.c.l.b16 %v1038
        %v1938 = vpack.c.b16 %v1587, %v1922
        %v1939 = vpack.c.b16 %v1589, %v1923
        %v1940 = vpack.c.b16 %v1591, %v1924
        %v1941 = vpack.c.b16 %v1593, %v1925
        %v1942 = vpack.c.b16 %v1595, %v1926
        %v1943 = vpack.c.b16 %v1597, %v1927
        %v1944 = vpack.c.b16 %v1599, %v1928
        %v1945 = vpack.c.b16 %v1601, %v1929
        %v1946 = vpack.c.b16 %v1603, %v1930
        %v1947 = vpack.c.b16 %v1605, %v1931
        %v1948 = vpack.c.b16 %v1607, %v1932
        %v1949 = vpack.c.b16 %v1609, %v1933
        %v1950 = vpack.c.b16 %v1611, %v1934
        %v1951 = vpack.c.b16 %v1613, %v1935
        %v1952 = vpack.c.b16 %v1615, %v1936
        %v1953 = vpack.c.b16 %v1617, %v1937
        %v1954 = vrot.slane %v1938, 1
        %v1955 = vrot.slane %v1698, 1
        %v1956 = vsel %vm1505, %v1954, %v1955
        %v1957 = vrot.slane %v1939, 1
        %v1958 = vrot.slane %v1699, 1
        %v1959 = vsel %vm1505, %v1957, %v1958
        %v1960 = vrot.slane %v1940, 1
        %v1961 = vrot.slane %v1700, 1
        %v1962 = vsel %vm1505, %v1960, %v1961
        %v1963 = vrot.slane %v1941, 1
        %v1964 = vrot.slane %v1701, 1
        %v1965 = vsel %vm1505, %v1963, %v1964
        %v1966 = vrot.slane %v1942, 1
        %v1967 = vrot.slane %v1702, 1
        %v1968 = vsel %vm1505, %v1966, %v1967
        %v1969 = vrot.slane %v1943, 1
        %v1970 = vrot.slane %v1703, 1
        %v1971 = vsel %vm1505, %v1969, %v1970
        %v1972 = vrot.slane %v1944, 1
        %v1973 = vrot.slane %v1704, 1
        %v1974 = vsel %vm1505, %v1972, %v1973
        %v1975 = vrot.slane %v1945, 1
        %v1976 = vrot.slane %v1705, 1
        %v1977 = vsel %vm1505, %v1975, %v1976
        %v1978 = vrot.slane %v1946, 1
        %v1979 = vrot.slane %v1706, 1
        %v1980 = vsel %vm1505, %v1978, %v1979
        %v1981 = vrot.slane %v1947, 1
        %v1982 = vrot.slane %v1707, 1
        %v1983 = vsel %vm1505, %v1981, %v1982
        %v1984 = vrot.slane %v1948, 1
        %v1985 = vrot.slane %v1708, 1
        %v1986 = vsel %vm1505, %v1984, %v1985
        %v1987 = vrot.slane %v1949, 1
        %v1988 = vrot.slane %v1709, 1
        %v1989 = vsel %vm1505, %v1987, %v1988
        %v1990 = vrot.slane %v1950, 1
        %v1991 = vrot.slane %v1710, 1
        %v1992 = vsel %vm1505, %v1990, %v1991
        %v1993 = vrot.slane %v1951, 1
        %v1994 = vrot.slane %v1711, 1
        %v1995 = vsel %vm1505, %v1993, %v1994
        %v1996 = vrot.slane %v1952, 1
        %v1997 = vrot.slane %v1712, 1
        %v1998 = vsel %vm1505, %v1996, %v1997
        %v1999 = vrot.slane %v1953, 1
        %v2000 = vrot.slane %v1713, 1
        %v2001 = vsel %vm1505, %v1999, %v2000
        %2002 = vrot.lane.b32.xlu0 %v1956, 64
        %v2003 = vpop.permute.xlu0 %2002
        %2004 = vrot.lane.b32.xlu0 %v1959, 64
        %v2005 = vpop.permute.xlu0 %2004
        %2006 = vrot.lane.b32.xlu0 %v1962, 64
        %v2007 = vpop.permute.xlu0 %2006
        %2008 = vrot.lane.b32.xlu0 %v1965, 64
        %v2009 = vpop.permute.xlu0 %2008
        %2010 = vrot.lane.b32.xlu0 %v1968, 64
        %v2011 = vpop.permute.xlu0 %2010
        %2012 = vrot.lane.b32.xlu0 %v1971, 64
        %v2013 = vpop.permute.xlu0 %2012
        %2014 = vrot.lane.b32.xlu0 %v1974, 64
        %v2015 = vpop.permute.xlu0 %2014
        %2016 = vrot.lane.b32.xlu0 %v1977, 64
        %v2017 = vpop.permute.xlu0 %2016
        %2018 = vrot.lane.b32.xlu0 %v1980, 64
        %v2019 = vpop.permute.xlu0 %2018
        %2020 = vrot.lane.b32.xlu0 %v1983, 64
        %v2021 = vpop.permute.xlu0 %2020
        %2022 = vrot.lane.b32.xlu0 %v1986, 64
        %v2023 = vpop.permute.xlu0 %2022
        %2024 = vrot.lane.b32.xlu0 %v1989, 64
        %v2025 = vpop.permute.xlu0 %2024
        %2026 = vrot.lane.b32.xlu0 %v1992, 64
        %v2027 = vpop.permute.xlu0 %2026
        %2028 = vrot.lane.b32.xlu0 %v1995, 64
        %v2029 = vpop.permute.xlu0 %2028
        %2030 = vrot.lane.b32.xlu0 %v1998, 64
        %v2031 = vpop.permute.xlu0 %2030
        %2032 = vrot.lane.b32.xlu0 %v2001, 64
        %v2033 = vpop.permute.xlu0 %2032
        %v2066 = vunpack.c.l.b16 %v1040
        %v2067 = vunpack.c.l.b16 %v1041
        %v2068 = vunpack.c.l.b16 %v1042
        %v2069 = vunpack.c.l.b16 %v1043
        %v2070 = vunpack.c.l.b16 %v1044
        %v2071 = vunpack.c.l.b16 %v1045
        %v2072 = vunpack.c.l.b16 %v1046
        %v2073 = vunpack.c.l.b16 %v1047
        %v2074 = vunpack.c.l.b16 %v1048
        %v2075 = vunpack.c.l.b16 %v1049
        %v2076 = vunpack.c.l.b16 %v1050
        %v2077 = vunpack.c.l.b16 %v1051
        %v2078 = vunpack.c.l.b16 %v1052
        %v2079 = vunpack.c.l.b16 %v1053
        %v2080 = vunpack.c.l.b16 %v1054
        %v2081 = vunpack.c.l.b16 %v1055
        %v2082 = vunpack.c.l.b16 %v1056
        %v2083 = vunpack.c.l.b16 %v1057
        %v2084 = vunpack.c.l.b16 %v1058
        %v2085 = vunpack.c.l.b16 %v1059
        %v2086 = vunpack.c.l.b16 %v1060
        %v2087 = vunpack.c.l.b16 %v1061
        %v2088 = vunpack.c.l.b16 %v1062
        %v2089 = vunpack.c.l.b16 %v1063
        %v2090 = vunpack.c.l.b16 %v1064
        %v2091 = vunpack.c.l.b16 %v1065
        %v2092 = vunpack.c.l.b16 %v1066
        %v2093 = vunpack.c.l.b16 %v1067
        %v2094 = vunpack.c.l.b16 %v1068
        %v2095 = vunpack.c.l.b16 %v1069
        %v2096 = vunpack.c.l.b16 %v1070
        %v2097 = vunpack.c.l.b16 %v1071
        %v2098 = vpack.c.b16 %v2067, %v2066
        %v2099 = vpack.c.b16 %v2069, %v2068
        %v2100 = vpack.c.b16 %v2071, %v2070
        %v2101 = vpack.c.b16 %v2073, %v2072
        %v2102 = vpack.c.b16 %v2075, %v2074
        %v2103 = vpack.c.b16 %v2077, %v2076
        %v2104 = vpack.c.b16 %v2079, %v2078
        %v2105 = vpack.c.b16 %v2081, %v2080
        %v2106 = vpack.c.b16 %v2083, %v2082
        %v2107 = vpack.c.b16 %v2085, %v2084
        %v2108 = vpack.c.b16 %v2087, %v2086
        %v2109 = vpack.c.b16 %v2089, %v2088
        %v2110 = vpack.c.b16 %v2091, %v2090
        %v2111 = vpack.c.b16 %v2093, %v2092
        %v2112 = vpack.c.b16 %v2095, %v2094
        %v2113 = vpack.c.b16 %v2097, %v2096
        %v2130 = vunpack.c.l.b16 %v1072
        %v2131 = vunpack.c.l.b16 %v1073
        %v2132 = vunpack.c.l.b16 %v1074
        %v2133 = vunpack.c.l.b16 %v1075
        %v2134 = vunpack.c.l.b16 %v1076
        %v2135 = vunpack.c.l.b16 %v1077
        %v2136 = vunpack.c.l.b16 %v1078
        %v2137 = vunpack.c.l.b16 %v1079
        %v2138 = vunpack.c.l.b16 %v1080
        %v2139 = vunpack.c.l.b16 %v1081
        %v2140 = vunpack.c.l.b16 %v1082
        %v2141 = vunpack.c.l.b16 %v1083
        %v2142 = vunpack.c.l.b16 %v1084
        %v2143 = vunpack.c.l.b16 %v1085
        %v2144 = vunpack.c.l.b16 %v1086
        %v2145 = vunpack.c.l.b16 %v1087
        %v2146 = vpack.c.b16 %v2130, %v2130
        %v2147 = vpack.c.b16 %v2131, %v2131
        %v2148 = vpack.c.b16 %v2132, %v2132
        %v2149 = vpack.c.b16 %v2133, %v2133
        %v2150 = vpack.c.b16 %v2134, %v2134
        %v2151 = vpack.c.b16 %v2135, %v2135
        %v2152 = vpack.c.b16 %v2136, %v2136
        %v2153 = vpack.c.b16 %v2137, %v2137
        %v2154 = vpack.c.b16 %v2138, %v2138
        %v2155 = vpack.c.b16 %v2139, %v2139
        %v2156 = vpack.c.b16 %v2140, %v2140
        %v2157 = vpack.c.b16 %v2141, %v2141
        %v2158 = vpack.c.b16 %v2142, %v2142
        %v2159 = vpack.c.b16 %v2143, %v2143
        %v2160 = vpack.c.b16 %v2144, %v2144
        %v2161 = vpack.c.b16 %v2145, %v2145
        %v2163 = vshrl.u32 %v2098, 16
        %v2165 = vshll.u32 %v2098, 16
        %v2167 = vrot.slane %v2165, 1
        %v2168 = vor.u32 %v2163, %v2167
        %v2170 = vshll.u32 %v2146, 16
        %v2172 = vrot.slane %v2170, 1
        %v2173 = vsel %vm1232, %v2168, %v2172
        %v2175 = vshrl.u32 %v2099, 16
        %v2177 = vshll.u32 %v2099, 16
        %v2179 = vrot.slane %v2177, 1
        %v2180 = vor.u32 %v2175, %v2179
        %v2182 = vshll.u32 %v2147, 16
        %v2184 = vrot.slane %v2182, 1
        %v2185 = vsel %vm1232, %v2180, %v2184
        %v2187 = vshrl.u32 %v2100, 16
        %v2189 = vshll.u32 %v2100, 16
        %v2191 = vrot.slane %v2189, 1
        %v2192 = vor.u32 %v2187, %v2191
        %v2194 = vshll.u32 %v2148, 16
        %v2196 = vrot.slane %v2194, 1
        %v2197 = vsel %vm1232, %v2192, %v2196
        %v2199 = vshrl.u32 %v2101, 16
        %v2201 = vshll.u32 %v2101, 16
        %v2203 = vrot.slane %v2201, 1
        %v2204 = vor.u32 %v2199, %v2203
        %v2206 = vshll.u32 %v2149, 16
        %v2208 = vrot.slane %v2206, 1
        %v2209 = vsel %vm1232, %v2204, %v2208
        %v2211 = vshrl.u32 %v2102, 16
        %v2213 = vshll.u32 %v2102, 16
        %v2215 = vrot.slane %v2213, 1
        %v2216 = vor.u32 %v2211, %v2215
        %v2218 = vshll.u32 %v2150, 16
        %v2220 = vrot.slane %v2218, 1
        %v2221 = vsel %vm1232, %v2216, %v2220
        %v2223 = vshrl.u32 %v2103, 16
        %v2225 = vshll.u32 %v2103, 16
        %v2227 = vrot.slane %v2225, 1
        %v2228 = vor.u32 %v2223, %v2227
        %v2230 = vshll.u32 %v2151, 16
        %v2232 = vrot.slane %v2230, 1
        %v2233 = vsel %vm1232, %v2228, %v2232
        %v2235 = vshrl.u32 %v2104, 16
        %v2237 = vshll.u32 %v2104, 16
        %v2239 = vrot.slane %v2237, 1
        %v2240 = vor.u32 %v2235, %v2239
        %v2242 = vshll.u32 %v2152, 16
        %v2244 = vrot.slane %v2242, 1
        %v2245 = vsel %vm1232, %v2240, %v2244
        %v2247 = vshrl.u32 %v2105, 16
        %v2249 = vshll.u32 %v2105, 16
        %v2251 = vrot.slane %v2249, 1
        %v2252 = vor.u32 %v2247, %v2251
        %v2254 = vshll.u32 %v2153, 16
        %v2256 = vrot.slane %v2254, 1
        %v2257 = vsel %vm1232, %v2252, %v2256
        %v2259 = vshrl.u32 %v2106, 16
        %v2261 = vshll.u32 %v2106, 16
        %v2263 = vrot.slane %v2261, 1
        %v2264 = vor.u32 %v2259, %v2263
        %v2266 = vshll.u32 %v2154, 16
        %v2268 = vrot.slane %v2266, 1
        %v2269 = vsel %vm1232, %v2264, %v2268
        %v2271 = vshrl.u32 %v2107, 16
        %v2273 = vshll.u32 %v2107, 16
        %v2275 = vrot.slane %v2273, 1
        %v2276 = vor.u32 %v2271, %v2275
        %v2278 = vshll.u32 %v2155, 16
        %v2280 = vrot.slane %v2278, 1
        %v2281 = vsel %vm1232, %v2276, %v2280
        %v2283 = vshrl.u32 %v2108, 16
        %v2285 = vshll.u32 %v2108, 16
        %v2287 = vrot.slane %v2285, 1
        %v2288 = vor.u32 %v2283, %v2287
        %v2290 = vshll.u32 %v2156, 16
        %v2292 = vrot.slane %v2290, 1
        %v2293 = vsel %vm1232, %v2288, %v2292
        %v2295 = vshrl.u32 %v2109, 16
        %v2297 = vshll.u32 %v2109, 16
        %v2299 = vrot.slane %v2297, 1
        %v2300 = vor.u32 %v2295, %v2299
        %v2302 = vshll.u32 %v2157, 16
        %v2304 = vrot.slane %v2302, 1
        %v2305 = vsel %vm1232, %v2300, %v2304
        %v2307 = vshrl.u32 %v2110, 16
        %v2309 = vshll.u32 %v2110, 16
        %v2311 = vrot.slane %v2309, 1
        %v2312 = vor.u32 %v2307, %v2311
        %v2314 = vshll.u32 %v2158, 16
        %v2316 = vrot.slane %v2314, 1
        %v2317 = vsel %vm1232, %v2312, %v2316
        %v2319 = vshrl.u32 %v2111, 16
        %v2321 = vshll.u32 %v2111, 16
        %v2323 = vrot.slane %v2321, 1
        %v2324 = vor.u32 %v2319, %v2323
        %v2326 = vshll.u32 %v2159, 16
        %v2328 = vrot.slane %v2326, 1
        %v2329 = vsel %vm1232, %v2324, %v2328
        %v2331 = vshrl.u32 %v2112, 16
        %v2333 = vshll.u32 %v2112, 16
        %v2335 = vrot.slane %v2333, 1
        %v2336 = vor.u32 %v2331, %v2335
        %v2338 = vshll.u32 %v2160, 16
        %v2340 = vrot.slane %v2338, 1
        %v2341 = vsel %vm1232, %v2336, %v2340
        %v2343 = vshrl.u32 %v2113, 16
        %v2345 = vshll.u32 %v2113, 16
        %v2347 = vrot.slane %v2345, 1
        %v2348 = vor.u32 %v2343, %v2347
        %v2350 = vshll.u32 %v2161, 16
        %v2352 = vrot.slane %v2350, 1
        %v2353 = vsel %vm1232, %v2348, %v2352
        %2354 = vrot.lane.b32.xlu0 %v2173, 64
        %v2355 = vpop.permute.xlu0 %2354
        %2356 = vrot.lane.b32.xlu0 %v2185, 64
        %v2357 = vpop.permute.xlu0 %2356
        %2358 = vrot.lane.b32.xlu0 %v2197, 64
        %v2359 = vpop.permute.xlu0 %2358
        %2360 = vrot.lane.b32.xlu0 %v2209, 64
        %v2361 = vpop.permute.xlu0 %2360
        %2362 = vrot.lane.b32.xlu0 %v2221, 64
        %v2363 = vpop.permute.xlu0 %2362
        %2364 = vrot.lane.b32.xlu0 %v2233, 64
        %v2365 = vpop.permute.xlu0 %2364
        %2366 = vrot.lane.b32.xlu0 %v2245, 64
        %v2367 = vpop.permute.xlu0 %2366
        %2368 = vrot.lane.b32.xlu0 %v2257, 64
        %v2369 = vpop.permute.xlu0 %2368
        %2370 = vrot.lane.b32.xlu0 %v2269, 64
        %v2371 = vpop.permute.xlu0 %2370
        %2372 = vrot.lane.b32.xlu0 %v2281, 64
        %v2373 = vpop.permute.xlu0 %2372
        %2374 = vrot.lane.b32.xlu0 %v2293, 64
        %v2375 = vpop.permute.xlu0 %2374
        %2376 = vrot.lane.b32.xlu0 %v2305, 64
        %v2377 = vpop.permute.xlu0 %2376
        %2378 = vrot.lane.b32.xlu0 %v2317, 64
        %v2379 = vpop.permute.xlu0 %2378
        %2380 = vrot.lane.b32.xlu0 %v2329, 64
        %v2381 = vpop.permute.xlu0 %2380
        %2382 = vrot.lane.b32.xlu0 %v2341, 64
        %v2383 = vpop.permute.xlu0 %2382
        %2384 = vrot.lane.b32.xlu0 %v2353, 64
        %v2385 = vpop.permute.xlu0 %2384
        %v2402 = vunpack.c.l.b16 %v1088
        %v2403 = vunpack.c.l.b16 %v1089
        %v2404 = vunpack.c.l.b16 %v1090
        %v2405 = vunpack.c.l.b16 %v1091
        %v2406 = vunpack.c.l.b16 %v1092
        %v2407 = vunpack.c.l.b16 %v1093
        %v2408 = vunpack.c.l.b16 %v1094
        %v2409 = vunpack.c.l.b16 %v1095
        %v2410 = vunpack.c.l.b16 %v1096
        %v2411 = vunpack.c.l.b16 %v1097
        %v2412 = vunpack.c.l.b16 %v1098
        %v2413 = vunpack.c.l.b16 %v1099
        %v2414 = vunpack.c.l.b16 %v1100
        %v2415 = vunpack.c.l.b16 %v1101
        %v2416 = vunpack.c.l.b16 %v1102
        %v2417 = vunpack.c.l.b16 %v1103
        %v2418 = vpack.c.b16 %v2067, %v2402
        %v2419 = vpack.c.b16 %v2069, %v2403
        %v2420 = vpack.c.b16 %v2071, %v2404
        %v2421 = vpack.c.b16 %v2073, %v2405
        %v2422 = vpack.c.b16 %v2075, %v2406
        %v2423 = vpack.c.b16 %v2077, %v2407
        %v2424 = vpack.c.b16 %v2079, %v2408
        %v2425 = vpack.c.b16 %v2081, %v2409
        %v2426 = vpack.c.b16 %v2083, %v2410
        %v2427 = vpack.c.b16 %v2085, %v2411
        %v2428 = vpack.c.b16 %v2087, %v2412
        %v2429 = vpack.c.b16 %v2089, %v2413
        %v2430 = vpack.c.b16 %v2091, %v2414
        %v2431 = vpack.c.b16 %v2093, %v2415
        %v2432 = vpack.c.b16 %v2095, %v2416
        %v2433 = vpack.c.b16 %v2097, %v2417
        %v2434 = vrot.slane %v2418, 1
        %v2435 = vrot.slane %v2146, 1
        %v2436 = vsel %vm1505, %v2434, %v2435
        %v2437 = vrot.slane %v2419, 1
        %v2438 = vrot.slane %v2147, 1
        %v2439 = vsel %vm1505, %v2437, %v2438
        %v2440 = vrot.slane %v2420, 1
        %v2441 = vrot.slane %v2148, 1
        %v2442 = vsel %vm1505, %v2440, %v2441
        %v2443 = vrot.slane %v2421, 1
        %v2444 = vrot.slane %v2149, 1
        %v2445 = vsel %vm1505, %v2443, %v2444
        %v2446 = vrot.slane %v2422, 1
        %v2447 = vrot.slane %v2150, 1
        %v2448 = vsel %vm1505, %v2446, %v2447
        %v2449 = vrot.slane %v2423, 1
        %v2450 = vrot.slane %v2151, 1
        %v2451 = vsel %vm1505, %v2449, %v2450
        %v2452 = vrot.slane %v2424, 1
        %v2453 = vrot.slane %v2152, 1
        %v2454 = vsel %vm1505, %v2452, %v2453
        %v2455 = vrot.slane %v2425, 1
        %v2456 = vrot.slane %v2153, 1
        %v2457 = vsel %vm1505, %v2455, %v2456
        %v2458 = vrot.slane %v2426, 1
        %v2459 = vrot.slane %v2154, 1
        %v2460 = vsel %vm1505, %v2458, %v2459
        %v2461 = vrot.slane %v2427, 1
        %v2462 = vrot.slane %v2155, 1
        %v2463 = vsel %vm1505, %v2461, %v2462
        %v2464 = vrot.slane %v2428, 1
        %v2465 = vrot.slane %v2156, 1
        %v2466 = vsel %vm1505, %v2464, %v2465
        %v2467 = vrot.slane %v2429, 1
        %v2468 = vrot.slane %v2157, 1
        %v2469 = vsel %vm1505, %v2467, %v2468
        %v2470 = vrot.slane %v2430, 1
        %v2471 = vrot.slane %v2158, 1
        %v2472 = vsel %vm1505, %v2470, %v2471
        %v2473 = vrot.slane %v2431, 1
        %v2474 = vrot.slane %v2159, 1
        %v2475 = vsel %vm1505, %v2473, %v2474
        %v2476 = vrot.slane %v2432, 1
        %v2477 = vrot.slane %v2160, 1
        %v2478 = vsel %vm1505, %v2476, %v2477
        %v2479 = vrot.slane %v2433, 1
        %v2480 = vrot.slane %v2161, 1
        %v2481 = vsel %vm1505, %v2479, %v2480
        %vm2482 = vcmask 523264
        %v2484 = vsel %vm2482, %v1168, %v1426
        %v2487 = vsel %vm2482, %v1169, %v1428
        %v2490 = vsel %vm2482, %v1170, %v1430
        %v2493 = vsel %vm2482, %v1171, %v1432
        %v2496 = vsel %vm2482, %v1172, %v1434
        %v2499 = vsel %vm2482, %v1173, %v1436
        %v2502 = vsel %vm2482, %v1174, %v1438
        %v2505 = vsel %vm2482, %v1175, %v1440
        %v2508 = vsel %vm2482, %v1176, %v1442
        %v2511 = vsel %vm2482, %v1177, %v1444
        %v2514 = vsel %vm2482, %v1178, %v1446
        %v2517 = vsel %vm2482, %v1179, %v1448
        %v2520 = vsel %vm2482, %v1180, %v1450
        %v2523 = vsel %vm2482, %v1181, %v1452
        %v2526 = vsel %vm2482, %v1182, %v1454
        %v2529 = vsel %vm2482, %v1183, %v1456
        %v2533 = vsel %vm2482, %v1508, %v1635
        %v2537 = vsel %vm2482, %v1511, %v1637
        %v2541 = vsel %vm2482, %v1514, %v1639
        %v2545 = vsel %vm2482, %v1517, %v1641
        %v2549 = vsel %vm2482, %v1520, %v1643
        %v2553 = vsel %vm2482, %v1523, %v1645
        %v2557 = vsel %vm2482, %v1526, %v1647
        %v2561 = vsel %vm2482, %v1529, %v1649
        %v2565 = vsel %vm2482, %v1532, %v1651
        %v2569 = vsel %vm2482, %v1535, %v1653
        %v2573 = vsel %vm2482, %v1538, %v1655
        %v2577 = vsel %vm2482, %v1541, %v1657
        %v2581 = vsel %vm2482, %v1544, %v1659
        %v2585 = vsel %vm2482, %v1547, %v1661
        %v2589 = vsel %vm2482, %v1550, %v1663
        %v2593 = vsel %vm2482, %v1553, %v1665
        %v2597 = vsel %vm2482, %v1725, %v2003
        %v2601 = vsel %vm2482, %v1737, %v2005
        %v2605 = vsel %vm2482, %v1749, %v2007
        %v2609 = vsel %vm2482, %v1761, %v2009
        %v2613 = vsel %vm2482, %v1773, %v2011
        %v2617 = vsel %vm2482, %v1785, %v2013
        %v2621 = vsel %vm2482, %v1797, %v2015
        %v2625 = vsel %vm2482, %v1809, %v2017
        %v2629 = vsel %vm2482, %v1821, %v2019
        %v2633 = vsel %vm2482, %v1833, %v2021
        %v2637 = vsel %vm2482, %v1845, %v2023
        %v2641 = vsel %vm2482, %v1857, %v2025
        %v2645 = vsel %vm2482, %v1869, %v2027
        %v2649 = vsel %vm2482, %v1881, %v2029
        %v2653 = vsel %vm2482, %v1893, %v2031
        %v2657 = vsel %vm2482, %v1905, %v2033
        %v2660 = vsel %vm2482, %v2098, %v2355
        %v2663 = vsel %vm2482, %v2099, %v2357
        %v2666 = vsel %vm2482, %v2100, %v2359
        %v2669 = vsel %vm2482, %v2101, %v2361
        %v2672 = vsel %vm2482, %v2102, %v2363
        %v2675 = vsel %vm2482, %v2103, %v2365
        %v2678 = vsel %vm2482, %v2104, %v2367
        %v2681 = vsel %vm2482, %v2105, %v2369
        %v2684 = vsel %vm2482, %v2106, %v2371
        %v2687 = vsel %vm2482, %v2107, %v2373
        %v2690 = vsel %vm2482, %v2108, %v2375
        %v2693 = vsel %vm2482, %v2109, %v2377
        %v2696 = vsel %vm2482, %v2110, %v2379
        %v2699 = vsel %vm2482, %v2111, %v2381
        %v2702 = vsel %vm2482, %v2112, %v2383
        %v2705 = vsel %vm2482, %v2113, %v2385
        %v2707 = vld [vmem:[%s1] sm:$0xf]
        %v2708 = vld [vmem:[%s1 + $0x4] sm:$0xf]
        %v2709 = vld [vmem:[%s1 + $0x8] sm:$0xf]
        %v2710 = vld [vmem:[%s1 + $0xc] sm:$0xf]
        %v2711 = vld [vmem:[%s1 + $0x10] sm:$0xf]
        %v2712 = vld [vmem:[%s1 + $0x14] sm:$0xf]
        %v2713 = vld [vmem:[%s1 + $0x18] sm:$0xf]
        %v2714 = vld [vmem:[%s1 + $0x1c] sm:$0xf]
        %v2715 = vld [vmem:[%s1 + $0x20] sm:$0xf]
        %v2716 = vld [vmem:[%s1 + $0x24] sm:$0xf]
        %v2717 = vld [vmem:[%s1 + $0x28] sm:$0xf]
        %v2718 = vld [vmem:[%s1 + $0x2c] sm:$0xf]
        %v2719 = vld [vmem:[%s1 + $0x30] sm:$0xf]
        %v2720 = vld [vmem:[%s1 + $0x34] sm:$0xf]
        %v2721 = vld [vmem:[%s1 + $0x38] sm:$0xf]
        %v2722 = vld [vmem:[%s1 + $0x3c] sm:$0xf]
        %v2723 = vld [vmem:[%s1 + $0x40] sm:$0xf]
        %v2724 = vld [vmem:[%s1 + $0x44] sm:$0xf]
        %v2725 = vld [vmem:[%s1 + $0x48] sm:$0xf]
        %v2726 = vld [vmem:[%s1 + $0x4c] sm:$0xf]
        %v2727 = vld [vmem:[%s1 + $0x50] sm:$0xf]
        %v2728 = vld [vmem:[%s1 + $0x54] sm:$0xf]
        %v2729 = vld [vmem:[%s1 + $0x58] sm:$0xf]
        %v2730 = vld [vmem:[%s1 + $0x5c] sm:$0xf]
        %v2731 = vld [vmem:[%s1 + $0x60] sm:$0xf]
        %v2732 = vld [vmem:[%s1 + $0x64] sm:$0xf]
        %v2733 = vld [vmem:[%s1 + $0x68] sm:$0xf]
        %v2734 = vld [vmem:[%s1 + $0x6c] sm:$0xf]
        %v2735 = vld [vmem:[%s1 + $0x70] sm:$0xf]
        %v2736 = vld [vmem:[%s1 + $0x74] sm:$0xf]
        %v2737 = vld [vmem:[%s1 + $0x78] sm:$0xf]
        %v2738 = vld [vmem:[%s1 + $0x7c] sm:$0xf]
        %v2739 = vld [vmem:[%s1 + $0x80] sm:$0xf]
        %v2740 = vld [vmem:[%s1 + $0x84] sm:$0xf]
        %v2741 = vld [vmem:[%s1 + $0x88] sm:$0xf]
        %v2742 = vld [vmem:[%s1 + $0x8c] sm:$0xf]
        %v2743 = vld [vmem:[%s1 + $0x90] sm:$0xf]
        %v2744 = vld [vmem:[%s1 + $0x94] sm:$0xf]
        %v2745 = vld [vmem:[%s1 + $0x98] sm:$0xf]
        %v2746 = vld [vmem:[%s1 + $0x9c] sm:$0xf]
        %v2747 = vld [vmem:[%s1 + $0xa0] sm:$0xf]
        %v2748 = vld [vmem:[%s1 + $0xa4] sm:$0xf]
        %v2749 = vld [vmem:[%s1 + $0xa8] sm:$0xf]
        %v2750 = vld [vmem:[%s1 + $0xac] sm:$0xf]
        %v2751 = vld [vmem:[%s1 + $0xb0] sm:$0xf]
        %v2752 = vld [vmem:[%s1 + $0xb4] sm:$0xf]
        %v2753 = vld [vmem:[%s1 + $0xb8] sm:$0xf]
        %v2754 = vld [vmem:[%s1 + $0xbc] sm:$0xf]
        %v2755 = vld [vmem:[%s1 + $0xc0] sm:$0xf]
        %v2756 = vld [vmem:[%s1 + $0xc4] sm:$0xf]
        %v2757 = vld [vmem:[%s1 + $0xc8] sm:$0xf]
        %v2758 = vld [vmem:[%s1 + $0xcc] sm:$0xf]
        %v2759 = vld [vmem:[%s1 + $0xd0] sm:$0xf]
        %v2760 = vld [vmem:[%s1 + $0xd4] sm:$0xf]
        %v2761 = vld [vmem:[%s1 + $0xd8] sm:$0xf]
        %v2762 = vld [vmem:[%s1 + $0xdc] sm:$0xf]
        %v2763 = vld [vmem:[%s1 + $0xe0] sm:$0xf]
        %v2764 = vld [vmem:[%s1 + $0xe4] sm:$0xf]
        %v2765 = vld [vmem:[%s1 + $0xe8] sm:$0xf]
        %v2766 = vld [vmem:[%s1 + $0xec] sm:$0xf]
        %v2767 = vld [vmem:[%s1 + $0xf0] sm:$0xf]
        %v2768 = vld [vmem:[%s1 + $0xf4] sm:$0xf]
        %v2769 = vld [vmem:[%s1 + $0xf8] sm:$0xf]
        %v2770 = vld [vmem:[%s1 + $0xfc] sm:$0xf]
        %v2771 = vld [vmem:[%s1 + $0x100] sm:$0xf]
        %v2772 = vld [vmem:[%s1 + $0x104] sm:$0xf]
        %v2773 = vld [vmem:[%s1 + $0x108] sm:$0xf]
        %v2774 = vld [vmem:[%s1 + $0x10c] sm:$0xf]
        %v2775 = vld [vmem:[%s1 + $0x110] sm:$0xf]
        %v2776 = vld [vmem:[%s1 + $0x114] sm:$0xf]
        %v2777 = vld [vmem:[%s1 + $0x118] sm:$0xf]
        %v2778 = vld [vmem:[%s1 + $0x11c] sm:$0xf]
        %v2851 = vunpack.c.l.b16 %v2707
        %v2852 = vunpack.c.l.b16 %v2708
        %v2853 = vunpack.c.l.b16 %v2709
        %v2854 = vunpack.c.l.b16 %v2710
        %v2855 = vunpack.c.l.b16 %v2711
        %v2856 = vunpack.c.l.b16 %v2712
        %v2857 = vunpack.c.l.b16 %v2713
        %v2858 = vunpack.c.l.b16 %v2714
        %v2859 = vunpack.c.l.b16 %v2715
        %v2860 = vunpack.c.l.b16 %v2716
        %v2861 = vunpack.c.l.b16 %v2717
        %v2862 = vunpack.c.l.b16 %v2718
        %v2863 = vunpack.c.l.b16 %v2719
        %v2864 = vunpack.c.l.b16 %v2720
        %v2865 = vunpack.c.l.b16 %v2721
        %v2866 = vunpack.c.l.b16 %v2722
        %v2867 = vunpack.c.l.b16 %v2723
        %v2868 = vunpack.c.l.b16 %v2724
        %v2869 = vunpack.c.l.b16 %v2725
        %v2870 = vunpack.c.l.b16 %v2726
        %v2871 = vunpack.c.l.b16 %v2727
        %v2872 = vunpack.c.l.b16 %v2728
        %v2873 = vunpack.c.l.b16 %v2729
        %v2874 = vunpack.c.l.b16 %v2730
        %v2875 = vunpack.c.l.b16 %v2731
        %v2876 = vunpack.c.l.b16 %v2732
        %v2877 = vunpack.c.l.b16 %v2733
        %v2878 = vunpack.c.l.b16 %v2734
        %v2879 = vunpack.c.l.b16 %v2735
        %v2880 = vunpack.c.l.b16 %v2736
        %v2881 = vunpack.c.l.b16 %v2737
        %v2882 = vunpack.c.l.b16 %v2738
        %v2883 = vunpack.c.l.b16 %v2739
        %v2884 = vunpack.c.l.b16 %v2740
        %v2885 = vunpack.c.l.b16 %v2741
        %v2886 = vunpack.c.l.b16 %v2742
        %v2887 = vunpack.c.l.b16 %v2743
        %v2888 = vunpack.c.l.b16 %v2744
        %v2889 = vunpack.c.l.b16 %v2745
        %v2890 = vunpack.c.l.b16 %v2746
        %v2891 = vunpack.c.l.b16 %v2747
        %v2892 = vunpack.c.l.b16 %v2748
        %v2893 = vunpack.c.l.b16 %v2749
        %v2894 = vunpack.c.l.b16 %v2750
        %v2895 = vunpack.c.l.b16 %v2751
        %v2896 = vunpack.c.l.b16 %v2752
        %v2897 = vunpack.c.l.b16 %v2753
        %v2898 = vunpack.c.l.b16 %v2754
        %v2899 = vunpack.c.l.b16 %v2755
        %v2900 = vunpack.c.l.b16 %v2756
        %v2901 = vunpack.c.l.b16 %v2757
        %v2902 = vunpack.c.l.b16 %v2758
        %v2903 = vunpack.c.l.b16 %v2759
        %v2904 = vunpack.c.l.b16 %v2760
        %v2905 = vunpack.c.l.b16 %v2761
        %v2906 = vunpack.c.l.b16 %v2762
        %v2907 = vunpack.c.l.b16 %v2763
        %v2908 = vunpack.c.l.b16 %v2764
        %v2909 = vunpack.c.l.b16 %v2765
        %v2910 = vunpack.c.l.b16 %v2766
        %v2911 = vunpack.c.l.b16 %v2767
        %v2912 = vunpack.c.l.b16 %v2768
        %v2913 = vunpack.c.l.b16 %v2769
        %v2914 = vunpack.c.l.b16 %v2770
        %v2915 = vunpack.c.l.b16 %v2771
        %v2916 = vunpack.c.l.b16 %v2772
        %v2917 = vunpack.c.l.b16 %v2773
        %v2918 = vunpack.c.l.b16 %v2774
        %v2919 = vunpack.c.l.b16 %v2775
        %v2920 = vunpack.c.l.b16 %v2776
        %v2921 = vunpack.c.l.b16 %v2777
        %v2922 = vunpack.c.l.b16 %v2778
        %v2923 = vpack.c.b16 %v2852, %v2851
        %v2924 = vpack.c.b16 %v2854, %v2853
        %v2925 = vpack.c.b16 %v2856, %v2855
        %v2926 = vpack.c.b16 %v2858, %v2857
        %v2927 = vpack.c.b16 %v2860, %v2859
        %v2928 = vpack.c.b16 %v2862, %v2861
        %v2929 = vpack.c.b16 %v2864, %v2863
        %v2930 = vpack.c.b16 %v2866, %v2865
        %v2931 = vpack.c.b16 %v2868, %v2867
        %v2932 = vpack.c.b16 %v2870, %v2869
        %v2933 = vpack.c.b16 %v2872, %v2871
        %v2934 = vpack.c.b16 %v2874, %v2873
        %v2935 = vpack.c.b16 %v2876, %v2875
        %v2936 = vpack.c.b16 %v2878, %v2877
        %v2937 = vpack.c.b16 %v2880, %v2879
        %v2938 = vpack.c.b16 %v2882, %v2881
        %v2939 = vpack.c.b16 %v2884, %v2883
        %v2940 = vpack.c.b16 %v2886, %v2885
        %v2941 = vpack.c.b16 %v2888, %v2887
        %v2942 = vpack.c.b16 %v2890, %v2889
        %v2943 = vpack.c.b16 %v2892, %v2891
        %v2944 = vpack.c.b16 %v2894, %v2893
        %v2945 = vpack.c.b16 %v2896, %v2895
        %v2946 = vpack.c.b16 %v2898, %v2897
        %v2947 = vpack.c.b16 %v2900, %v2899
        %v2948 = vpack.c.b16 %v2902, %v2901
        %v2949 = vpack.c.b16 %v2904, %v2903
        %v2950 = vpack.c.b16 %v2906, %v2905
        %v2951 = vpack.c.b16 %v2908, %v2907
        %v2952 = vpack.c.b16 %v2910, %v2909
        %v2953 = vpack.c.b16 %v2912, %v2911
        %v2954 = vpack.c.b16 %v2914, %v2913
        %v2955 = vpack.c.b16 %v2916, %v2915
        %v2956 = vpack.c.b16 %v2918, %v2917
        %v2957 = vpack.c.b16 %v2920, %v2919
        %v2958 = vpack.c.b16 %v2922, %v2921
        %v2996 = vsel %vm2482, %v2436, 0
        %v2999 = vsel %vm2482, %v2439, 0
        %v3002 = vsel %vm2482, %v2442, 0
        %v3005 = vsel %vm2482, %v2445, 0
        %v3008 = vsel %vm2482, %v2448, 0
        %v3011 = vsel %vm2482, %v2451, 0
        %v3014 = vsel %vm2482, %v2454, 0
        %v3017 = vsel %vm2482, %v2457, 0
        %v3020 = vsel %vm2482, %v2460, 0
        %v3023 = vsel %vm2482, %v2463, 0
        %v3026 = vsel %vm2482, %v2466, 0
        %v3029 = vsel %vm2482, %v2469, 0
        %v3032 = vsel %vm2482, %v2472, 0
        %v3035 = vsel %vm2482, %v2475, 0
        %v3038 = vsel %vm2482, %v2478, 0
        %v3041 = vsel %vm2482, %v2481, 0
        %3043 = vmatprep.subr.bf16.mxu0 0
        %3044 = vmatpush1.bf16.msra.mxu0 %v2923
        %3045 = vmatprep.subr.bf16.mxu0 0
        %3046 = vmatpush1.bf16.msra.mxu0 %v2924
        %3047 = vmatprep.subr.bf16.mxu0 0
        %3048 = vmatpush1.bf16.msra.mxu0 %v2925
        %3049 = vmatprep.subr.bf16.mxu0 0
        %3050 = vmatpush1.bf16.msra.mxu0 %v2926
        %3051 = vmatprep.subr.bf16.mxu0 0
        %3052 = vmatpush1.bf16.msra.mxu0 %v2927
        %3053 = vmatprep.subr.bf16.mxu0 0
        %3054 = vmatpush1.bf16.msra.mxu0 %v2928
        %3055 = vmatprep.subr.bf16.mxu0 0
        %3056 = vmatpush1.bf16.msra.mxu0 %v2929
        %3057 = vmatprep.subr.bf16.mxu0 0
        %3058 = vmatpush1.bf16.msra.mxu0 %v2930
        %3059 = vmatprep.subr.bf16.mxu0 0
        %3060 = vmatpush1.bf16.msra.mxu0 %v2931
        %3061 = vmatprep.subr.bf16.mxu0 0
        %3062 = vmatpush1.bf16.msra.mxu0 %v2932
        %3063 = vmatprep.subr.bf16.mxu0 0
        %3064 = vmatpush1.bf16.msra.mxu0 %v2933
        %3065 = vmatprep.subr.bf16.mxu0 0
        %3066 = vmatpush1.bf16.msra.mxu0 %v2934
        %3067 = vmatprep.subr.bf16.mxu0 0
        %3068 = vmatpush1.bf16.msra.mxu0 %v2935
        %3069 = vmatprep.subr.bf16.mxu0 0
        %3070 = vmatpush1.bf16.msra.mxu0 %v2936
        %3071 = vmatprep.subr.bf16.mxu0 0
        %3072 = vmatpush1.bf16.msra.mxu0 %v2937
        %3073 = vmatprep.subr.bf16.mxu0 0
        %3074 = vmatpush1.bf16.msra.mxu0 %v2938
        %3075 = vmatprep.mubr.bf16.mxu0 %v2533
        %3076 = vmatmul.mubr.bf16.gmra.mrb[0].mxu0 %v2484
        %v3077 = vpop.f32.mrb[0].mxu0
        %v3078 = vadd.f32 0.0, %v3077
        %v3079 = vpop.f32.mrb[0].mxu0
        %v3080 = vpop.f32.mrb[0].mxu0
        %v3081 = vadd.f32 0.0, %v3080
        %v3082 = vpop.f32.mrb[0].mxu0
        %3083 = vmatprep.mubr.bf16.mxu0 %v2537
        %3084 = vmatmul.mubr.bf16.gmra.mrb[0].mxu0 %v2487
        %v3085 = vpop.f32.mrb[0].mxu0
        %v3086 = vadd.f32 0.0, %v3085
        %v3087 = vpop.f32.mrb[0].mxu0
        %v3088 = vpop.f32.mrb[0].mxu0
        %v3089 = vadd.f32 0.0, %v3088
        %v3090 = vpop.f32.mrb[0].mxu0
        %3091 = vmatprep.mubr.bf16.mxu0 %v2541
        %3092 = vmatmul.mubr.bf16.gmra.mrb[0].mxu0 %v2490
        %v3093 = vpop.f32.mrb[0].mxu0
        %v3094 = vadd.f32 0.0, %v3093
        %v3095 = vpop.f32.mrb[0].mxu0
        %v3096 = vpop.f32.mrb[0].mxu0
        %v3097 = vadd.f32 0.0, %v3096
        %v3098 = vpop.f32.mrb[0].mxu0
        %3099 = vmatprep.mubr.bf16.mxu0 %v2545
        %3100 = vmatmul.mubr.bf16.gmra.mrb[0].mxu0 %v2493
        %v3101 = vpop.f32.mrb[0].mxu0
        %v3102 = vadd.f32 0.0, %v3101
        %v3103 = vpop.f32.mrb[0].mxu0
        %v3104 = vpop.f32.mrb[0].mxu0
        %v3105 = vadd.f32 0.0, %v3104
        %v3106 = vpop.f32.mrb[0].mxu0
        %3107 = vmatprep.mubr.bf16.mxu0 %v2549
        %3108 = vmatmul.mubr.bf16.gmra.mrb[0].mxu0 %v2496
        %v3109 = vpop.f32.mrb[0].mxu0
        %v3110 = vadd.f32 0.0, %v3109
        %v3111 = vpop.f32.mrb[0].mxu0
        %v3112 = vpop.f32.mrb[0].mxu0
        %v3113 = vadd.f32 0.0, %v3112
        %v3114 = vpop.f32.mrb[0].mxu0
        %3115 = vmatprep.mubr.bf16.mxu0 %v2553
        %3116 = vmatmul.mubr.bf16.gmra.mrb[0].mxu0 %v2499
        %v3117 = vpop.f32.mrb[0].mxu0
        %v3118 = vadd.f32 0.0, %v3117
        %v3119 = vpop.f32.mrb[0].mxu0
        %v3120 = vpop.f32.mrb[0].mxu0
        %v3121 = vadd.f32 0.0, %v3120
        %v3122 = vpop.f32.mrb[0].mxu0
        %3123 = vmatprep.mubr.bf16.mxu0 %v2557
        %3124 = vmatmul.mubr.bf16.gmra.mrb[0].mxu0 %v2502
        %v3125 = vpop.f32.mrb[0].mxu0
        %v3126 = vadd.f32 0.0, %v3125
        %v3127 = vpop.f32.mrb[0].mxu0
        %v3128 = vpop.f32.mrb[0].mxu0
        %v3129 = vadd.f32 0.0, %v3128
        %v3130 = vpop.f32.mrb[0].mxu0
        %3131 = vmatprep.mubr.bf16.mxu0 %v2561
        %3132 = vmatmul.mubr.bf16.gmra.mrb[0].mxu0 %v2505
        %v3133 = vpop.f32.mrb[0].mxu0
        %v3134 = vadd.f32 0.0, %v3133
        %v3135 = vpop.f32.mrb[0].mxu0
        %v3136 = vpop.f32.mrb[0].mxu0
        %v3137 = vadd.f32 0.0, %v3136
        %v3138 = vpop.f32.mrb[0].mxu0
        %3139 = vmatprep.mubr.bf16.mxu0 %v2565
        %3140 = vmatmul.mubr.bf16.gmra.mrb[0].mxu0 %v2508
        %v3141 = vpop.f32.mrb[0].mxu0
        %v3142 = vadd.f32 0.0, %v3141
        %v3143 = vpop.f32.mrb[0].mxu0
        %v3144 = vpop.f32.mrb[0].mxu0
        %v3145 = vadd.f32 0.0, %v3144
        %v3146 = vpop.f32.mrb[0].mxu0
        %3147 = vmatprep.mubr.bf16.mxu0 %v2569
        %3148 = vmatmul.mubr.bf16.gmra.mrb[0].mxu0 %v2511
        %v3149 = vpop.f32.mrb[0].mxu0
        %v3150 = vadd.f32 0.0, %v3149
        %v3151 = vpop.f32.mrb[0].mxu0
        %v3152 = vpop.f32.mrb[0].mxu0
        %v3153 = vadd.f32 0.0, %v3152
        %v3154 = vpop.f32.mrb[0].mxu0
        %3155 = vmatprep.mubr.bf16.mxu0 %v2573
        %3156 = vmatmul.mubr.bf16.gmra.mrb[0].mxu0 %v2514
        %v3157 = vpop.f32.mrb[0].mxu0
        %v3158 = vadd.f32 0.0, %v3157
        %v3159 = vpop.f32.mrb[0].mxu0
        %v3160 = vpop.f32.mrb[0].mxu0
        %v3161 = vadd.f32 0.0, %v3160
        %v3162 = vpop.f32.mrb[0].mxu0
        %3163 = vmatprep.mubr.bf16.mxu0 %v2577
        %3164 = vmatmul.mubr.bf16.gmra.mrb[0].mxu0 %v2517
        %v3165 = vpop.f32.mrb[0].mxu0
        %v3166 = vadd.f32 0.0, %v3165
        %v3167 = vpop.f32.mrb[0].mxu0
        %v3168 = vpop.f32.mrb[0].mxu0
        %v3169 = vadd.f32 0.0, %v3168
        %v3170 = vpop.f32.mrb[0].mxu0
        %3171 = vmatprep.mubr.bf16.mxu0 %v2581
        %3172 = vmatmul.mubr.bf16.gmra.mrb[0].mxu0 %v2520
        %v3173 = vpop.f32.mrb[0].mxu0
        %v3174 = vadd.f32 0.0, %v3173
        %v3175 = vpop.f32.mrb[0].mxu0
        %v3176 = vpop.f32.mrb[0].mxu0
        %v3177 = vadd.f32 0.0, %v3176
        %v3178 = vpop.f32.mrb[0].mxu0
        %3179 = vmatprep.mubr.bf16.mxu0 %v2585
        %3180 = vmatmul.mubr.bf16.gmra.mrb[0].mxu0 %v2523
        %v3181 = vpop.f32.mrb[0].mxu0
        %v3182 = vadd.f32 0.0, %v3181
        %v3183 = vpop.f32.mrb[0].mxu0
        %v3184 = vpop.f32.mrb[0].mxu0
        %v3185 = vadd.f32 0.0, %v3184
        %v3186 = vpop.f32.mrb[0].mxu0
        %3187 = vmatprep.mubr.bf16.mxu0 %v2589
        %3188 = vmatmul.mubr.bf16.gmra.mrb[0].mxu0 %v2526
        %v3189 = vpop.f32.mrb[0].mxu0
        %v3190 = vadd.f32 0.0, %v3189
        %v3191 = vpop.f32.mrb[0].mxu0
        %v3192 = vpop.f32.mrb[0].mxu0
        %v3193 = vadd.f32 0.0, %v3192
        %v3194 = vpop.f32.mrb[0].mxu0
        %3195 = vmatprep.mubr.bf16.mxu0 %v2593
        %3196 = vmatmul.mubr.bf16.gmra.mrb[0].mxu0 %v2529
        %v3197 = vpop.f32.mrb[0].mxu0
        %v3198 = vadd.f32 0.0, %v3197
        %v3199 = vpop.f32.mrb[0].mxu0
        %v3200 = vpop.f32.mrb[0].mxu0
        %v3201 = vadd.f32 0.0, %v3200
        %v3202 = vpop.f32.mrb[0].mxu0
        %3203 = vdwg.mxu0
        %3204 = vmatprep.subr.bf16.mxu0 0
        %3205 = vmatpush1.bf16.msra.mxu0 %v2939
        %3206 = vmatprep.subr.bf16.mxu0 0
        %3207 = vmatpush1.bf16.msra.mxu0 %v2940
        %3208 = vmatprep.subr.bf16.mxu0 0
        %3209 = vmatpush1.bf16.msra.mxu0 %v2941
        %3210 = vmatprep.subr.bf16.mxu0 0
        %3211 = vmatpush1.bf16.msra.mxu0 %v2942
        %3212 = vmatprep.subr.bf16.mxu0 0
        %3213 = vmatpush1.bf16.msra.mxu0 %v2943
        %3214 = vmatprep.subr.bf16.mxu0 0
        %3215 = vmatpush1.bf16.msra.mxu0 %v2944
        %3216 = vmatprep.subr.bf16.mxu0 0
        %3217 = vmatpush1.bf16.msra.mxu0 %v2945
        %3218 = vmatprep.subr.bf16.mxu0 0
        %3219 = vmatpush1.bf16.msra.mxu0 %v2946
        %3220 = vmatprep.subr.bf16.mxu0 0
        %3221 = vmatpush1.bf16.msra.mxu0 %v2947
        %3222 = vmatprep.subr.bf16.mxu0 0
        %3223 = vmatpush1.bf16.msra.mxu0 %v2948
        %3224 = vmatprep.subr.bf16.mxu0 0
        %3225 = vmatpush1.bf16.msra.mxu0 %v2949
        %3226 = vmatprep.subr.bf16.mxu0 0
        %3227 = vmatpush1.bf16.msra.mxu0 %v2950
        %3228 = vmatprep.subr.bf16.mxu0 0
        %3229 = vmatpush1.bf16.msra.mxu0 %v2951
        %3230 = vmatprep.subr.bf16.mxu0 0
        %3231 = vmatpush1.bf16.msra.mxu0 %v2952
        %3232 = vmatprep.subr.bf16.mxu0 0
        %3233 = vmatpush1.bf16.msra.mxu0 %v2953
        %3234 = vmatprep.subr.bf16.mxu0 0
        %3235 = vmatpush1.bf16.msra.mxu0 %v2954
        %3236 = vmatprep.mubr.bf16.mxu0 %v2660
        %3237 = vmatmul.mubr.bf16.gmra.mrb[0].mxu0 %v2597
        %v3238 = vpop.f32.mrb[0].mxu0
        %v3239 = vadd.f32 %v3078, %v3238
        %v3240 = vpop.f32.mrb[0].mxu0
        %v3241 = vpop.f32.mrb[0].mxu0
        %v3242 = vadd.f32 %v3081, %v3241
        %v3243 = vpop.f32.mrb[0].mxu0
        %3244 = vmatprep.mubr.bf16.mxu0 %v2663
        %3245 = vmatmul.mubr.bf16.gmra.mrb[0].mxu0 %v2601
        %v3246 = vpop.f32.mrb[0].mxu0
        %v3247 = vadd.f32 %v3086, %v3246
        %v3248 = vpop.f32.mrb[0].mxu0
        %v3249 = vpop.f32.mrb[0].mxu0
        %v3250 = vadd.f32 %v3089, %v3249
        %v3251 = vpop.f32.mrb[0].mxu0
        %3252 = vmatprep.mubr.bf16.mxu0 %v2666
        %3253 = vmatmul.mubr.bf16.gmra.mrb[0].mxu0 %v2605
        %v3254 = vpop.f32.mrb[0].mxu0
        %v3255 = vadd.f32 %v3094, %v3254
        %v3256 = vpop.f32.mrb[0].mxu0
        %v3257 = vpop.f32.mrb[0].mxu0
        %v3258 = vadd.f32 %v3097, %v3257
        %v3259 = vpop.f32.mrb[0].mxu0
        %3260 = vmatprep.mubr.bf16.mxu0 %v2669
        %3261 = vmatmul.mubr.bf16.gmra.mrb[0].mxu0 %v2609
        %v3262 = vpop.f32.mrb[0].mxu0
        %v3263 = vadd.f32 %v3102, %v3262
        %v3264 = vpop.f32.mrb[0].mxu0
        %v3265 = vpop.f32.mrb[0].mxu0
        %v3266 = vadd.f32 %v3105, %v3265
        %v3267 = vpop.f32.mrb[0].mxu0
        %3268 = vmatprep.mubr.bf16.mxu0 %v2672
        %3269 = vmatmul.mubr.bf16.gmra.mrb[0].mxu0 %v2613
        %v3270 = vpop.f32.mrb[0].mxu0
        %v3271 = vadd.f32 %v3110, %v3270
        %v3272 = vpop.f32.mrb[0].mxu0
        %v3273 = vpop.f32.mrb[0].mxu0
        %v3274 = vadd.f32 %v3113, %v3273
        %v3275 = vpop.f32.mrb[0].mxu0
        %3276 = vmatprep.mubr.bf16.mxu0 %v2675
        %3277 = vmatmul.mubr.bf16.gmra.mrb[0].mxu0 %v2617
        %v3278 = vpop.f32.mrb[0].mxu0
        %v3279 = vadd.f32 %v3118, %v3278
        %v3280 = vpop.f32.mrb[0].mxu0
        %v3281 = vpop.f32.mrb[0].mxu0
        %v3282 = vadd.f32 %v3121, %v3281
        %v3283 = vpop.f32.mrb[0].mxu0
        %3284 = vmatprep.mubr.bf16.mxu0 %v2678
        %3285 = vmatmul.mubr.bf16.gmra.mrb[0].mxu0 %v2621
        %v3286 = vpop.f32.mrb[0].mxu0
        %v3287 = vadd.f32 %v3126, %v3286
        %v3288 = vpop.f32.mrb[0].mxu0
        %v3289 = vpop.f32.mrb[0].mxu0
        %v3290 = vadd.f32 %v3129, %v3289
        %v3291 = vpop.f32.mrb[0].mxu0
        %3292 = vmatprep.mubr.bf16.mxu0 %v2681
        %3293 = vmatmul.mubr.bf16.gmra.mrb[0].mxu0 %v2625
        %v3294 = vpop.f32.mrb[0].mxu0
        %v3295 = vadd.f32 %v3134, %v3294
        %v3296 = vpop.f32.mrb[0].mxu0
        %v3297 = vpop.f32.mrb[0].mxu0
        %v3298 = vadd.f32 %v3137, %v3297
        %v3299 = vpop.f32.mrb[0].mxu0
        %3300 = vmatprep.mubr.bf16.mxu0 %v2684
        %3301 = vmatmul.mubr.bf16.gmra.mrb[0].mxu0 %v2629
        %v3302 = vpop.f32.mrb[0].mxu0
        %v3303 = vadd.f32 %v3142, %v3302
        %v3304 = vpop.f32.mrb[0].mxu0
        %v3305 = vpop.f32.mrb[0].mxu0
        %v3306 = vadd.f32 %v3145, %v3305
        %v3307 = vpop.f32.mrb[0].mxu0
        %3308 = vmatprep.mubr.bf16.mxu0 %v2687
        %3309 = vmatmul.mubr.bf16.gmra.mrb[0].mxu0 %v2633
        %v3310 = vpop.f32.mrb[0].mxu0
        %v3311 = vadd.f32 %v3150, %v3310
        %v3312 = vpop.f32.mrb[0].mxu0
        %v3313 = vpop.f32.mrb[0].mxu0
        %v3314 = vadd.f32 %v3153, %v3313
        %v3315 = vpop.f32.mrb[0].mxu0
        %3316 = vmatprep.mubr.bf16.mxu0 %v2690
        %3317 = vmatmul.mubr.bf16.gmra.mrb[0].mxu0 %v2637
        %v3318 = vpop.f32.mrb[0].mxu0
        %v3319 = vadd.f32 %v3158, %v3318
        %v3320 = vpop.f32.mrb[0].mxu0
        %v3321 = vpop.f32.mrb[0].mxu0
        %v3322 = vadd.f32 %v3161, %v3321
        %v3323 = vpop.f32.mrb[0].mxu0
        %3324 = vmatprep.mubr.bf16.mxu0 %v2693
        %3325 = vmatmul.mubr.bf16.gmra.mrb[0].mxu0 %v2641
        %v3326 = vpop.f32.mrb[0].mxu0
        %v3327 = vadd.f32 %v3166, %v3326
        %v3328 = vpop.f32.mrb[0].mxu0
        %v3329 = vpop.f32.mrb[0].mxu0
        %v3330 = vadd.f32 %v3169, %v3329
        %v3331 = vpop.f32.mrb[0].mxu0
        %3332 = vmatprep.mubr.bf16.mxu0 %v2696
        %3333 = vmatmul.mubr.bf16.gmra.mrb[0].mxu0 %v2645
        %v3334 = vpop.f32.mrb[0].mxu0
        %v3335 = vadd.f32 %v3174, %v3334
        %v3336 = vpop.f32.mrb[0].mxu0
        %v3337 = vpop.f32.mrb[0].mxu0
        %v3338 = vadd.f32 %v3177, %v3337
        %v3339 = vpop.f32.mrb[0].mxu0
        %3340 = vmatprep.mubr.bf16.mxu0 %v2699
        %3341 = vmatmul.mubr.bf16.gmra.mrb[0].mxu0 %v2649
        %v3342 = vpop.f32.mrb[0].mxu0
        %v3343 = vadd.f32 %v3182, %v3342
        %v3344 = vpop.f32.mrb[0].mxu0
        %v3345 = vpop.f32.mrb[0].mxu0
        %v3346 = vadd.f32 %v3185, %v3345
        %v3347 = vpop.f32.mrb[0].mxu0
        %3348 = vmatprep.mubr.bf16.mxu0 %v2702
        %3349 = vmatmul.mubr.bf16.gmra.mrb[0].mxu0 %v2653
        %v3350 = vpop.f32.mrb[0].mxu0
        %v3351 = vadd.f32 %v3190, %v3350
        %v3352 = vpop.f32.mrb[0].mxu0
        %v3353 = vpop.f32.mrb[0].mxu0
        %v3354 = vadd.f32 %v3193, %v3353
        %v3355 = vpop.f32.mrb[0].mxu0
        %3356 = vmatprep.mubr.bf16.mxu0 %v2705
        %3357 = vmatmul.mubr.bf16.gmra.mrb[0].mxu0 %v2657
        %v3358 = vpop.f32.mrb[0].mxu0
        %v3359 = vadd.f32 %v3198, %v3358
        %v3360 = vpop.f32.mrb[0].mxu0
        %v3361 = vpop.f32.mrb[0].mxu0
        %v3362 = vadd.f32 %v3201, %v3361
        %v3363 = vpop.f32.mrb[0].mxu0
        %3364 = vdwg.mxu0
        %3365 = vmatprep.subr.bf16.mxu0 0
        %3366 = vmatpush1.bf16.msra.mxu0 %v2955
        %3367 = vmatprep.subr.bf16.mxu0 0
        %3368 = vmatpush1.bf16.msra.mxu0 %v2956
        %3369 = vmatprep.subr.bf16.mxu0 0
        %3370 = vmatpush1.bf16.msra.mxu0 %v2957
        %3371 = vmatprep.subr.bf16.mxu0 0
        %3372 = vmatpush1.bf16.msra.mxu0 %v2958
        %3373 = vmatprep.subr.bf16.mxu0 0
        %3374 = vmatpush1.bf16.msra.mxu0 0
        %3375 = vmatprep.subr.bf16.mxu0 0
        %3376 = vmatpush1.bf16.msra.mxu0 0
        %3377 = vmatprep.subr.bf16.mxu0 0
        %3378 = vmatpush1.bf16.msra.mxu0 0
        %3379 = vmatprep.subr.bf16.mxu0 0
        %3380 = vmatpush1.bf16.msra.mxu0 0
        %3381 = vmatprep.subr.bf16.mxu0 0
        %3382 = vmatpush1.bf16.msra.mxu0 0
        %3383 = vmatprep.subr.bf16.mxu0 0
        %3384 = vmatpush1.bf16.msra.mxu0 0
        %3385 = vmatprep.subr.bf16.mxu0 0
        %3386 = vmatpush1.bf16.msra.mxu0 0
        %3387 = vmatprep.subr.bf16.mxu0 0
        %3388 = vmatpush1.bf16.msra.mxu0 0
        %3389 = vmatprep.subr.bf16.mxu0 0
        %3390 = vmatpush1.bf16.msra.mxu0 0
        %3391 = vmatprep.subr.bf16.mxu0 0
        %3392 = vmatpush1.bf16.msra.mxu0 0
        %3393 = vmatprep.subr.bf16.mxu0 0
        %3394 = vmatpush1.bf16.msra.mxu0 0
        %3395 = vmatprep.subr.bf16.mxu0 0
        %3396 = vmatpush1.bf16.msra.mxu0 0
        %3397 = vmatprep.mubr.bf16.mxu0 0
        %3398 = vmatmul.mubr.bf16.gmra.mrb[0].mxu0 %v2996
        %v3399 = vpop.f32.mrb[0].mxu0
        %v3400 = vadd.f32 %v3239, %v3399
        %v3401 = vpop.f32.mrb[0].mxu0
        %v3402 = vpop.f32.mrb[0].mxu0
        %v3403 = vadd.f32 %v3242, %v3402
        %v3404 = vpop.f32.mrb[0].mxu0
        %3405 = vmatprep.mubr.bf16.mxu0 0
        %3406 = vmatmul.mubr.bf16.gmra.mrb[0].mxu0 %v2999
        %v3407 = vpop.f32.mrb[0].mxu0
        %v3408 = vadd.f32 %v3247, %v3407
        %v3409 = vpop.f32.mrb[0].mxu0
        %v3410 = vpop.f32.mrb[0].mxu0
        %v3411 = vadd.f32 %v3250, %v3410
        %v3412 = vpop.f32.mrb[0].mxu0
        %3413 = vmatprep.mubr.bf16.mxu0 0
        %3414 = vmatmul.mubr.bf16.gmra.mrb[0].mxu0 %v3002
        %v3415 = vpop.f32.mrb[0].mxu0
        %v3416 = vadd.f32 %v3255, %v3415
        %v3417 = vpop.f32.mrb[0].mxu0
        %v3418 = vpop.f32.mrb[0].mxu0
        %v3419 = vadd.f32 %v3258, %v3418
        %v3420 = vpop.f32.mrb[0].mxu0
        %3421 = vmatprep.mubr.bf16.mxu0 0
        %3422 = vmatmul.mubr.bf16.gmra.mrb[0].mxu0 %v3005
        %v3423 = vpop.f32.mrb[0].mxu0
        %v3424 = vadd.f32 %v3263, %v3423
        %v3425 = vpop.f32.mrb[0].mxu0
        %v3426 = vpop.f32.mrb[0].mxu0
        %v3427 = vadd.f32 %v3266, %v3426
        %v3428 = vpop.f32.mrb[0].mxu0
        %3429 = vmatprep.mubr.bf16.mxu0 0
        %3430 = vmatmul.mubr.bf16.gmra.mrb[0].mxu0 %v3008
        %v3431 = vpop.f32.mrb[0].mxu0
        %v3432 = vadd.f32 %v3271, %v3431
        %v3433 = vpop.f32.mrb[0].mxu0
        %v3434 = vpop.f32.mrb[0].mxu0
        %v3435 = vadd.f32 %v3274, %v3434
        %v3436 = vpop.f32.mrb[0].mxu0
        %3437 = vmatprep.mubr.bf16.mxu0 0
        %3438 = vmatmul.mubr.bf16.gmra.mrb[0].mxu0 %v3011
        %v3439 = vpop.f32.mrb[0].mxu0
        %v3440 = vadd.f32 %v3279, %v3439
        %v3441 = vpop.f32.mrb[0].mxu0
        %v3442 = vpop.f32.mrb[0].mxu0
        %v3443 = vadd.f32 %v3282, %v3442
        %v3444 = vpop.f32.mrb[0].mxu0
        %3445 = vmatprep.mubr.bf16.mxu0 0
        %3446 = vmatmul.mubr.bf16.gmra.mrb[0].mxu0 %v3014
        %v3447 = vpop.f32.mrb[0].mxu0
        %v3448 = vadd.f32 %v3287, %v3447
        %v3449 = vpop.f32.mrb[0].mxu0
        %v3450 = vpop.f32.mrb[0].mxu0
        %v3451 = vadd.f32 %v3290, %v3450
        %v3452 = vpop.f32.mrb[0].mxu0
        %3453 = vmatprep.mubr.bf16.mxu0 0
        %3454 = vmatmul.mubr.bf16.gmra.mrb[0].mxu0 %v3017
        %v3455 = vpop.f32.mrb[0].mxu0
        %v3456 = vadd.f32 %v3295, %v3455
        %v3457 = vpop.f32.mrb[0].mxu0
        %v3458 = vpop.f32.mrb[0].mxu0
        %v3459 = vadd.f32 %v3298, %v3458
        %v3460 = vpop.f32.mrb[0].mxu0
        %3461 = vmatprep.mubr.bf16.mxu0 0
        %3462 = vmatmul.mubr.bf16.gmra.mrb[0].mxu0 %v3020
        %v3463 = vpop.f32.mrb[0].mxu0
        %v3464 = vadd.f32 %v3303, %v3463
        %v3465 = vpop.f32.mrb[0].mxu0
        %v3466 = vpop.f32.mrb[0].mxu0
        %v3467 = vadd.f32 %v3306, %v3466
        %v3468 = vpop.f32.mrb[0].mxu0
        %3469 = vmatprep.mubr.bf16.mxu0 0
        %3470 = vmatmul.mubr.bf16.gmra.mrb[0].mxu0 %v3023
        %v3471 = vpop.f32.mrb[0].mxu0
        %v3472 = vadd.f32 %v3311, %v3471
        %v3473 = vpop.f32.mrb[0].mxu0
        %v3474 = vpop.f32.mrb[0].mxu0
        %v3475 = vadd.f32 %v3314, %v3474
        %v3476 = vpop.f32.mrb[0].mxu0
        %3477 = vmatprep.mubr.bf16.mxu0 0
        %3478 = vmatmul.mubr.bf16.gmra.mrb[0].mxu0 %v3026
        %v3479 = vpop.f32.mrb[0].mxu0
        %v3480 = vadd.f32 %v3319, %v3479
        %v3481 = vpop.f32.mrb[0].mxu0
        %v3482 = vpop.f32.mrb[0].mxu0
        %v3483 = vadd.f32 %v3322, %v3482
        %v3484 = vpop.f32.mrb[0].mxu0
        %3485 = vmatprep.mubr.bf16.mxu0 0
        %3486 = vmatmul.mubr.bf16.gmra.mrb[0].mxu0 %v3029
        %v3487 = vpop.f32.mrb[0].mxu0
        %v3488 = vadd.f32 %v3327, %v3487
        %v3489 = vpop.f32.mrb[0].mxu0
        %v3490 = vpop.f32.mrb[0].mxu0
        %v3491 = vadd.f32 %v3330, %v3490
        %v3492 = vpop.f32.mrb[0].mxu0
        %3493 = vmatprep.mubr.bf16.mxu0 0
        %3494 = vmatmul.mubr.bf16.gmra.mrb[0].mxu0 %v3032
        %v3495 = vpop.f32.mrb[0].mxu0
        %v3496 = vadd.f32 %v3335, %v3495
        %v3497 = vpop.f32.mrb[0].mxu0
        %v3498 = vpop.f32.mrb[0].mxu0
        %v3499 = vadd.f32 %v3338, %v3498
        %v3500 = vpop.f32.mrb[0].mxu0
        %3501 = vmatprep.mubr.bf16.mxu0 0
        %3502 = vmatmul.mubr.bf16.gmra.mrb[0].mxu0 %v3035
        %v3503 = vpop.f32.mrb[0].mxu0
        %v3504 = vadd.f32 %v3343, %v3503
        %v3505 = vpop.f32.mrb[0].mxu0
        %v3506 = vpop.f32.mrb[0].mxu0
        %v3507 = vadd.f32 %v3346, %v3506
        %v3508 = vpop.f32.mrb[0].mxu0
        %3509 = vmatprep.mubr.bf16.mxu0 0
        %3510 = vmatmul.mubr.bf16.gmra.mrb[0].mxu0 %v3038
        %v3511 = vpop.f32.mrb[0].mxu0
        %v3512 = vadd.f32 %v3351, %v3511
        %v3513 = vpop.f32.mrb[0].mxu0
        %v3514 = vpop.f32.mrb[0].mxu0
        %v3515 = vadd.f32 %v3354, %v3514
        %v3516 = vpop.f32.mrb[0].mxu0
        %3517 = vmatprep.mubr.bf16.mxu0 0
        %3518 = vmatmul.mubr.bf16.gmra.mrb[0].mxu0 %v3041
        %v3519 = vpop.f32.mrb[0].mxu0
        %v3520 = vadd.f32 %v3359, %v3519
        %v3521 = vpop.f32.mrb[0].mxu0
        %v3522 = vpop.f32.mrb[0].mxu0
        %v3523 = vadd.f32 %v3362, %v3522
        %v3524 = vpop.f32.mrb[0].mxu0
        %3525 = vdwg.mxu0
        %v3526 = vsel %vm2482, %v3400, 0.0
        %v3527 = vsel %vm2482, %v3403, 0.0
        %v3528 = vadd.f32 %v3526, %v3527
        %v3529 = vsel %vm2482, %v3408, 0.0
        %v3530 = vadd.f32 %v3528, %v3529
        %v3531 = vsel %vm2482, %v3411, 0.0
        %v3532 = vadd.f32 %v3530, %v3531
        %v3533 = vsel %vm2482, %v3416, 0.0
        %v3534 = vadd.f32 %v3532, %v3533
        %v3535 = vsel %vm2482, %v3419, 0.0
        %v3536 = vadd.f32 %v3534, %v3535
        %v3537 = vsel %vm2482, %v3424, 0.0
        %v3538 = vadd.f32 %v3536, %v3537
        %v3539 = vsel %vm2482, %v3427, 0.0
        %v3540 = vadd.f32 %v3538, %v3539
        %v3541 = vsel %vm2482, %v3432, 0.0
        %v3542 = vadd.f32 %v3540, %v3541
        %v3543 = vsel %vm2482, %v3435, 0.0
        %v3544 = vadd.f32 %v3542, %v3543
        %v3545 = vsel %vm2482, %v3440, 0.0
        %v3546 = vadd.f32 %v3544, %v3545
        %v3547 = vsel %vm2482, %v3443, 0.0
        %v3548 = vadd.f32 %v3546, %v3547
        %v3549 = vsel %vm2482, %v3448, 0.0
        %v3550 = vadd.f32 %v3548, %v3549
        %v3551 = vsel %vm2482, %v3451, 0.0
        %v3552 = vadd.f32 %v3550, %v3551
        %v3553 = vsel %vm2482, %v3456, 0.0
        %v3554 = vadd.f32 %v3552, %v3553
        %v3555 = vsel %vm2482, %v3459, 0.0
        %v3556 = vadd.f32 %v3554, %v3555
        %v3557 = vsel %vm2482, %v3464, 0.0
        %v3558 = vadd.f32 %v3556, %v3557
        %v3559 = vsel %vm2482, %v3467, 0.0
        %v3560 = vadd.f32 %v3558, %v3559
        %v3561 = vsel %vm2482, %v3472, 0.0
        %v3562 = vadd.f32 %v3560, %v3561
        %v3563 = vsel %vm2482, %v3475, 0.0
        %v3564 = vadd.f32 %v3562, %v3563
        %v3565 = vsel %vm2482, %v3480, 0.0
        %v3566 = vadd.f32 %v3564, %v3565
        %v3567 = vsel %vm2482, %v3483, 0.0
        %v3568 = vadd.f32 %v3566, %v3567
        %v3569 = vsel %vm2482, %v3488, 0.0
        %v3570 = vadd.f32 %v3568, %v3569
        %v3571 = vsel %vm2482, %v3491, 0.0
        %v3572 = vadd.f32 %v3570, %v3571
        %v3573 = vsel %vm2482, %v3496, 0.0
        %v3574 = vadd.f32 %v3572, %v3573
        %v3575 = vsel %vm2482, %v3499, 0.0
        %v3576 = vadd.f32 %v3574, %v3575
        %v3577 = vsel %vm2482, %v3504, 0.0
        %v3578 = vadd.f32 %v3576, %v3577
        %v3579 = vsel %vm2482, %v3507, 0.0
        %v3580 = vadd.f32 %v3578, %v3579
        %v3581 = vsel %vm2482, %v3512, 0.0
        %v3582 = vadd.f32 %v3580, %v3581
        %v3583 = vsel %vm2482, %v3515, 0.0
        %v3584 = vadd.f32 %v3582, %v3583
        %v3585 = vsel %vm2482, %v3520, 0.0
        %v3586 = vadd.f32 %v3584, %v3585
        %v3587 = vsel %vm2482, %v3523, 0.0
        %v3588 = vadd.f32 %v3586, %v3587
        %v3589 = vrot.slane %v3588, 4
        %v3590 = vadd.f32 %v3588, %v3589
        %v3591 = vrot.slane %v3590, 2
        %v3592 = vadd.f32 %v3590, %v3591
        %v3593 = vrot.slane %v3592, 1
        %v3594 = vadd.f32 %v3592, %v3593
        %v3595 = vmul.f32 %v3594, 0.00390625
        %v3596 = vmul.f32 %v3400, %v3400
        %v3597 = vmul.f32 %v3403, %v3403
        %v3598 = vmul.f32 %v3408, %v3408
        %v3599 = vmul.f32 %v3411, %v3411
        %v3600 = vmul.f32 %v3416, %v3416
        %v3601 = vmul.f32 %v3419, %v3419
        %v3602 = vmul.f32 %v3424, %v3424
        %v3603 = vmul.f32 %v3427, %v3427
        %v3604 = vmul.f32 %v3432, %v3432
        %v3605 = vmul.f32 %v3435, %v3435
        %v3606 = vmul.f32 %v3440, %v3440
        %v3607 = vmul.f32 %v3443, %v3443
        %v3608 = vmul.f32 %v3448, %v3448
        %v3609 = vmul.f32 %v3451, %v3451
        %v3610 = vmul.f32 %v3456, %v3456
        %v3611 = vmul.f32 %v3459, %v3459
        %v3612 = vmul.f32 %v3464, %v3464
        %v3613 = vmul.f32 %v3467, %v3467
        %v3614 = vmul.f32 %v3472, %v3472
        %v3615 = vmul.f32 %v3475, %v3475
        %v3616 = vmul.f32 %v3480, %v3480
        %v3617 = vmul.f32 %v3483, %v3483
        %v3618 = vmul.f32 %v3488, %v3488
        %v3619 = vmul.f32 %v3491, %v3491
        %v3620 = vmul.f32 %v3496, %v3496
        %v3621 = vmul.f32 %v3499, %v3499
        %v3622 = vmul.f32 %v3504, %v3504
        %v3623 = vmul.f32 %v3507, %v3507
        %v3624 = vmul.f32 %v3512, %v3512
        %v3625 = vmul.f32 %v3515, %v3515
        %v3626 = vmul.f32 %v3520, %v3520
        %v3627 = vmul.f32 %v3523, %v3523
        %v3628 = vsel %vm2482, %v3596, 0.0
        %v3629 = vsel %vm2482, %v3597, 0.0
        %v3630 = vadd.f32 %v3628, %v3629
        %v3631 = vsel %vm2482, %v3598, 0.0
        %v3632 = vadd.f32 %v3630, %v3631
        %v3633 = vsel %vm2482, %v3599, 0.0
        %v3634 = vadd.f32 %v3632, %v3633
        %v3635 = vsel %vm2482, %v3600, 0.0
        %v3636 = vadd.f32 %v3634, %v3635
        %v3637 = vsel %vm2482, %v3601, 0.0
        %v3638 = vadd.f32 %v3636, %v3637
        %v3639 = vsel %vm2482, %v3602, 0.0
        %v3640 = vadd.f32 %v3638, %v3639
        %v3641 = vsel %vm2482, %v3603, 0.0
        %v3642 = vadd.f32 %v3640, %v3641
        %v3643 = vsel %vm2482, %v3604, 0.0
        %v3644 = vadd.f32 %v3642, %v3643
        %v3645 = vsel %vm2482, %v3605, 0.0
        %v3646 = vadd.f32 %v3644, %v3645
        %v3647 = vsel %vm2482, %v3606, 0.0
        %v3648 = vadd.f32 %v3646, %v3647
        %v3649 = vsel %vm2482, %v3607, 0.0
        %v3650 = vadd.f32 %v3648, %v3649
        %v3651 = vsel %vm2482, %v3608, 0.0
        %v3652 = vadd.f32 %v3650, %v3651
        %v3653 = vsel %vm2482, %v3609, 0.0
        %v3654 = vadd.f32 %v3652, %v3653
        %v3655 = vsel %vm2482, %v3610, 0.0
        %v3656 = vadd.f32 %v3654, %v3655
        %v3657 = vsel %vm2482, %v3611, 0.0
        %v3658 = vadd.f32 %v3656, %v3657
        %v3659 = vsel %vm2482, %v3612, 0.0
        %v3660 = vadd.f32 %v3658, %v3659
        %v3661 = vsel %vm2482, %v3613, 0.0
        %v3662 = vadd.f32 %v3660, %v3661
        %v3663 = vsel %vm2482, %v3614, 0.0
        %v3664 = vadd.f32 %v3662, %v3663
        %v3665 = vsel %vm2482, %v3615, 0.0
        %v3666 = vadd.f32 %v3664, %v3665
        %v3667 = vsel %vm2482, %v3616, 0.0
        %v3668 = vadd.f32 %v3666, %v3667
        %v3669 = vsel %vm2482, %v3617, 0.0
        %v3670 = vadd.f32 %v3668, %v3669
        %v3671 = vsel %vm2482, %v3618, 0.0
        %v3672 = vadd.f32 %v3670, %v3671
        %v3673 = vsel %vm2482, %v3619, 0.0
        %v3674 = vadd.f32 %v3672, %v3673
        %v3675 = vsel %vm2482, %v3620, 0.0
        %v3676 = vadd.f32 %v3674, %v3675
        %v3677 = vsel %vm2482, %v3621, 0.0
        %v3678 = vadd.f32 %v3676, %v3677
        %v3679 = vsel %vm2482, %v3622, 0.0
        %v3680 = vadd.f32 %v3678, %v3679
        %v3681 = vsel %vm2482, %v3623, 0.0
        %v3682 = vadd.f32 %v3680, %v3681
        %v3683 = vsel %vm2482, %v3624, 0.0
        %v3684 = vadd.f32 %v3682, %v3683
        %v3685 = vsel %vm2482, %v3625, 0.0
        %v3686 = vadd.f32 %v3684, %v3685
        %v3687 = vsel %vm2482, %v3626, 0.0
        %v3688 = vadd.f32 %v3686, %v3687
        %v3689 = vsel %vm2482, %v3627, 0.0
        %v3690 = vadd.f32 %v3688, %v3689
        %v3691 = vrot.slane %v3690, 4
        %v3692 = vadd.f32 %v3690, %v3691
        %v3693 = vrot.slane %v3692, 2
        %v3694 = vadd.f32 %v3692, %v3693
        %v3695 = vrot.slane %v3694, 1
        %v3696 = vadd.f32 %v3694, %v3695
        %v3697 = vmul.f32 %v3696, 0.00390625
        %v3698 = vmul.f32 %v3595, %v3595
        %v3699 = vsub.f32 %v3697, %v3698
        %v3700 = vsub.f32 %v3400, %v3595
        %v3701 = vsub.f32 %v3403, %v3595
        %v3702 = vsub.f32 %v3408, %v3595
        %v3703 = vsub.f32 %v3411, %v3595
        %v3704 = vsub.f32 %v3416, %v3595
        %v3705 = vsub.f32 %v3419, %v3595
        %v3706 = vsub.f32 %v3424, %v3595
        %v3707 = vsub.f32 %v3427, %v3595
        %v3708 = vsub.f32 %v3432, %v3595
        %v3709 = vsub.f32 %v3435, %v3595
        %v3710 = vsub.f32 %v3440, %v3595
        %v3711 = vsub.f32 %v3443, %v3595
        %v3712 = vsub.f32 %v3448, %v3595
        %v3713 = vsub.f32 %v3451, %v3595
        %v3714 = vsub.f32 %v3456, %v3595
        %v3715 = vsub.f32 %v3459, %v3595
        %v3716 = vsub.f32 %v3464, %v3595
        %v3717 = vsub.f32 %v3467, %v3595
        %v3718 = vsub.f32 %v3472, %v3595
        %v3719 = vsub.f32 %v3475, %v3595
        %v3720 = vsub.f32 %v3480, %v3595
        %v3721 = vsub.f32 %v3483, %v3595
        %v3722 = vsub.f32 %v3488, %v3595
        %v3723 = vsub.f32 %v3491, %v3595
        %v3724 = vsub.f32 %v3496, %v3595
        %v3725 = vsub.f32 %v3499, %v3595
        %v3726 = vsub.f32 %v3504, %v3595
        %v3727 = vsub.f32 %v3507, %v3595
        %v3728 = vsub.f32 %v3512, %v3595
        %v3729 = vsub.f32 %v3515, %v3595
        %v3730 = vsub.f32 %v3520, %v3595
        %v3731 = vsub.f32 %v3523, %v3595
        %v3732 = vadd.f32 %v3699, 1e-05
        %v3733 = vrsqrt.pop %v3732
        %v3734 = vmul.f32 %v3700, %v3733
        %v3735 = vmul.f32 %v3701, %v3733
        %v3736 = vmul.f32 %v3702, %v3733
        %v3737 = vmul.f32 %v3703, %v3733
        %v3738 = vmul.f32 %v3704, %v3733
        %v3739 = vmul.f32 %v3705, %v3733
        %v3740 = vmul.f32 %v3706, %v3733
        %v3741 = vmul.f32 %v3707, %v3733
        %v3742 = vmul.f32 %v3708, %v3733
        %v3743 = vmul.f32 %v3709, %v3733
        %v3744 = vmul.f32 %v3710, %v3733
        %v3745 = vmul.f32 %v3711, %v3733
        %v3746 = vmul.f32 %v3712, %v3733
        %v3747 = vmul.f32 %v3713, %v3733
        %v3748 = vmul.f32 %v3714, %v3733
        %v3749 = vmul.f32 %v3715, %v3733
        %v3750 = vmul.f32 %v3716, %v3733
        %v3751 = vmul.f32 %v3717, %v3733
        %v3752 = vmul.f32 %v3718, %v3733
        %v3753 = vmul.f32 %v3719, %v3733
        %v3754 = vmul.f32 %v3720, %v3733
        %v3755 = vmul.f32 %v3721, %v3733
        %v3756 = vmul.f32 %v3722, %v3733
        %v3757 = vmul.f32 %v3723, %v3733
        %v3758 = vmul.f32 %v3724, %v3733
        %v3759 = vmul.f32 %v3725, %v3733
        %v3760 = vmul.f32 %v3726, %v3733
        %v3761 = vmul.f32 %v3727, %v3733
        %v3762 = vmul.f32 %v3728, %v3733
        %v3763 = vmul.f32 %v3729, %v3733
        %v3764 = vmul.f32 %v3730, %v3733
        %v3765 = vmul.f32 %v3731, %v3733
        %vm3766 = vcmp.ge.f32.partialorder %v3734, 0.0
        %vm3767 = vcmp.ge.f32.partialorder %v3735, 0.0
        %vm3768 = vcmp.ge.f32.partialorder %v3736, 0.0
        %vm3769 = vcmp.ge.f32.partialorder %v3737, 0.0
        %vm3770 = vcmp.ge.f32.partialorder %v3738, 0.0
        %vm3771 = vcmp.ge.f32.partialorder %v3739, 0.0
        %vm3772 = vcmp.ge.f32.partialorder %v3740, 0.0
        %vm3773 = vcmp.ge.f32.partialorder %v3741, 0.0
        %vm3774 = vcmp.ge.f32.partialorder %v3742, 0.0
        %vm3775 = vcmp.ge.f32.partialorder %v3743, 0.0
        %vm3776 = vcmp.ge.f32.partialorder %v3744, 0.0
        %vm3777 = vcmp.ge.f32.partialorder %v3745, 0.0
        %vm3778 = vcmp.ge.f32.partialorder %v3746, 0.0
        %vm3779 = vcmp.ge.f32.partialorder %v3747, 0.0
        %vm3780 = vcmp.ge.f32.partialorder %v3748, 0.0
        %vm3781 = vcmp.ge.f32.partialorder %v3749, 0.0
        %vm3782 = vcmp.ge.f32.partialorder %v3750, 0.0
        %vm3783 = vcmp.ge.f32.partialorder %v3751, 0.0
        %vm3784 = vcmp.ge.f32.partialorder %v3752, 0.0
        %vm3785 = vcmp.ge.f32.partialorder %v3753, 0.0
        %vm3786 = vcmp.ge.f32.partialorder %v3754, 0.0
        %vm3787 = vcmp.ge.f32.partialorder %v3755, 0.0
        %vm3788 = vcmp.ge.f32.partialorder %v3756, 0.0
        %vm3789 = vcmp.ge.f32.partialorder %v3757, 0.0
        %vm3790 = vcmp.ge.f32.partialorder %v3758, 0.0
        %vm3791 = vcmp.ge.f32.partialorder %v3759, 0.0
        %vm3792 = vcmp.ge.f32.partialorder %v3760, 0.0
        %vm3793 = vcmp.ge.f32.partialorder %v3761, 0.0
        %vm3794 = vcmp.ge.f32.partialorder %v3762, 0.0
        %vm3795 = vcmp.ge.f32.partialorder %v3763, 0.0
        %vm3796 = vcmp.ge.f32.partialorder %v3764, 0.0
        %vm3797 = vcmp.ge.f32.partialorder %v3765, 0.0
        %v3798 = vmul.f32 %v3734, 0.01
        %v3799 = vmul.f32 %v3735, 0.01
        %v3800 = vmul.f32 %v3736, 0.01
        %v3801 = vmul.f32 %v3737, 0.01
        %v3802 = vmul.f32 %v3738, 0.01
        %v3803 = vmul.f32 %v3739, 0.01
        %v3804 = vmul.f32 %v3740, 0.01
        %v3805 = vmul.f32 %v3741, 0.01
        %v3806 = vmul.f32 %v3742, 0.01
        %v3807 = vmul.f32 %v3743, 0.01
        %v3808 = vmul.f32 %v3744, 0.01
        %v3809 = vmul.f32 %v3745, 0.01
        %v3810 = vmul.f32 %v3746, 0.01
        %v3811 = vmul.f32 %v3747, 0.01
        %v3812 = vmul.f32 %v3748, 0.01
        %v3813 = vmul.f32 %v3749, 0.01
        %v3814 = vmul.f32 %v3750, 0.01
        %v3815 = vmul.f32 %v3751, 0.01
        %v3816 = vmul.f32 %v3752, 0.01
        %v3817 = vmul.f32 %v3753, 0.01
        %v3818 = vmul.f32 %v3754, 0.01
        %v3819 = vmul.f32 %v3755, 0.01
        %v3820 = vmul.f32 %v3756, 0.01
        %v3821 = vmul.f32 %v3757, 0.01
        %v3822 = vmul.f32 %v3758, 0.01
        %v3823 = vmul.f32 %v3759, 0.01
        %v3824 = vmul.f32 %v3760, 0.01
        %v3825 = vmul.f32 %v3761, 0.01
        %v3826 = vmul.f32 %v3762, 0.01
        %v3827 = vmul.f32 %v3763, 0.01
        %v3828 = vmul.f32 %v3764, 0.01
        %v3829 = vmul.f32 %v3765, 0.01
        %v3830 = vsel %vm3766, %v3734, %v3798
        %v3831 = vsel %vm3767, %v3735, %v3799
        %v3832 = vsel %vm3768, %v3736, %v3800
        %v3833 = vsel %vm3769, %v3737, %v3801
        %v3834 = vsel %vm3770, %v3738, %v3802
        %v3835 = vsel %vm3771, %v3739, %v3803
        %v3836 = vsel %vm3772, %v3740, %v3804
        %v3837 = vsel %vm3773, %v3741, %v3805
        %v3838 = vsel %vm3774, %v3742, %v3806
        %v3839 = vsel %vm3775, %v3743, %v3807
        %v3840 = vsel %vm3776, %v3744, %v3808
        %v3841 = vsel %vm3777, %v3745, %v3809
        %v3842 = vsel %vm3778, %v3746, %v3810
        %v3843 = vsel %vm3779, %v3747, %v3811
        %v3844 = vsel %vm3780, %v3748, %v3812
        %v3845 = vsel %vm3781, %v3749, %v3813
        %v3846 = vsel %vm3782, %v3750, %v3814
        %v3847 = vsel %vm3783, %v3751, %v3815
        %v3848 = vsel %vm3784, %v3752, %v3816
        %v3849 = vsel %vm3785, %v3753, %v3817
        %v3850 = vsel %vm3786, %v3754, %v3818
        %v3851 = vsel %vm3787, %v3755, %v3819
        %v3852 = vsel %vm3788, %v3756, %v3820
        %v3853 = vsel %vm3789, %v3757, %v3821
        %v3854 = vsel %vm3790, %v3758, %v3822
        %v3855 = vsel %vm3791, %v3759, %v3823
        %v3856 = vsel %vm3792, %v3760, %v3824
        %v3857 = vsel %vm3793, %v3761, %v3825
        %v3858 = vsel %vm3794, %v3762, %v3826
        %v3859 = vsel %vm3795, %v3763, %v3827
        %v3860 = vsel %vm3796, %v3764, %v3828
        %v3861 = vsel %vm3797, %v3765, %v3829
        %v3862 = vpack.c.bf16 %v3831, %v3830
        %v3863 = vpack.c.bf16 %v3833, %v3832
        %v3864 = vpack.c.bf16 %v3835, %v3834
        %v3865 = vpack.c.bf16 %v3837, %v3836
        %v3866 = vpack.c.bf16 %v3839, %v3838
        %v3867 = vpack.c.bf16 %v3841, %v3840
        %v3868 = vpack.c.bf16 %v3843, %v3842
        %v3869 = vpack.c.bf16 %v3845, %v3844
        %v3870 = vpack.c.bf16 %v3847, %v3846
        %v3871 = vpack.c.bf16 %v3849, %v3848
        %v3872 = vpack.c.bf16 %v3851, %v3850
        %v3873 = vpack.c.bf16 %v3853, %v3852
        %v3874 = vpack.c.bf16 %v3855, %v3854
        %v3875 = vpack.c.bf16 %v3857, %v3856
        %v3876 = vpack.c.bf16 %v3859, %v3858
        %v3877 = vpack.c.bf16 %v3861, %v3860
        %v3894 = vunpack.c.l.b16 %v3862
        %v3895 = vunpack.c.h.b16 %v3862
        %v3896 = vunpack.c.l.b16 %v3863
        %v3897 = vunpack.c.h.b16 %v3863
        %v3898 = vunpack.c.l.b16 %v3864
        %v3899 = vunpack.c.h.b16 %v3864
        %v3900 = vunpack.c.l.b16 %v3865
        %v3901 = vunpack.c.h.b16 %v3865
        %v3902 = vunpack.c.l.b16 %v3866
        %v3903 = vunpack.c.h.b16 %v3866
        %v3904 = vunpack.c.l.b16 %v3867
        %v3905 = vunpack.c.h.b16 %v3867
        %v3906 = vunpack.c.l.b16 %v3868
        %v3907 = vunpack.c.h.b16 %v3868
        %v3908 = vunpack.c.l.b16 %v3869
        %v3909 = vunpack.c.h.b16 %v3869
        %v3910 = vunpack.c.l.b16 %v3870
        %v3911 = vunpack.c.h.b16 %v3870
        %v3912 = vunpack.c.l.b16 %v3871
        %v3913 = vunpack.c.h.b16 %v3871
        %v3914 = vunpack.c.l.b16 %v3872
        %v3915 = vunpack.c.h.b16 %v3872
        %v3916 = vunpack.c.l.b16 %v3873
        %v3917 = vunpack.c.h.b16 %v3873
        %v3918 = vunpack.c.l.b16 %v3874
        %v3919 = vunpack.c.h.b16 %v3874
        %v3920 = vunpack.c.l.b16 %v3875
        %v3921 = vunpack.c.h.b16 %v3875
        %v3922 = vunpack.c.l.b16 %v3876
        %v3923 = vunpack.c.h.b16 %v3876
        %v3924 = vunpack.c.l.b16 %v3877
        %v3925 = vunpack.c.h.b16 %v3877
        %v3926 = vpack.c.b16 %v3894, %v3894
        %v3927 = vpack.c.b16 %v3895, %v3895
        %v3928 = vpack.c.b16 %v3896, %v3896
        %v3929 = vpack.c.b16 %v3897, %v3897
        %v3930 = vpack.c.b16 %v3898, %v3898
        %v3931 = vpack.c.b16 %v3899, %v3899
        %v3932 = vpack.c.b16 %v3900, %v3900
        %v3933 = vpack.c.b16 %v3901, %v3901
        %v3934 = vpack.c.b16 %v3902, %v3902
        %v3935 = vpack.c.b16 %v3903, %v3903
        %v3936 = vpack.c.b16 %v3904, %v3904
        %v3937 = vpack.c.b16 %v3905, %v3905
        %v3938 = vpack.c.b16 %v3906, %v3906
        %v3939 = vpack.c.b16 %v3907, %v3907
        %v3940 = vpack.c.b16 %v3908, %v3908
        %v3941 = vpack.c.b16 %v3909, %v3909
        %v3942 = vpack.c.b16 %v3910, %v3910
        %v3943 = vpack.c.b16 %v3911, %v3911
        %v3944 = vpack.c.b16 %v3912, %v3912
        %v3945 = vpack.c.b16 %v3913, %v3913
        %v3946 = vpack.c.b16 %v3914, %v3914
        %v3947 = vpack.c.b16 %v3915, %v3915
        %v3948 = vpack.c.b16 %v3916, %v3916
        %v3949 = vpack.c.b16 %v3917, %v3917
        %v3950 = vpack.c.b16 %v3918, %v3918
        %v3951 = vpack.c.b16 %v3919, %v3919
        %v3952 = vpack.c.b16 %v3920, %v3920
        %v3953 = vpack.c.b16 %v3921, %v3921
        %v3954 = vpack.c.b16 %v3922, %v3922
        %v3955 = vpack.c.b16 %v3923, %v3923
        %v3956 = vpack.c.b16 %v3924, %v3924
        %v3957 = vpack.c.b16 %v3925, %v3925
        %v3959 = vshrl.u32 %v3926, 16
        %v3961 = vrot.slane %v3959, 7
        %v3962 = vshll.u32 %v3926, 16
        %v3964 = vor.u32 %v3961, %v3962
        %v3965 = vrot.slane %v3961, 4
        %v3967 = vshrl.u32 %v3927, 16
        %v3969 = vrot.slane %v3967, 7
        %v3970 = vshll.u32 %v3927, 16
        %v3972 = vor.u32 %v3969, %v3970
        %v3973 = vsel %vm475, %v3965, %v3972
        %v3974 = vrot.slane %v3969, 4
        %v3976 = vshrl.u32 %v3928, 16
        %v3978 = vrot.slane %v3976, 7
        %v3979 = vshll.u32 %v3928, 16
        %v3981 = vor.u32 %v3978, %v3979
        %v3982 = vrot.slane %v3978, 4
        %v3984 = vshrl.u32 %v3929, 16
        %v3986 = vrot.slane %v3984, 7
        %v3987 = vshll.u32 %v3929, 16
        %v3989 = vor.u32 %v3986, %v3987
        %v3990 = vsel %vm475, %v3982, %v3989
        %v3991 = vrot.slane %v3986, 4
        %v3993 = vshrl.u32 %v3930, 16
        %v3995 = vrot.slane %v3993, 7
        %v3996 = vshll.u32 %v3930, 16
        %v3998 = vor.u32 %v3995, %v3996
        %v3999 = vrot.slane %v3995, 4
        %v4001 = vshrl.u32 %v3931, 16
        %v4003 = vrot.slane %v4001, 7
        %v4004 = vshll.u32 %v3931, 16
        %v4006 = vor.u32 %v4003, %v4004
        %v4007 = vsel %vm475, %v3999, %v4006
        %v4008 = vrot.slane %v4003, 4
        %v4010 = vshrl.u32 %v3932, 16
        %v4012 = vrot.slane %v4010, 7
        %v4013 = vshll.u32 %v3932, 16
        %v4015 = vor.u32 %v4012, %v4013
        %v4016 = vrot.slane %v4012, 4
        %v4018 = vshrl.u32 %v3933, 16
        %v4020 = vrot.slane %v4018, 7
        %v4021 = vshll.u32 %v3933, 16
        %v4023 = vor.u32 %v4020, %v4021
        %v4024 = vsel %vm475, %v4016, %v4023
        %v4025 = vrot.slane %v4020, 4
        %v4027 = vshrl.u32 %v3934, 16
        %v4029 = vrot.slane %v4027, 7
        %v4030 = vshll.u32 %v3934, 16
        %v4032 = vor.u32 %v4029, %v4030
        %v4033 = vrot.slane %v4029, 4
        %v4035 = vshrl.u32 %v3935, 16
        %v4037 = vrot.slane %v4035, 7
        %v4038 = vshll.u32 %v3935, 16
        %v4040 = vor.u32 %v4037, %v4038
        %v4041 = vsel %vm475, %v4033, %v4040
        %v4042 = vrot.slane %v4037, 4
        %v4044 = vshrl.u32 %v3936, 16
        %v4046 = vrot.slane %v4044, 7
        %v4047 = vshll.u32 %v3936, 16
        %v4049 = vor.u32 %v4046, %v4047
        %v4050 = vrot.slane %v4046, 4
        %v4052 = vshrl.u32 %v3937, 16
        %v4054 = vrot.slane %v4052, 7
        %v4055 = vshll.u32 %v3937, 16
        %v4057 = vor.u32 %v4054, %v4055
        %v4058 = vsel %vm475, %v4050, %v4057
        %v4059 = vrot.slane %v4054, 4
        %v4061 = vshrl.u32 %v3938, 16
        %v4063 = vrot.slane %v4061, 7
        %v4064 = vshll.u32 %v3938, 16
        %v4066 = vor.u32 %v4063, %v4064
        %v4067 = vrot.slane %v4063, 4
        %v4069 = vshrl.u32 %v3939, 16
        %v4071 = vrot.slane %v4069, 7
        %v4072 = vshll.u32 %v3939, 16
        %v4074 = vor.u32 %v4071, %v4072
        %v4075 = vsel %vm475, %v4067, %v4074
        %v4076 = vrot.slane %v4071, 4
        %v4078 = vshrl.u32 %v3940, 16
        %v4080 = vrot.slane %v4078, 7
        %v4081 = vshll.u32 %v3940, 16
        %v4083 = vor.u32 %v4080, %v4081
        %v4084 = vrot.slane %v4080, 4
        %v4086 = vshrl.u32 %v3941, 16
        %v4088 = vrot.slane %v4086, 7
        %v4089 = vshll.u32 %v3941, 16
        %v4091 = vor.u32 %v4088, %v4089
        %v4092 = vsel %vm475, %v4084, %v4091
        %v4093 = vrot.slane %v4088, 4
        %v4095 = vshrl.u32 %v3942, 16
        %v4097 = vrot.slane %v4095, 7
        %v4098 = vshll.u32 %v3942, 16
        %v4100 = vor.u32 %v4097, %v4098
        %v4101 = vrot.slane %v4097, 4
        %v4103 = vshrl.u32 %v3943, 16
        %v4105 = vrot.slane %v4103, 7
        %v4106 = vshll.u32 %v3943, 16
        %v4108 = vor.u32 %v4105, %v4106
        %v4109 = vsel %vm475, %v4101, %v4108
        %v4110 = vrot.slane %v4105, 4
        %v4112 = vshrl.u32 %v3944, 16
        %v4114 = vrot.slane %v4112, 7
        %v4115 = vshll.u32 %v3944, 16
        %v4117 = vor.u32 %v4114, %v4115
        %v4118 = vrot.slane %v4114, 4
        %v4120 = vshrl.u32 %v3945, 16
        %v4122 = vrot.slane %v4120, 7
        %v4123 = vshll.u32 %v3945, 16
        %v4125 = vor.u32 %v4122, %v4123
        %v4126 = vsel %vm475, %v4118, %v4125
        %v4127 = vrot.slane %v4122, 4
        %v4129 = vshrl.u32 %v3946, 16
        %v4131 = vrot.slane %v4129, 7
        %v4132 = vshll.u32 %v3946, 16
        %v4134 = vor.u32 %v4131, %v4132
        %v4135 = vrot.slane %v4131, 4
        %v4137 = vshrl.u32 %v3947, 16
        %v4139 = vrot.slane %v4137, 7
        %v4140 = vshll.u32 %v3947, 16
        %v4142 = vor.u32 %v4139, %v4140
        %v4143 = vsel %vm475, %v4135, %v4142
        %v4144 = vrot.slane %v4139, 4
        %v4146 = vshrl.u32 %v3948, 16
        %v4148 = vrot.slane %v4146, 7
        %v4149 = vshll.u32 %v3948, 16
        %v4151 = vor.u32 %v4148, %v4149
        %v4152 = vrot.slane %v4148, 4
        %v4154 = vshrl.u32 %v3949, 16
        %v4156 = vrot.slane %v4154, 7
        %v4157 = vshll.u32 %v3949, 16
        %v4159 = vor.u32 %v4156, %v4157
        %v4160 = vsel %vm475, %v4152, %v4159
        %v4161 = vrot.slane %v4156, 4
        %v4163 = vshrl.u32 %v3950, 16
        %v4165 = vrot.slane %v4163, 7
        %v4166 = vshll.u32 %v3950, 16
        %v4168 = vor.u32 %v4165, %v4166
        %v4169 = vrot.slane %v4165, 4
        %v4171 = vshrl.u32 %v3951, 16
        %v4173 = vrot.slane %v4171, 7
        %v4174 = vshll.u32 %v3951, 16
        %v4176 = vor.u32 %v4173, %v4174
        %v4177 = vsel %vm475, %v4169, %v4176
        %v4178 = vrot.slane %v4173, 4
        %v4180 = vshrl.u32 %v3952, 16
        %v4182 = vrot.slane %v4180, 7
        %v4183 = vshll.u32 %v3952, 16
        %v4185 = vor.u32 %v4182, %v4183
        %v4186 = vrot.slane %v4182, 4
        %v4188 = vshrl.u32 %v3953, 16
        %v4190 = vrot.slane %v4188, 7
        %v4191 = vshll.u32 %v3953, 16
        %v4193 = vor.u32 %v4190, %v4191
        %v4194 = vsel %vm475, %v4186, %v4193
        %v4195 = vrot.slane %v4190, 4
        %v4197 = vshrl.u32 %v3954, 16
        %v4199 = vrot.slane %v4197, 7
        %v4200 = vshll.u32 %v3954, 16
        %v4202 = vor.u32 %v4199, %v4200
        %v4203 = vrot.slane %v4199, 4
        %v4205 = vshrl.u32 %v3955, 16
        %v4207 = vrot.slane %v4205, 7
        %v4208 = vshll.u32 %v3955, 16
        %v4210 = vor.u32 %v4207, %v4208
        %v4211 = vsel %vm475, %v4203, %v4210
        %v4212 = vrot.slane %v4207, 4
        %v4214 = vshrl.u32 %v3956, 16
        %v4216 = vrot.slane %v4214, 7
        %v4217 = vshll.u32 %v3956, 16
        %v4219 = vor.u32 %v4216, %v4217
        %v4220 = vrot.slane %v4216, 4
        %v4222 = vshrl.u32 %v3957, 16
        %v4224 = vrot.slane %v4222, 7
        %v4225 = vshll.u32 %v3957, 16
        %v4227 = vor.u32 %v4224, %v4225
        %v4228 = vsel %vm475, %v4220, %v4227
        %v4229 = vrot.slane %v4224, 4
        %v4278 = vsel %vm798, %v3964, %v975
        %4279 = vst [vmem:[%s796] sm:$0xf] %v4278
        %4280 = vst.msk [vmem:[%s796 + $0x4] sm:$0xf] %vm224, %v3973
        %v4281 = vld [vmem:[%s796 + $0x8] sm:$0x1]
        %v4282 = vsel %vm235, %v3974, %v4281
        %4283 = vst [vmem:[%s796 + $0x8] sm:$0x1] %v4282
        %v4284 = vld [vmem:[%s796 + $0xc] sm:$0xf]
        %v4285 = vsel %vm798, %v3981, %v4284
        %4286 = vst [vmem:[%s796 + $0xc] sm:$0xf] %v4285
        %4287 = vst.msk [vmem:[%s796 + $0x10] sm:$0xf] %vm224, %v3990
        %v4288 = vld [vmem:[%s796 + $0x14] sm:$0x1]
        %v4289 = vsel %vm235, %v3991, %v4288
        %4290 = vst [vmem:[%s796 + $0x14] sm:$0x1] %v4289
        %v4291 = vld [vmem:[%s796 + $0x18] sm:$0xf]
        %v4292 = vsel %vm798, %v3998, %v4291
        %4293 = vst [vmem:[%s796 + $0x18] sm:$0xf] %v4292
        %4294 = vst.msk [vmem:[%s796 + $0x1c] sm:$0xf] %vm224, %v4007
        %v4295 = vld [vmem:[%s796 + $0x20] sm:$0x1]
        %v4296 = vsel %vm235, %v4008, %v4295
        %4297 = vst [vmem:[%s796 + $0x20] sm:$0x1] %v4296
        %v4298 = vld [vmem:[%s796 + $0x24] sm:$0xf]
        %v4299 = vsel %vm798, %v4015, %v4298
        %4300 = vst [vmem:[%s796 + $0x24] sm:$0xf] %v4299
        %4301 = vst.msk [vmem:[%s796 + $0x28] sm:$0xf] %vm224, %v4024
        %v4302 = vld [vmem:[%s796 + $0x2c] sm:$0x1]
        %v4303 = vsel %vm235, %v4025, %v4302
        %4304 = vst [vmem:[%s796 + $0x2c] sm:$0x1] %v4303
        %v4305 = vld [vmem:[%s796 + $0x30] sm:$0xf]
        %v4306 = vsel %vm798, %v4032, %v4305
        %4307 = vst [vmem:[%s796 + $0x30] sm:$0xf] %v4306
        %4308 = vst.msk [vmem:[%s796 + $0x34] sm:$0xf] %vm224, %v4041
        %v4309 = vld [vmem:[%s796 + $0x38] sm:$0x1]
        %v4310 = vsel %vm235, %v4042, %v4309
        %4311 = vst [vmem:[%s796 + $0x38] sm:$0x1] %v4310
        %v4312 = vld [vmem:[%s796 + $0x3c] sm:$0xf]
        %v4313 = vsel %vm798, %v4049, %v4312
        %4314 = vst [vmem:[%s796 + $0x3c] sm:$0xf] %v4313
        %4315 = vst.msk [vmem:[%s796 + $0x40] sm:$0xf] %vm224, %v4058
        %v4316 = vld [vmem:[%s796 + $0x44] sm:$0x1]
        %v4317 = vsel %vm235, %v4059, %v4316
        %4318 = vst [vmem:[%s796 + $0x44] sm:$0x1] %v4317
        %v4319 = vld [vmem:[%s796 + $0x48] sm:$0xf]
        %v4320 = vsel %vm798, %v4066, %v4319
        %4321 = vst [vmem:[%s796 + $0x48] sm:$0xf] %v4320
        %4322 = vst.msk [vmem:[%s796 + $0x4c] sm:$0xf] %vm224, %v4075
        %v4323 = vld [vmem:[%s796 + $0x50] sm:$0x1]
        %v4324 = vsel %vm235, %v4076, %v4323
        %4325 = vst [vmem:[%s796 + $0x50] sm:$0x1] %v4324
        %v4326 = vld [vmem:[%s796 + $0x54] sm:$0xf]
        %v4327 = vsel %vm798, %v4083, %v4326
        %4328 = vst [vmem:[%s796 + $0x54] sm:$0xf] %v4327
        %4329 = vst.msk [vmem:[%s796 + $0x58] sm:$0xf] %vm224, %v4092
        %v4330 = vld [vmem:[%s796 + $0x5c] sm:$0x1]
        %v4331 = vsel %vm235, %v4093, %v4330
        %4332 = vst [vmem:[%s796 + $0x5c] sm:$0x1] %v4331
        %v4333 = vld [vmem:[%s796 + $0x60] sm:$0xf]
        %v4334 = vsel %vm798, %v4100, %v4333
        %4335 = vst [vmem:[%s796 + $0x60] sm:$0xf] %v4334
        %4336 = vst.msk [vmem:[%s796 + $0x64] sm:$0xf] %vm224, %v4109
        %v4337 = vld [vmem:[%s796 + $0x68] sm:$0x1]
        %v4338 = vsel %vm235, %v4110, %v4337
        %4339 = vst [vmem:[%s796 + $0x68] sm:$0x1] %v4338
        %v4340 = vld [vmem:[%s796 + $0x6c] sm:$0xf]
        %v4341 = vsel %vm798, %v4117, %v4340
        %4342 = vst [vmem:[%s796 + $0x6c] sm:$0xf] %v4341
        %4343 = vst.msk [vmem:[%s796 + $0x70] sm:$0xf] %vm224, %v4126
        %v4344 = vld [vmem:[%s796 + $0x74] sm:$0x1]
        %v4345 = vsel %vm235, %v4127, %v4344
        %4346 = vst [vmem:[%s796 + $0x74] sm:$0x1] %v4345
        %v4347 = vld [vmem:[%s796 + $0x78] sm:$0xf]
        %v4348 = vsel %vm798, %v4134, %v4347
        %4349 = vst [vmem:[%s796 + $0x78] sm:$0xf] %v4348
        %4350 = vst.msk [vmem:[%s796 + $0x7c] sm:$0xf] %vm224, %v4143
        %v4351 = vld [vmem:[%s796 + $0x80] sm:$0x1]
        %v4352 = vsel %vm235, %v4144, %v4351
        %4353 = vst [vmem:[%s796 + $0x80] sm:$0x1] %v4352
        %v4354 = vld [vmem:[%s796 + $0x84] sm:$0xf]
        %v4355 = vsel %vm798, %v4151, %v4354
        %4356 = vst [vmem:[%s796 + $0x84] sm:$0xf] %v4355
        %4357 = vst.msk [vmem:[%s796 + $0x88] sm:$0xf] %vm224, %v4160
        %v4358 = vld [vmem:[%s796 + $0x8c] sm:$0x1]
        %v4359 = vsel %vm235, %v4161, %v4358
        %4360 = vst [vmem:[%s796 + $0x8c] sm:$0x1] %v4359
        %v4361 = vld [vmem:[%s796 + $0x90] sm:$0xf]
        %v4362 = vsel %vm798, %v4168, %v4361
        %4363 = vst [vmem:[%s796 + $0x90] sm:$0xf] %v4362
        %4364 = vst.msk [vmem:[%s796 + $0x94] sm:$0xf] %vm224, %v4177
        %v4365 = vld [vmem:[%s796 + $0x98] sm:$0x1]
        %v4366 = vsel %vm235, %v4178, %v4365
        %4367 = vst [vmem:[%s796 + $0x98] sm:$0x1] %v4366
        %v4368 = vld [vmem:[%s796 + $0x9c] sm:$0xf]
        %v4369 = vsel %vm798, %v4185, %v4368
        %4370 = vst [vmem:[%s796 + $0x9c] sm:$0xf] %v4369
        %4371 = vst.msk [vmem:[%s796 + $0xa0] sm:$0xf] %vm224, %v4194
        %v4372 = vld [vmem:[%s796 + $0xa4] sm:$0x1]
        %v4373 = vsel %vm235, %v4195, %v4372
        %4374 = vst [vmem:[%s796 + $0xa4] sm:$0x1] %v4373
        %v4375 = vld [vmem:[%s796 + $0xa8] sm:$0xf]
        %v4376 = vsel %vm798, %v4202, %v4375
        %4377 = vst [vmem:[%s796 + $0xa8] sm:$0xf] %v4376
        %4378 = vst.msk [vmem:[%s796 + $0xac] sm:$0xf] %vm224, %v4211
        %v4379 = vld [vmem:[%s796 + $0xb0] sm:$0x1]
        %v4380 = vsel %vm235, %v4212, %v4379
        %4381 = vst [vmem:[%s796 + $0xb0] sm:$0x1] %v4380
        %v4382 = vld [vmem:[%s796 + $0xb4] sm:$0xf]
        %v4383 = vsel %vm798, %v4219, %v4382
        %4384 = vst [vmem:[%s796 + $0xb4] sm:$0xf] %v4383
        %4385 = vst.msk [vmem:[%s796 + $0xb8] sm:$0xf] %vm224, %v4228
        %v4386 = vld [vmem:[%s796 + $0xbc] sm:$0x1]
        %v4387 = vsel %vm235, %v4229, %v4386
        %4388 = vst [vmem:[%s796 + $0xbc] sm:$0x1] %v4387
        %v4389 = vld [vmem:[#allocation2] sm:$0xf]
        %v4390 = vld [vmem:[#allocation2 + $0x4] sm:$0xf]
        %v4391 = vld [vmem:[#allocation2 + $0xc] sm:$0xf]
        %v4392 = vld [vmem:[#allocation2 + $0x10] sm:$0xf]
        %v4393 = vld [vmem:[#allocation2 + $0x18] sm:$0xf]
        %v4394 = vld [vmem:[#allocation2 + $0x1c] sm:$0xf]
        %v4395 = vld [vmem:[#allocation2 + $0x24] sm:$0xf]
        %v4396 = vld [vmem:[#allocation2 + $0x28] sm:$0xf]
        %v4397 = vld [vmem:[#allocation2 + $0x30] sm:$0xf]
        %v4398 = vld [vmem:[#allocation2 + $0x34] sm:$0xf]
        %v4399 = vld [vmem:[#allocation2 + $0x3c] sm:$0xf]
        %v4400 = vld [vmem:[#allocation2 + $0x40] sm:$0xf]
        %v4401 = vld [vmem:[#allocation2 + $0x48] sm:$0xf]
        %v4402 = vld [vmem:[#allocation2 + $0x4c] sm:$0xf]
        %v4403 = vld [vmem:[#allocation2 + $0x54] sm:$0xf]
        %v4404 = vld [vmem:[#allocation2 + $0x58] sm:$0xf]
        %v4405 = vld [vmem:[#allocation2 + $0x60] sm:$0xf]
        %v4406 = vld [vmem:[#allocation2 + $0x64] sm:$0xf]
        %v4407 = vld [vmem:[#allocation2 + $0x6c] sm:$0xf]
        %v4408 = vld [vmem:[#allocation2 + $0x70] sm:$0xf]
        %v4409 = vld [vmem:[#allocation2 + $0x78] sm:$0xf]
        %v4410 = vld [vmem:[#allocation2 + $0x7c] sm:$0xf]
        %v4411 = vld [vmem:[#allocation2 + $0x84] sm:$0xf]
        %v4412 = vld [vmem:[#allocation2 + $0x88] sm:$0xf]
        %v4413 = vld [vmem:[#allocation2 + $0x90] sm:$0xf]
        %v4414 = vld [vmem:[#allocation2 + $0x94] sm:$0xf]
        %v4415 = vld [vmem:[#allocation2 + $0x9c] sm:$0xf]
        %v4416 = vld [vmem:[#allocation2 + $0xa0] sm:$0xf]
        %v4417 = vld [vmem:[#allocation2 + $0xa8] sm:$0xf]
        %v4418 = vld [vmem:[#allocation2 + $0xac] sm:$0xf]
        %v4419 = vld [vmem:[#allocation2 + $0xb4] sm:$0xf]
        %v4420 = vld [vmem:[#allocation2 + $0xb8] sm:$0xf]
        %v4421 = vld [vmem:[#allocation2 + $0x8] sm:$0x1]
        %v4422 = vld [vmem:[#allocation2 + $0x14] sm:$0x1]
        %v4423 = vld [vmem:[#allocation2 + $0x20] sm:$0x1]
        %v4424 = vld [vmem:[#allocation2 + $0x2c] sm:$0x1]
        %v4425 = vld [vmem:[#allocation2 + $0x38] sm:$0x1]
        %v4426 = vld [vmem:[#allocation2 + $0x44] sm:$0x1]
        %v4427 = vld [vmem:[#allocation2 + $0x50] sm:$0x1]
        %v4428 = vld [vmem:[#allocation2 + $0x5c] sm:$0x1]
        %v4429 = vld [vmem:[#allocation2 + $0x68] sm:$0x1]
        %v4430 = vld [vmem:[#allocation2 + $0x74] sm:$0x1]
        %v4431 = vld [vmem:[#allocation2 + $0x80] sm:$0x1]
        %v4432 = vld [vmem:[#allocation2 + $0x8c] sm:$0x1]
        %v4433 = vld [vmem:[#allocation2 + $0x98] sm:$0x1]
        %v4434 = vld [vmem:[#allocation2 + $0xa4] sm:$0x1]
        %v4435 = vld [vmem:[#allocation2 + $0xb0] sm:$0x1]
        %v4436 = vld [vmem:[#allocation2 + $0xbc] sm:$0x1]
        %v4437 = vld [vmem:[#allocation2] sm:$0xe]
        %v4438 = vld [vmem:[#allocation2 + $0xc] sm:$0xe]
        %v4439 = vld [vmem:[#allocation2 + $0x18] sm:$0xe]
        %v4440 = vld [vmem:[#allocation2 + $0x24] sm:$0xe]
        %v4441 = vld [vmem:[#allocation2 + $0x30] sm:$0xe]
        %v4442 = vld [vmem:[#allocation2 + $0x3c] sm:$0xe]
        %v4443 = vld [vmem:[#allocation2 + $0x48] sm:$0xe]
        %v4444 = vld [vmem:[#allocation2 + $0x54] sm:$0xe]
        %v4445 = vld [vmem:[#allocation2 + $0x60] sm:$0xe]
        %v4446 = vld [vmem:[#allocation2 + $0x6c] sm:$0xe]
        %v4447 = vld [vmem:[#allocation2 + $0x78] sm:$0xe]
        %v4448 = vld [vmem:[#allocation2 + $0x84] sm:$0xe]
        %v4449 = vld [vmem:[#allocation2 + $0x90] sm:$0xe]
        %v4450 = vld [vmem:[#allocation2 + $0x9c] sm:$0xe]
        %v4451 = vld [vmem:[#allocation2 + $0xa8] sm:$0xe]
        %v4452 = vld [vmem:[#allocation2 + $0xb4] sm:$0xe]
        %v4453 = vld [vmem:[%s796] sm:$0xf]
        %v4454 = vld [vmem:[%s796 + $0x4] sm:$0xf]
        %v4455 = vld [vmem:[%s796 + $0xc] sm:$0xf]
        %v4456 = vld [vmem:[%s796 + $0x10] sm:$0xf]
        %v4457 = vld [vmem:[%s796 + $0x18] sm:$0xf]
        %v4458 = vld [vmem:[%s796 + $0x1c] sm:$0xf]
        %v4459 = vld [vmem:[%s796 + $0x24] sm:$0xf]
        %v4460 = vld [vmem:[%s796 + $0x28] sm:$0xf]
        %v4461 = vld [vmem:[%s796 + $0x30] sm:$0xf]
        %v4462 = vld [vmem:[%s796 + $0x34] sm:$0xf]
        %v4463 = vld [vmem:[%s796 + $0x3c] sm:$0xf]
        %v4464 = vld [vmem:[%s796 + $0x40] sm:$0xf]
        %v4465 = vld [vmem:[%s796 + $0x48] sm:$0xf]
        %v4466 = vld [vmem:[%s796 + $0x4c] sm:$0xf]
        %v4467 = vld [vmem:[%s796 + $0x54] sm:$0xf]
        %v4468 = vld [vmem:[%s796 + $0x58] sm:$0xf]
        %v4469 = vld [vmem:[%s796 + $0x60] sm:$0xf]
        %v4470 = vld [vmem:[%s796 + $0x64] sm:$0xf]
        %v4471 = vld [vmem:[%s796 + $0x6c] sm:$0xf]
        %v4472 = vld [vmem:[%s796 + $0x70] sm:$0xf]
        %v4473 = vld [vmem:[%s796 + $0x78] sm:$0xf]
        %v4474 = vld [vmem:[%s796 + $0x7c] sm:$0xf]
        %v4475 = vld [vmem:[%s796 + $0x84] sm:$0xf]
        %v4476 = vld [vmem:[%s796 + $0x88] sm:$0xf]
        %v4477 = vld [vmem:[%s796 + $0x90] sm:$0xf]
        %v4478 = vld [vmem:[%s796 + $0x94] sm:$0xf]
        %v4479 = vld [vmem:[%s796 + $0x9c] sm:$0xf]
        %v4480 = vld [vmem:[%s796 + $0xa0] sm:$0xf]
        %v4481 = vld [vmem:[%s796 + $0xa8] sm:$0xf]
        %v4482 = vld [vmem:[%s796 + $0xac] sm:$0xf]
        %v4483 = vld [vmem:[%s796 + $0xb4] sm:$0xf]
        %v4484 = vld [vmem:[%s796 + $0xb8] sm:$0xf]
        %v4485 = vld [vmem:[%s796 + $0x8] sm:$0x1]
        %v4486 = vld [vmem:[%s796 + $0x14] sm:$0x1]
        %v4487 = vld [vmem:[%s796 + $0x20] sm:$0x1]
        %v4488 = vld [vmem:[%s796 + $0x2c] sm:$0x1]
        %v4489 = vld [vmem:[%s796 + $0x38] sm:$0x1]
        %v4490 = vld [vmem:[%s796 + $0x44] sm:$0x1]
        %v4491 = vld [vmem:[%s796 + $0x50] sm:$0x1]
        %v4492 = vld [vmem:[%s796 + $0x5c] sm:$0x1]
        %v4493 = vld [vmem:[%s796 + $0x68] sm:$0x1]
        %v4494 = vld [vmem:[%s796 + $0x74] sm:$0x1]
        %v4495 = vld [vmem:[%s796 + $0x80] sm:$0x1]
        %v4496 = vld [vmem:[%s796 + $0x8c] sm:$0x1]
        %v4497 = vld [vmem:[%s796 + $0x98] sm:$0x1]
        %v4498 = vld [vmem:[%s796 + $0xa4] sm:$0x1]
        %v4499 = vld [vmem:[%s796 + $0xb0] sm:$0x1]
        %v4500 = vld [vmem:[%s796 + $0xbc] sm:$0x1]
        %v4501 = vld [vmem:[%s796] sm:$0xe]
        %v4502 = vld [vmem:[%s796 + $0xc] sm:$0xe]
        %v4503 = vld [vmem:[%s796 + $0x18] sm:$0xe]
        %v4504 = vld [vmem:[%s796 + $0x24] sm:$0xe]
        %v4505 = vld [vmem:[%s796 + $0x30] sm:$0xe]
        %v4506 = vld [vmem:[%s796 + $0x3c] sm:$0xe]
        %v4507 = vld [vmem:[%s796 + $0x48] sm:$0xe]
        %v4508 = vld [vmem:[%s796 + $0x54] sm:$0xe]
        %v4509 = vld [vmem:[%s796 + $0x60] sm:$0xe]
        %v4510 = vld [vmem:[%s796 + $0x6c] sm:$0xe]
        %v4511 = vld [vmem:[%s796 + $0x78] sm:$0xe]
        %v4512 = vld [vmem:[%s796 + $0x84] sm:$0xe]
        %v4513 = vld [vmem:[%s796 + $0x90] sm:$0xe]
        %v4514 = vld [vmem:[%s796 + $0x9c] sm:$0xe]
        %v4515 = vld [vmem:[%s796 + $0xa8] sm:$0xe]
        %v4516 = vld [vmem:[%s796 + $0xb4] sm:$0xe]
        %v4517 = vld [vmem:[%s1039] sm:$0xf]
        %v4518 = vld [vmem:[%s1039 + $0x4] sm:$0xf]
        %v4519 = vld [vmem:[%s1039 + $0xc] sm:$0xf]
        %v4520 = vld [vmem:[%s1039 + $0x10] sm:$0xf]
        %v4521 = vld [vmem:[%s1039 + $0x18] sm:$0xf]
        %v4522 = vld [vmem:[%s1039 + $0x1c] sm:$0xf]
        %v4523 = vld [vmem:[%s1039 + $0x24] sm:$0xf]
        %v4524 = vld [vmem:[%s1039 + $0x28] sm:$0xf]
        %v4525 = vld [vmem:[%s1039 + $0x30] sm:$0xf]
        %v4526 = vld [vmem:[%s1039 + $0x34] sm:$0xf]
        %v4527 = vld [vmem:[%s1039 + $0x3c] sm:$0xf]
        %v4528 = vld [vmem:[%s1039 + $0x40] sm:$0xf]
        %v4529 = vld [vmem:[%s1039 + $0x48] sm:$0xf]
        %v4530 = vld [vmem:[%s1039 + $0x4c] sm:$0xf]
        %v4531 = vld [vmem:[%s1039 + $0x54] sm:$0xf]
        %v4532 = vld [vmem:[%s1039 + $0x58] sm:$0xf]
        %v4533 = vld [vmem:[%s1039 + $0x60] sm:$0xf]
        %v4534 = vld [vmem:[%s1039 + $0x64] sm:$0xf]
        %v4535 = vld [vmem:[%s1039 + $0x6c] sm:$0xf]
        %v4536 = vld [vmem:[%s1039 + $0x70] sm:$0xf]
        %v4537 = vld [vmem:[%s1039 + $0x78] sm:$0xf]
        %v4538 = vld [vmem:[%s1039 + $0x7c] sm:$0xf]
        %v4539 = vld [vmem:[%s1039 + $0x84] sm:$0xf]
        %v4540 = vld [vmem:[%s1039 + $0x88] sm:$0xf]
        %v4541 = vld [vmem:[%s1039 + $0x90] sm:$0xf]
        %v4542 = vld [vmem:[%s1039 + $0x94] sm:$0xf]
        %v4543 = vld [vmem:[%s1039 + $0x9c] sm:$0xf]
        %v4544 = vld [vmem:[%s1039 + $0xa0] sm:$0xf]
        %v4545 = vld [vmem:[%s1039 + $0xa8] sm:$0xf]
        %v4546 = vld [vmem:[%s1039 + $0xac] sm:$0xf]
        %v4547 = vld [vmem:[%s1039 + $0xb4] sm:$0xf]
        %v4548 = vld [vmem:[%s1039 + $0xb8] sm:$0xf]
        %v4549 = vld [vmem:[%s1039 + $0x8] sm:$0x1]
        %v4550 = vld [vmem:[%s1039 + $0x14] sm:$0x1]
        %v4551 = vld [vmem:[%s1039 + $0x20] sm:$0x1]
        %v4552 = vld [vmem:[%s1039 + $0x2c] sm:$0x1]
        %v4553 = vld [vmem:[%s1039 + $0x38] sm:$0x1]
        %v4554 = vld [vmem:[%s1039 + $0x44] sm:$0x1]
        %v4555 = vld [vmem:[%s1039 + $0x50] sm:$0x1]
        %v4556 = vld [vmem:[%s1039 + $0x5c] sm:$0x1]
        %v4557 = vld [vmem:[%s1039 + $0x68] sm:$0x1]
        %v4558 = vld [vmem:[%s1039 + $0x74] sm:$0x1]
        %v4559 = vld [vmem:[%s1039 + $0x80] sm:$0x1]
        %v4560 = vld [vmem:[%s1039 + $0x8c] sm:$0x1]
        %v4561 = vld [vmem:[%s1039 + $0x98] sm:$0x1]
        %v4562 = vld [vmem:[%s1039 + $0xa4] sm:$0x1]
        %v4563 = vld [vmem:[%s1039 + $0xb0] sm:$0x1]
        %v4564 = vld [vmem:[%s1039 + $0xbc] sm:$0x1]
        %v4565 = vld [vmem:[%s1039] sm:$0xe]
        %v4566 = vld [vmem:[%s1039 + $0xc] sm:$0xe]
        %v4567 = vld [vmem:[%s1039 + $0x18] sm:$0xe]
        %v4568 = vld [vmem:[%s1039 + $0x24] sm:$0xe]
        %v4569 = vld [vmem:[%s1039 + $0x30] sm:$0xe]
        %v4570 = vld [vmem:[%s1039 + $0x3c] sm:$0xe]
        %v4571 = vld [vmem:[%s1039 + $0x48] sm:$0xe]
        %v4572 = vld [vmem:[%s1039 + $0x54] sm:$0xe]
        %v4573 = vld [vmem:[%s1039 + $0x60] sm:$0xe]
        %v4574 = vld [vmem:[%s1039 + $0x6c] sm:$0xe]
        %v4575 = vld [vmem:[%s1039 + $0x78] sm:$0xe]
        %v4576 = vld [vmem:[%s1039 + $0x84] sm:$0xe]
        %v4577 = vld [vmem:[%s1039 + $0x90] sm:$0xe]
        %v4578 = vld [vmem:[%s1039 + $0x9c] sm:$0xe]
        %v4579 = vld [vmem:[%s1039 + $0xa8] sm:$0xe]
        %v4580 = vld [vmem:[%s1039 + $0xb4] sm:$0xe]
        %v4613 = vunpack.c.l.b16 %v4389
        %v4614 = vunpack.c.l.b16 %v4390
        %v4615 = vunpack.c.l.b16 %v4391
        %v4616 = vunpack.c.l.b16 %v4392
        %v4617 = vunpack.c.l.b16 %v4393
        %v4618 = vunpack.c.l.b16 %v4394
        %v4619 = vunpack.c.l.b16 %v4395
        %v4620 = vunpack.c.l.b16 %v4396
        %v4621 = vunpack.c.l.b16 %v4397
        %v4622 = vunpack.c.l.b16 %v4398
        %v4623 = vunpack.c.l.b16 %v4399
        %v4624 = vunpack.c.l.b16 %v4400
        %v4625 = vunpack.c.l.b16 %v4401
        %v4626 = vunpack.c.l.b16 %v4402
        %v4627 = vunpack.c.l.b16 %v4403
        %v4628 = vunpack.c.l.b16 %v4404
        %v4629 = vunpack.c.l.b16 %v4405
        %v4630 = vunpack.c.l.b16 %v4406
        %v4631 = vunpack.c.l.b16 %v4407
        %v4632 = vunpack.c.l.b16 %v4408
        %v4633 = vunpack.c.l.b16 %v4409
        %v4634 = vunpack.c.l.b16 %v4410
        %v4635 = vunpack.c.l.b16 %v4411
        %v4636 = vunpack.c.l.b16 %v4412
        %v4637 = vunpack.c.l.b16 %v4413
        %v4638 = vunpack.c.l.b16 %v4414
        %v4639 = vunpack.c.l.b16 %v4415
        %v4640 = vunpack.c.l.b16 %v4416
        %v4641 = vunpack.c.l.b16 %v4417
        %v4642 = vunpack.c.l.b16 %v4418
        %v4643 = vunpack.c.l.b16 %v4419
        %v4644 = vunpack.c.l.b16 %v4420
        %v4645 = vpack.c.b16 %v4614, %v4613
        %v4646 = vpack.c.b16 %v4616, %v4615
        %v4647 = vpack.c.b16 %v4618, %v4617
        %v4648 = vpack.c.b16 %v4620, %v4619
        %v4649 = vpack.c.b16 %v4622, %v4621
        %v4650 = vpack.c.b16 %v4624, %v4623
        %v4651 = vpack.c.b16 %v4626, %v4625
        %v4652 = vpack.c.b16 %v4628, %v4627
        %v4653 = vpack.c.b16 %v4630, %v4629
        %v4654 = vpack.c.b16 %v4632, %v4631
        %v4655 = vpack.c.b16 %v4634, %v4633
        %v4656 = vpack.c.b16 %v4636, %v4635
        %v4657 = vpack.c.b16 %v4638, %v4637
        %v4658 = vpack.c.b16 %v4640, %v4639
        %v4659 = vpack.c.b16 %v4642, %v4641
        %v4660 = vpack.c.b16 %v4644, %v4643
        %v4677 = vunpack.c.l.b16 %v4421
        %v4678 = vunpack.c.l.b16 %v4422
        %v4679 = vunpack.c.l.b16 %v4423
        %v4680 = vunpack.c.l.b16 %v4424
        %v4681 = vunpack.c.l.b16 %v4425
        %v4682 = vunpack.c.l.b16 %v4426
        %v4683 = vunpack.c.l.b16 %v4427
        %v4684 = vunpack.c.l.b16 %v4428
        %v4685 = vunpack.c.l.b16 %v4429
        %v4686 = vunpack.c.l.b16 %v4430
        %v4687 = vunpack.c.l.b16 %v4431
        %v4688 = vunpack.c.l.b16 %v4432
        %v4689 = vunpack.c.l.b16 %v4433
        %v4690 = vunpack.c.l.b16 %v4434
        %v4691 = vunpack.c.l.b16 %v4435
        %v4692 = vunpack.c.l.b16 %v4436
        %v4693 = vpack.c.b16 %v4677, %v4677
        %v4694 = vpack.c.b16 %v4678, %v4678
        %v4695 = vpack.c.b16 %v4679, %v4679
        %v4696 = vpack.c.b16 %v4680, %v4680
        %v4697 = vpack.c.b16 %v4681, %v4681
        %v4698 = vpack.c.b16 %v4682, %v4682
        %v4699 = vpack.c.b16 %v4683, %v4683
        %v4700 = vpack.c.b16 %v4684, %v4684
        %v4701 = vpack.c.b16 %v4685, %v4685
        %v4702 = vpack.c.b16 %v4686, %v4686
        %v4703 = vpack.c.b16 %v4687, %v4687
        %v4704 = vpack.c.b16 %v4688, %v4688
        %v4705 = vpack.c.b16 %v4689, %v4689
        %v4706 = vpack.c.b16 %v4690, %v4690
        %v4707 = vpack.c.b16 %v4691, %v4691
        %v4708 = vpack.c.b16 %v4692, %v4692
        %v4710 = vshrl.u32 %v4645, 16
        %v4712 = vshll.u32 %v4645, 16
        %v4714 = vrot.slane %v4712, 1
        %v4715 = vor.u32 %v4710, %v4714
        %v4717 = vshll.u32 %v4693, 16
        %v4719 = vrot.slane %v4717, 1
        %v4720 = vsel %vm1232, %v4715, %v4719
        %v4722 = vshrl.u32 %v4646, 16
        %v4724 = vshll.u32 %v4646, 16
        %v4726 = vrot.slane %v4724, 1
        %v4727 = vor.u32 %v4722, %v4726
        %v4729 = vshll.u32 %v4694, 16
        %v4731 = vrot.slane %v4729, 1
        %v4732 = vsel %vm1232, %v4727, %v4731
        %v4734 = vshrl.u32 %v4647, 16
        %v4736 = vshll.u32 %v4647, 16
        %v4738 = vrot.slane %v4736, 1
        %v4739 = vor.u32 %v4734, %v4738
        %v4741 = vshll.u32 %v4695, 16
        %v4743 = vrot.slane %v4741, 1
        %v4744 = vsel %vm1232, %v4739, %v4743
        %v4746 = vshrl.u32 %v4648, 16
        %v4748 = vshll.u32 %v4648, 16
        %v4750 = vrot.slane %v4748, 1
        %v4751 = vor.u32 %v4746, %v4750
        %v4753 = vshll.u32 %v4696, 16
        %v4755 = vrot.slane %v4753, 1
        %v4756 = vsel %vm1232, %v4751, %v4755
        %v4758 = vshrl.u32 %v4649, 16
        %v4760 = vshll.u32 %v4649, 16
        %v4762 = vrot.slane %v4760, 1
        %v4763 = vor.u32 %v4758, %v4762
        %v4765 = vshll.u32 %v4697, 16
        %v4767 = vrot.slane %v4765, 1
        %v4768 = vsel %vm1232, %v4763, %v4767
        %v4770 = vshrl.u32 %v4650, 16
        %v4772 = vshll.u32 %v4650, 16
        %v4774 = vrot.slane %v4772, 1
        %v4775 = vor.u32 %v4770, %v4774
        %v4777 = vshll.u32 %v4698, 16
        %v4779 = vrot.slane %v4777, 1
        %v4780 = vsel %vm1232, %v4775, %v4779
        %v4782 = vshrl.u32 %v4651, 16
        %v4784 = vshll.u32 %v4651, 16
        %v4786 = vrot.slane %v4784, 1
        %v4787 = vor.u32 %v4782, %v4786
        %v4789 = vshll.u32 %v4699, 16
        %v4791 = vrot.slane %v4789, 1
        %v4792 = vsel %vm1232, %v4787, %v4791
        %v4794 = vshrl.u32 %v4652, 16
        %v4796 = vshll.u32 %v4652, 16
        %v4798 = vrot.slane %v4796, 1
        %v4799 = vor.u32 %v4794, %v4798
        %v4801 = vshll.u32 %v4700, 16
        %v4803 = vrot.slane %v4801, 1
        %v4804 = vsel %vm1232, %v4799, %v4803
        %v4806 = vshrl.u32 %v4653, 16
        %v4808 = vshll.u32 %v4653, 16
        %v4810 = vrot.slane %v4808, 1
        %v4811 = vor.u32 %v4806, %v4810
        %v4813 = vshll.u32 %v4701, 16
        %v4815 = vrot.slane %v4813, 1
        %v4816 = vsel %vm1232, %v4811, %v4815
        %v4818 = vshrl.u32 %v4654, 16
        %v4820 = vshll.u32 %v4654, 16
        %v4822 = vrot.slane %v4820, 1
        %v4823 = vor.u32 %v4818, %v4822
        %v4825 = vshll.u32 %v4702, 16
        %v4827 = vrot.slane %v4825, 1
        %v4828 = vsel %vm1232, %v4823, %v4827
        %v4830 = vshrl.u32 %v4655, 16
        %v4832 = vshll.u32 %v4655, 16
        %v4834 = vrot.slane %v4832, 1
        %v4835 = vor.u32 %v4830, %v4834
        %v4837 = vshll.u32 %v4703, 16
        %v4839 = vrot.slane %v4837, 1
        %v4840 = vsel %vm1232, %v4835, %v4839
        %v4842 = vshrl.u32 %v4656, 16
        %v4844 = vshll.u32 %v4656, 16
        %v4846 = vrot.slane %v4844, 1
        %v4847 = vor.u32 %v4842, %v4846
        %v4849 = vshll.u32 %v4704, 16
        %v4851 = vrot.slane %v4849, 1
        %v4852 = vsel %vm1232, %v4847, %v4851
        %v4854 = vshrl.u32 %v4657, 16
        %v4856 = vshll.u32 %v4657, 16
        %v4858 = vrot.slane %v4856, 1
        %v4859 = vor.u32 %v4854, %v4858
        %v4861 = vshll.u32 %v4705, 16
        %v4863 = vrot.slane %v4861, 1
        %v4864 = vsel %vm1232, %v4859, %v4863
        %v4866 = vshrl.u32 %v4658, 16
        %v4868 = vshll.u32 %v4658, 16
        %v4870 = vrot.slane %v4868, 1
        %v4871 = vor.u32 %v4866, %v4870
        %v4873 = vshll.u32 %v4706, 16
        %v4875 = vrot.slane %v4873, 1
        %v4876 = vsel %vm1232, %v4871, %v4875
        %v4878 = vshrl.u32 %v4659, 16
        %v4880 = vshll.u32 %v4659, 16
        %v4882 = vrot.slane %v4880, 1
        %v4883 = vor.u32 %v4878, %v4882
        %v4885 = vshll.u32 %v4707, 16
        %v4887 = vrot.slane %v4885, 1
        %v4888 = vsel %vm1232, %v4883, %v4887
        %v4890 = vshrl.u32 %v4660, 16
        %v4892 = vshll.u32 %v4660, 16
        %v4894 = vrot.slane %v4892, 1
        %v4895 = vor.u32 %v4890, %v4894
        %v4897 = vshll.u32 %v4708, 16
        %v4899 = vrot.slane %v4897, 1
        %v4900 = vsel %vm1232, %v4895, %v4899
        %4901 = vrot.lane.b32.xlu0 %v4720, 64
        %v4902 = vpop.permute.xlu0 %4901
        %4903 = vrot.lane.b32.xlu0 %v4732, 64
        %v4904 = vpop.permute.xlu0 %4903
        %4905 = vrot.lane.b32.xlu0 %v4744, 64
        %v4906 = vpop.permute.xlu0 %4905
        %4907 = vrot.lane.b32.xlu0 %v4756, 64
        %v4908 = vpop.permute.xlu0 %4907
        %4909 = vrot.lane.b32.xlu0 %v4768, 64
        %v4910 = vpop.permute.xlu0 %4909
        %4911 = vrot.lane.b32.xlu0 %v4780, 64
        %v4912 = vpop.permute.xlu0 %4911
        %4913 = vrot.lane.b32.xlu0 %v4792, 64
        %v4914 = vpop.permute.xlu0 %4913
        %4915 = vrot.lane.b32.xlu0 %v4804, 64
        %v4916 = vpop.permute.xlu0 %4915
        %4917 = vrot.lane.b32.xlu0 %v4816, 64
        %v4918 = vpop.permute.xlu0 %4917
        %4919 = vrot.lane.b32.xlu0 %v4828, 64
        %v4920 = vpop.permute.xlu0 %4919
        %4921 = vrot.lane.b32.xlu0 %v4840, 64
        %v4922 = vpop.permute.xlu0 %4921
        %4923 = vrot.lane.b32.xlu0 %v4852, 64
        %v4924 = vpop.permute.xlu0 %4923
        %4925 = vrot.lane.b32.xlu0 %v4864, 64
        %v4926 = vpop.permute.xlu0 %4925
        %4927 = vrot.lane.b32.xlu0 %v4876, 64
        %v4928 = vpop.permute.xlu0 %4927
        %4929 = vrot.lane.b32.xlu0 %v4888, 64
        %v4930 = vpop.permute.xlu0 %4929
        %4931 = vrot.lane.b32.xlu0 %v4900, 64
        %v4932 = vpop.permute.xlu0 %4931
        %v4949 = vunpack.c.l.b16 %v4437
        %v4950 = vunpack.c.l.b16 %v4438
        %v4951 = vunpack.c.l.b16 %v4439
        %v4952 = vunpack.c.l.b16 %v4440
        %v4953 = vunpack.c.l.b16 %v4441
        %v4954 = vunpack.c.l.b16 %v4442
        %v4955 = vunpack.c.l.b16 %v4443
        %v4956 = vunpack.c.l.b16 %v4444
        %v4957 = vunpack.c.l.b16 %v4445
        %v4958 = vunpack.c.l.b16 %v4446
        %v4959 = vunpack.c.l.b16 %v4447
        %v4960 = vunpack.c.l.b16 %v4448
        %v4961 = vunpack.c.l.b16 %v4449
        %v4962 = vunpack.c.l.b16 %v4450
        %v4963 = vunpack.c.l.b16 %v4451
        %v4964 = vunpack.c.l.b16 %v4452
        %v4965 = vpack.c.b16 %v4614, %v4949
        %v4966 = vpack.c.b16 %v4616, %v4950
        %v4967 = vpack.c.b16 %v4618, %v4951
        %v4968 = vpack.c.b16 %v4620, %v4952
        %v4969 = vpack.c.b16 %v4622, %v4953
        %v4970 = vpack.c.b16 %v4624, %v4954
        %v4971 = vpack.c.b16 %v4626, %v4955
        %v4972 = vpack.c.b16 %v4628, %v4956
        %v4973 = vpack.c.b16 %v4630, %v4957
        %v4974 = vpack.c.b16 %v4632, %v4958
        %v4975 = vpack.c.b16 %v4634, %v4959
        %v4976 = vpack.c.b16 %v4636, %v4960
        %v4977 = vpack.c.b16 %v4638, %v4961
        %v4978 = vpack.c.b16 %v4640, %v4962
        %v4979 = vpack.c.b16 %v4642, %v4963
        %v4980 = vpack.c.b16 %v4644, %v4964
        %v4981 = vrot.slane %v4965, 1
        %v4982 = vrot.slane %v4693, 1
        %v4983 = vsel %vm1505, %v4981, %v4982
        %v4984 = vrot.slane %v4966, 1
        %v4985 = vrot.slane %v4694, 1
        %v4986 = vsel %vm1505, %v4984, %v4985
        %v4987 = vrot.slane %v4967, 1
        %v4988 = vrot.slane %v4695, 1
        %v4989 = vsel %vm1505, %v4987, %v4988
        %v4990 = vrot.slane %v4968, 1
        %v4991 = vrot.slane %v4696, 1
        %v4992 = vsel %vm1505, %v4990, %v4991
        %v4993 = vrot.slane %v4969, 1
        %v4994 = vrot.slane %v4697, 1
        %v4995 = vsel %vm1505, %v4993, %v4994
        %v4996 = vrot.slane %v4970, 1
        %v4997 = vrot.slane %v4698, 1
        %v4998 = vsel %vm1505, %v4996, %v4997
        %v4999 = vrot.slane %v4971, 1
        %v5000 = vrot.slane %v4699, 1
        %v5001 = vsel %vm1505, %v4999, %v5000
        %v5002 = vrot.slane %v4972, 1
        %v5003 = vrot.slane %v4700, 1
        %v5004 = vsel %vm1505, %v5002, %v5003
        %v5005 = vrot.slane %v4973, 1
        %v5006 = vrot.slane %v4701, 1
        %v5007 = vsel %vm1505, %v5005, %v5006
        %v5008 = vrot.slane %v4974, 1
        %v5009 = vrot.slane %v4702, 1
        %v5010 = vsel %vm1505, %v5008, %v5009
        %v5011 = vrot.slane %v4975, 1
        %v5012 = vrot.slane %v4703, 1
        %v5013 = vsel %vm1505, %v5011, %v5012
        %v5014 = vrot.slane %v4976, 1
        %v5015 = vrot.slane %v4704, 1
        %v5016 = vsel %vm1505, %v5014, %v5015
        %v5017 = vrot.slane %v4977, 1
        %v5018 = vrot.slane %v4705, 1
        %v5019 = vsel %vm1505, %v5017, %v5018
        %v5020 = vrot.slane %v4978, 1
        %v5021 = vrot.slane %v4706, 1
        %v5022 = vsel %vm1505, %v5020, %v5021
        %v5023 = vrot.slane %v4979, 1
        %v5024 = vrot.slane %v4707, 1
        %v5025 = vsel %vm1505, %v5023, %v5024
        %v5026 = vrot.slane %v4980, 1
        %v5027 = vrot.slane %v4708, 1
        %v5028 = vsel %vm1505, %v5026, %v5027
        %v5061 = vunpack.c.l.b16 %v4453
        %v5062 = vunpack.c.l.b16 %v4454
        %v5063 = vunpack.c.l.b16 %v4455
        %v5064 = vunpack.c.l.b16 %v4456
        %v5065 = vunpack.c.l.b16 %v4457
        %v5066 = vunpack.c.l.b16 %v4458
        %v5067 = vunpack.c.l.b16 %v4459
        %v5068 = vunpack.c.l.b16 %v4460
        %v5069 = vunpack.c.l.b16 %v4461
        %v5070 = vunpack.c.l.b16 %v4462
        %v5071 = vunpack.c.l.b16 %v4463
        %v5072 = vunpack.c.l.b16 %v4464
        %v5073 = vunpack.c.l.b16 %v4465
        %v5074 = vunpack.c.l.b16 %v4466
        %v5075 = vunpack.c.l.b16 %v4467
        %v5076 = vunpack.c.l.b16 %v4468
        %v5077 = vunpack.c.l.b16 %v4469
        %v5078 = vunpack.c.l.b16 %v4470
        %v5079 = vunpack.c.l.b16 %v4471
        %v5080 = vunpack.c.l.b16 %v4472
        %v5081 = vunpack.c.l.b16 %v4473
        %v5082 = vunpack.c.l.b16 %v4474
        %v5083 = vunpack.c.l.b16 %v4475
        %v5084 = vunpack.c.l.b16 %v4476
        %v5085 = vunpack.c.l.b16 %v4477
        %v5086 = vunpack.c.l.b16 %v4478
        %v5087 = vunpack.c.l.b16 %v4479
        %v5088 = vunpack.c.l.b16 %v4480
        %v5089 = vunpack.c.l.b16 %v4481
        %v5090 = vunpack.c.l.b16 %v4482
        %v5091 = vunpack.c.l.b16 %v4483
        %v5092 = vunpack.c.l.b16 %v4484
        %v5093 = vpack.c.b16 %v5062, %v5061
        %v5094 = vpack.c.b16 %v5064, %v5063
        %v5095 = vpack.c.b16 %v5066, %v5065
        %v5096 = vpack.c.b16 %v5068, %v5067
        %v5097 = vpack.c.b16 %v5070, %v5069
        %v5098 = vpack.c.b16 %v5072, %v5071
        %v5099 = vpack.c.b16 %v5074, %v5073
        %v5100 = vpack.c.b16 %v5076, %v5075
        %v5101 = vpack.c.b16 %v5078, %v5077
        %v5102 = vpack.c.b16 %v5080, %v5079
        %v5103 = vpack.c.b16 %v5082, %v5081
        %v5104 = vpack.c.b16 %v5084, %v5083
        %v5105 = vpack.c.b16 %v5086, %v5085
        %v5106 = vpack.c.b16 %v5088, %v5087
        %v5107 = vpack.c.b16 %v5090, %v5089
        %v5108 = vpack.c.b16 %v5092, %v5091
        %5109 = vrot.lane.b32.xlu0 %v5093, 64
        %v5110 = vpop.permute.xlu0 %5109
        %5111 = vrot.lane.b32.xlu0 %v5094, 64
        %v5112 = vpop.permute.xlu0 %5111
        %5113 = vrot.lane.b32.xlu0 %v5095, 64
        %v5114 = vpop.permute.xlu0 %5113
        %5115 = vrot.lane.b32.xlu0 %v5096, 64
        %v5116 = vpop.permute.xlu0 %5115
        %5117 = vrot.lane.b32.xlu0 %v5097, 64
        %v5118 = vpop.permute.xlu0 %5117
        %5119 = vrot.lane.b32.xlu0 %v5098, 64
        %v5120 = vpop.permute.xlu0 %5119
        %5121 = vrot.lane.b32.xlu0 %v5099, 64
        %v5122 = vpop.permute.xlu0 %5121
        %5123 = vrot.lane.b32.xlu0 %v5100, 64
        %v5124 = vpop.permute.xlu0 %5123
        %5125 = vrot.lane.b32.xlu0 %v5101, 64
        %v5126 = vpop.permute.xlu0 %5125
        %5127 = vrot.lane.b32.xlu0 %v5102, 64
        %v5128 = vpop.permute.xlu0 %5127
        %5129 = vrot.lane.b32.xlu0 %v5103, 64
        %v5130 = vpop.permute.xlu0 %5129
        %5131 = vrot.lane.b32.xlu0 %v5104, 64
        %v5132 = vpop.permute.xlu0 %5131
        %5133 = vrot.lane.b32.xlu0 %v5105, 64
        %v5134 = vpop.permute.xlu0 %5133
        %5135 = vrot.lane.b32.xlu0 %v5106, 64
        %v5136 = vpop.permute.xlu0 %5135
        %5137 = vrot.lane.b32.xlu0 %v5107, 64
        %v5138 = vpop.permute.xlu0 %5137
        %5139 = vrot.lane.b32.xlu0 %v5108, 64
        %v5140 = vpop.permute.xlu0 %5139
        %v5157 = vunpack.c.l.b16 %v4485
        %v5158 = vunpack.c.l.b16 %v4486
        %v5159 = vunpack.c.l.b16 %v4487
        %v5160 = vunpack.c.l.b16 %v4488
        %v5161 = vunpack.c.l.b16 %v4489
        %v5162 = vunpack.c.l.b16 %v4490
        %v5163 = vunpack.c.l.b16 %v4491
        %v5164 = vunpack.c.l.b16 %v4492
        %v5165 = vunpack.c.l.b16 %v4493
        %v5166 = vunpack.c.l.b16 %v4494
        %v5167 = vunpack.c.l.b16 %v4495
        %v5168 = vunpack.c.l.b16 %v4496
        %v5169 = vunpack.c.l.b16 %v4497
        %v5170 = vunpack.c.l.b16 %v4498
        %v5171 = vunpack.c.l.b16 %v4499
        %v5172 = vunpack.c.l.b16 %v4500
        %v5173 = vpack.c.b16 %v5157, %v5157
        %v5174 = vpack.c.b16 %v5158, %v5158
        %v5175 = vpack.c.b16 %v5159, %v5159
        %v5176 = vpack.c.b16 %v5160, %v5160
        %v5177 = vpack.c.b16 %v5161, %v5161
        %v5178 = vpack.c.b16 %v5162, %v5162
        %v5179 = vpack.c.b16 %v5163, %v5163
        %v5180 = vpack.c.b16 %v5164, %v5164
        %v5181 = vpack.c.b16 %v5165, %v5165
        %v5182 = vpack.c.b16 %v5166, %v5166
        %v5183 = vpack.c.b16 %v5167, %v5167
        %v5184 = vpack.c.b16 %v5168, %v5168
        %v5185 = vpack.c.b16 %v5169, %v5169
        %v5186 = vpack.c.b16 %v5170, %v5170
        %v5187 = vpack.c.b16 %v5171, %v5171
        %v5188 = vpack.c.b16 %v5172, %v5172
        %v5190 = vshrl.u32 %v5093, 16
        %v5192 = vshll.u32 %v5093, 16
        %v5194 = vrot.slane %v5192, 1
        %v5195 = vor.u32 %v5190, %v5194
        %v5197 = vshll.u32 %v5173, 16
        %v5199 = vrot.slane %v5197, 1
        %v5200 = vsel %vm1232, %v5195, %v5199
        %v5202 = vshrl.u32 %v5094, 16
        %v5204 = vshll.u32 %v5094, 16
        %v5206 = vrot.slane %v5204, 1
        %v5207 = vor.u32 %v5202, %v5206
        %v5209 = vshll.u32 %v5174, 16
        %v5211 = vrot.slane %v5209, 1
        %v5212 = vsel %vm1232, %v5207, %v5211
        %v5214 = vshrl.u32 %v5095, 16
        %v5216 = vshll.u32 %v5095, 16
        %v5218 = vrot.slane %v5216, 1
        %v5219 = vor.u32 %v5214, %v5218
        %v5221 = vshll.u32 %v5175, 16
        %v5223 = vrot.slane %v5221, 1
        %v5224 = vsel %vm1232, %v5219, %v5223
        %v5226 = vshrl.u32 %v5096, 16
        %v5228 = vshll.u32 %v5096, 16
        %v5230 = vrot.slane %v5228, 1
        %v5231 = vor.u32 %v5226, %v5230
        %v5233 = vshll.u32 %v5176, 16
        %v5235 = vrot.slane %v5233, 1
        %v5236 = vsel %vm1232, %v5231, %v5235
        %v5238 = vshrl.u32 %v5097, 16
        %v5240 = vshll.u32 %v5097, 16
        %v5242 = vrot.slane %v5240, 1
        %v5243 = vor.u32 %v5238, %v5242
        %v5245 = vshll.u32 %v5177, 16
        %v5247 = vrot.slane %v5245, 1
        %v5248 = vsel %vm1232, %v5243, %v5247
        %v5250 = vshrl.u32 %v5098, 16
        %v5252 = vshll.u32 %v5098, 16
        %v5254 = vrot.slane %v5252, 1
        %v5255 = vor.u32 %v5250, %v5254
        %v5257 = vshll.u32 %v5178, 16
        %v5259 = vrot.slane %v5257, 1
        %v5260 = vsel %vm1232, %v5255, %v5259
        %v5262 = vshrl.u32 %v5099, 16
        %v5264 = vshll.u32 %v5099, 16
        %v5266 = vrot.slane %v5264, 1
        %v5267 = vor.u32 %v5262, %v5266
        %v5269 = vshll.u32 %v5179, 16
        %v5271 = vrot.slane %v5269, 1
        %v5272 = vsel %vm1232, %v5267, %v5271
        %v5274 = vshrl.u32 %v5100, 16
        %v5276 = vshll.u32 %v5100, 16
        %v5278 = vrot.slane %v5276, 1
        %v5279 = vor.u32 %v5274, %v5278
        %v5281 = vshll.u32 %v5180, 16
        %v5283 = vrot.slane %v5281, 1
        %v5284 = vsel %vm1232, %v5279, %v5283
        %v5286 = vshrl.u32 %v5101, 16
        %v5288 = vshll.u32 %v5101, 16
        %v5290 = vrot.slane %v5288, 1
        %v5291 = vor.u32 %v5286, %v5290
        %v5293 = vshll.u32 %v5181, 16
        %v5295 = vrot.slane %v5293, 1
        %v5296 = vsel %vm1232, %v5291, %v5295
        %v5298 = vshrl.u32 %v5102, 16
        %v5300 = vshll.u32 %v5102, 16
        %v5302 = vrot.slane %v5300, 1
        %v5303 = vor.u32 %v5298, %v5302
        %v5305 = vshll.u32 %v5182, 16
        %v5307 = vrot.slane %v5305, 1
        %v5308 = vsel %vm1232, %v5303, %v5307
        %v5310 = vshrl.u32 %v5103, 16
        %v5312 = vshll.u32 %v5103, 16
        %v5314 = vrot.slane %v5312, 1
        %v5315 = vor.u32 %v5310, %v5314
        %v5317 = vshll.u32 %v5183, 16
        %v5319 = vrot.slane %v5317, 1
        %v5320 = vsel %vm1232, %v5315, %v5319
        %v5322 = vshrl.u32 %v5104, 16
        %v5324 = vshll.u32 %v5104, 16
        %v5326 = vrot.slane %v5324, 1
        %v5327 = vor.u32 %v5322, %v5326
        %v5329 = vshll.u32 %v5184, 16
        %v5331 = vrot.slane %v5329, 1
        %v5332 = vsel %vm1232, %v5327, %v5331
        %v5334 = vshrl.u32 %v5105, 16
        %v5336 = vshll.u32 %v5105, 16
        %v5338 = vrot.slane %v5336, 1
        %v5339 = vor.u32 %v5334, %v5338
        %v5341 = vshll.u32 %v5185, 16
        %v5343 = vrot.slane %v5341, 1
        %v5344 = vsel %vm1232, %v5339, %v5343
        %v5346 = vshrl.u32 %v5106, 16
        %v5348 = vshll.u32 %v5106, 16
        %v5350 = vrot.slane %v5348, 1
        %v5351 = vor.u32 %v5346, %v5350
        %v5353 = vshll.u32 %v5186, 16
        %v5355 = vrot.slane %v5353, 1
        %v5356 = vsel %vm1232, %v5351, %v5355
        %v5358 = vshrl.u32 %v5107, 16
        %v5360 = vshll.u32 %v5107, 16
        %v5362 = vrot.slane %v5360, 1
        %v5363 = vor.u32 %v5358, %v5362
        %v5365 = vshll.u32 %v5187, 16
        %v5367 = vrot.slane %v5365, 1
        %v5368 = vsel %vm1232, %v5363, %v5367
        %v5370 = vshrl.u32 %v5108, 16
        %v5372 = vshll.u32 %v5108, 16
        %v5374 = vrot.slane %v5372, 1
        %v5375 = vor.u32 %v5370, %v5374
        %v5377 = vshll.u32 %v5188, 16
        %v5379 = vrot.slane %v5377, 1
        %v5380 = vsel %vm1232, %v5375, %v5379
        %v5397 = vunpack.c.l.b16 %v4501
        %v5398 = vunpack.c.l.b16 %v4502
        %v5399 = vunpack.c.l.b16 %v4503
        %v5400 = vunpack.c.l.b16 %v4504
        %v5401 = vunpack.c.l.b16 %v4505
        %v5402 = vunpack.c.l.b16 %v4506
        %v5403 = vunpack.c.l.b16 %v4507
        %v5404 = vunpack.c.l.b16 %v4508
        %v5405 = vunpack.c.l.b16 %v4509
        %v5406 = vunpack.c.l.b16 %v4510
        %v5407 = vunpack.c.l.b16 %v4511
        %v5408 = vunpack.c.l.b16 %v4512
        %v5409 = vunpack.c.l.b16 %v4513
        %v5410 = vunpack.c.l.b16 %v4514
        %v5411 = vunpack.c.l.b16 %v4515
        %v5412 = vunpack.c.l.b16 %v4516
        %v5413 = vpack.c.b16 %v5062, %v5397
        %v5414 = vpack.c.b16 %v5064, %v5398
        %v5415 = vpack.c.b16 %v5066, %v5399
        %v5416 = vpack.c.b16 %v5068, %v5400
        %v5417 = vpack.c.b16 %v5070, %v5401
        %v5418 = vpack.c.b16 %v5072, %v5402
        %v5419 = vpack.c.b16 %v5074, %v5403
        %v5420 = vpack.c.b16 %v5076, %v5404
        %v5421 = vpack.c.b16 %v5078, %v5405
        %v5422 = vpack.c.b16 %v5080, %v5406
        %v5423 = vpack.c.b16 %v5082, %v5407
        %v5424 = vpack.c.b16 %v5084, %v5408
        %v5425 = vpack.c.b16 %v5086, %v5409
        %v5426 = vpack.c.b16 %v5088, %v5410
        %v5427 = vpack.c.b16 %v5090, %v5411
        %v5428 = vpack.c.b16 %v5092, %v5412
        %v5429 = vrot.slane %v5413, 1
        %v5430 = vrot.slane %v5173, 1
        %v5431 = vsel %vm1505, %v5429, %v5430
        %v5432 = vrot.slane %v5414, 1
        %v5433 = vrot.slane %v5174, 1
        %v5434 = vsel %vm1505, %v5432, %v5433
        %v5435 = vrot.slane %v5415, 1
        %v5436 = vrot.slane %v5175, 1
        %v5437 = vsel %vm1505, %v5435, %v5436
        %v5438 = vrot.slane %v5416, 1
        %v5439 = vrot.slane %v5176, 1
        %v5440 = vsel %vm1505, %v5438, %v5439
        %v5441 = vrot.slane %v5417, 1
        %v5442 = vrot.slane %v5177, 1
        %v5443 = vsel %vm1505, %v5441, %v5442
        %v5444 = vrot.slane %v5418, 1
        %v5445 = vrot.slane %v5178, 1
        %v5446 = vsel %vm1505, %v5444, %v5445
        %v5447 = vrot.slane %v5419, 1
        %v5448 = vrot.slane %v5179, 1
        %v5449 = vsel %vm1505, %v5447, %v5448
        %v5450 = vrot.slane %v5420, 1
        %v5451 = vrot.slane %v5180, 1
        %v5452 = vsel %vm1505, %v5450, %v5451
        %v5453 = vrot.slane %v5421, 1
        %v5454 = vrot.slane %v5181, 1
        %v5455 = vsel %vm1505, %v5453, %v5454
        %v5456 = vrot.slane %v5422, 1
        %v5457 = vrot.slane %v5182, 1
        %v5458 = vsel %vm1505, %v5456, %v5457
        %v5459 = vrot.slane %v5423, 1
        %v5460 = vrot.slane %v5183, 1
        %v5461 = vsel %vm1505, %v5459, %v5460
        %v5462 = vrot.slane %v5424, 1
        %v5463 = vrot.slane %v5184, 1
        %v5464 = vsel %vm1505, %v5462, %v5463
        %v5465 = vrot.slane %v5425, 1
        %v5466 = vrot.slane %v5185, 1
        %v5467 = vsel %vm1505, %v5465, %v5466
        %v5468 = vrot.slane %v5426, 1
        %v5469 = vrot.slane %v5186, 1
        %v5470 = vsel %vm1505, %v5468, %v5469
        %v5471 = vrot.slane %v5427, 1
        %v5472 = vrot.slane %v5187, 1
        %v5473 = vsel %vm1505, %v5471, %v5472
        %v5474 = vrot.slane %v5428, 1
        %v5475 = vrot.slane %v5188, 1
        %v5476 = vsel %vm1505, %v5474, %v5475
        %5477 = vrot.lane.b32.xlu0 %v5431, 64
        %v5478 = vpop.permute.xlu0 %5477
        %5479 = vrot.lane.b32.xlu0 %v5434, 64
        %v5480 = vpop.permute.xlu0 %5479
        %5481 = vrot.lane.b32.xlu0 %v5437, 64
        %v5482 = vpop.permute.xlu0 %5481
        %5483 = vrot.lane.b32.xlu0 %v5440, 64
        %v5484 = vpop.permute.xlu0 %5483
        %5485 = vrot.lane.b32.xlu0 %v5443, 64
        %v5486 = vpop.permute.xlu0 %5485
        %5487 = vrot.lane.b32.xlu0 %v5446, 64
        %v5488 = vpop.permute.xlu0 %5487
        %5489 = vrot.lane.b32.xlu0 %v5449, 64
        %v5490 = vpop.permute.xlu0 %5489
        %5491 = vrot.lane.b32.xlu0 %v5452, 64
        %v5492 = vpop.permute.xlu0 %5491
        %5493 = vrot.lane.b32.xlu0 %v5455, 64
        %v5494 = vpop.permute.xlu0 %5493
        %5495 = vrot.lane.b32.xlu0 %v5458, 64
        %v5496 = vpop.permute.xlu0 %5495
        %5497 = vrot.lane.b32.xlu0 %v5461, 64
        %v5498 = vpop.permute.xlu0 %5497
        %5499 = vrot.lane.b32.xlu0 %v5464, 64
        %v5500 = vpop.permute.xlu0 %5499
        %5501 = vrot.lane.b32.xlu0 %v5467, 64
        %v5502 = vpop.permute.xlu0 %5501
        %5503 = vrot.lane.b32.xlu0 %v5470, 64
        %v5504 = vpop.permute.xlu0 %5503
        %5505 = vrot.lane.b32.xlu0 %v5473, 64
        %v5506 = vpop.permute.xlu0 %5505
        %5507 = vrot.lane.b32.xlu0 %v5476, 64
        %v5508 = vpop.permute.xlu0 %5507
        %v5541 = vunpack.c.l.b16 %v4517
        %v5542 = vunpack.c.l.b16 %v4518
        %v5543 = vunpack.c.l.b16 %v4519
        %v5544 = vunpack.c.l.b16 %v4520
        %v5545 = vunpack.c.l.b16 %v4521
        %v5546 = vunpack.c.l.b16 %v4522
        %v5547 = vunpack.c.l.b16 %v4523
        %v5548 = vunpack.c.l.b16 %v4524
        %v5549 = vunpack.c.l.b16 %v4525
        %v5550 = vunpack.c.l.b16 %v4526
        %v5551 = vunpack.c.l.b16 %v4527
        %v5552 = vunpack.c.l.b16 %v4528
        %v5553 = vunpack.c.l.b16 %v4529
        %v5554 = vunpack.c.l.b16 %v4530
        %v5555 = vunpack.c.l.b16 %v4531
        %v5556 = vunpack.c.l.b16 %v4532
        %v5557 = vunpack.c.l.b16 %v4533
        %v5558 = vunpack.c.l.b16 %v4534
        %v5559 = vunpack.c.l.b16 %v4535
        %v5560 = vunpack.c.l.b16 %v4536
        %v5561 = vunpack.c.l.b16 %v4537
        %v5562 = vunpack.c.l.b16 %v4538
        %v5563 = vunpack.c.l.b16 %v4539
        %v5564 = vunpack.c.l.b16 %v4540
        %v5565 = vunpack.c.l.b16 %v4541
        %v5566 = vunpack.c.l.b16 %v4542
        %v5567 = vunpack.c.l.b16 %v4543
        %v5568 = vunpack.c.l.b16 %v4544
        %v5569 = vunpack.c.l.b16 %v4545
        %v5570 = vunpack.c.l.b16 %v4546
        %v5571 = vunpack.c.l.b16 %v4547
        %v5572 = vunpack.c.l.b16 %v4548
        %v5573 = vpack.c.b16 %v5542, %v5541
        %v5574 = vpack.c.b16 %v5544, %v5543
        %v5575 = vpack.c.b16 %v5546, %v5545
        %v5576 = vpack.c.b16 %v5548, %v5547
        %v5577 = vpack.c.b16 %v5550, %v5549
        %v5578 = vpack.c.b16 %v5552, %v5551
        %v5579 = vpack.c.b16 %v5554, %v5553
        %v5580 = vpack.c.b16 %v5556, %v5555
        %v5581 = vpack.c.b16 %v5558, %v5557
        %v5582 = vpack.c.b16 %v5560, %v5559
        %v5583 = vpack.c.b16 %v5562, %v5561
        %v5584 = vpack.c.b16 %v5564, %v5563
        %v5585 = vpack.c.b16 %v5566, %v5565
        %v5586 = vpack.c.b16 %v5568, %v5567
        %v5587 = vpack.c.b16 %v5570, %v5569
        %v5588 = vpack.c.b16 %v5572, %v5571
        %v5605 = vunpack.c.l.b16 %v4549
        %v5606 = vunpack.c.l.b16 %v4550
        %v5607 = vunpack.c.l.b16 %v4551
        %v5608 = vunpack.c.l.b16 %v4552
        %v5609 = vunpack.c.l.b16 %v4553
        %v5610 = vunpack.c.l.b16 %v4554
        %v5611 = vunpack.c.l.b16 %v4555
        %v5612 = vunpack.c.l.b16 %v4556
        %v5613 = vunpack.c.l.b16 %v4557
        %v5614 = vunpack.c.l.b16 %v4558
        %v5615 = vunpack.c.l.b16 %v4559
        %v5616 = vunpack.c.l.b16 %v4560
        %v5617 = vunpack.c.l.b16 %v4561
        %v5618 = vunpack.c.l.b16 %v4562
        %v5619 = vunpack.c.l.b16 %v4563
        %v5620 = vunpack.c.l.b16 %v4564
        %v5621 = vpack.c.b16 %v5605, %v5605
        %v5622 = vpack.c.b16 %v5606, %v5606
        %v5623 = vpack.c.b16 %v5607, %v5607
        %v5624 = vpack.c.b16 %v5608, %v5608
        %v5625 = vpack.c.b16 %v5609, %v5609
        %v5626 = vpack.c.b16 %v5610, %v5610
        %v5627 = vpack.c.b16 %v5611, %v5611
        %v5628 = vpack.c.b16 %v5612, %v5612
        %v5629 = vpack.c.b16 %v5613, %v5613
        %v5630 = vpack.c.b16 %v5614, %v5614
        %v5631 = vpack.c.b16 %v5615, %v5615
        %v5632 = vpack.c.b16 %v5616, %v5616
        %v5633 = vpack.c.b16 %v5617, %v5617
        %v5634 = vpack.c.b16 %v5618, %v5618
        %v5635 = vpack.c.b16 %v5619, %v5619
        %v5636 = vpack.c.b16 %v5620, %v5620
        %v5638 = vshrl.u32 %v5573, 16
        %v5640 = vshll.u32 %v5573, 16
        %v5642 = vrot.slane %v5640, 1
        %v5643 = vor.u32 %v5638, %v5642
        %v5645 = vshll.u32 %v5621, 16
        %v5647 = vrot.slane %v5645, 1
        %v5648 = vsel %vm1232, %v5643, %v5647
        %v5650 = vshrl.u32 %v5574, 16
        %v5652 = vshll.u32 %v5574, 16
        %v5654 = vrot.slane %v5652, 1
        %v5655 = vor.u32 %v5650, %v5654
        %v5657 = vshll.u32 %v5622, 16
        %v5659 = vrot.slane %v5657, 1
        %v5660 = vsel %vm1232, %v5655, %v5659
        %v5662 = vshrl.u32 %v5575, 16
        %v5664 = vshll.u32 %v5575, 16
        %v5666 = vrot.slane %v5664, 1
        %v5667 = vor.u32 %v5662, %v5666
        %v5669 = vshll.u32 %v5623, 16
        %v5671 = vrot.slane %v5669, 1
        %v5672 = vsel %vm1232, %v5667, %v5671
        %v5674 = vshrl.u32 %v5576, 16
        %v5676 = vshll.u32 %v5576, 16
        %v5678 = vrot.slane %v5676, 1
        %v5679 = vor.u32 %v5674, %v5678
        %v5681 = vshll.u32 %v5624, 16
        %v5683 = vrot.slane %v5681, 1
        %v5684 = vsel %vm1232, %v5679, %v5683
        %v5686 = vshrl.u32 %v5577, 16
        %v5688 = vshll.u32 %v5577, 16
        %v5690 = vrot.slane %v5688, 1
        %v5691 = vor.u32 %v5686, %v5690
        %v5693 = vshll.u32 %v5625, 16
        %v5695 = vrot.slane %v5693, 1
        %v5696 = vsel %vm1232, %v5691, %v5695
        %v5698 = vshrl.u32 %v5578, 16
        %v5700 = vshll.u32 %v5578, 16
        %v5702 = vrot.slane %v5700, 1
        %v5703 = vor.u32 %v5698, %v5702
        %v5705 = vshll.u32 %v5626, 16
        %v5707 = vrot.slane %v5705, 1
        %v5708 = vsel %vm1232, %v5703, %v5707
        %v5710 = vshrl.u32 %v5579, 16
        %v5712 = vshll.u32 %v5579, 16
        %v5714 = vrot.slane %v5712, 1
        %v5715 = vor.u32 %v5710, %v5714
        %v5717 = vshll.u32 %v5627, 16
        %v5719 = vrot.slane %v5717, 1
        %v5720 = vsel %vm1232, %v5715, %v5719
        %v5722 = vshrl.u32 %v5580, 16
        %v5724 = vshll.u32 %v5580, 16
        %v5726 = vrot.slane %v5724, 1
        %v5727 = vor.u32 %v5722, %v5726
        %v5729 = vshll.u32 %v5628, 16
        %v5731 = vrot.slane %v5729, 1
        %v5732 = vsel %vm1232, %v5727, %v5731
        %v5734 = vshrl.u32 %v5581, 16
        %v5736 = vshll.u32 %v5581, 16
        %v5738 = vrot.slane %v5736, 1
        %v5739 = vor.u32 %v5734, %v5738
        %v5741 = vshll.u32 %v5629, 16
        %v5743 = vrot.slane %v5741, 1
        %v5744 = vsel %vm1232, %v5739, %v5743
        %v5746 = vshrl.u32 %v5582, 16
        %v5748 = vshll.u32 %v5582, 16
        %v5750 = vrot.slane %v5748, 1
        %v5751 = vor.u32 %v5746, %v5750
        %v5753 = vshll.u32 %v5630, 16
        %v5755 = vrot.slane %v5753, 1
        %v5756 = vsel %vm1232, %v5751, %v5755
        %v5758 = vshrl.u32 %v5583, 16
        %v5760 = vshll.u32 %v5583, 16
        %v5762 = vrot.slane %v5760, 1
        %v5763 = vor.u32 %v5758, %v5762
        %v5765 = vshll.u32 %v5631, 16
        %v5767 = vrot.slane %v5765, 1
        %v5768 = vsel %vm1232, %v5763, %v5767
        %v5770 = vshrl.u32 %v5584, 16
        %v5772 = vshll.u32 %v5584, 16
        %v5774 = vrot.slane %v5772, 1
        %v5775 = vor.u32 %v5770, %v5774
        %v5777 = vshll.u32 %v5632, 16
        %v5779 = vrot.slane %v5777, 1
        %v5780 = vsel %vm1232, %v5775, %v5779
        %v5782 = vshrl.u32 %v5585, 16
        %v5784 = vshll.u32 %v5585, 16
        %v5786 = vrot.slane %v5784, 1
        %v5787 = vor.u32 %v5782, %v5786
        %v5789 = vshll.u32 %v5633, 16
        %v5791 = vrot.slane %v5789, 1
        %v5792 = vsel %vm1232, %v5787, %v5791
        %v5794 = vshrl.u32 %v5586, 16
        %v5796 = vshll.u32 %v5586, 16
        %v5798 = vrot.slane %v5796, 1
        %v5799 = vor.u32 %v5794, %v5798
        %v5801 = vshll.u32 %v5634, 16
        %v5803 = vrot.slane %v5801, 1
        %v5804 = vsel %vm1232, %v5799, %v5803
        %v5806 = vshrl.u32 %v5587, 16
        %v5808 = vshll.u32 %v5587, 16
        %v5810 = vrot.slane %v5808, 1
        %v5811 = vor.u32 %v5806, %v5810
        %v5813 = vshll.u32 %v5635, 16
        %v5815 = vrot.slane %v5813, 1
        %v5816 = vsel %vm1232, %v5811, %v5815
        %v5818 = vshrl.u32 %v5588, 16
        %v5820 = vshll.u32 %v5588, 16
        %v5822 = vrot.slane %v5820, 1
        %v5823 = vor.u32 %v5818, %v5822
        %v5825 = vshll.u32 %v5636, 16
        %v5827 = vrot.slane %v5825, 1
        %v5828 = vsel %vm1232, %v5823, %v5827
        %5829 = vrot.lane.b32.xlu0 %v5648, 64
        %v5830 = vpop.permute.xlu0 %5829
        %5831 = vrot.lane.b32.xlu0 %v5660, 64
        %v5832 = vpop.permute.xlu0 %5831
        %5833 = vrot.lane.b32.xlu0 %v5672, 64
        %v5834 = vpop.permute.xlu0 %5833
        %5835 = vrot.lane.b32.xlu0 %v5684, 64
        %v5836 = vpop.permute.xlu0 %5835
        %5837 = vrot.lane.b32.xlu0 %v5696, 64
        %v5838 = vpop.permute.xlu0 %5837
        %5839 = vrot.lane.b32.xlu0 %v5708, 64
        %v5840 = vpop.permute.xlu0 %5839
        %5841 = vrot.lane.b32.xlu0 %v5720, 64
        %v5842 = vpop.permute.xlu0 %5841
        %5843 = vrot.lane.b32.xlu0 %v5732, 64
        %v5844 = vpop.permute.xlu0 %5843
        %5845 = vrot.lane.b32.xlu0 %v5744, 64
        %v5846 = vpop.permute.xlu0 %5845
        %5847 = vrot.lane.b32.xlu0 %v5756, 64
        %v5848 = vpop.permute.xlu0 %5847
        %5849 = vrot.lane.b32.xlu0 %v5768, 64
        %v5850 = vpop.permute.xlu0 %5849
        %5851 = vrot.lane.b32.xlu0 %v5780, 64
        %v5852 = vpop.permute.xlu0 %5851
        %5853 = vrot.lane.b32.xlu0 %v5792, 64
        %v5854 = vpop.permute.xlu0 %5853
        %5855 = vrot.lane.b32.xlu0 %v5804, 64
        %v5856 = vpop.permute.xlu0 %5855
        %5857 = vrot.lane.b32.xlu0 %v5816, 64
        %v5858 = vpop.permute.xlu0 %5857
        %5859 = vrot.lane.b32.xlu0 %v5828, 64
        %v5860 = vpop.permute.xlu0 %5859
        %v5877 = vunpack.c.l.b16 %v4565
        %v5878 = vunpack.c.l.b16 %v4566
        %v5879 = vunpack.c.l.b16 %v4567
        %v5880 = vunpack.c.l.b16 %v4568
        %v5881 = vunpack.c.l.b16 %v4569
        %v5882 = vunpack.c.l.b16 %v4570
        %v5883 = vunpack.c.l.b16 %v4571
        %v5884 = vunpack.c.l.b16 %v4572
        %v5885 = vunpack.c.l.b16 %v4573
        %v5886 = vunpack.c.l.b16 %v4574
        %v5887 = vunpack.c.l.b16 %v4575
        %v5888 = vunpack.c.l.b16 %v4576
        %v5889 = vunpack.c.l.b16 %v4577
        %v5890 = vunpack.c.l.b16 %v4578
        %v5891 = vunpack.c.l.b16 %v4579
        %v5892 = vunpack.c.l.b16 %v4580
        %v5893 = vpack.c.b16 %v5542, %v5877
        %v5894 = vpack.c.b16 %v5544, %v5878
        %v5895 = vpack.c.b16 %v5546, %v5879
        %v5896 = vpack.c.b16 %v5548, %v5880
        %v5897 = vpack.c.b16 %v5550, %v5881
        %v5898 = vpack.c.b16 %v5552, %v5882
        %v5899 = vpack.c.b16 %v5554, %v5883
        %v5900 = vpack.c.b16 %v5556, %v5884
        %v5901 = vpack.c.b16 %v5558, %v5885
        %v5902 = vpack.c.b16 %v5560, %v5886
        %v5903 = vpack.c.b16 %v5562, %v5887
        %v5904 = vpack.c.b16 %v5564, %v5888
        %v5905 = vpack.c.b16 %v5566, %v5889
        %v5906 = vpack.c.b16 %v5568, %v5890
        %v5907 = vpack.c.b16 %v5570, %v5891
        %v5908 = vpack.c.b16 %v5572, %v5892
        %v5909 = vrot.slane %v5893, 1
        %v5910 = vrot.slane %v5621, 1
        %v5911 = vsel %vm1505, %v5909, %v5910
        %v5912 = vrot.slane %v5894, 1
        %v5913 = vrot.slane %v5622, 1
        %v5914 = vsel %vm1505, %v5912, %v5913
        %v5915 = vrot.slane %v5895, 1
        %v5916 = vrot.slane %v5623, 1
        %v5917 = vsel %vm1505, %v5915, %v5916
        %v5918 = vrot.slane %v5896, 1
        %v5919 = vrot.slane %v5624, 1
        %v5920 = vsel %vm1505, %v5918, %v5919
        %v5921 = vrot.slane %v5897, 1
        %v5922 = vrot.slane %v5625, 1
        %v5923 = vsel %vm1505, %v5921, %v5922
        %v5924 = vrot.slane %v5898, 1
        %v5925 = vrot.slane %v5626, 1
        %v5926 = vsel %vm1505, %v5924, %v5925
        %v5927 = vrot.slane %v5899, 1
        %v5928 = vrot.slane %v5627, 1
        %v5929 = vsel %vm1505, %v5927, %v5928
        %v5930 = vrot.slane %v5900, 1
        %v5931 = vrot.slane %v5628, 1
        %v5932 = vsel %vm1505, %v5930, %v5931
        %v5933 = vrot.slane %v5901, 1
        %v5934 = vrot.slane %v5629, 1
        %v5935 = vsel %vm1505, %v5933, %v5934
        %v5936 = vrot.slane %v5902, 1
        %v5937 = vrot.slane %v5630, 1
        %v5938 = vsel %vm1505, %v5936, %v5937
        %v5939 = vrot.slane %v5903, 1
        %v5940 = vrot.slane %v5631, 1
        %v5941 = vsel %vm1505, %v5939, %v5940
        %v5942 = vrot.slane %v5904, 1
        %v5943 = vrot.slane %v5632, 1
        %v5944 = vsel %vm1505, %v5942, %v5943
        %v5945 = vrot.slane %v5905, 1
        %v5946 = vrot.slane %v5633, 1
        %v5947 = vsel %vm1505, %v5945, %v5946
        %v5948 = vrot.slane %v5906, 1
        %v5949 = vrot.slane %v5634, 1
        %v5950 = vsel %vm1505, %v5948, %v5949
        %v5951 = vrot.slane %v5907, 1
        %v5952 = vrot.slane %v5635, 1
        %v5953 = vsel %vm1505, %v5951, %v5952
        %v5954 = vrot.slane %v5908, 1
        %v5955 = vrot.slane %v5636, 1
        %v5956 = vsel %vm1505, %v5954, %v5955
        %v5958 = vsel %vm2482, %v4645, %v4902
        %v5961 = vsel %vm2482, %v4646, %v4904
        %v5964 = vsel %vm2482, %v4647, %v4906
        %v5967 = vsel %vm2482, %v4648, %v4908
        %v5970 = vsel %vm2482, %v4649, %v4910
        %v5973 = vsel %vm2482, %v4650, %v4912
        %v5976 = vsel %vm2482, %v4651, %v4914
        %v5979 = vsel %vm2482, %v4652, %v4916
        %v5982 = vsel %vm2482, %v4653, %v4918
        %v5985 = vsel %vm2482, %v4654, %v4920
        %v5988 = vsel %vm2482, %v4655, %v4922
        %v5991 = vsel %vm2482, %v4656, %v4924
        %v5994 = vsel %vm2482, %v4657, %v4926
        %v5997 = vsel %vm2482, %v4658, %v4928
        %v6000 = vsel %vm2482, %v4659, %v4930
        %v6003 = vsel %vm2482, %v4660, %v4932
        %v6007 = vsel %vm2482, %v4983, %v5110
        %v6011 = vsel %vm2482, %v4986, %v5112
        %v6015 = vsel %vm2482, %v4989, %v5114
        %v6019 = vsel %vm2482, %v4992, %v5116
        %v6023 = vsel %vm2482, %v4995, %v5118
        %v6027 = vsel %vm2482, %v4998, %v5120
        %v6031 = vsel %vm2482, %v5001, %v5122
        %v6035 = vsel %vm2482, %v5004, %v5124
        %v6039 = vsel %vm2482, %v5007, %v5126
        %v6043 = vsel %vm2482, %v5010, %v5128
        %v6047 = vsel %vm2482, %v5013, %v5130
        %v6051 = vsel %vm2482, %v5016, %v5132
        %v6055 = vsel %vm2482, %v5019, %v5134
        %v6059 = vsel %vm2482, %v5022, %v5136
        %v6063 = vsel %vm2482, %v5025, %v5138
        %v6067 = vsel %vm2482, %v5028, %v5140
        %v6071 = vsel %vm2482, %v5200, %v5478
        %v6075 = vsel %vm2482, %v5212, %v5480
        %v6079 = vsel %vm2482, %v5224, %v5482
        %v6083 = vsel %vm2482, %v5236, %v5484
        %v6087 = vsel %vm2482, %v5248, %v5486
        %v6091 = vsel %vm2482, %v5260, %v5488
        %v6095 = vsel %vm2482, %v5272, %v5490
        %v6099 = vsel %vm2482, %v5284, %v5492
        %v6103 = vsel %vm2482, %v5296, %v5494
        %v6107 = vsel %vm2482, %v5308, %v5496
        %v6111 = vsel %vm2482, %v5320, %v5498
        %v6115 = vsel %vm2482, %v5332, %v5500
        %v6119 = vsel %vm2482, %v5344, %v5502
        %v6123 = vsel %vm2482, %v5356, %v5504
        %v6127 = vsel %vm2482, %v5368, %v5506
        %v6131 = vsel %vm2482, %v5380, %v5508
        %v6134 = vsel %vm2482, %v5573, %v5830
        %v6137 = vsel %vm2482, %v5574, %v5832
        %v6140 = vsel %vm2482, %v5575, %v5834
        %v6143 = vsel %vm2482, %v5576, %v5836
        %v6146 = vsel %vm2482, %v5577, %v5838
        %v6149 = vsel %vm2482, %v5578, %v5840
        %v6152 = vsel %vm2482, %v5579, %v5842
        %v6155 = vsel %vm2482, %v5580, %v5844
        %v6158 = vsel %vm2482, %v5581, %v5846
        %v6161 = vsel %vm2482, %v5582, %v5848
        %v6164 = vsel %vm2482, %v5583, %v5850
        %v6167 = vsel %vm2482, %v5584, %v5852
        %v6170 = vsel %vm2482, %v5585, %v5854
        %v6173 = vsel %vm2482, %v5586, %v5856
        %v6176 = vsel %vm2482, %v5587, %v5858
        %v6179 = vsel %vm2482, %v5588, %v5860
        %v6181 = vld [vmem:[%s2] sm:$0xf]
        %v6182 = vld [vmem:[%s2 + $0x4] sm:$0xf]
        %v6183 = vld [vmem:[%s2 + $0x8] sm:$0xf]
        %v6184 = vld [vmem:[%s2 + $0xc] sm:$0xf]
        %v6185 = vld [vmem:[%s2 + $0x10] sm:$0xf]
        %v6186 = vld [vmem:[%s2 + $0x14] sm:$0xf]
        %v6187 = vld [vmem:[%s2 + $0x18] sm:$0xf]
        %v6188 = vld [vmem:[%s2 + $0x1c] sm:$0xf]
        %v6189 = vld [vmem:[%s2 + $0x20] sm:$0xf]
        %v6190 = vld [vmem:[%s2 + $0x24] sm:$0xf]
        %v6191 = vld [vmem:[%s2 + $0x28] sm:$0xf]
        %v6192 = vld [vmem:[%s2 + $0x2c] sm:$0xf]
        %v6193 = vld [vmem:[%s2 + $0x30] sm:$0xf]
        %v6194 = vld [vmem:[%s2 + $0x34] sm:$0xf]
        %v6195 = vld [vmem:[%s2 + $0x38] sm:$0xf]
        %v6196 = vld [vmem:[%s2 + $0x3c] sm:$0xf]
        %v6197 = vld [vmem:[%s2 + $0x40] sm:$0xf]
        %v6198 = vld [vmem:[%s2 + $0x44] sm:$0xf]
        %v6199 = vld [vmem:[%s2 + $0x48] sm:$0xf]
        %v6200 = vld [vmem:[%s2 + $0x4c] sm:$0xf]
        %v6201 = vld [vmem:[%s2 + $0x50] sm:$0xf]
        %v6202 = vld [vmem:[%s2 + $0x54] sm:$0xf]
        %v6203 = vld [vmem:[%s2 + $0x58] sm:$0xf]
        %v6204 = vld [vmem:[%s2 + $0x5c] sm:$0xf]
        %v6205 = vld [vmem:[%s2 + $0x60] sm:$0xf]
        %v6206 = vld [vmem:[%s2 + $0x64] sm:$0xf]
        %v6207 = vld [vmem:[%s2 + $0x68] sm:$0xf]
        %v6208 = vld [vmem:[%s2 + $0x6c] sm:$0xf]
        %v6209 = vld [vmem:[%s2 + $0x70] sm:$0xf]
        %v6210 = vld [vmem:[%s2 + $0x74] sm:$0xf]
        %v6211 = vld [vmem:[%s2 + $0x78] sm:$0xf]
        %v6212 = vld [vmem:[%s2 + $0x7c] sm:$0xf]
        %v6213 = vld [vmem:[%s2 + $0x80] sm:$0xf]
        %v6214 = vld [vmem:[%s2 + $0x84] sm:$0xf]
        %v6215 = vld [vmem:[%s2 + $0x88] sm:$0xf]
        %v6216 = vld [vmem:[%s2 + $0x8c] sm:$0xf]
        %v6217 = vld [vmem:[%s2 + $0x90] sm:$0xf]
        %v6218 = vld [vmem:[%s2 + $0x94] sm:$0xf]
        %v6219 = vld [vmem:[%s2 + $0x98] sm:$0xf]
        %v6220 = vld [vmem:[%s2 + $0x9c] sm:$0xf]
        %v6221 = vld [vmem:[%s2 + $0xa0] sm:$0xf]
        %v6222 = vld [vmem:[%s2 + $0xa4] sm:$0xf]
        %v6223 = vld [vmem:[%s2 + $0xa8] sm:$0xf]
        %v6224 = vld [vmem:[%s2 + $0xac] sm:$0xf]
        %v6225 = vld [vmem:[%s2 + $0xb0] sm:$0xf]
        %v6226 = vld [vmem:[%s2 + $0xb4] sm:$0xf]
        %v6227 = vld [vmem:[%s2 + $0xb8] sm:$0xf]
        %v6228 = vld [vmem:[%s2 + $0xbc] sm:$0xf]
        %v6229 = vld [vmem:[%s2 + $0xc0] sm:$0xf]
        %v6230 = vld [vmem:[%s2 + $0xc4] sm:$0xf]
        %v6231 = vld [vmem:[%s2 + $0xc8] sm:$0xf]
        %v6232 = vld [vmem:[%s2 + $0xcc] sm:$0xf]
        %v6233 = vld [vmem:[%s2 + $0xd0] sm:$0xf]
        %v6234 = vld [vmem:[%s2 + $0xd4] sm:$0xf]
        %v6235 = vld [vmem:[%s2 + $0xd8] sm:$0xf]
        %v6236 = vld [vmem:[%s2 + $0xdc] sm:$0xf]
        %v6237 = vld [vmem:[%s2 + $0xe0] sm:$0xf]
        %v6238 = vld [vmem:[%s2 + $0xe4] sm:$0xf]
        %v6239 = vld [vmem:[%s2 + $0xe8] sm:$0xf]
        %v6240 = vld [vmem:[%s2 + $0xec] sm:$0xf]
        %v6241 = vld [vmem:[%s2 + $0xf0] sm:$0xf]
        %v6242 = vld [vmem:[%s2 + $0xf4] sm:$0xf]
        %v6243 = vld [vmem:[%s2 + $0xf8] sm:$0xf]
        %v6244 = vld [vmem:[%s2 + $0xfc] sm:$0xf]
        %v6245 = vld [vmem:[%s2 + $0x100] sm:$0xf]
        %v6246 = vld [vmem:[%s2 + $0x104] sm:$0xf]
        %v6247 = vld [vmem:[%s2 + $0x108] sm:$0xf]
        %v6248 = vld [vmem:[%s2 + $0x10c] sm:$0xf]
        %v6249 = vld [vmem:[%s2 + $0x110] sm:$0xf]
        %v6250 = vld [vmem:[%s2 + $0x114] sm:$0xf]
        %v6251 = vld [vmem:[%s2 + $0x118] sm:$0xf]
        %v6252 = vld [vmem:[%s2 + $0x11c] sm:$0xf]
        %v6325 = vunpack.c.l.b16 %v6181
        %v6326 = vunpack.c.l.b16 %v6182
        %v6327 = vunpack.c.l.b16 %v6183
        %v6328 = vunpack.c.l.b16 %v6184
        %v6329 = vunpack.c.l.b16 %v6185
        %v6330 = vunpack.c.l.b16 %v6186
        %v6331 = vunpack.c.l.b16 %v6187
        %v6332 = vunpack.c.l.b16 %v6188
        %v6333 = vunpack.c.l.b16 %v6189
        %v6334 = vunpack.c.l.b16 %v6190
        %v6335 = vunpack.c.l.b16 %v6191
        %v6336 = vunpack.c.l.b16 %v6192
        %v6337 = vunpack.c.l.b16 %v6193
        %v6338 = vunpack.c.l.b16 %v6194
        %v6339 = vunpack.c.l.b16 %v6195
        %v6340 = vunpack.c.l.b16 %v6196
        %v6341 = vunpack.c.l.b16 %v6197
        %v6342 = vunpack.c.l.b16 %v6198
        %v6343 = vunpack.c.l.b16 %v6199
        %v6344 = vunpack.c.l.b16 %v6200
        %v6345 = vunpack.c.l.b16 %v6201
        %v6346 = vunpack.c.l.b16 %v6202
        %v6347 = vunpack.c.l.b16 %v6203
        %v6348 = vunpack.c.l.b16 %v6204
        %v6349 = vunpack.c.l.b16 %v6205
        %v6350 = vunpack.c.l.b16 %v6206
        %v6351 = vunpack.c.l.b16 %v6207
        %v6352 = vunpack.c.l.b16 %v6208
        %v6353 = vunpack.c.l.b16 %v6209
        %v6354 = vunpack.c.l.b16 %v6210
        %v6355 = vunpack.c.l.b16 %v6211
        %v6356 = vunpack.c.l.b16 %v6212
        %v6357 = vunpack.c.l.b16 %v6213
        %v6358 = vunpack.c.l.b16 %v6214
        %v6359 = vunpack.c.l.b16 %v6215
        %v6360 = vunpack.c.l.b16 %v6216
        %v6361 = vunpack.c.l.b16 %v6217
        %v6362 = vunpack.c.l.b16 %v6218
        %v6363 = vunpack.c.l.b16 %v6219
        %v6364 = vunpack.c.l.b16 %v6220
        %v6365 = vunpack.c.l.b16 %v6221
        %v6366 = vunpack.c.l.b16 %v6222
        %v6367 = vunpack.c.l.b16 %v6223
        %v6368 = vunpack.c.l.b16 %v6224
        %v6369 = vunpack.c.l.b16 %v6225
        %v6370 = vunpack.c.l.b16 %v6226
        %v6371 = vunpack.c.l.b16 %v6227
        %v6372 = vunpack.c.l.b16 %v6228
        %v6373 = vunpack.c.l.b16 %v6229
        %v6374 = vunpack.c.l.b16 %v6230
        %v6375 = vunpack.c.l.b16 %v6231
        %v6376 = vunpack.c.l.b16 %v6232
        %v6377 = vunpack.c.l.b16 %v6233
        %v6378 = vunpack.c.l.b16 %v6234
        %v6379 = vunpack.c.l.b16 %v6235
        %v6380 = vunpack.c.l.b16 %v6236
        %v6381 = vunpack.c.l.b16 %v6237
        %v6382 = vunpack.c.l.b16 %v6238
        %v6383 = vunpack.c.l.b16 %v6239
        %v6384 = vunpack.c.l.b16 %v6240
        %v6385 = vunpack.c.l.b16 %v6241
        %v6386 = vunpack.c.l.b16 %v6242
        %v6387 = vunpack.c.l.b16 %v6243
        %v6388 = vunpack.c.l.b16 %v6244
        %v6389 = vunpack.c.l.b16 %v6245
        %v6390 = vunpack.c.l.b16 %v6246
        %v6391 = vunpack.c.l.b16 %v6247
        %v6392 = vunpack.c.l.b16 %v6248
        %v6393 = vunpack.c.l.b16 %v6249
        %v6394 = vunpack.c.l.b16 %v6250
        %v6395 = vunpack.c.l.b16 %v6251
        %v6396 = vunpack.c.l.b16 %v6252
        %v6397 = vpack.c.b16 %v6326, %v6325
        %v6398 = vpack.c.b16 %v6328, %v6327
        %v6399 = vpack.c.b16 %v6330, %v6329
        %v6400 = vpack.c.b16 %v6332, %v6331
        %v6401 = vpack.c.b16 %v6334, %v6333
        %v6402 = vpack.c.b16 %v6336, %v6335
        %v6403 = vpack.c.b16 %v6338, %v6337
        %v6404 = vpack.c.b16 %v6340, %v6339
        %v6405 = vpack.c.b16 %v6342, %v6341
        %v6406 = vpack.c.b16 %v6344, %v6343
        %v6407 = vpack.c.b16 %v6346, %v6345
        %v6408 = vpack.c.b16 %v6348, %v6347
        %v6409 = vpack.c.b16 %v6350, %v6349
        %v6410 = vpack.c.b16 %v6352, %v6351
        %v6411 = vpack.c.b16 %v6354, %v6353
        %v6412 = vpack.c.b16 %v6356, %v6355
        %v6413 = vpack.c.b16 %v6358, %v6357
        %v6414 = vpack.c.b16 %v6360, %v6359
        %v6415 = vpack.c.b16 %v6362, %v6361
        %v6416 = vpack.c.b16 %v6364, %v6363
        %v6417 = vpack.c.b16 %v6366, %v6365
        %v6418 = vpack.c.b16 %v6368, %v6367
        %v6419 = vpack.c.b16 %v6370, %v6369
        %v6420 = vpack.c.b16 %v6372, %v6371
        %v6421 = vpack.c.b16 %v6374, %v6373
        %v6422 = vpack.c.b16 %v6376, %v6375
        %v6423 = vpack.c.b16 %v6378, %v6377
        %v6424 = vpack.c.b16 %v6380, %v6379
        %v6425 = vpack.c.b16 %v6382, %v6381
        %v6426 = vpack.c.b16 %v6384, %v6383
        %v6427 = vpack.c.b16 %v6386, %v6385
        %v6428 = vpack.c.b16 %v6388, %v6387
        %v6429 = vpack.c.b16 %v6390, %v6389
        %v6430 = vpack.c.b16 %v6392, %v6391
        %v6431 = vpack.c.b16 %v6394, %v6393
        %v6432 = vpack.c.b16 %v6396, %v6395
        %v6470 = vsel %vm2482, %v5911, 0
        %v6473 = vsel %vm2482, %v5914, 0
        %v6476 = vsel %vm2482, %v5917, 0
        %v6479 = vsel %vm2482, %v5920, 0
        %v6482 = vsel %vm2482, %v5923, 0
        %v6485 = vsel %vm2482, %v5926, 0
        %v6488 = vsel %vm2482, %v5929, 0
        %v6491 = vsel %vm2482, %v5932, 0
        %v6494 = vsel %vm2482, %v5935, 0
        %v6497 = vsel %vm2482, %v5938, 0
        %v6500 = vsel %vm2482, %v5941, 0
        %v6503 = vsel %vm2482, %v5944, 0
        %v6506 = vsel %vm2482, %v5947, 0
        %v6509 = vsel %vm2482, %v5950, 0
        %v6512 = vsel %vm2482, %v5953, 0
        %v6515 = vsel %vm2482, %v5956, 0
        %6517 = vmatprep.subr.bf16.mxu0 0
        %6518 = vmatpush1.bf16.msra.mxu0 %v6397
        %6519 = vmatprep.subr.bf16.mxu0 0
        %6520 = vmatpush1.bf16.msra.mxu0 %v6398
        %6521 = vmatprep.subr.bf16.mxu0 0
        %6522 = vmatpush1.bf16.msra.mxu0 %v6399
        %6523 = vmatprep.subr.bf16.mxu0 0
        %6524 = vmatpush1.bf16.msra.mxu0 %v6400
        %6525 = vmatprep.subr.bf16.mxu0 0
        %6526 = vmatpush1.bf16.msra.mxu0 %v6401
        %6527 = vmatprep.subr.bf16.mxu0 0
        %6528 = vmatpush1.bf16.msra.mxu0 %v6402
        %6529 = vmatprep.subr.bf16.mxu0 0
        %6530 = vmatpush1.bf16.msra.mxu0 %v6403
        %6531 = vmatprep.subr.bf16.mxu0 0
        %6532 = vmatpush1.bf16.msra.mxu0 %v6404
        %6533 = vmatprep.subr.bf16.mxu0 0
        %6534 = vmatpush1.bf16.msra.mxu0 %v6405
        %6535 = vmatprep.subr.bf16.mxu0 0
        %6536 = vmatpush1.bf16.msra.mxu0 %v6406
        %6537 = vmatprep.subr.bf16.mxu0 0
        %6538 = vmatpush1.bf16.msra.mxu0 %v6407
        %6539 = vmatprep.subr.bf16.mxu0 0
        %6540 = vmatpush1.bf16.msra.mxu0 %v6408
        %6541 = vmatprep.subr.bf16.mxu0 0
        %6542 = vmatpush1.bf16.msra.mxu0 %v6409
        %6543 = vmatprep.subr.bf16.mxu0 0
        %6544 = vmatpush1.bf16.msra.mxu0 %v6410
        %6545 = vmatprep.subr.bf16.mxu0 0
        %6546 = vmatpush1.bf16.msra.mxu0 %v6411
        %6547 = vmatprep.subr.bf16.mxu0 0
        %6548 = vmatpush1.bf16.msra.mxu0 %v6412
        %6549 = vmatprep.mubr.bf16.mxu0 %v6007
        %6550 = vmatmul.mubr.bf16.gmra.mrb[0].mxu0 %v5958
        %v6551 = vpop.f32.mrb[0].mxu0
        %v6552 = vadd.f32 0.0, %v6551
        %v6553 = vpop.f32.mrb[0].mxu0
        %v6554 = vpop.f32.mrb[0].mxu0
        %v6555 = vadd.f32 0.0, %v6554
        %v6556 = vpop.f32.mrb[0].mxu0
        %6557 = vmatprep.mubr.bf16.mxu0 %v6011
        %6558 = vmatmul.mubr.bf16.gmra.mrb[0].mxu0 %v5961
        %v6559 = vpop.f32.mrb[0].mxu0
        %v6560 = vadd.f32 0.0, %v6559
        %v6561 = vpop.f32.mrb[0].mxu0
        %v6562 = vpop.f32.mrb[0].mxu0
        %v6563 = vadd.f32 0.0, %v6562
        %v6564 = vpop.f32.mrb[0].mxu0
        %6565 = vmatprep.mubr.bf16.mxu0 %v6015
        %6566 = vmatmul.mubr.bf16.gmra.mrb[0].mxu0 %v5964
        %v6567 = vpop.f32.mrb[0].mxu0
        %v6568 = vadd.f32 0.0, %v6567
        %v6569 = vpop.f32.mrb[0].mxu0
        %v6570 = vpop.f32.mrb[0].mxu0
        %v6571 = vadd.f32 0.0, %v6570
        %v6572 = vpop.f32.mrb[0].mxu0
        %6573 = vmatprep.mubr.bf16.mxu0 %v6019
        %6574 = vmatmul.mubr.bf16.gmra.mrb[0].mxu0 %v5967
        %v6575 = vpop.f32.mrb[0].mxu0
        %v6576 = vadd.f32 0.0, %v6575
        %v6577 = vpop.f32.mrb[0].mxu0
        %v6578 = vpop.f32.mrb[0].mxu0
        %v6579 = vadd.f32 0.0, %v6578
        %v6580 = vpop.f32.mrb[0].mxu0
        %6581 = vmatprep.mubr.bf16.mxu0 %v6023
        %6582 = vmatmul.mubr.bf16.gmra.mrb[0].mxu0 %v5970
        %v6583 = vpop.f32.mrb[0].mxu0
        %v6584 = vadd.f32 0.0, %v6583
        %v6585 = vpop.f32.mrb[0].mxu0
        %v6586 = vpop.f32.mrb[0].mxu0
        %v6587 = vadd.f32 0.0, %v6586
        %v6588 = vpop.f32.mrb[0].mxu0
        %6589 = vmatprep.mubr.bf16.mxu0 %v6027
        %6590 = vmatmul.mubr.bf16.gmra.mrb[0].mxu0 %v5973
        %v6591 = vpop.f32.mrb[0].mxu0
        %v6592 = vadd.f32 0.0, %v6591
        %v6593 = vpop.f32.mrb[0].mxu0
        %v6594 = vpop.f32.mrb[0].mxu0
        %v6595 = vadd.f32 0.0, %v6594
        %v6596 = vpop.f32.mrb[0].mxu0
        %6597 = vmatprep.mubr.bf16.mxu0 %v6031
        %6598 = vmatmul.mubr.bf16.gmra.mrb[0].mxu0 %v5976
        %v6599 = vpop.f32.mrb[0].mxu0
        %v6600 = vadd.f32 0.0, %v6599
        %v6601 = vpop.f32.mrb[0].mxu0
        %v6602 = vpop.f32.mrb[0].mxu0
        %v6603 = vadd.f32 0.0, %v6602
        %v6604 = vpop.f32.mrb[0].mxu0
        %6605 = vmatprep.mubr.bf16.mxu0 %v6035
        %6606 = vmatmul.mubr.bf16.gmra.mrb[0].mxu0 %v5979
        %v6607 = vpop.f32.mrb[0].mxu0
        %v6608 = vadd.f32 0.0, %v6607
        %v6609 = vpop.f32.mrb[0].mxu0
        %v6610 = vpop.f32.mrb[0].mxu0
        %v6611 = vadd.f32 0.0, %v6610
        %v6612 = vpop.f32.mrb[0].mxu0
        %6613 = vmatprep.mubr.bf16.mxu0 %v6039
        %6614 = vmatmul.mubr.bf16.gmra.mrb[0].mxu0 %v5982
        %v6615 = vpop.f32.mrb[0].mxu0
        %v6616 = vadd.f32 0.0, %v6615
        %v6617 = vpop.f32.mrb[0].mxu0
        %v6618 = vpop.f32.mrb[0].mxu0
        %v6619 = vadd.f32 0.0, %v6618
        %v6620 = vpop.f32.mrb[0].mxu0
        %6621 = vmatprep.mubr.bf16.mxu0 %v6043
        %6622 = vmatmul.mubr.bf16.gmra.mrb[0].mxu0 %v5985
        %v6623 = vpop.f32.mrb[0].mxu0
        %v6624 = vadd.f32 0.0, %v6623
        %v6625 = vpop.f32.mrb[0].mxu0
        %v6626 = vpop.f32.mrb[0].mxu0
        %v6627 = vadd.f32 0.0, %v6626
        %v6628 = vpop.f32.mrb[0].mxu0
        %6629 = vmatprep.mubr.bf16.mxu0 %v6047
        %6630 = vmatmul.mubr.bf16.gmra.mrb[0].mxu0 %v5988
        %v6631 = vpop.f32.mrb[0].mxu0
        %v6632 = vadd.f32 0.0, %v6631
        %v6633 = vpop.f32.mrb[0].mxu0
        %v6634 = vpop.f32.mrb[0].mxu0
        %v6635 = vadd.f32 0.0, %v6634
        %v6636 = vpop.f32.mrb[0].mxu0
        %6637 = vmatprep.mubr.bf16.mxu0 %v6051
        %6638 = vmatmul.mubr.bf16.gmra.mrb[0].mxu0 %v5991
        %v6639 = vpop.f32.mrb[0].mxu0
        %v6640 = vadd.f32 0.0, %v6639
        %v6641 = vpop.f32.mrb[0].mxu0
        %v6642 = vpop.f32.mrb[0].mxu0
        %v6643 = vadd.f32 0.0, %v6642
        %v6644 = vpop.f32.mrb[0].mxu0
        %6645 = vmatprep.mubr.bf16.mxu0 %v6055
        %6646 = vmatmul.mubr.bf16.gmra.mrb[0].mxu0 %v5994
        %v6647 = vpop.f32.mrb[0].mxu0
        %v6648 = vadd.f32 0.0, %v6647
        %v6649 = vpop.f32.mrb[0].mxu0
        %v6650 = vpop.f32.mrb[0].mxu0
        %v6651 = vadd.f32 0.0, %v6650
        %v6652 = vpop.f32.mrb[0].mxu0
        %6653 = vmatprep.mubr.bf16.mxu0 %v6059
        %6654 = vmatmul.mubr.bf16.gmra.mrb[0].mxu0 %v5997
        %v6655 = vpop.f32.mrb[0].mxu0
        %v6656 = vadd.f32 0.0, %v6655
        %v6657 = vpop.f32.mrb[0].mxu0
        %v6658 = vpop.f32.mrb[0].mxu0
        %v6659 = vadd.f32 0.0, %v6658
        %v6660 = vpop.f32.mrb[0].mxu0
        %6661 = vmatprep.mubr.bf16.mxu0 %v6063
        %6662 = vmatmul.mubr.bf16.gmra.mrb[0].mxu0 %v6000
        %v6663 = vpop.f32.mrb[0].mxu0
        %v6664 = vadd.f32 0.0, %v6663
        %v6665 = vpop.f32.mrb[0].mxu0
        %v6666 = vpop.f32.mrb[0].mxu0
        %v6667 = vadd.f32 0.0, %v6666
        %v6668 = vpop.f32.mrb[0].mxu0
        %6669 = vmatprep.mubr.bf16.mxu0 %v6067
        %6670 = vmatmul.mubr.bf16.gmra.mrb[0].mxu0 %v6003
        %v6671 = vpop.f32.mrb[0].mxu0
        %v6672 = vadd.f32 0.0, %v6671
        %v6673 = vpop.f32.mrb[0].mxu0
        %v6674 = vpop.f32.mrb[0].mxu0
        %v6675 = vadd.f32 0.0, %v6674
        %v6676 = vpop.f32.mrb[0].mxu0
        %6677 = vdwg.mxu0
        %6678 = vmatprep.subr.bf16.mxu0 0
        %6679 = vmatpush1.bf16.msra.mxu0 %v6413
        %6680 = vmatprep.subr.bf16.mxu0 0
        %6681 = vmatpush1.bf16.msra.mxu0 %v6414
        %6682 = vmatprep.subr.bf16.mxu0 0
        %6683 = vmatpush1.bf16.msra.mxu0 %v6415
        %6684 = vmatprep.subr.bf16.mxu0 0
        %6685 = vmatpush1.bf16.msra.mxu0 %v6416
        %6686 = vmatprep.subr.bf16.mxu0 0
        %6687 = vmatpush1.bf16.msra.mxu0 %v6417
        %6688 = vmatprep.subr.bf16.mxu0 0
        %6689 = vmatpush1.bf16.msra.mxu0 %v6418
        %6690 = vmatprep.subr.bf16.mxu0 0
        %6691 = vmatpush1.bf16.msra.mxu0 %v6419
        %6692 = vmatprep.subr.bf16.mxu0 0
        %6693 = vmatpush1.bf16.msra.mxu0 %v6420
        %6694 = vmatprep.subr.bf16.mxu0 0
        %6695 = vmatpush1.bf16.msra.mxu0 %v6421
        %6696 = vmatprep.subr.bf16.mxu0 0
        %6697 = vmatpush1.bf16.msra.mxu0 %v6422
        %6698 = vmatprep.subr.bf16.mxu0 0
        %6699 = vmatpush1.bf16.msra.mxu0 %v6423
        %6700 = vmatprep.subr.bf16.mxu0 0
        %6701 = vmatpush1.bf16.msra.mxu0 %v6424
        %6702 = vmatprep.subr.bf16.mxu0 0
        %6703 = vmatpush1.bf16.msra.mxu0 %v6425
        %6704 = vmatprep.subr.bf16.mxu0 0
        %6705 = vmatpush1.bf16.msra.mxu0 %v6426
        %6706 = vmatprep.subr.bf16.mxu0 0
        %6707 = vmatpush1.bf16.msra.mxu0 %v6427
        %6708 = vmatprep.subr.bf16.mxu0 0
        %6709 = vmatpush1.bf16.msra.mxu0 %v6428
        %6710 = vmatprep.mubr.bf16.mxu0 %v6134
        %6711 = vmatmul.mubr.bf16.gmra.mrb[0].mxu0 %v6071
        %v6712 = vpop.f32.mrb[0].mxu0
        %v6713 = vadd.f32 %v6552, %v6712
        %v6714 = vpop.f32.mrb[0].mxu0
        %v6715 = vpop.f32.mrb[0].mxu0
        %v6716 = vadd.f32 %v6555, %v6715
        %v6717 = vpop.f32.mrb[0].mxu0
        %6718 = vmatprep.mubr.bf16.mxu0 %v6137
        %6719 = vmatmul.mubr.bf16.gmra.mrb[0].mxu0 %v6075
        %v6720 = vpop.f32.mrb[0].mxu0
        %v6721 = vadd.f32 %v6560, %v6720
        %v6722 = vpop.f32.mrb[0].mxu0
        %v6723 = vpop.f32.mrb[0].mxu0
        %v6724 = vadd.f32 %v6563, %v6723
        %v6725 = vpop.f32.mrb[0].mxu0
        %6726 = vmatprep.mubr.bf16.mxu0 %v6140
        %6727 = vmatmul.mubr.bf16.gmra.mrb[0].mxu0 %v6079
        %v6728 = vpop.f32.mrb[0].mxu0
        %v6729 = vadd.f32 %v6568, %v6728
        %v6730 = vpop.f32.mrb[0].mxu0
        %v6731 = vpop.f32.mrb[0].mxu0
        %v6732 = vadd.f32 %v6571, %v6731
        %v6733 = vpop.f32.mrb[0].mxu0
        %6734 = vmatprep.mubr.bf16.mxu0 %v6143
        %6735 = vmatmul.mubr.bf16.gmra.mrb[0].mxu0 %v6083
        %v6736 = vpop.f32.mrb[0].mxu0
        %v6737 = vadd.f32 %v6576, %v6736
        %v6738 = vpop.f32.mrb[0].mxu0
        %v6739 = vpop.f32.mrb[0].mxu0
        %v6740 = vadd.f32 %v6579, %v6739
        %v6741 = vpop.f32.mrb[0].mxu0
        %6742 = vmatprep.mubr.bf16.mxu0 %v6146
        %6743 = vmatmul.mubr.bf16.gmra.mrb[0].mxu0 %v6087
        %v6744 = vpop.f32.mrb[0].mxu0
        %v6745 = vadd.f32 %v6584, %v6744
        %v6746 = vpop.f32.mrb[0].mxu0
        %v6747 = vpop.f32.mrb[0].mxu0
        %v6748 = vadd.f32 %v6587, %v6747
        %v6749 = vpop.f32.mrb[0].mxu0
        %6750 = vmatprep.mubr.bf16.mxu0 %v6149
        %6751 = vmatmul.mubr.bf16.gmra.mrb[0].mxu0 %v6091
        %v6752 = vpop.f32.mrb[0].mxu0
        %v6753 = vadd.f32 %v6592, %v6752
        %v6754 = vpop.f32.mrb[0].mxu0
        %v6755 = vpop.f32.mrb[0].mxu0
        %v6756 = vadd.f32 %v6595, %v6755
        %v6757 = vpop.f32.mrb[0].mxu0
        %6758 = vmatprep.mubr.bf16.mxu0 %v6152
        %6759 = vmatmul.mubr.bf16.gmra.mrb[0].mxu0 %v6095
        %v6760 = vpop.f32.mrb[0].mxu0
        %v6761 = vadd.f32 %v6600, %v6760
        %v6762 = vpop.f32.mrb[0].mxu0
        %v6763 = vpop.f32.mrb[0].mxu0
        %v6764 = vadd.f32 %v6603, %v6763
        %v6765 = vpop.f32.mrb[0].mxu0
        %6766 = vmatprep.mubr.bf16.mxu0 %v6155
        %6767 = vmatmul.mubr.bf16.gmra.mrb[0].mxu0 %v6099
        %v6768 = vpop.f32.mrb[0].mxu0
        %v6769 = vadd.f32 %v6608, %v6768
        %v6770 = vpop.f32.mrb[0].mxu0
        %v6771 = vpop.f32.mrb[0].mxu0
        %v6772 = vadd.f32 %v6611, %v6771
        %v6773 = vpop.f32.mrb[0].mxu0
        %6774 = vmatprep.mubr.bf16.mxu0 %v6158
        %6775 = vmatmul.mubr.bf16.gmra.mrb[0].mxu0 %v6103
        %v6776 = vpop.f32.mrb[0].mxu0
        %v6777 = vadd.f32 %v6616, %v6776
        %v6778 = vpop.f32.mrb[0].mxu0
        %v6779 = vpop.f32.mrb[0].mxu0
        %v6780 = vadd.f32 %v6619, %v6779
        %v6781 = vpop.f32.mrb[0].mxu0
        %6782 = vmatprep.mubr.bf16.mxu0 %v6161
        %6783 = vmatmul.mubr.bf16.gmra.mrb[0].mxu0 %v6107
        %v6784 = vpop.f32.mrb[0].mxu0
        %v6785 = vadd.f32 %v6624, %v6784
        %v6786 = vpop.f32.mrb[0].mxu0
        %v6787 = vpop.f32.mrb[0].mxu0
        %v6788 = vadd.f32 %v6627, %v6787
        %v6789 = vpop.f32.mrb[0].mxu0
        %6790 = vmatprep.mubr.bf16.mxu0 %v6164
        %6791 = vmatmul.mubr.bf16.gmra.mrb[0].mxu0 %v6111
        %v6792 = vpop.f32.mrb[0].mxu0
        %v6793 = vadd.f32 %v6632, %v6792
        %v6794 = vpop.f32.mrb[0].mxu0
        %v6795 = vpop.f32.mrb[0].mxu0
        %v6796 = vadd.f32 %v6635, %v6795
        %v6797 = vpop.f32.mrb[0].mxu0
        %6798 = vmatprep.mubr.bf16.mxu0 %v6167
        %6799 = vmatmul.mubr.bf16.gmra.mrb[0].mxu0 %v6115
        %v6800 = vpop.f32.mrb[0].mxu0
        %v6801 = vadd.f32 %v6640, %v6800
        %v6802 = vpop.f32.mrb[0].mxu0
        %v6803 = vpop.f32.mrb[0].mxu0
        %v6804 = vadd.f32 %v6643, %v6803
        %v6805 = vpop.f32.mrb[0].mxu0
        %6806 = vmatprep.mubr.bf16.mxu0 %v6170
        %6807 = vmatmul.mubr.bf16.gmra.mrb[0].mxu0 %v6119
        %v6808 = vpop.f32.mrb[0].mxu0
        %v6809 = vadd.f32 %v6648, %v6808
        %v6810 = vpop.f32.mrb[0].mxu0
        %v6811 = vpop.f32.mrb[0].mxu0
        %v6812 = vadd.f32 %v6651, %v6811
        %v6813 = vpop.f32.mrb[0].mxu0
        %6814 = vmatprep.mubr.bf16.mxu0 %v6173
        %6815 = vmatmul.mubr.bf16.gmra.mrb[0].mxu0 %v6123
        %v6816 = vpop.f32.mrb[0].mxu0
        %v6817 = vadd.f32 %v6656, %v6816
        %v6818 = vpop.f32.mrb[0].mxu0
        %v6819 = vpop.f32.mrb[0].mxu0
        %v6820 = vadd.f32 %v6659, %v6819
        %v6821 = vpop.f32.mrb[0].mxu0
        %6822 = vmatprep.mubr.bf16.mxu0 %v6176
        %6823 = vmatmul.mubr.bf16.gmra.mrb[0].mxu0 %v6127
        %v6824 = vpop.f32.mrb[0].mxu0
        %v6825 = vadd.f32 %v6664, %v6824
        %v6826 = vpop.f32.mrb[0].mxu0
        %v6827 = vpop.f32.mrb[0].mxu0
        %v6828 = vadd.f32 %v6667, %v6827
        %v6829 = vpop.f32.mrb[0].mxu0
        %6830 = vmatprep.mubr.bf16.mxu0 %v6179
        %6831 = vmatmul.mubr.bf16.gmra.mrb[0].mxu0 %v6131
        %v6832 = vpop.f32.mrb[0].mxu0
        %v6833 = vadd.f32 %v6672, %v6832
        %v6834 = vpop.f32.mrb[0].mxu0
        %v6835 = vpop.f32.mrb[0].mxu0
        %v6836 = vadd.f32 %v6675, %v6835
        %v6837 = vpop.f32.mrb[0].mxu0
        %6838 = vdwg.mxu0
        %6839 = vmatprep.subr.bf16.mxu0 0
        %6840 = vmatpush1.bf16.msra.mxu0 %v6429
        %6841 = vmatprep.subr.bf16.mxu0 0
        %6842 = vmatpush1.bf16.msra.mxu0 %v6430
        %6843 = vmatprep.subr.bf16.mxu0 0
        %6844 = vmatpush1.bf16.msra.mxu0 %v6431
        %6845 = vmatprep.subr.bf16.mxu0 0
        %6846 = vmatpush1.bf16.msra.mxu0 %v6432
        %6847 = vmatprep.subr.bf16.mxu0 0
        %6848 = vmatpush1.bf16.msra.mxu0 0
        %6849 = vmatprep.subr.bf16.mxu0 0
        %6850 = vmatpush1.bf16.msra.mxu0 0
        %6851 = vmatprep.subr.bf16.mxu0 0
        %6852 = vmatpush1.bf16.msra.mxu0 0
        %6853 = vmatprep.subr.bf16.mxu0 0
        %6854 = vmatpush1.bf16.msra.mxu0 0
        %6855 = vmatprep.subr.bf16.mxu0 0
        %6856 = vmatpush1.bf16.msra.mxu0 0
        %6857 = vmatprep.subr.bf16.mxu0 0
        %6858 = vmatpush1.bf16.msra.mxu0 0
        %6859 = vmatprep.subr.bf16.mxu0 0
        %6860 = vmatpush1.bf16.msra.mxu0 0
        %6861 = vmatprep.subr.bf16.mxu0 0
        %6862 = vmatpush1.bf16.msra.mxu0 0
        %6863 = vmatprep.subr.bf16.mxu0 0
        %6864 = vmatpush1.bf16.msra.mxu0 0
        %6865 = vmatprep.subr.bf16.mxu0 0
        %6866 = vmatpush1.bf16.msra.mxu0 0
        %6867 = vmatprep.subr.bf16.mxu0 0
        %6868 = vmatpush1.bf16.msra.mxu0 0
        %6869 = vmatprep.subr.bf16.mxu0 0
        %6870 = vmatpush1.bf16.msra.mxu0 0
        %6871 = vmatprep.mubr.bf16.mxu0 0
        %6872 = vmatmul.mubr.bf16.gmra.mrb[0].mxu0 %v6470
        %v6873 = vpop.f32.mrb[0].mxu0
        %v6874 = vadd.f32 %v6713, %v6873
        %v6875 = vpop.f32.mrb[0].mxu0
        %v6876 = vpop.f32.mrb[0].mxu0
        %v6877 = vadd.f32 %v6716, %v6876
        %v6878 = vpop.f32.mrb[0].mxu0
        %6879 = vmatprep.mubr.bf16.mxu0 0
        %6880 = vmatmul.mubr.bf16.gmra.mrb[0].mxu0 %v6473
        %v6881 = vpop.f32.mrb[0].mxu0
        %v6882 = vadd.f32 %v6721, %v6881
        %v6883 = vpop.f32.mrb[0].mxu0
        %v6884 = vpop.f32.mrb[0].mxu0
        %v6885 = vadd.f32 %v6724, %v6884
        %v6886 = vpop.f32.mrb[0].mxu0
        %6887 = vmatprep.mubr.bf16.mxu0 0
        %6888 = vmatmul.mubr.bf16.gmra.mrb[0].mxu0 %v6476
        %v6889 = vpop.f32.mrb[0].mxu0
        %v6890 = vadd.f32 %v6729, %v6889
        %v6891 = vpop.f32.mrb[0].mxu0
        %v6892 = vpop.f32.mrb[0].mxu0
        %v6893 = vadd.f32 %v6732, %v6892
        %v6894 = vpop.f32.mrb[0].mxu0
        %6895 = vmatprep.mubr.bf16.mxu0 0
        %6896 = vmatmul.mubr.bf16.gmra.mrb[0].mxu0 %v6479
        %v6897 = vpop.f32.mrb[0].mxu0
        %v6898 = vadd.f32 %v6737, %v6897
        %v6899 = vpop.f32.mrb[0].mxu0
        %v6900 = vpop.f32.mrb[0].mxu0
        %v6901 = vadd.f32 %v6740, %v6900
        %v6902 = vpop.f32.mrb[0].mxu0
        %6903 = vmatprep.mubr.bf16.mxu0 0
        %6904 = vmatmul.mubr.bf16.gmra.mrb[0].mxu0 %v6482
        %v6905 = vpop.f32.mrb[0].mxu0
        %v6906 = vadd.f32 %v6745, %v6905
        %v6907 = vpop.f32.mrb[0].mxu0
        %v6908 = vpop.f32.mrb[0].mxu0
        %v6909 = vadd.f32 %v6748, %v6908
        %v6910 = vpop.f32.mrb[0].mxu0
        %6911 = vmatprep.mubr.bf16.mxu0 0
        %6912 = vmatmul.mubr.bf16.gmra.mrb[0].mxu0 %v6485
        %v6913 = vpop.f32.mrb[0].mxu0
        %v6914 = vadd.f32 %v6753, %v6913
        %v6915 = vpop.f32.mrb[0].mxu0
        %v6916 = vpop.f32.mrb[0].mxu0
        %v6917 = vadd.f32 %v6756, %v6916
        %v6918 = vpop.f32.mrb[0].mxu0
        %6919 = vmatprep.mubr.bf16.mxu0 0
        %6920 = vmatmul.mubr.bf16.gmra.mrb[0].mxu0 %v6488
        %v6921 = vpop.f32.mrb[0].mxu0
        %v6922 = vadd.f32 %v6761, %v6921
        %v6923 = vpop.f32.mrb[0].mxu0
        %v6924 = vpop.f32.mrb[0].mxu0
        %v6925 = vadd.f32 %v6764, %v6924
        %v6926 = vpop.f32.mrb[0].mxu0
        %6927 = vmatprep.mubr.bf16.mxu0 0
        %6928 = vmatmul.mubr.bf16.gmra.mrb[0].mxu0 %v6491
        %v6929 = vpop.f32.mrb[0].mxu0
        %v6930 = vadd.f32 %v6769, %v6929
        %v6931 = vpop.f32.mrb[0].mxu0
        %v6932 = vpop.f32.mrb[0].mxu0
        %v6933 = vadd.f32 %v6772, %v6932
        %v6934 = vpop.f32.mrb[0].mxu0
        %6935 = vmatprep.mubr.bf16.mxu0 0
        %6936 = vmatmul.mubr.bf16.gmra.mrb[0].mxu0 %v6494
        %v6937 = vpop.f32.mrb[0].mxu0
        %v6938 = vadd.f32 %v6777, %v6937
        %v6939 = vpop.f32.mrb[0].mxu0
        %v6940 = vpop.f32.mrb[0].mxu0
        %v6941 = vadd.f32 %v6780, %v6940
        %v6942 = vpop.f32.mrb[0].mxu0
        %6943 = vmatprep.mubr.bf16.mxu0 0
        %6944 = vmatmul.mubr.bf16.gmra.mrb[0].mxu0 %v6497
        %v6945 = vpop.f32.mrb[0].mxu0
        %v6946 = vadd.f32 %v6785, %v6945
        %v6947 = vpop.f32.mrb[0].mxu0
        %v6948 = vpop.f32.mrb[0].mxu0
        %v6949 = vadd.f32 %v6788, %v6948
        %v6950 = vpop.f32.mrb[0].mxu0
        %6951 = vmatprep.mubr.bf16.mxu0 0
        %6952 = vmatmul.mubr.bf16.gmra.mrb[0].mxu0 %v6500
        %v6953 = vpop.f32.mrb[0].mxu0
        %v6954 = vadd.f32 %v6793, %v6953
        %v6955 = vpop.f32.mrb[0].mxu0
        %v6956 = vpop.f32.mrb[0].mxu0
        %v6957 = vadd.f32 %v6796, %v6956
        %v6958 = vpop.f32.mrb[0].mxu0
        %6959 = vmatprep.mubr.bf16.mxu0 0
        %6960 = vmatmul.mubr.bf16.gmra.mrb[0].mxu0 %v6503
        %v6961 = vpop.f32.mrb[0].mxu0
        %v6962 = vadd.f32 %v6801, %v6961
        %v6963 = vpop.f32.mrb[0].mxu0
        %v6964 = vpop.f32.mrb[0].mxu0
        %v6965 = vadd.f32 %v6804, %v6964
        %v6966 = vpop.f32.mrb[0].mxu0
        %6967 = vmatprep.mubr.bf16.mxu0 0
        %6968 = vmatmul.mubr.bf16.gmra.mrb[0].mxu0 %v6506
        %v6969 = vpop.f32.mrb[0].mxu0
        %v6970 = vadd.f32 %v6809, %v6969
        %v6971 = vpop.f32.mrb[0].mxu0
        %v6972 = vpop.f32.mrb[0].mxu0
        %v6973 = vadd.f32 %v6812, %v6972
        %v6974 = vpop.f32.mrb[0].mxu0
        %6975 = vmatprep.mubr.bf16.mxu0 0
        %6976 = vmatmul.mubr.bf16.gmra.mrb[0].mxu0 %v6509
        %v6977 = vpop.f32.mrb[0].mxu0
        %v6978 = vadd.f32 %v6817, %v6977
        %v6979 = vpop.f32.mrb[0].mxu0
        %v6980 = vpop.f32.mrb[0].mxu0
        %v6981 = vadd.f32 %v6820, %v6980
        %v6982 = vpop.f32.mrb[0].mxu0
        %6983 = vmatprep.mubr.bf16.mxu0 0
        %6984 = vmatmul.mubr.bf16.gmra.mrb[0].mxu0 %v6512
        %v6985 = vpop.f32.mrb[0].mxu0
        %v6986 = vadd.f32 %v6825, %v6985
        %v6987 = vpop.f32.mrb[0].mxu0
        %v6988 = vpop.f32.mrb[0].mxu0
        %v6989 = vadd.f32 %v6828, %v6988
        %v6990 = vpop.f32.mrb[0].mxu0
        %6991 = vmatprep.mubr.bf16.mxu0 0
        %6992 = vmatmul.mubr.bf16.gmra.mrb[0].mxu0 %v6515
        %v6993 = vpop.f32.mrb[0].mxu0
        %v6994 = vadd.f32 %v6833, %v6993
        %v6995 = vpop.f32.mrb[0].mxu0
        %v6996 = vpop.f32.mrb[0].mxu0
        %v6997 = vadd.f32 %v6836, %v6996
        %v6998 = vpop.f32.mrb[0].mxu0
        %6999 = vdwg.mxu0
        %v7000 = vsel %vm2482, %v6874, 0.0
        %v7001 = vsel %vm2482, %v6877, 0.0
        %v7002 = vadd.f32 %v7000, %v7001
        %v7003 = vsel %vm2482, %v6882, 0.0
        %v7004 = vadd.f32 %v7002, %v7003
        %v7005 = vsel %vm2482, %v6885, 0.0
        %v7006 = vadd.f32 %v7004, %v7005
        %v7007 = vsel %vm2482, %v6890, 0.0
        %v7008 = vadd.f32 %v7006, %v7007
        %v7009 = vsel %vm2482, %v6893, 0.0
        %v7010 = vadd.f32 %v7008, %v7009
        %v7011 = vsel %vm2482, %v6898, 0.0
        %v7012 = vadd.f32 %v7010, %v7011
        %v7013 = vsel %vm2482, %v6901, 0.0
        %v7014 = vadd.f32 %v7012, %v7013
        %v7015 = vsel %vm2482, %v6906, 0.0
        %v7016 = vadd.f32 %v7014, %v7015
        %v7017 = vsel %vm2482, %v6909, 0.0
        %v7018 = vadd.f32 %v7016, %v7017
        %v7019 = vsel %vm2482, %v6914, 0.0
        %v7020 = vadd.f32 %v7018, %v7019
        %v7021 = vsel %vm2482, %v6917, 0.0
        %v7022 = vadd.f32 %v7020, %v7021
        %v7023 = vsel %vm2482, %v6922, 0.0
        %v7024 = vadd.f32 %v7022, %v7023
        %v7025 = vsel %vm2482, %v6925, 0.0
        %v7026 = vadd.f32 %v7024, %v7025
        %v7027 = vsel %vm2482, %v6930, 0.0
        %v7028 = vadd.f32 %v7026, %v7027
        %v7029 = vsel %vm2482, %v6933, 0.0
        %v7030 = vadd.f32 %v7028, %v7029
        %v7031 = vsel %vm2482, %v6938, 0.0
        %v7032 = vadd.f32 %v7030, %v7031
        %v7033 = vsel %vm2482, %v6941, 0.0
        %v7034 = vadd.f32 %v7032, %v7033
        %v7035 = vsel %vm2482, %v6946, 0.0
        %v7036 = vadd.f32 %v7034, %v7035
        %v7037 = vsel %vm2482, %v6949, 0.0
        %v7038 = vadd.f32 %v7036, %v7037
        %v7039 = vsel %vm2482, %v6954, 0.0
        %v7040 = vadd.f32 %v7038, %v7039
        %v7041 = vsel %vm2482, %v6957, 0.0
        %v7042 = vadd.f32 %v7040, %v7041
        %v7043 = vsel %vm2482, %v6962, 0.0
        %v7044 = vadd.f32 %v7042, %v7043
        %v7045 = vsel %vm2482, %v6965, 0.0
        %v7046 = vadd.f32 %v7044, %v7045
        %v7047 = vsel %vm2482, %v6970, 0.0
        %v7048 = vadd.f32 %v7046, %v7047
        %v7049 = vsel %vm2482, %v6973, 0.0
        %v7050 = vadd.f32 %v7048, %v7049
        %v7051 = vsel %vm2482, %v6978, 0.0
        %v7052 = vadd.f32 %v7050, %v7051
        %v7053 = vsel %vm2482, %v6981, 0.0
        %v7054 = vadd.f32 %v7052, %v7053
        %v7055 = vsel %vm2482, %v6986, 0.0
        %v7056 = vadd.f32 %v7054, %v7055
        %v7057 = vsel %vm2482, %v6989, 0.0
        %v7058 = vadd.f32 %v7056, %v7057
        %v7059 = vsel %vm2482, %v6994, 0.0
        %v7060 = vadd.f32 %v7058, %v7059
        %v7061 = vsel %vm2482, %v6997, 0.0
        %v7062 = vadd.f32 %v7060, %v7061
        %v7063 = vrot.slane %v7062, 4
        %v7064 = vadd.f32 %v7062, %v7063
        %v7065 = vrot.slane %v7064, 2
        %v7066 = vadd.f32 %v7064, %v7065
        %v7067 = vrot.slane %v7066, 1
        %v7068 = vadd.f32 %v7066, %v7067
        %v7069 = vmul.f32 %v7068, 0.00390625
        %v7070 = vmul.f32 %v6874, %v6874
        %v7071 = vmul.f32 %v6877, %v6877
        %v7072 = vmul.f32 %v6882, %v6882
        %v7073 = vmul.f32 %v6885, %v6885
        %v7074 = vmul.f32 %v6890, %v6890
        %v7075 = vmul.f32 %v6893, %v6893
        %v7076 = vmul.f32 %v6898, %v6898
        %v7077 = vmul.f32 %v6901, %v6901
        %v7078 = vmul.f32 %v6906, %v6906
        %v7079 = vmul.f32 %v6909, %v6909
        %v7080 = vmul.f32 %v6914, %v6914
        %v7081 = vmul.f32 %v6917, %v6917
        %v7082 = vmul.f32 %v6922, %v6922
        %v7083 = vmul.f32 %v6925, %v6925
        %v7084 = vmul.f32 %v6930, %v6930
        %v7085 = vmul.f32 %v6933, %v6933
        %v7086 = vmul.f32 %v6938, %v6938
        %v7087 = vmul.f32 %v6941, %v6941
        %v7088 = vmul.f32 %v6946, %v6946
        %v7089 = vmul.f32 %v6949, %v6949
        %v7090 = vmul.f32 %v6954, %v6954
        %v7091 = vmul.f32 %v6957, %v6957
        %v7092 = vmul.f32 %v6962, %v6962
        %v7093 = vmul.f32 %v6965, %v6965
        %v7094 = vmul.f32 %v6970, %v6970
        %v7095 = vmul.f32 %v6973, %v6973
        %v7096 = vmul.f32 %v6978, %v6978
        %v7097 = vmul.f32 %v6981, %v6981
        %v7098 = vmul.f32 %v6986, %v6986
        %v7099 = vmul.f32 %v6989, %v6989
        %v7100 = vmul.f32 %v6994, %v6994
        %v7101 = vmul.f32 %v6997, %v6997
        %v7102 = vsel %vm2482, %v7070, 0.0
        %v7103 = vsel %vm2482, %v7071, 0.0
        %v7104 = vadd.f32 %v7102, %v7103
        %v7105 = vsel %vm2482, %v7072, 0.0
        %v7106 = vadd.f32 %v7104, %v7105
        %v7107 = vsel %vm2482, %v7073, 0.0
        %v7108 = vadd.f32 %v7106, %v7107
        %v7109 = vsel %vm2482, %v7074, 0.0
        %v7110 = vadd.f32 %v7108, %v7109
        %v7111 = vsel %vm2482, %v7075, 0.0
        %v7112 = vadd.f32 %v7110, %v7111
        %v7113 = vsel %vm2482, %v7076, 0.0
        %v7114 = vadd.f32 %v7112, %v7113
        %v7115 = vsel %vm2482, %v7077, 0.0
        %v7116 = vadd.f32 %v7114, %v7115
        %v7117 = vsel %vm2482, %v7078, 0.0
        %v7118 = vadd.f32 %v7116, %v7117
        %v7119 = vsel %vm2482, %v7079, 0.0
        %v7120 = vadd.f32 %v7118, %v7119
        %v7121 = vsel %vm2482, %v7080, 0.0
        %v7122 = vadd.f32 %v7120, %v7121
        %v7123 = vsel %vm2482, %v7081, 0.0
        %v7124 = vadd.f32 %v7122, %v7123
        %v7125 = vsel %vm2482, %v7082, 0.0
        %v7126 = vadd.f32 %v7124, %v7125
        %v7127 = vsel %vm2482, %v7083, 0.0
        %v7128 = vadd.f32 %v7126, %v7127
        %v7129 = vsel %vm2482, %v7084, 0.0
        %v7130 = vadd.f32 %v7128, %v7129
        %v7131 = vsel %vm2482, %v7085, 0.0
        %v7132 = vadd.f32 %v7130, %v7131
        %v7133 = vsel %vm2482, %v7086, 0.0
        %v7134 = vadd.f32 %v7132, %v7133
        %v7135 = vsel %vm2482, %v7087, 0.0
        %v7136 = vadd.f32 %v7134, %v7135
        %v7137 = vsel %vm2482, %v7088, 0.0
        %v7138 = vadd.f32 %v7136, %v7137
        %v7139 = vsel %vm2482, %v7089, 0.0
        %v7140 = vadd.f32 %v7138, %v7139
        %v7141 = vsel %vm2482, %v7090, 0.0
        %v7142 = vadd.f32 %v7140, %v7141
        %v7143 = vsel %vm2482, %v7091, 0.0
        %v7144 = vadd.f32 %v7142, %v7143
        %v7145 = vsel %vm2482, %v7092, 0.0
        %v7146 = vadd.f32 %v7144, %v7145
        %v7147 = vsel %vm2482, %v7093, 0.0
        %v7148 = vadd.f32 %v7146, %v7147
        %v7149 = vsel %vm2482, %v7094, 0.0
        %v7150 = vadd.f32 %v7148, %v7149
        %v7151 = vsel %vm2482, %v7095, 0.0
        %v7152 = vadd.f32 %v7150, %v7151
        %v7153 = vsel %vm2482, %v7096, 0.0
        %v7154 = vadd.f32 %v7152, %v7153
        %v7155 = vsel %vm2482, %v7097, 0.0
        %v7156 = vadd.f32 %v7154, %v7155
        %v7157 = vsel %vm2482, %v7098, 0.0
        %v7158 = vadd.f32 %v7156, %v7157
        %v7159 = vsel %vm2482, %v7099, 0.0
        %v7160 = vadd.f32 %v7158, %v7159
        %v7161 = vsel %vm2482, %v7100, 0.0
        %v7162 = vadd.f32 %v7160, %v7161
        %v7163 = vsel %vm2482, %v7101, 0.0
        %v7164 = vadd.f32 %v7162, %v7163
        %v7165 = vrot.slane %v7164, 4
        %v7166 = vadd.f32 %v7164, %v7165
        %v7167 = vrot.slane %v7166, 2
        %v7168 = vadd.f32 %v7166, %v7167
        %v7169 = vrot.slane %v7168, 1
        %v7170 = vadd.f32 %v7168, %v7169
        %v7171 = vmul.f32 %v7170, 0.00390625
        %v7172 = vmul.f32 %v7069, %v7069
        %v7173 = vsub.f32 %v7171, %v7172
        %v7174 = vsub.f32 %v6874, %v7069
        %v7175 = vsub.f32 %v6877, %v7069
        %v7176 = vsub.f32 %v6882, %v7069
        %v7177 = vsub.f32 %v6885, %v7069
        %v7178 = vsub.f32 %v6890, %v7069
        %v7179 = vsub.f32 %v6893, %v7069
        %v7180 = vsub.f32 %v6898, %v7069
        %v7181 = vsub.f32 %v6901, %v7069
        %v7182 = vsub.f32 %v6906, %v7069
        %v7183 = vsub.f32 %v6909, %v7069
        %v7184 = vsub.f32 %v6914, %v7069
        %v7185 = vsub.f32 %v6917, %v7069
        %v7186 = vsub.f32 %v6922, %v7069
        %v7187 = vsub.f32 %v6925, %v7069
        %v7188 = vsub.f32 %v6930, %v7069
        %v7189 = vsub.f32 %v6933, %v7069
        %v7190 = vsub.f32 %v6938, %v7069
        %v7191 = vsub.f32 %v6941, %v7069
        %v7192 = vsub.f32 %v6946, %v7069
        %v7193 = vsub.f32 %v6949, %v7069
        %v7194 = vsub.f32 %v6954, %v7069
        %v7195 = vsub.f32 %v6957, %v7069
        %v7196 = vsub.f32 %v6962, %v7069
        %v7197 = vsub.f32 %v6965, %v7069
        %v7198 = vsub.f32 %v6970, %v7069
        %v7199 = vsub.f32 %v6973, %v7069
        %v7200 = vsub.f32 %v6978, %v7069
        %v7201 = vsub.f32 %v6981, %v7069
        %v7202 = vsub.f32 %v6986, %v7069
        %v7203 = vsub.f32 %v6989, %v7069
        %v7204 = vsub.f32 %v6994, %v7069
        %v7205 = vsub.f32 %v6997, %v7069
        %v7206 = vadd.f32 %v7173, 1e-05
        %v7207 = vrsqrt.pop %v7206
        %v7208 = vmul.f32 %v7174, %v7207
        %v7209 = vmul.f32 %v7175, %v7207
        %v7210 = vmul.f32 %v7176, %v7207
        %v7211 = vmul.f32 %v7177, %v7207
        %v7212 = vmul.f32 %v7178, %v7207
        %v7213 = vmul.f32 %v7179, %v7207
        %v7214 = vmul.f32 %v7180, %v7207
        %v7215 = vmul.f32 %v7181, %v7207
        %v7216 = vmul.f32 %v7182, %v7207
        %v7217 = vmul.f32 %v7183, %v7207
        %v7218 = vmul.f32 %v7184, %v7207
        %v7219 = vmul.f32 %v7185, %v7207
        %v7220 = vmul.f32 %v7186, %v7207
        %v7221 = vmul.f32 %v7187, %v7207
        %v7222 = vmul.f32 %v7188, %v7207
        %v7223 = vmul.f32 %v7189, %v7207
        %v7224 = vmul.f32 %v7190, %v7207
        %v7225 = vmul.f32 %v7191, %v7207
        %v7226 = vmul.f32 %v7192, %v7207
        %v7227 = vmul.f32 %v7193, %v7207
        %v7228 = vmul.f32 %v7194, %v7207
        %v7229 = vmul.f32 %v7195, %v7207
        %v7230 = vmul.f32 %v7196, %v7207
        %v7231 = vmul.f32 %v7197, %v7207
        %v7232 = vmul.f32 %v7198, %v7207
        %v7233 = vmul.f32 %v7199, %v7207
        %v7234 = vmul.f32 %v7200, %v7207
        %v7235 = vmul.f32 %v7201, %v7207
        %v7236 = vmul.f32 %v7202, %v7207
        %v7237 = vmul.f32 %v7203, %v7207
        %v7238 = vmul.f32 %v7204, %v7207
        %v7239 = vmul.f32 %v7205, %v7207
        %vm7240 = vcmp.ge.f32.partialorder %v7208, 0.0
        %vm7241 = vcmp.ge.f32.partialorder %v7209, 0.0
        %vm7242 = vcmp.ge.f32.partialorder %v7210, 0.0
        %vm7243 = vcmp.ge.f32.partialorder %v7211, 0.0
        %vm7244 = vcmp.ge.f32.partialorder %v7212, 0.0
        %vm7245 = vcmp.ge.f32.partialorder %v7213, 0.0
        %vm7246 = vcmp.ge.f32.partialorder %v7214, 0.0
        %vm7247 = vcmp.ge.f32.partialorder %v7215, 0.0
        %vm7248 = vcmp.ge.f32.partialorder %v7216, 0.0
        %vm7249 = vcmp.ge.f32.partialorder %v7217, 0.0
        %vm7250 = vcmp.ge.f32.partialorder %v7218, 0.0
        %vm7251 = vcmp.ge.f32.partialorder %v7219, 0.0
        %vm7252 = vcmp.ge.f32.partialorder %v7220, 0.0
        %vm7253 = vcmp.ge.f32.partialorder %v7221, 0.0
        %vm7254 = vcmp.ge.f32.partialorder %v7222, 0.0
        %vm7255 = vcmp.ge.f32.partialorder %v7223, 0.0
        %vm7256 = vcmp.ge.f32.partialorder %v7224, 0.0
        %vm7257 = vcmp.ge.f32.partialorder %v7225, 0.0
        %vm7258 = vcmp.ge.f32.partialorder %v7226, 0.0
        %vm7259 = vcmp.ge.f32.partialorder %v7227, 0.0
        %vm7260 = vcmp.ge.f32.partialorder %v7228, 0.0
        %vm7261 = vcmp.ge.f32.partialorder %v7229, 0.0
        %vm7262 = vcmp.ge.f32.partialorder %v7230, 0.0
        %vm7263 = vcmp.ge.f32.partialorder %v7231, 0.0
        %vm7264 = vcmp.ge.f32.partialorder %v7232, 0.0
        %vm7265 = vcmp.ge.f32.partialorder %v7233, 0.0
        %vm7266 = vcmp.ge.f32.partialorder %v7234, 0.0
        %vm7267 = vcmp.ge.f32.partialorder %v7235, 0.0
        %vm7268 = vcmp.ge.f32.partialorder %v7236, 0.0
        %vm7269 = vcmp.ge.f32.partialorder %v7237, 0.0
        %vm7270 = vcmp.ge.f32.partialorder %v7238, 0.0
        %vm7271 = vcmp.ge.f32.partialorder %v7239, 0.0
        %v7272 = vmul.f32 %v7208, 0.01
        %v7273 = vmul.f32 %v7209, 0.01
        %v7274 = vmul.f32 %v7210, 0.01
        %v7275 = vmul.f32 %v7211, 0.01
        %v7276 = vmul.f32 %v7212, 0.01
        %v7277 = vmul.f32 %v7213, 0.01
        %v7278 = vmul.f32 %v7214, 0.01
        %v7279 = vmul.f32 %v7215, 0.01
        %v7280 = vmul.f32 %v7216, 0.01
        %v7281 = vmul.f32 %v7217, 0.01
        %v7282 = vmul.f32 %v7218, 0.01
        %v7283 = vmul.f32 %v7219, 0.01
        %v7284 = vmul.f32 %v7220, 0.01
        %v7285 = vmul.f32 %v7221, 0.01
        %v7286 = vmul.f32 %v7222, 0.01
        %v7287 = vmul.f32 %v7223, 0.01
        %v7288 = vmul.f32 %v7224, 0.01
        %v7289 = vmul.f32 %v7225, 0.01
        %v7290 = vmul.f32 %v7226, 0.01
        %v7291 = vmul.f32 %v7227, 0.01
        %v7292 = vmul.f32 %v7228, 0.01
        %v7293 = vmul.f32 %v7229, 0.01
        %v7294 = vmul.f32 %v7230, 0.01
        %v7295 = vmul.f32 %v7231, 0.01
        %v7296 = vmul.f32 %v7232, 0.01
        %v7297 = vmul.f32 %v7233, 0.01
        %v7298 = vmul.f32 %v7234, 0.01
        %v7299 = vmul.f32 %v7235, 0.01
        %v7300 = vmul.f32 %v7236, 0.01
        %v7301 = vmul.f32 %v7237, 0.01
        %v7302 = vmul.f32 %v7238, 0.01
        %v7303 = vmul.f32 %v7239, 0.01
        %v7304 = vsel %vm7240, %v7208, %v7272
        %v7305 = vsel %vm7241, %v7209, %v7273
        %v7306 = vsel %vm7242, %v7210, %v7274
        %v7307 = vsel %vm7243, %v7211, %v7275
        %v7308 = vsel %vm7244, %v7212, %v7276
        %v7309 = vsel %vm7245, %v7213, %v7277
        %v7310 = vsel %vm7246, %v7214, %v7278
        %v7311 = vsel %vm7247, %v7215, %v7279
        %v7312 = vsel %vm7248, %v7216, %v7280
        %v7313 = vsel %vm7249, %v7217, %v7281
        %v7314 = vsel %vm7250, %v7218, %v7282
        %v7315 = vsel %vm7251, %v7219, %v7283
        %v7316 = vsel %vm7252, %v7220, %v7284
        %v7317 = vsel %vm7253, %v7221, %v7285
        %v7318 = vsel %vm7254, %v7222, %v7286
        %v7319 = vsel %vm7255, %v7223, %v7287
        %v7320 = vsel %vm7256, %v7224, %v7288
        %v7321 = vsel %vm7257, %v7225, %v7289
        %v7322 = vsel %vm7258, %v7226, %v7290
        %v7323 = vsel %vm7259, %v7227, %v7291
        %v7324 = vsel %vm7260, %v7228, %v7292
        %v7325 = vsel %vm7261, %v7229, %v7293
        %v7326 = vsel %vm7262, %v7230, %v7294
        %v7327 = vsel %vm7263, %v7231, %v7295
        %v7328 = vsel %vm7264, %v7232, %v7296
        %v7329 = vsel %vm7265, %v7233, %v7297
        %v7330 = vsel %vm7266, %v7234, %v7298
        %v7331 = vsel %vm7267, %v7235, %v7299
        %v7332 = vsel %vm7268, %v7236, %v7300
        %v7333 = vsel %vm7269, %v7237, %v7301
        %v7334 = vsel %vm7270, %v7238, %v7302
        %v7335 = vsel %vm7271, %v7239, %v7303
        %v7336 = vpack.c.bf16 %v7305, %v7304
        %v7337 = vpack.c.bf16 %v7307, %v7306
        %v7338 = vpack.c.bf16 %v7309, %v7308
        %v7339 = vpack.c.bf16 %v7311, %v7310
        %v7340 = vpack.c.bf16 %v7313, %v7312
        %v7341 = vpack.c.bf16 %v7315, %v7314
        %v7342 = vpack.c.bf16 %v7317, %v7316
        %v7343 = vpack.c.bf16 %v7319, %v7318
        %v7344 = vpack.c.bf16 %v7321, %v7320
        %v7345 = vpack.c.bf16 %v7323, %v7322
        %v7346 = vpack.c.bf16 %v7325, %v7324
        %v7347 = vpack.c.bf16 %v7327, %v7326
        %v7348 = vpack.c.bf16 %v7329, %v7328
        %v7349 = vpack.c.bf16 %v7331, %v7330
        %v7350 = vpack.c.bf16 %v7333, %v7332
        %v7351 = vpack.c.bf16 %v7335, %v7334
        %v7368 = vunpack.c.l.b16 %v7336
        %v7369 = vunpack.c.h.b16 %v7336
        %v7370 = vunpack.c.l.b16 %v7337
        %v7371 = vunpack.c.h.b16 %v7337
        %v7372 = vunpack.c.l.b16 %v7338
        %v7373 = vunpack.c.h.b16 %v7338
        %v7374 = vunpack.c.l.b16 %v7339
        %v7375 = vunpack.c.h.b16 %v7339
        %v7376 = vunpack.c.l.b16 %v7340
        %v7377 = vunpack.c.h.b16 %v7340
        %v7378 = vunpack.c.l.b16 %v7341
        %v7379 = vunpack.c.h.b16 %v7341
        %v7380 = vunpack.c.l.b16 %v7342
        %v7381 = vunpack.c.h.b16 %v7342
        %v7382 = vunpack.c.l.b16 %v7343
        %v7383 = vunpack.c.h.b16 %v7343
        %v7384 = vunpack.c.l.b16 %v7344
        %v7385 = vunpack.c.h.b16 %v7344
        %v7386 = vunpack.c.l.b16 %v7345
        %v7387 = vunpack.c.h.b16 %v7345
        %v7388 = vunpack.c.l.b16 %v7346
        %v7389 = vunpack.c.h.b16 %v7346
        %v7390 = vunpack.c.l.b16 %v7347
        %v7391 = vunpack.c.h.b16 %v7347
        %v7392 = vunpack.c.l.b16 %v7348
        %v7393 = vunpack.c.h.b16 %v7348
        %v7394 = vunpack.c.l.b16 %v7349
        %v7395 = vunpack.c.h.b16 %v7349
        %v7396 = vunpack.c.l.b16 %v7350
        %v7397 = vunpack.c.h.b16 %v7350
        %v7398 = vunpack.c.l.b16 %v7351
        %v7399 = vunpack.c.h.b16 %v7351
        %v7400 = vpack.c.b16 %v7368, %v7368
        %v7401 = vpack.c.b16 %v7369, %v7369
        %v7402 = vpack.c.b16 %v7370, %v7370
        %v7403 = vpack.c.b16 %v7371, %v7371
        %v7404 = vpack.c.b16 %v7372, %v7372
        %v7405 = vpack.c.b16 %v7373, %v7373
        %v7406 = vpack.c.b16 %v7374, %v7374
        %v7407 = vpack.c.b16 %v7375, %v7375
        %v7408 = vpack.c.b16 %v7376, %v7376
        %v7409 = vpack.c.b16 %v7377, %v7377
        %v7410 = vpack.c.b16 %v7378, %v7378
        %v7411 = vpack.c.b16 %v7379, %v7379
        %v7412 = vpack.c.b16 %v7380, %v7380
        %v7413 = vpack.c.b16 %v7381, %v7381
        %v7414 = vpack.c.b16 %v7382, %v7382
        %v7415 = vpack.c.b16 %v7383, %v7383
        %v7416 = vpack.c.b16 %v7384, %v7384
        %v7417 = vpack.c.b16 %v7385, %v7385
        %v7418 = vpack.c.b16 %v7386, %v7386
        %v7419 = vpack.c.b16 %v7387, %v7387
        %v7420 = vpack.c.b16 %v7388, %v7388
        %v7421 = vpack.c.b16 %v7389, %v7389
        %v7422 = vpack.c.b16 %v7390, %v7390
        %v7423 = vpack.c.b16 %v7391, %v7391
        %v7424 = vpack.c.b16 %v7392, %v7392
        %v7425 = vpack.c.b16 %v7393, %v7393
        %v7426 = vpack.c.b16 %v7394, %v7394
        %v7427 = vpack.c.b16 %v7395, %v7395
        %v7428 = vpack.c.b16 %v7396, %v7396
        %v7429 = vpack.c.b16 %v7397, %v7397
        %v7430 = vpack.c.b16 %v7398, %v7398
        %v7431 = vpack.c.b16 %v7399, %v7399
        %v7433 = vshrl.u32 %v7400, 16
        %v7435 = vrot.slane %v7433, 7
        %v7436 = vshll.u32 %v7400, 16
        %v7438 = vor.u32 %v7435, %v7436
        %v7439 = vrot.slane %v7435, 4
        %v7441 = vshrl.u32 %v7401, 16
        %v7443 = vrot.slane %v7441, 7
        %v7444 = vshll.u32 %v7401, 16
        %v7446 = vor.u32 %v7443, %v7444
        %v7447 = vsel %vm475, %v7439, %v7446
        %v7448 = vrot.slane %v7443, 4
        %v7450 = vshrl.u32 %v7402, 16
        %v7452 = vrot.slane %v7450, 7
        %v7453 = vshll.u32 %v7402, 16
        %v7455 = vor.u32 %v7452, %v7453
        %v7456 = vrot.slane %v7452, 4
        %v7458 = vshrl.u32 %v7403, 16
        %v7460 = vrot.slane %v7458, 7
        %v7461 = vshll.u32 %v7403, 16
        %v7463 = vor.u32 %v7460, %v7461
        %v7464 = vsel %vm475, %v7456, %v7463
        %v7465 = vrot.slane %v7460, 4
        %v7467 = vshrl.u32 %v7404, 16
        %v7469 = vrot.slane %v7467, 7
        %v7470 = vshll.u32 %v7404, 16
        %v7472 = vor.u32 %v7469, %v7470
        %v7473 = vrot.slane %v7469, 4
        %v7475 = vshrl.u32 %v7405, 16
        %v7477 = vrot.slane %v7475, 7
        %v7478 = vshll.u32 %v7405, 16
        %v7480 = vor.u32 %v7477, %v7478
        %v7481 = vsel %vm475, %v7473, %v7480
        %v7482 = vrot.slane %v7477, 4
        %v7484 = vshrl.u32 %v7406, 16
        %v7486 = vrot.slane %v7484, 7
        %v7487 = vshll.u32 %v7406, 16
        %v7489 = vor.u32 %v7486, %v7487
        %v7490 = vrot.slane %v7486, 4
        %v7492 = vshrl.u32 %v7407, 16
        %v7494 = vrot.slane %v7492, 7
        %v7495 = vshll.u32 %v7407, 16
        %v7497 = vor.u32 %v7494, %v7495
        %v7498 = vsel %vm475, %v7490, %v7497
        %v7499 = vrot.slane %v7494, 4
        %v7501 = vshrl.u32 %v7408, 16
        %v7503 = vrot.slane %v7501, 7
        %v7504 = vshll.u32 %v7408, 16
        %v7506 = vor.u32 %v7503, %v7504
        %v7507 = vrot.slane %v7503, 4
        %v7509 = vshrl.u32 %v7409, 16
        %v7511 = vrot.slane %v7509, 7
        %v7512 = vshll.u32 %v7409, 16
        %v7514 = vor.u32 %v7511, %v7512
        %v7515 = vsel %vm475, %v7507, %v7514
        %v7516 = vrot.slane %v7511, 4
        %v7518 = vshrl.u32 %v7410, 16
        %v7520 = vrot.slane %v7518, 7
        %v7521 = vshll.u32 %v7410, 16
        %v7523 = vor.u32 %v7520, %v7521
        %v7524 = vrot.slane %v7520, 4
        %v7526 = vshrl.u32 %v7411, 16
        %v7528 = vrot.slane %v7526, 7
        %v7529 = vshll.u32 %v7411, 16
        %v7531 = vor.u32 %v7528, %v7529
        %v7532 = vsel %vm475, %v7524, %v7531
        %v7533 = vrot.slane %v7528, 4
        %v7535 = vshrl.u32 %v7412, 16
        %v7537 = vrot.slane %v7535, 7
        %v7538 = vshll.u32 %v7412, 16
        %v7540 = vor.u32 %v7537, %v7538
        %v7541 = vrot.slane %v7537, 4
        %v7543 = vshrl.u32 %v7413, 16
        %v7545 = vrot.slane %v7543, 7
        %v7546 = vshll.u32 %v7413, 16
        %v7548 = vor.u32 %v7545, %v7546
        %v7549 = vsel %vm475, %v7541, %v7548
        %v7550 = vrot.slane %v7545, 4
        %v7552 = vshrl.u32 %v7414, 16
        %v7554 = vrot.slane %v7552, 7
        %v7555 = vshll.u32 %v7414, 16
        %v7557 = vor.u32 %v7554, %v7555
        %v7558 = vrot.slane %v7554, 4
        %v7560 = vshrl.u32 %v7415, 16
        %v7562 = vrot.slane %v7560, 7
        %v7563 = vshll.u32 %v7415, 16
        %v7565 = vor.u32 %v7562, %v7563
        %v7566 = vsel %vm475, %v7558, %v7565
        %v7567 = vrot.slane %v7562, 4
        %v7569 = vshrl.u32 %v7416, 16
        %v7571 = vrot.slane %v7569, 7
        %v7572 = vshll.u32 %v7416, 16
        %v7574 = vor.u32 %v7571, %v7572
        %v7575 = vrot.slane %v7571, 4
        %v7577 = vshrl.u32 %v7417, 16
        %v7579 = vrot.slane %v7577, 7
        %v7580 = vshll.u32 %v7417, 16
        %v7582 = vor.u32 %v7579, %v7580
        %v7583 = vsel %vm475, %v7575, %v7582
        %v7584 = vrot.slane %v7579, 4
        %v7586 = vshrl.u32 %v7418, 16
        %v7588 = vrot.slane %v7586, 7
        %v7589 = vshll.u32 %v7418, 16
        %v7591 = vor.u32 %v7588, %v7589
        %v7592 = vrot.slane %v7588, 4
        %v7594 = vshrl.u32 %v7419, 16
        %v7596 = vrot.slane %v7594, 7
        %v7597 = vshll.u32 %v7419, 16
        %v7599 = vor.u32 %v7596, %v7597
        %v7600 = vsel %vm475, %v7592, %v7599
        %v7601 = vrot.slane %v7596, 4
        %v7603 = vshrl.u32 %v7420, 16
        %v7605 = vrot.slane %v7603, 7
        %v7606 = vshll.u32 %v7420, 16
        %v7608 = vor.u32 %v7605, %v7606
        %v7609 = vrot.slane %v7605, 4
        %v7611 = vshrl.u32 %v7421, 16
        %v7613 = vrot.slane %v7611, 7
        %v7614 = vshll.u32 %v7421, 16
        %v7616 = vor.u32 %v7613, %v7614
        %v7617 = vsel %vm475, %v7609, %v7616
        %v7618 = vrot.slane %v7613, 4
        %v7620 = vshrl.u32 %v7422, 16
        %v7622 = vrot.slane %v7620, 7
        %v7623 = vshll.u32 %v7422, 16
        %v7625 = vor.u32 %v7622, %v7623
        %v7626 = vrot.slane %v7622, 4
        %v7628 = vshrl.u32 %v7423, 16
        %v7630 = vrot.slane %v7628, 7
        %v7631 = vshll.u32 %v7423, 16
        %v7633 = vor.u32 %v7630, %v7631
        %v7634 = vsel %vm475, %v7626, %v7633
        %v7635 = vrot.slane %v7630, 4
        %v7637 = vshrl.u32 %v7424, 16
        %v7639 = vrot.slane %v7637, 7
        %v7640 = vshll.u32 %v7424, 16
        %v7642 = vor.u32 %v7639, %v7640
        %v7643 = vrot.slane %v7639, 4
        %v7645 = vshrl.u32 %v7425, 16
        %v7647 = vrot.slane %v7645, 7
        %v7648 = vshll.u32 %v7425, 16
        %v7650 = vor.u32 %v7647, %v7648
        %v7651 = vsel %vm475, %v7643, %v7650
        %v7652 = vrot.slane %v7647, 4
        %v7654 = vshrl.u32 %v7426, 16
        %v7656 = vrot.slane %v7654, 7
        %v7657 = vshll.u32 %v7426, 16
        %v7659 = vor.u32 %v7656, %v7657
        %v7660 = vrot.slane %v7656, 4
        %v7662 = vshrl.u32 %v7427, 16
        %v7664 = vrot.slane %v7662, 7
        %v7665 = vshll.u32 %v7427, 16
        %v7667 = vor.u32 %v7664, %v7665
        %v7668 = vsel %vm475, %v7660, %v7667
        %v7669 = vrot.slane %v7664, 4
        %v7671 = vshrl.u32 %v7428, 16
        %v7673 = vrot.slane %v7671, 7
        %v7674 = vshll.u32 %v7428, 16
        %v7676 = vor.u32 %v7673, %v7674
        %v7677 = vrot.slane %v7673, 4
        %v7679 = vshrl.u32 %v7429, 16
        %v7681 = vrot.slane %v7679, 7
        %v7682 = vshll.u32 %v7429, 16
        %v7684 = vor.u32 %v7681, %v7682
        %v7685 = vsel %vm475, %v7677, %v7684
        %v7686 = vrot.slane %v7681, 4
        %v7688 = vshrl.u32 %v7430, 16
        %v7690 = vrot.slane %v7688, 7
        %v7691 = vshll.u32 %v7430, 16
        %v7693 = vor.u32 %v7690, %v7691
        %v7694 = vrot.slane %v7690, 4
        %v7696 = vshrl.u32 %v7431, 16
        %v7698 = vrot.slane %v7696, 7
        %v7699 = vshll.u32 %v7431, 16
        %v7701 = vor.u32 %v7698, %v7699
        %v7702 = vsel %vm475, %v7694, %v7701
        %v7703 = vrot.slane %v7698, 4
        %v7752 = vsel %vm798, %v7438, %v4453
        %7753 = vst [vmem:[%s796] sm:$0xf] %v7752
        %7754 = vst.msk [vmem:[%s796 + $0x4] sm:$0xf] %vm224, %v7447
        %v7755 = vld [vmem:[%s796 + $0x8] sm:$0x1]
        %v7756 = vsel %vm235, %v7448, %v7755
        %7757 = vst [vmem:[%s796 + $0x8] sm:$0x1] %v7756
        %v7758 = vld [vmem:[%s796 + $0xc] sm:$0xf]
        %v7759 = vsel %vm798, %v7455, %v7758
        %7760 = vst [vmem:[%s796 + $0xc] sm:$0xf] %v7759
        %7761 = vst.msk [vmem:[%s796 + $0x10] sm:$0xf] %vm224, %v7464
        %v7762 = vld [vmem:[%s796 + $0x14] sm:$0x1]
        %v7763 = vsel %vm235, %v7465, %v7762
        %7764 = vst [vmem:[%s796 + $0x14] sm:$0x1] %v7763
        %v7765 = vld [vmem:[%s796 + $0x18] sm:$0xf]
        %v7766 = vsel %vm798, %v7472, %v7765
        %7767 = vst [vmem:[%s796 + $0x18] sm:$0xf] %v7766
        %7768 = vst.msk [vmem:[%s796 + $0x1c] sm:$0xf] %vm224, %v7481
        %v7769 = vld [vmem:[%s796 + $0x20] sm:$0x1]
        %v7770 = vsel %vm235, %v7482, %v7769
        %7771 = vst [vmem:[%s796 + $0x20] sm:$0x1] %v7770
        %v7772 = vld [vmem:[%s796 + $0x24] sm:$0xf]
        %v7773 = vsel %vm798, %v7489, %v7772
        %7774 = vst [vmem:[%s796 + $0x24] sm:$0xf] %v7773
        %7775 = vst.msk [vmem:[%s796 + $0x28] sm:$0xf] %vm224, %v7498
        %v7776 = vld [vmem:[%s796 + $0x2c] sm:$0x1]
        %v7777 = vsel %vm235, %v7499, %v7776
        %7778 = vst [vmem:[%s796 + $0x2c] sm:$0x1] %v7777
        %v7779 = vld [vmem:[%s796 + $0x30] sm:$0xf]
        %v7780 = vsel %vm798, %v7506, %v7779
        %7781 = vst [vmem:[%s796 + $0x30] sm:$0xf] %v7780
        %7782 = vst.msk [vmem:[%s796 + $0x34] sm:$0xf] %vm224, %v7515
        %v7783 = vld [vmem:[%s796 + $0x38] sm:$0x1]
        %v7784 = vsel %vm235, %v7516, %v7783
        %7785 = vst [vmem:[%s796 + $0x38] sm:$0x1] %v7784
        %v7786 = vld [vmem:[%s796 + $0x3c] sm:$0xf]
        %v7787 = vsel %vm798, %v7523, %v7786
        %7788 = vst [vmem:[%s796 + $0x3c] sm:$0xf] %v7787
        %7789 = vst.msk [vmem:[%s796 + $0x40] sm:$0xf] %vm224, %v7532
        %v7790 = vld [vmem:[%s796 + $0x44] sm:$0x1]
        %v7791 = vsel %vm235, %v7533, %v7790
        %7792 = vst [vmem:[%s796 + $0x44] sm:$0x1] %v7791
        %v7793 = vld [vmem:[%s796 + $0x48] sm:$0xf]
        %v7794 = vsel %vm798, %v7540, %v7793
        %7795 = vst [vmem:[%s796 + $0x48] sm:$0xf] %v7794
        %7796 = vst.msk [vmem:[%s796 + $0x4c] sm:$0xf] %vm224, %v7549
        %v7797 = vld [vmem:[%s796 + $0x50] sm:$0x1]
        %v7798 = vsel %vm235, %v7550, %v7797
        %7799 = vst [vmem:[%s796 + $0x50] sm:$0x1] %v7798
        %v7800 = vld [vmem:[%s796 + $0x54] sm:$0xf]
        %v7801 = vsel %vm798, %v7557, %v7800
        %7802 = vst [vmem:[%s796 + $0x54] sm:$0xf] %v7801
        %7803 = vst.msk [vmem:[%s796 + $0x58] sm:$0xf] %vm224, %v7566
        %v7804 = vld [vmem:[%s796 + $0x5c] sm:$0x1]
        %v7805 = vsel %vm235, %v7567, %v7804
        %7806 = vst [vmem:[%s796 + $0x5c] sm:$0x1] %v7805
        %v7807 = vld [vmem:[%s796 + $0x60] sm:$0xf]
        %v7808 = vsel %vm798, %v7574, %v7807
        %7809 = vst [vmem:[%s796 + $0x60] sm:$0xf] %v7808
        %7810 = vst.msk [vmem:[%s796 + $0x64] sm:$0xf] %vm224, %v7583
        %v7811 = vld [vmem:[%s796 + $0x68] sm:$0x1]
        %v7812 = vsel %vm235, %v7584, %v7811
        %7813 = vst [vmem:[%s796 + $0x68] sm:$0x1] %v7812
        %v7814 = vld [vmem:[%s796 + $0x6c] sm:$0xf]
        %v7815 = vsel %vm798, %v7591, %v7814
        %7816 = vst [vmem:[%s796 + $0x6c] sm:$0xf] %v7815
        %7817 = vst.msk [vmem:[%s796 + $0x70] sm:$0xf] %vm224, %v7600
        %v7818 = vld [vmem:[%s796 + $0x74] sm:$0x1]
        %v7819 = vsel %vm235, %v7601, %v7818
        %7820 = vst [vmem:[%s796 + $0x74] sm:$0x1] %v7819
        %v7821 = vld [vmem:[%s796 + $0x78] sm:$0xf]
        %v7822 = vsel %vm798, %v7608, %v7821
        %7823 = vst [vmem:[%s796 + $0x78] sm:$0xf] %v7822
        %7824 = vst.msk [vmem:[%s796 + $0x7c] sm:$0xf] %vm224, %v7617
        %v7825 = vld [vmem:[%s796 + $0x80] sm:$0x1]
        %v7826 = vsel %vm235, %v7618, %v7825
        %7827 = vst [vmem:[%s796 + $0x80] sm:$0x1] %v7826
        %v7828 = vld [vmem:[%s796 + $0x84] sm:$0xf]
        %v7829 = vsel %vm798, %v7625, %v7828
        %7830 = vst [vmem:[%s796 + $0x84] sm:$0xf] %v7829
        %7831 = vst.msk [vmem:[%s796 + $0x88] sm:$0xf] %vm224, %v7634
        %v7832 = vld [vmem:[%s796 + $0x8c] sm:$0x1]
        %v7833 = vsel %vm235, %v7635, %v7832
        %7834 = vst [vmem:[%s796 + $0x8c] sm:$0x1] %v7833
        %v7835 = vld [vmem:[%s796 + $0x90] sm:$0xf]
        %v7836 = vsel %vm798, %v7642, %v7835
        %7837 = vst [vmem:[%s796 + $0x90] sm:$0xf] %v7836
        %7838 = vst.msk [vmem:[%s796 + $0x94] sm:$0xf] %vm224, %v7651
        %v7839 = vld [vmem:[%s796 + $0x98] sm:$0x1]
        %v7840 = vsel %vm235, %v7652, %v7839
        %7841 = vst [vmem:[%s796 + $0x98] sm:$0x1] %v7840
        %v7842 = vld [vmem:[%s796 + $0x9c] sm:$0xf]
        %v7843 = vsel %vm798, %v7659, %v7842
        %7844 = vst [vmem:[%s796 + $0x9c] sm:$0xf] %v7843
        %7845 = vst.msk [vmem:[%s796 + $0xa0] sm:$0xf] %vm224, %v7668
        %v7846 = vld [vmem:[%s796 + $0xa4] sm:$0x1]
        %v7847 = vsel %vm235, %v7669, %v7846
        %7848 = vst [vmem:[%s796 + $0xa4] sm:$0x1] %v7847
        %v7849 = vld [vmem:[%s796 + $0xa8] sm:$0xf]
        %v7850 = vsel %vm798, %v7676, %v7849
        %7851 = vst [vmem:[%s796 + $0xa8] sm:$0xf] %v7850
        %7852 = vst.msk [vmem:[%s796 + $0xac] sm:$0xf] %vm224, %v7685
        %v7853 = vld [vmem:[%s796 + $0xb0] sm:$0x1]
        %v7854 = vsel %vm235, %v7686, %v7853
        %7855 = vst [vmem:[%s796 + $0xb0] sm:$0x1] %v7854
        %v7856 = vld [vmem:[%s796 + $0xb4] sm:$0xf]
        %v7857 = vsel %vm798, %v7693, %v7856
        %7858 = vst [vmem:[%s796 + $0xb4] sm:$0xf] %v7857
        %7859 = vst.msk [vmem:[%s796 + $0xb8] sm:$0xf] %vm224, %v7702
        %v7860 = vld [vmem:[%s796 + $0xbc] sm:$0x1]
        %v7861 = vsel %vm235, %v7703, %v7860
        %7862 = vst [vmem:[%s796 + $0xbc] sm:$0x1] %v7861
        %v7863 = vld [vmem:[#allocation2] sm:$0xf]
        %v7864 = vld [vmem:[#allocation2 + $0x4] sm:$0xf]
        %v7865 = vld [vmem:[#allocation2 + $0xc] sm:$0xf]
        %v7866 = vld [vmem:[#allocation2 + $0x10] sm:$0xf]
        %v7867 = vld [vmem:[#allocation2 + $0x18] sm:$0xf]
        %v7868 = vld [vmem:[#allocation2 + $0x1c] sm:$0xf]
        %v7869 = vld [vmem:[#allocation2 + $0x24] sm:$0xf]
        %v7870 = vld [vmem:[#allocation2 + $0x28] sm:$0xf]
        %v7871 = vld [vmem:[#allocation2 + $0x30] sm:$0xf]
        %v7872 = vld [vmem:[#allocation2 + $0x34] sm:$0xf]
        %v7873 = vld [vmem:[#allocation2 + $0x3c] sm:$0xf]
        %v7874 = vld [vmem:[#allocation2 + $0x40] sm:$0xf]
        %v7875 = vld [vmem:[#allocation2 + $0x48] sm:$0xf]
        %v7876 = vld [vmem:[#allocation2 + $0x4c] sm:$0xf]
        %v7877 = vld [vmem:[#allocation2 + $0x54] sm:$0xf]
        %v7878 = vld [vmem:[#allocation2 + $0x58] sm:$0xf]
        %v7879 = vld [vmem:[#allocation2 + $0x60] sm:$0xf]
        %v7880 = vld [vmem:[#allocation2 + $0x64] sm:$0xf]
        %v7881 = vld [vmem:[#allocation2 + $0x6c] sm:$0xf]
        %v7882 = vld [vmem:[#allocation2 + $0x70] sm:$0xf]
        %v7883 = vld [vmem:[#allocation2 + $0x78] sm:$0xf]
        %v7884 = vld [vmem:[#allocation2 + $0x7c] sm:$0xf]
        %v7885 = vld [vmem:[#allocation2 + $0x84] sm:$0xf]
        %v7886 = vld [vmem:[#allocation2 + $0x88] sm:$0xf]
        %v7887 = vld [vmem:[#allocation2 + $0x90] sm:$0xf]
        %v7888 = vld [vmem:[#allocation2 + $0x94] sm:$0xf]
        %v7889 = vld [vmem:[#allocation2 + $0x9c] sm:$0xf]
        %v7890 = vld [vmem:[#allocation2 + $0xa0] sm:$0xf]
        %v7891 = vld [vmem:[#allocation2 + $0xa8] sm:$0xf]
        %v7892 = vld [vmem:[#allocation2 + $0xac] sm:$0xf]
        %v7893 = vld [vmem:[#allocation2 + $0xb4] sm:$0xf]
        %v7894 = vld [vmem:[#allocation2 + $0xb8] sm:$0xf]
        %v7895 = vld [vmem:[#allocation2 + $0x8] sm:$0x1]
        %v7896 = vld [vmem:[#allocation2 + $0x14] sm:$0x1]
        %v7897 = vld [vmem:[#allocation2 + $0x20] sm:$0x1]
        %v7898 = vld [vmem:[#allocation2 + $0x2c] sm:$0x1]
        %v7899 = vld [vmem:[#allocation2 + $0x38] sm:$0x1]
        %v7900 = vld [vmem:[#allocation2 + $0x44] sm:$0x1]
        %v7901 = vld [vmem:[#allocation2 + $0x50] sm:$0x1]
        %v7902 = vld [vmem:[#allocation2 + $0x5c] sm:$0x1]
        %v7903 = vld [vmem:[#allocation2 + $0x68] sm:$0x1]
        %v7904 = vld [vmem:[#allocation2 + $0x74] sm:$0x1]
        %v7905 = vld [vmem:[#allocation2 + $0x80] sm:$0x1]
        %v7906 = vld [vmem:[#allocation2 + $0x8c] sm:$0x1]
        %v7907 = vld [vmem:[#allocation2 + $0x98] sm:$0x1]
        %v7908 = vld [vmem:[#allocation2 + $0xa4] sm:$0x1]
        %v7909 = vld [vmem:[#allocation2 + $0xb0] sm:$0x1]
        %v7910 = vld [vmem:[#allocation2 + $0xbc] sm:$0x1]
        %v7911 = vld [vmem:[#allocation2] sm:$0xe]
        %v7912 = vld [vmem:[#allocation2 + $0xc] sm:$0xe]
        %v7913 = vld [vmem:[#allocation2 + $0x18] sm:$0xe]
        %v7914 = vld [vmem:[#allocation2 + $0x24] sm:$0xe]
        %v7915 = vld [vmem:[#allocation2 + $0x30] sm:$0xe]
        %v7916 = vld [vmem:[#allocation2 + $0x3c] sm:$0xe]
        %v7917 = vld [vmem:[#allocation2 + $0x48] sm:$0xe]
        %v7918 = vld [vmem:[#allocation2 + $0x54] sm:$0xe]
        %v7919 = vld [vmem:[#allocation2 + $0x60] sm:$0xe]
        %v7920 = vld [vmem:[#allocation2 + $0x6c] sm:$0xe]
        %v7921 = vld [vmem:[#allocation2 + $0x78] sm:$0xe]
        %v7922 = vld [vmem:[#allocation2 + $0x84] sm:$0xe]
        %v7923 = vld [vmem:[#allocation2 + $0x90] sm:$0xe]
        %v7924 = vld [vmem:[#allocation2 + $0x9c] sm:$0xe]
        %v7925 = vld [vmem:[#allocation2 + $0xa8] sm:$0xe]
        %v7926 = vld [vmem:[#allocation2 + $0xb4] sm:$0xe]
        %v7927 = vld [vmem:[%s796] sm:$0xf]
        %v7928 = vld [vmem:[%s796 + $0x4] sm:$0xf]
        %v7929 = vld [vmem:[%s796 + $0xc] sm:$0xf]
        %v7930 = vld [vmem:[%s796 + $0x10] sm:$0xf]
        %v7931 = vld [vmem:[%s796 + $0x18] sm:$0xf]
        %v7932 = vld [vmem:[%s796 + $0x1c] sm:$0xf]
        %v7933 = vld [vmem:[%s796 + $0x24] sm:$0xf]
        %v7934 = vld [vmem:[%s796 + $0x28] sm:$0xf]
        %v7935 = vld [vmem:[%s796 + $0x30] sm:$0xf]
        %v7936 = vld [vmem:[%s796 + $0x34] sm:$0xf]
        %v7937 = vld [vmem:[%s796 + $0x3c] sm:$0xf]
        %v7938 = vld [vmem:[%s796 + $0x40] sm:$0xf]
        %v7939 = vld [vmem:[%s796 + $0x48] sm:$0xf]
        %v7940 = vld [vmem:[%s796 + $0x4c] sm:$0xf]
        %v7941 = vld [vmem:[%s796 + $0x54] sm:$0xf]
        %v7942 = vld [vmem:[%s796 + $0x58] sm:$0xf]
        %v7943 = vld [vmem:[%s796 + $0x60] sm:$0xf]
        %v7944 = vld [vmem:[%s796 + $0x64] sm:$0xf]
        %v7945 = vld [vmem:[%s796 + $0x6c] sm:$0xf]
        %v7946 = vld [vmem:[%s796 + $0x70] sm:$0xf]
        %v7947 = vld [vmem:[%s796 + $0x78] sm:$0xf]
        %v7948 = vld [vmem:[%s796 + $0x7c] sm:$0xf]
        %v7949 = vld [vmem:[%s796 + $0x84] sm:$0xf]
        %v7950 = vld [vmem:[%s796 + $0x88] sm:$0xf]
        %v7951 = vld [vmem:[%s796 + $0x90] sm:$0xf]
        %v7952 = vld [vmem:[%s796 + $0x94] sm:$0xf]
        %v7953 = vld [vmem:[%s796 + $0x9c] sm:$0xf]
        %v7954 = vld [vmem:[%s796 + $0xa0] sm:$0xf]
        %v7955 = vld [vmem:[%s796 + $0xa8] sm:$0xf]
        %v7956 = vld [vmem:[%s796 + $0xac] sm:$0xf]
        %v7957 = vld [vmem:[%s796 + $0xb4] sm:$0xf]
        %v7958 = vld [vmem:[%s796 + $0xb8] sm:$0xf]
        %v7959 = vld [vmem:[%s796 + $0x8] sm:$0x1]
        %v7960 = vld [vmem:[%s796 + $0x14] sm:$0x1]
        %v7961 = vld [vmem:[%s796 + $0x20] sm:$0x1]
        %v7962 = vld [vmem:[%s796 + $0x2c] sm:$0x1]
        %v7963 = vld [vmem:[%s796 + $0x38] sm:$0x1]
        %v7964 = vld [vmem:[%s796 + $0x44] sm:$0x1]
        %v7965 = vld [vmem:[%s796 + $0x50] sm:$0x1]
        %v7966 = vld [vmem:[%s796 + $0x5c] sm:$0x1]
        %v7967 = vld [vmem:[%s796 + $0x68] sm:$0x1]
        %v7968 = vld [vmem:[%s796 + $0x74] sm:$0x1]
        %v7969 = vld [vmem:[%s796 + $0x80] sm:$0x1]
        %v7970 = vld [vmem:[%s796 + $0x8c] sm:$0x1]
        %v7971 = vld [vmem:[%s796 + $0x98] sm:$0x1]
        %v7972 = vld [vmem:[%s796 + $0xa4] sm:$0x1]
        %v7973 = vld [vmem:[%s796 + $0xb0] sm:$0x1]
        %v7974 = vld [vmem:[%s796 + $0xbc] sm:$0x1]
        %v7975 = vld [vmem:[%s796] sm:$0xe]
        %v7976 = vld [vmem:[%s796 + $0xc] sm:$0xe]
        %v7977 = vld [vmem:[%s796 + $0x18] sm:$0xe]
        %v7978 = vld [vmem:[%s796 + $0x24] sm:$0xe]
        %v7979 = vld [vmem:[%s796 + $0x30] sm:$0xe]
        %v7980 = vld [vmem:[%s796 + $0x3c] sm:$0xe]
        %v7981 = vld [vmem:[%s796 + $0x48] sm:$0xe]
        %v7982 = vld [vmem:[%s796 + $0x54] sm:$0xe]
        %v7983 = vld [vmem:[%s796 + $0x60] sm:$0xe]
        %v7984 = vld [vmem:[%s796 + $0x6c] sm:$0xe]
        %v7985 = vld [vmem:[%s796 + $0x78] sm:$0xe]
        %v7986 = vld [vmem:[%s796 + $0x84] sm:$0xe]
        %v7987 = vld [vmem:[%s796 + $0x90] sm:$0xe]
        %v7988 = vld [vmem:[%s796 + $0x9c] sm:$0xe]
        %v7989 = vld [vmem:[%s796 + $0xa8] sm:$0xe]
        %v7990 = vld [vmem:[%s796 + $0xb4] sm:$0xe]
        %v7991 = vld [vmem:[%s1039] sm:$0xf]
        %v7992 = vld [vmem:[%s1039 + $0x4] sm:$0xf]
        %v7993 = vld [vmem:[%s1039 + $0xc] sm:$0xf]
        %v7994 = vld [vmem:[%s1039 + $0x10] sm:$0xf]
        %v7995 = vld [vmem:[%s1039 + $0x18] sm:$0xf]
        %v7996 = vld [vmem:[%s1039 + $0x1c] sm:$0xf]
        %v7997 = vld [vmem:[%s1039 + $0x24] sm:$0xf]
        %v7998 = vld [vmem:[%s1039 + $0x28] sm:$0xf]
        %v7999 = vld [vmem:[%s1039 + $0x30] sm:$0xf]
        %v8000 = vld [vmem:[%s1039 + $0x34] sm:$0xf]
        %v8001 = vld [vmem:[%s1039 + $0x3c] sm:$0xf]
        %v8002 = vld [vmem:[%s1039 + $0x40] sm:$0xf]
        %v8003 = vld [vmem:[%s1039 + $0x48] sm:$0xf]
        %v8004 = vld [vmem:[%s1039 + $0x4c] sm:$0xf]
        %v8005 = vld [vmem:[%s1039 + $0x54] sm:$0xf]
        %v8006 = vld [vmem:[%s1039 + $0x58] sm:$0xf]
        %v8007 = vld [vmem:[%s1039 + $0x60] sm:$0xf]
        %v8008 = vld [vmem:[%s1039 + $0x64] sm:$0xf]
        %v8009 = vld [vmem:[%s1039 + $0x6c] sm:$0xf]
        %v8010 = vld [vmem:[%s1039 + $0x70] sm:$0xf]
        %v8011 = vld [vmem:[%s1039 + $0x78] sm:$0xf]
        %v8012 = vld [vmem:[%s1039 + $0x7c] sm:$0xf]
        %v8013 = vld [vmem:[%s1039 + $0x84] sm:$0xf]
        %v8014 = vld [vmem:[%s1039 + $0x88] sm:$0xf]
        %v8015 = vld [vmem:[%s1039 + $0x90] sm:$0xf]
        %v8016 = vld [vmem:[%s1039 + $0x94] sm:$0xf]
        %v8017 = vld [vmem:[%s1039 + $0x9c] sm:$0xf]
        %v8018 = vld [vmem:[%s1039 + $0xa0] sm:$0xf]
        %v8019 = vld [vmem:[%s1039 + $0xa8] sm:$0xf]
        %v8020 = vld [vmem:[%s1039 + $0xac] sm:$0xf]
        %v8021 = vld [vmem:[%s1039 + $0xb4] sm:$0xf]
        %v8022 = vld [vmem:[%s1039 + $0xb8] sm:$0xf]
        %v8023 = vld [vmem:[%s1039 + $0x8] sm:$0x1]
        %v8024 = vld [vmem:[%s1039 + $0x14] sm:$0x1]
        %v8025 = vld [vmem:[%s1039 + $0x20] sm:$0x1]
        %v8026 = vld [vmem:[%s1039 + $0x2c] sm:$0x1]
        %v8027 = vld [vmem:[%s1039 + $0x38] sm:$0x1]
        %v8028 = vld [vmem:[%s1039 + $0x44] sm:$0x1]
        %v8029 = vld [vmem:[%s1039 + $0x50] sm:$0x1]
        %v8030 = vld [vmem:[%s1039 + $0x5c] sm:$0x1]
        %v8031 = vld [vmem:[%s1039 + $0x68] sm:$0x1]
        %v8032 = vld [vmem:[%s1039 + $0x74] sm:$0x1]
        %v8033 = vld [vmem:[%s1039 + $0x80] sm:$0x1]
        %v8034 = vld [vmem:[%s1039 + $0x8c] sm:$0x1]
        %v8035 = vld [vmem:[%s1039 + $0x98] sm:$0x1]
        %v8036 = vld [vmem:[%s1039 + $0xa4] sm:$0x1]
        %v8037 = vld [vmem:[%s1039 + $0xb0] sm:$0x1]
        %v8038 = vld [vmem:[%s1039 + $0xbc] sm:$0x1]
        %v8039 = vld [vmem:[%s1039] sm:$0xe]
        %v8040 = vld [vmem:[%s1039 + $0xc] sm:$0xe]
        %v8041 = vld [vmem:[%s1039 + $0x18] sm:$0xe]
        %v8042 = vld [vmem:[%s1039 + $0x24] sm:$0xe]
        %v8043 = vld [vmem:[%s1039 + $0x30] sm:$0xe]
        %v8044 = vld [vmem:[%s1039 + $0x3c] sm:$0xe]
        %v8045 = vld [vmem:[%s1039 + $0x48] sm:$0xe]
        %v8046 = vld [vmem:[%s1039 + $0x54] sm:$0xe]
        %v8047 = vld [vmem:[%s1039 + $0x60] sm:$0xe]
        %v8048 = vld [vmem:[%s1039 + $0x6c] sm:$0xe]
        %v8049 = vld [vmem:[%s1039 + $0x78] sm:$0xe]
        %v8050 = vld [vmem:[%s1039 + $0x84] sm:$0xe]
        %v8051 = vld [vmem:[%s1039 + $0x90] sm:$0xe]
        %v8052 = vld [vmem:[%s1039 + $0x9c] sm:$0xe]
        %v8053 = vld [vmem:[%s1039 + $0xa8] sm:$0xe]
        %v8054 = vld [vmem:[%s1039 + $0xb4] sm:$0xe]
        %v8087 = vunpack.c.l.b16 %v7863
        %v8088 = vunpack.c.l.b16 %v7864
        %v8089 = vunpack.c.l.b16 %v7865
        %v8090 = vunpack.c.l.b16 %v7866
        %v8091 = vunpack.c.l.b16 %v7867
        %v8092 = vunpack.c.l.b16 %v7868
        %v8093 = vunpack.c.l.b16 %v7869
        %v8094 = vunpack.c.l.b16 %v7870
        %v8095 = vunpack.c.l.b16 %v7871
        %v8096 = vunpack.c.l.b16 %v7872
        %v8097 = vunpack.c.l.b16 %v7873
        %v8098 = vunpack.c.l.b16 %v7874
        %v8099 = vunpack.c.l.b16 %v7875
        %v8100 = vunpack.c.l.b16 %v7876
        %v8101 = vunpack.c.l.b16 %v7877
        %v8102 = vunpack.c.l.b16 %v7878
        %v8103 = vunpack.c.l.b16 %v7879
        %v8104 = vunpack.c.l.b16 %v7880
        %v8105 = vunpack.c.l.b16 %v7881
        %v8106 = vunpack.c.l.b16 %v7882
        %v8107 = vunpack.c.l.b16 %v7883
        %v8108 = vunpack.c.l.b16 %v7884
        %v8109 = vunpack.c.l.b16 %v7885
        %v8110 = vunpack.c.l.b16 %v7886
        %v8111 = vunpack.c.l.b16 %v7887
        %v8112 = vunpack.c.l.b16 %v7888
        %v8113 = vunpack.c.l.b16 %v7889
        %v8114 = vunpack.c.l.b16 %v7890
        %v8115 = vunpack.c.l.b16 %v7891
        %v8116 = vunpack.c.l.b16 %v7892
        %v8117 = vunpack.c.l.b16 %v7893
        %v8118 = vunpack.c.l.b16 %v7894
        %v8119 = vpack.c.b16 %v8088, %v8087
        %v8120 = vpack.c.b16 %v8090, %v8089
        %v8121 = vpack.c.b16 %v8092, %v8091
        %v8122 = vpack.c.b16 %v8094, %v8093
        %v8123 = vpack.c.b16 %v8096, %v8095
        %v8124 = vpack.c.b16 %v8098, %v8097
        %v8125 = vpack.c.b16 %v8100, %v8099
        %v8126 = vpack.c.b16 %v8102, %v8101
        %v8127 = vpack.c.b16 %v8104, %v8103
        %v8128 = vpack.c.b16 %v8106, %v8105
        %v8129 = vpack.c.b16 %v8108, %v8107
        %v8130 = vpack.c.b16 %v8110, %v8109
        %v8131 = vpack.c.b16 %v8112, %v8111
        %v8132 = vpack.c.b16 %v8114, %v8113
        %v8133 = vpack.c.b16 %v8116, %v8115
        %v8134 = vpack.c.b16 %v8118, %v8117
        %v8151 = vunpack.c.l.b16 %v7895
        %v8152 = vunpack.c.l.b16 %v7896
        %v8153 = vunpack.c.l.b16 %v7897
        %v8154 = vunpack.c.l.b16 %v7898
        %v8155 = vunpack.c.l.b16 %v7899
        %v8156 = vunpack.c.l.b16 %v7900
        %v8157 = vunpack.c.l.b16 %v7901
        %v8158 = vunpack.c.l.b16 %v7902
        %v8159 = vunpack.c.l.b16 %v7903
        %v8160 = vunpack.c.l.b16 %v7904
        %v8161 = vunpack.c.l.b16 %v7905
        %v8162 = vunpack.c.l.b16 %v7906
        %v8163 = vunpack.c.l.b16 %v7907
        %v8164 = vunpack.c.l.b16 %v7908
        %v8165 = vunpack.c.l.b16 %v7909
        %v8166 = vunpack.c.l.b16 %v7910
        %v8167 = vpack.c.b16 %v8151, %v8151
        %v8168 = vpack.c.b16 %v8152, %v8152
        %v8169 = vpack.c.b16 %v8153, %v8153
        %v8170 = vpack.c.b16 %v8154, %v8154
        %v8171 = vpack.c.b16 %v8155, %v8155
        %v8172 = vpack.c.b16 %v8156, %v8156
        %v8173 = vpack.c.b16 %v8157, %v8157
        %v8174 = vpack.c.b16 %v8158, %v8158
        %v8175 = vpack.c.b16 %v8159, %v8159
        %v8176 = vpack.c.b16 %v8160, %v8160
        %v8177 = vpack.c.b16 %v8161, %v8161
        %v8178 = vpack.c.b16 %v8162, %v8162
        %v8179 = vpack.c.b16 %v8163, %v8163
        %v8180 = vpack.c.b16 %v8164, %v8164
        %v8181 = vpack.c.b16 %v8165, %v8165
        %v8182 = vpack.c.b16 %v8166, %v8166
        %v8184 = vshrl.u32 %v8119, 16
        %v8186 = vshll.u32 %v8119, 16
        %v8188 = vrot.slane %v8186, 1
        %v8189 = vor.u32 %v8184, %v8188
        %v8191 = vshll.u32 %v8167, 16
        %v8193 = vrot.slane %v8191, 1
        %v8194 = vsel %vm1232, %v8189, %v8193
        %v8196 = vshrl.u32 %v8120, 16
        %v8198 = vshll.u32 %v8120, 16
        %v8200 = vrot.slane %v8198, 1
        %v8201 = vor.u32 %v8196, %v8200
        %v8203 = vshll.u32 %v8168, 16
        %v8205 = vrot.slane %v8203, 1
        %v8206 = vsel %vm1232, %v8201, %v8205
        %v8208 = vshrl.u32 %v8121, 16
        %v8210 = vshll.u32 %v8121, 16
        %v8212 = vrot.slane %v8210, 1
        %v8213 = vor.u32 %v8208, %v8212
        %v8215 = vshll.u32 %v8169, 16
        %v8217 = vrot.slane %v8215, 1
        %v8218 = vsel %vm1232, %v8213, %v8217
        %v8220 = vshrl.u32 %v8122, 16
        %v8222 = vshll.u32 %v8122, 16
        %v8224 = vrot.slane %v8222, 1
        %v8225 = vor.u32 %v8220, %v8224
        %v8227 = vshll.u32 %v8170, 16
        %v8229 = vrot.slane %v8227, 1
        %v8230 = vsel %vm1232, %v8225, %v8229
        %v8232 = vshrl.u32 %v8123, 16
        %v8234 = vshll.u32 %v8123, 16
        %v8236 = vrot.slane %v8234, 1
        %v8237 = vor.u32 %v8232, %v8236
        %v8239 = vshll.u32 %v8171, 16
        %v8241 = vrot.slane %v8239, 1
        %v8242 = vsel %vm1232, %v8237, %v8241
        %v8244 = vshrl.u32 %v8124, 16
        %v8246 = vshll.u32 %v8124, 16
        %v8248 = vrot.slane %v8246, 1
        %v8249 = vor.u32 %v8244, %v8248
        %v8251 = vshll.u32 %v8172, 16
        %v8253 = vrot.slane %v8251, 1
        %v8254 = vsel %vm1232, %v8249, %v8253
        %v8256 = vshrl.u32 %v8125, 16
        %v8258 = vshll.u32 %v8125, 16
        %v8260 = vrot.slane %v8258, 1
        %v8261 = vor.u32 %v8256, %v8260
        %v8263 = vshll.u32 %v8173, 16
        %v8265 = vrot.slane %v8263, 1
        %v8266 = vsel %vm1232, %v8261, %v8265
        %v8268 = vshrl.u32 %v8126, 16
        %v8270 = vshll.u32 %v8126, 16
        %v8272 = vrot.slane %v8270, 1
        %v8273 = vor.u32 %v8268, %v8272
        %v8275 = vshll.u32 %v8174, 16
        %v8277 = vrot.slane %v8275, 1
        %v8278 = vsel %vm1232, %v8273, %v8277
        %v8280 = vshrl.u32 %v8127, 16
        %v8282 = vshll.u32 %v8127, 16
        %v8284 = vrot.slane %v8282, 1
        %v8285 = vor.u32 %v8280, %v8284
        %v8287 = vshll.u32 %v8175, 16
        %v8289 = vrot.slane %v8287, 1
        %v8290 = vsel %vm1232, %v8285, %v8289
        %v8292 = vshrl.u32 %v8128, 16
        %v8294 = vshll.u32 %v8128, 16
        %v8296 = vrot.slane %v8294, 1
        %v8297 = vor.u32 %v8292, %v8296
        %v8299 = vshll.u32 %v8176, 16
        %v8301 = vrot.slane %v8299, 1
        %v8302 = vsel %vm1232, %v8297, %v8301
        %v8304 = vshrl.u32 %v8129, 16
        %v8306 = vshll.u32 %v8129, 16
        %v8308 = vrot.slane %v8306, 1
        %v8309 = vor.u32 %v8304, %v8308
        %v8311 = vshll.u32 %v8177, 16
        %v8313 = vrot.slane %v8311, 1
        %v8314 = vsel %vm1232, %v8309, %v8313
        %v8316 = vshrl.u32 %v8130, 16
        %v8318 = vshll.u32 %v8130, 16
        %v8320 = vrot.slane %v8318, 1
        %v8321 = vor.u32 %v8316, %v8320
        %v8323 = vshll.u32 %v8178, 16
        %v8325 = vrot.slane %v8323, 1
        %v8326 = vsel %vm1232, %v8321, %v8325
        %v8328 = vshrl.u32 %v8131, 16
        %v8330 = vshll.u32 %v8131, 16
        %v8332 = vrot.slane %v8330, 1
        %v8333 = vor.u32 %v8328, %v8332
        %v8335 = vshll.u32 %v8179, 16
        %v8337 = vrot.slane %v8335, 1
        %v8338 = vsel %vm1232, %v8333, %v8337
        %v8340 = vshrl.u32 %v8132, 16
        %v8342 = vshll.u32 %v8132, 16
        %v8344 = vrot.slane %v8342, 1
        %v8345 = vor.u32 %v8340, %v8344
        %v8347 = vshll.u32 %v8180, 16
        %v8349 = vrot.slane %v8347, 1
        %v8350 = vsel %vm1232, %v8345, %v8349
        %v8352 = vshrl.u32 %v8133, 16
        %v8354 = vshll.u32 %v8133, 16
        %v8356 = vrot.slane %v8354, 1
        %v8357 = vor.u32 %v8352, %v8356
        %v8359 = vshll.u32 %v8181, 16
        %v8361 = vrot.slane %v8359, 1
        %v8362 = vsel %vm1232, %v8357, %v8361
        %v8364 = vshrl.u32 %v8134, 16
        %v8366 = vshll.u32 %v8134, 16
        %v8368 = vrot.slane %v8366, 1
        %v8369 = vor.u32 %v8364, %v8368
        %v8371 = vshll.u32 %v8182, 16
        %v8373 = vrot.slane %v8371, 1
        %v8374 = vsel %vm1232, %v8369, %v8373
        %8375 = vrot.lane.b32.xlu0 %v8194, 64
        %v8376 = vpop.permute.xlu0 %8375
        %8377 = vrot.lane.b32.xlu0 %v8206, 64
        %v8378 = vpop.permute.xlu0 %8377
        %8379 = vrot.lane.b32.xlu0 %v8218, 64
        %v8380 = vpop.permute.xlu0 %8379
        %8381 = vrot.lane.b32.xlu0 %v8230, 64
        %v8382 = vpop.permute.xlu0 %8381
        %8383 = vrot.lane.b32.xlu0 %v8242, 64
        %v8384 = vpop.permute.xlu0 %8383
        %8385 = vrot.lane.b32.xlu0 %v8254, 64
        %v8386 = vpop.permute.xlu0 %8385
        %8387 = vrot.lane.b32.xlu0 %v8266, 64
        %v8388 = vpop.permute.xlu0 %8387
        %8389 = vrot.lane.b32.xlu0 %v8278, 64
        %v8390 = vpop.permute.xlu0 %8389
        %8391 = vrot.lane.b32.xlu0 %v8290, 64
        %v8392 = vpop.permute.xlu0 %8391
        %8393 = vrot.lane.b32.xlu0 %v8302, 64
        %v8394 = vpop.permute.xlu0 %8393
        %8395 = vrot.lane.b32.xlu0 %v8314, 64
        %v8396 = vpop.permute.xlu0 %8395
        %8397 = vrot.lane.b32.xlu0 %v8326, 64
        %v8398 = vpop.permute.xlu0 %8397
        %8399 = vrot.lane.b32.xlu0 %v8338, 64
        %v8400 = vpop.permute.xlu0 %8399
        %8401 = vrot.lane.b32.xlu0 %v8350, 64
        %v8402 = vpop.permute.xlu0 %8401
        %8403 = vrot.lane.b32.xlu0 %v8362, 64
        %v8404 = vpop.permute.xlu0 %8403
        %8405 = vrot.lane.b32.xlu0 %v8374, 64
        %v8406 = vpop.permute.xlu0 %8405
        %v8423 = vunpack.c.l.b16 %v7911
        %v8424 = vunpack.c.l.b16 %v7912
        %v8425 = vunpack.c.l.b16 %v7913
        %v8426 = vunpack.c.l.b16 %v7914
        %v8427 = vunpack.c.l.b16 %v7915
        %v8428 = vunpack.c.l.b16 %v7916
        %v8429 = vunpack.c.l.b16 %v7917
        %v8430 = vunpack.c.l.b16 %v7918
        %v8431 = vunpack.c.l.b16 %v7919
        %v8432 = vunpack.c.l.b16 %v7920
        %v8433 = vunpack.c.l.b16 %v7921
        %v8434 = vunpack.c.l.b16 %v7922
        %v8435 = vunpack.c.l.b16 %v7923
        %v8436 = vunpack.c.l.b16 %v7924
        %v8437 = vunpack.c.l.b16 %v7925
        %v8438 = vunpack.c.l.b16 %v7926
        %v8439 = vpack.c.b16 %v8088, %v8423
        %v8440 = vpack.c.b16 %v8090, %v8424
        %v8441 = vpack.c.b16 %v8092, %v8425
        %v8442 = vpack.c.b16 %v8094, %v8426
        %v8443 = vpack.c.b16 %v8096, %v8427
        %v8444 = vpack.c.b16 %v8098, %v8428
        %v8445 = vpack.c.b16 %v8100, %v8429
        %v8446 = vpack.c.b16 %v8102, %v8430
        %v8447 = vpack.c.b16 %v8104, %v8431
        %v8448 = vpack.c.b16 %v8106, %v8432
        %v8449 = vpack.c.b16 %v8108, %v8433
        %v8450 = vpack.c.b16 %v8110, %v8434
        %v8451 = vpack.c.b16 %v8112, %v8435
        %v8452 = vpack.c.b16 %v8114, %v8436
        %v8453 = vpack.c.b16 %v8116, %v8437
        %v8454 = vpack.c.b16 %v8118, %v8438
        %v8455 = vrot.slane %v8439, 1
        %v8456 = vrot.slane %v8167, 1
        %v8457 = vsel %vm1505, %v8455, %v8456
        %v8458 = vrot.slane %v8440, 1
        %v8459 = vrot.slane %v8168, 1
        %v8460 = vsel %vm1505, %v8458, %v8459
        %v8461 = vrot.slane %v8441, 1
        %v8462 = vrot.slane %v8169, 1
        %v8463 = vsel %vm1505, %v8461, %v8462
        %v8464 = vrot.slane %v8442, 1
        %v8465 = vrot.slane %v8170, 1
        %v8466 = vsel %vm1505, %v8464, %v8465
        %v8467 = vrot.slane %v8443, 1
        %v8468 = vrot.slane %v8171, 1
        %v8469 = vsel %vm1505, %v8467, %v8468
        %v8470 = vrot.slane %v8444, 1
        %v8471 = vrot.slane %v8172, 1
        %v8472 = vsel %vm1505, %v8470, %v8471
        %v8473 = vrot.slane %v8445, 1
        %v8474 = vrot.slane %v8173, 1
        %v8475 = vsel %vm1505, %v8473, %v8474
        %v8476 = vrot.slane %v8446, 1
        %v8477 = vrot.slane %v8174, 1
        %v8478 = vsel %vm1505, %v8476, %v8477
        %v8479 = vrot.slane %v8447, 1
        %v8480 = vrot.slane %v8175, 1
        %v8481 = vsel %vm1505, %v8479, %v8480
        %v8482 = vrot.slane %v8448, 1
        %v8483 = vrot.slane %v8176, 1
        %v8484 = vsel %vm1505, %v8482, %v8483
        %v8485 = vrot.slane %v8449, 1
        %v8486 = vrot.slane %v8177, 1
        %v8487 = vsel %vm1505, %v8485, %v8486
        %v8488 = vrot.slane %v8450, 1
        %v8489 = vrot.slane %v8178, 1
        %v8490 = vsel %vm1505, %v8488, %v8489
        %v8491 = vrot.slane %v8451, 1
        %v8492 = vrot.slane %v8179, 1
        %v8493 = vsel %vm1505, %v8491, %v8492
        %v8494 = vrot.slane %v8452, 1
        %v8495 = vrot.slane %v8180, 1
        %v8496 = vsel %vm1505, %v8494, %v8495
        %v8497 = vrot.slane %v8453, 1
        %v8498 = vrot.slane %v8181, 1
        %v8499 = vsel %vm1505, %v8497, %v8498
        %v8500 = vrot.slane %v8454, 1
        %v8501 = vrot.slane %v8182, 1
        %v8502 = vsel %vm1505, %v8500, %v8501
        %v8535 = vunpack.c.l.b16 %v7927
        %v8536 = vunpack.c.l.b16 %v7928
        %v8537 = vunpack.c.l.b16 %v7929
        %v8538 = vunpack.c.l.b16 %v7930
        %v8539 = vunpack.c.l.b16 %v7931
        %v8540 = vunpack.c.l.b16 %v7932
        %v8541 = vunpack.c.l.b16 %v7933
        %v8542 = vunpack.c.l.b16 %v7934
        %v8543 = vunpack.c.l.b16 %v7935
        %v8544 = vunpack.c.l.b16 %v7936
        %v8545 = vunpack.c.l.b16 %v7937
        %v8546 = vunpack.c.l.b16 %v7938
        %v8547 = vunpack.c.l.b16 %v7939
        %v8548 = vunpack.c.l.b16 %v7940
        %v8549 = vunpack.c.l.b16 %v7941
        %v8550 = vunpack.c.l.b16 %v7942
        %v8551 = vunpack.c.l.b16 %v7943
        %v8552 = vunpack.c.l.b16 %v7944
        %v8553 = vunpack.c.l.b16 %v7945
        %v8554 = vunpack.c.l.b16 %v7946
        %v8555 = vunpack.c.l.b16 %v7947
        %v8556 = vunpack.c.l.b16 %v7948
        %v8557 = vunpack.c.l.b16 %v7949
        %v8558 = vunpack.c.l.b16 %v7950
        %v8559 = vunpack.c.l.b16 %v7951
        %v8560 = vunpack.c.l.b16 %v7952
        %v8561 = vunpack.c.l.b16 %v7953
        %v8562 = vunpack.c.l.b16 %v7954
        %v8563 = vunpack.c.l.b16 %v7955
        %v8564 = vunpack.c.l.b16 %v7956
        %v8565 = vunpack.c.l.b16 %v7957
        %v8566 = vunpack.c.l.b16 %v7958
        %v8567 = vpack.c.b16 %v8536, %v8535
        %v8568 = vpack.c.b16 %v8538, %v8537
        %v8569 = vpack.c.b16 %v8540, %v8539
        %v8570 = vpack.c.b16 %v8542, %v8541
        %v8571 = vpack.c.b16 %v8544, %v8543
        %v8572 = vpack.c.b16 %v8546, %v8545
        %v8573 = vpack.c.b16 %v8548, %v8547
        %v8574 = vpack.c.b16 %v8550, %v8549
        %v8575 = vpack.c.b16 %v8552, %v8551
        %v8576 = vpack.c.b16 %v8554, %v8553
        %v8577 = vpack.c.b16 %v8556, %v8555
        %v8578 = vpack.c.b16 %v8558, %v8557
        %v8579 = vpack.c.b16 %v8560, %v8559
        %v8580 = vpack.c.b16 %v8562, %v8561
        %v8581 = vpack.c.b16 %v8564, %v8563
        %v8582 = vpack.c.b16 %v8566, %v8565
        %8583 = vrot.lane.b32.xlu0 %v8567, 64
        %v8584 = vpop.permute.xlu0 %8583
        %8585 = vrot.lane.b32.xlu0 %v8568, 64
        %v8586 = vpop.permute.xlu0 %8585
        %8587 = vrot.lane.b32.xlu0 %v8569, 64
        %v8588 = vpop.permute.xlu0 %8587
        %8589 = vrot.lane.b32.xlu0 %v8570, 64
        %v8590 = vpop.permute.xlu0 %8589
        %8591 = vrot.lane.b32.xlu0 %v8571, 64
        %v8592 = vpop.permute.xlu0 %8591
        %8593 = vrot.lane.b32.xlu0 %v8572, 64
        %v8594 = vpop.permute.xlu0 %8593
        %8595 = vrot.lane.b32.xlu0 %v8573, 64
        %v8596 = vpop.permute.xlu0 %8595
        %8597 = vrot.lane.b32.xlu0 %v8574, 64
        %v8598 = vpop.permute.xlu0 %8597
        %8599 = vrot.lane.b32.xlu0 %v8575, 64
        %v8600 = vpop.permute.xlu0 %8599
        %8601 = vrot.lane.b32.xlu0 %v8576, 64
        %v8602 = vpop.permute.xlu0 %8601
        %8603 = vrot.lane.b32.xlu0 %v8577, 64
        %v8604 = vpop.permute.xlu0 %8603
        %8605 = vrot.lane.b32.xlu0 %v8578, 64
        %v8606 = vpop.permute.xlu0 %8605
        %8607 = vrot.lane.b32.xlu0 %v8579, 64
        %v8608 = vpop.permute.xlu0 %8607
        %8609 = vrot.lane.b32.xlu0 %v8580, 64
        %v8610 = vpop.permute.xlu0 %8609
        %8611 = vrot.lane.b32.xlu0 %v8581, 64
        %v8612 = vpop.permute.xlu0 %8611
        %8613 = vrot.lane.b32.xlu0 %v8582, 64
        %v8614 = vpop.permute.xlu0 %8613
        %v8631 = vunpack.c.l.b16 %v7959
        %v8632 = vunpack.c.l.b16 %v7960
        %v8633 = vunpack.c.l.b16 %v7961
        %v8634 = vunpack.c.l.b16 %v7962
        %v8635 = vunpack.c.l.b16 %v7963
        %v8636 = vunpack.c.l.b16 %v7964
        %v8637 = vunpack.c.l.b16 %v7965
        %v8638 = vunpack.c.l.b16 %v7966
        %v8639 = vunpack.c.l.b16 %v7967
        %v8640 = vunpack.c.l.b16 %v7968
        %v8641 = vunpack.c.l.b16 %v7969
        %v8642 = vunpack.c.l.b16 %v7970
        %v8643 = vunpack.c.l.b16 %v7971
        %v8644 = vunpack.c.l.b16 %v7972
        %v8645 = vunpack.c.l.b16 %v7973
        %v8646 = vunpack.c.l.b16 %v7974
        %v8647 = vpack.c.b16 %v8631, %v8631
        %v8648 = vpack.c.b16 %v8632, %v8632
        %v8649 = vpack.c.b16 %v8633, %v8633
        %v8650 = vpack.c.b16 %v8634, %v8634
        %v8651 = vpack.c.b16 %v8635, %v8635
        %v8652 = vpack.c.b16 %v8636, %v8636
        %v8653 = vpack.c.b16 %v8637, %v8637
        %v8654 = vpack.c.b16 %v8638, %v8638
        %v8655 = vpack.c.b16 %v8639, %v8639
        %v8656 = vpack.c.b16 %v8640, %v8640
        %v8657 = vpack.c.b16 %v8641, %v8641
        %v8658 = vpack.c.b16 %v8642, %v8642
        %v8659 = vpack.c.b16 %v8643, %v8643
        %v8660 = vpack.c.b16 %v8644, %v8644
        %v8661 = vpack.c.b16 %v8645, %v8645
        %v8662 = vpack.c.b16 %v8646, %v8646
        %v8664 = vshrl.u32 %v8567, 16
        %v8666 = vshll.u32 %v8567, 16
        %v8668 = vrot.slane %v8666, 1
        %v8669 = vor.u32 %v8664, %v8668
        %v8671 = vshll.u32 %v8647, 16
        %v8673 = vrot.slane %v8671, 1
        %v8674 = vsel %vm1232, %v8669, %v8673
        %v8676 = vshrl.u32 %v8568, 16
        %v8678 = vshll.u32 %v8568, 16
        %v8680 = vrot.slane %v8678, 1
        %v8681 = vor.u32 %v8676, %v8680
        %v8683 = vshll.u32 %v8648, 16
        %v8685 = vrot.slane %v8683, 1
        %v8686 = vsel %vm1232, %v8681, %v8685
        %v8688 = vshrl.u32 %v8569, 16
        %v8690 = vshll.u32 %v8569, 16
        %v8692 = vrot.slane %v8690, 1
        %v8693 = vor.u32 %v8688, %v8692
        %v8695 = vshll.u32 %v8649, 16
        %v8697 = vrot.slane %v8695, 1
        %v8698 = vsel %vm1232, %v8693, %v8697
        %v8700 = vshrl.u32 %v8570, 16
        %v8702 = vshll.u32 %v8570, 16
        %v8704 = vrot.slane %v8702, 1
        %v8705 = vor.u32 %v8700, %v8704
        %v8707 = vshll.u32 %v8650, 16
        %v8709 = vrot.slane %v8707, 1
        %v8710 = vsel %vm1232, %v8705, %v8709
        %v8712 = vshrl.u32 %v8571, 16
        %v8714 = vshll.u32 %v8571, 16
        %v8716 = vrot.slane %v8714, 1
        %v8717 = vor.u32 %v8712, %v8716
        %v8719 = vshll.u32 %v8651, 16
        %v8721 = vrot.slane %v8719, 1
        %v8722 = vsel %vm1232, %v8717, %v8721
        %v8724 = vshrl.u32 %v8572, 16
        %v8726 = vshll.u32 %v8572, 16
        %v8728 = vrot.slane %v8726, 1
        %v8729 = vor.u32 %v8724, %v8728
        %v8731 = vshll.u32 %v8652, 16
        %v8733 = vrot.slane %v8731, 1
        %v8734 = vsel %vm1232, %v8729, %v8733
        %v8736 = vshrl.u32 %v8573, 16
        %v8738 = vshll.u32 %v8573, 16
        %v8740 = vrot.slane %v8738, 1
        %v8741 = vor.u32 %v8736, %v8740
        %v8743 = vshll.u32 %v8653, 16
        %v8745 = vrot.slane %v8743, 1
        %v8746 = vsel %vm1232, %v8741, %v8745
        %v8748 = vshrl.u32 %v8574, 16
        %v8750 = vshll.u32 %v8574, 16
        %v8752 = vrot.slane %v8750, 1
        %v8753 = vor.u32 %v8748, %v8752
        %v8755 = vshll.u32 %v8654, 16
        %v8757 = vrot.slane %v8755, 1
        %v8758 = vsel %vm1232, %v8753, %v8757
        %v8760 = vshrl.u32 %v8575, 16
        %v8762 = vshll.u32 %v8575, 16
        %v8764 = vrot.slane %v8762, 1
        %v8765 = vor.u32 %v8760, %v8764
        %v8767 = vshll.u32 %v8655, 16
        %v8769 = vrot.slane %v8767, 1
        %v8770 = vsel %vm1232, %v8765, %v8769
        %v8772 = vshrl.u32 %v8576, 16
        %v8774 = vshll.u32 %v8576, 16
        %v8776 = vrot.slane %v8774, 1
        %v8777 = vor.u32 %v8772, %v8776
        %v8779 = vshll.u32 %v8656, 16
        %v8781 = vrot.slane %v8779, 1
        %v8782 = vsel %vm1232, %v8777, %v8781
        %v8784 = vshrl.u32 %v8577, 16
        %v8786 = vshll.u32 %v8577, 16
        %v8788 = vrot.slane %v8786, 1
        %v8789 = vor.u32 %v8784, %v8788
        %v8791 = vshll.u32 %v8657, 16
        %v8793 = vrot.slane %v8791, 1
        %v8794 = vsel %vm1232, %v8789, %v8793
        %v8796 = vshrl.u32 %v8578, 16
        %v8798 = vshll.u32 %v8578, 16
        %v8800 = vrot.slane %v8798, 1
        %v8801 = vor.u32 %v8796, %v8800
        %v8803 = vshll.u32 %v8658, 16
        %v8805 = vrot.slane %v8803, 1
        %v8806 = vsel %vm1232, %v8801, %v8805
        %v8808 = vshrl.u32 %v8579, 16
        %v8810 = vshll.u32 %v8579, 16
        %v8812 = vrot.slane %v8810, 1
        %v8813 = vor.u32 %v8808, %v8812
        %v8815 = vshll.u32 %v8659, 16
        %v8817 = vrot.slane %v8815, 1
        %v8818 = vsel %vm1232, %v8813, %v8817
        %v8820 = vshrl.u32 %v8580, 16
        %v8822 = vshll.u32 %v8580, 16
        %v8824 = vrot.slane %v8822, 1
        %v8825 = vor.u32 %v8820, %v8824
        %v8827 = vshll.u32 %v8660, 16
        %v8829 = vrot.slane %v8827, 1
        %v8830 = vsel %vm1232, %v8825, %v8829
        %v8832 = vshrl.u32 %v8581, 16
        %v8834 = vshll.u32 %v8581, 16
        %v8836 = vrot.slane %v8834, 1
        %v8837 = vor.u32 %v8832, %v8836
        %v8839 = vshll.u32 %v8661, 16
        %v8841 = vrot.slane %v8839, 1
        %v8842 = vsel %vm1232, %v8837, %v8841
        %v8844 = vshrl.u32 %v8582, 16
        %v8846 = vshll.u32 %v8582, 16
        %v8848 = vrot.slane %v8846, 1
        %v8849 = vor.u32 %v8844, %v8848
        %v8851 = vshll.u32 %v8662, 16
        %v8853 = vrot.slane %v8851, 1
        %v8854 = vsel %vm1232, %v8849, %v8853
        %v8871 = vunpack.c.l.b16 %v7975
        %v8872 = vunpack.c.l.b16 %v7976
        %v8873 = vunpack.c.l.b16 %v7977
        %v8874 = vunpack.c.l.b16 %v7978
        %v8875 = vunpack.c.l.b16 %v7979
        %v8876 = vunpack.c.l.b16 %v7980
        %v8877 = vunpack.c.l.b16 %v7981
        %v8878 = vunpack.c.l.b16 %v7982
        %v8879 = vunpack.c.l.b16 %v7983
        %v8880 = vunpack.c.l.b16 %v7984
        %v8881 = vunpack.c.l.b16 %v7985
        %v8882 = vunpack.c.l.b16 %v7986
        %v8883 = vunpack.c.l.b16 %v7987
        %v8884 = vunpack.c.l.b16 %v7988
        %v8885 = vunpack.c.l.b16 %v7989
        %v8886 = vunpack.c.l.b16 %v7990
        %v8887 = vpack.c.b16 %v8536, %v8871
        %v8888 = vpack.c.b16 %v8538, %v8872
        %v8889 = vpack.c.b16 %v8540, %v8873
        %v8890 = vpack.c.b16 %v8542, %v8874
        %v8891 = vpack.c.b16 %v8544, %v8875
        %v8892 = vpack.c.b16 %v8546, %v8876
        %v8893 = vpack.c.b16 %v8548, %v8877
        %v8894 = vpack.c.b16 %v8550, %v8878
        %v8895 = vpack.c.b16 %v8552, %v8879
        %v8896 = vpack.c.b16 %v8554, %v8880
        %v8897 = vpack.c.b16 %v8556, %v8881
        %v8898 = vpack.c.b16 %v8558, %v8882
        %v8899 = vpack.c.b16 %v8560, %v8883
        %v8900 = vpack.c.b16 %v8562, %v8884
        %v8901 = vpack.c.b16 %v8564, %v8885
        %v8902 = vpack.c.b16 %v8566, %v8886
        %v8903 = vrot.slane %v8887, 1
        %v8904 = vrot.slane %v8647, 1
        %v8905 = vsel %vm1505, %v8903, %v8904
        %v8906 = vrot.slane %v8888, 1
        %v8907 = vrot.slane %v8648, 1
        %v8908 = vsel %vm1505, %v8906, %v8907
        %v8909 = vrot.slane %v8889, 1
        %v8910 = vrot.slane %v8649, 1
        %v8911 = vsel %vm1505, %v8909, %v8910
        %v8912 = vrot.slane %v8890, 1
        %v8913 = vrot.slane %v8650, 1
        %v8914 = vsel %vm1505, %v8912, %v8913
        %v8915 = vrot.slane %v8891, 1
        %v8916 = vrot.slane %v8651, 1
        %v8917 = vsel %vm1505, %v8915, %v8916
        %v8918 = vrot.slane %v8892, 1
        %v8919 = vrot.slane %v8652, 1
        %v8920 = vsel %vm1505, %v8918, %v8919
        %v8921 = vrot.slane %v8893, 1
        %v8922 = vrot.slane %v8653, 1
        %v8923 = vsel %vm1505, %v8921, %v8922
        %v8924 = vrot.slane %v8894, 1
        %v8925 = vrot.slane %v8654, 1
        %v8926 = vsel %vm1505, %v8924, %v8925
        %v8927 = vrot.slane %v8895, 1
        %v8928 = vrot.slane %v8655, 1
        %v8929 = vsel %vm1505, %v8927, %v8928
        %v8930 = vrot.slane %v8896, 1
        %v8931 = vrot.slane %v8656, 1
        %v8932 = vsel %vm1505, %v8930, %v8931
        %v8933 = vrot.slane %v8897, 1
        %v8934 = vrot.slane %v8657, 1
        %v8935 = vsel %vm1505, %v8933, %v8934
        %v8936 = vrot.slane %v8898, 1
        %v8937 = vrot.slane %v8658, 1
        %v8938 = vsel %vm1505, %v8936, %v8937
        %v8939 = vrot.slane %v8899, 1
        %v8940 = vrot.slane %v8659, 1
        %v8941 = vsel %vm1505, %v8939, %v8940
        %v8942 = vrot.slane %v8900, 1
        %v8943 = vrot.slane %v8660, 1
        %v8944 = vsel %vm1505, %v8942, %v8943
        %v8945 = vrot.slane %v8901, 1
        %v8946 = vrot.slane %v8661, 1
        %v8947 = vsel %vm1505, %v8945, %v8946
        %v8948 = vrot.slane %v8902, 1
        %v8949 = vrot.slane %v8662, 1
        %v8950 = vsel %vm1505, %v8948, %v8949
        %8951 = vrot.lane.b32.xlu0 %v8905, 64
        %v8952 = vpop.permute.xlu0 %8951
        %8953 = vrot.lane.b32.xlu0 %v8908, 64
        %v8954 = vpop.permute.xlu0 %8953
        %8955 = vrot.lane.b32.xlu0 %v8911, 64
        %v8956 = vpop.permute.xlu0 %8955
        %8957 = vrot.lane.b32.xlu0 %v8914, 64
        %v8958 = vpop.permute.xlu0 %8957
        %8959 = vrot.lane.b32.xlu0 %v8917, 64
        %v8960 = vpop.permute.xlu0 %8959
        %8961 = vrot.lane.b32.xlu0 %v8920, 64
        %v8962 = vpop.permute.xlu0 %8961
        %8963 = vrot.lane.b32.xlu0 %v8923, 64
        %v8964 = vpop.permute.xlu0 %8963
        %8965 = vrot.lane.b32.xlu0 %v8926, 64
        %v8966 = vpop.permute.xlu0 %8965
        %8967 = vrot.lane.b32.xlu0 %v8929, 64
        %v8968 = vpop.permute.xlu0 %8967
        %8969 = vrot.lane.b32.xlu0 %v8932, 64
        %v8970 = vpop.permute.xlu0 %8969
        %8971 = vrot.lane.b32.xlu0 %v8935, 64
        %v8972 = vpop.permute.xlu0 %8971
        %8973 = vrot.lane.b32.xlu0 %v8938, 64
        %v8974 = vpop.permute.xlu0 %8973
        %8975 = vrot.lane.b32.xlu0 %v8941, 64
        %v8976 = vpop.permute.xlu0 %8975
        %8977 = vrot.lane.b32.xlu0 %v8944, 64
        %v8978 = vpop.permute.xlu0 %8977
        %8979 = vrot.lane.b32.xlu0 %v8947, 64
        %v8980 = vpop.permute.xlu0 %8979
        %8981 = vrot.lane.b32.xlu0 %v8950, 64
        %v8982 = vpop.permute.xlu0 %8981
        %v9015 = vunpack.c.l.b16 %v7991
        %v9016 = vunpack.c.l.b16 %v7992
        %v9017 = vunpack.c.l.b16 %v7993
        %v9018 = vunpack.c.l.b16 %v7994
        %v9019 = vunpack.c.l.b16 %v7995
        %v9020 = vunpack.c.l.b16 %v7996
        %v9021 = vunpack.c.l.b16 %v7997
        %v9022 = vunpack.c.l.b16 %v7998
        %v9023 = vunpack.c.l.b16 %v7999
        %v9024 = vunpack.c.l.b16 %v8000
        %v9025 = vunpack.c.l.b16 %v8001
        %v9026 = vunpack.c.l.b16 %v8002
        %v9027 = vunpack.c.l.b16 %v8003
        %v9028 = vunpack.c.l.b16 %v8004
        %v9029 = vunpack.c.l.b16 %v8005
        %v9030 = vunpack.c.l.b16 %v8006
        %v9031 = vunpack.c.l.b16 %v8007
        %v9032 = vunpack.c.l.b16 %v8008
        %v9033 = vunpack.c.l.b16 %v8009
        %v9034 = vunpack.c.l.b16 %v8010
        %v9035 = vunpack.c.l.b16 %v8011
        %v9036 = vunpack.c.l.b16 %v8012
        %v9037 = vunpack.c.l.b16 %v8013
        %v9038 = vunpack.c.l.b16 %v8014
        %v9039 = vunpack.c.l.b16 %v8015
        %v9040 = vunpack.c.l.b16 %v8016
        %v9041 = vunpack.c.l.b16 %v8017
        %v9042 = vunpack.c.l.b16 %v8018
        %v9043 = vunpack.c.l.b16 %v8019
        %v9044 = vunpack.c.l.b16 %v8020
        %v9045 = vunpack.c.l.b16 %v8021
        %v9046 = vunpack.c.l.b16 %v8022
        %v9047 = vpack.c.b16 %v9016, %v9015
        %v9048 = vpack.c.b16 %v9018, %v9017
        %v9049 = vpack.c.b16 %v9020, %v9019
        %v9050 = vpack.c.b16 %v9022, %v9021
        %v9051 = vpack.c.b16 %v9024, %v9023
        %v9052 = vpack.c.b16 %v9026, %v9025
        %v9053 = vpack.c.b16 %v9028, %v9027
        %v9054 = vpack.c.b16 %v9030, %v9029
        %v9055 = vpack.c.b16 %v9032, %v9031
        %v9056 = vpack.c.b16 %v9034, %v9033
        %v9057 = vpack.c.b16 %v9036, %v9035
        %v9058 = vpack.c.b16 %v9038, %v9037
        %v9059 = vpack.c.b16 %v9040, %v9039
        %v9060 = vpack.c.b16 %v9042, %v9041
        %v9061 = vpack.c.b16 %v9044, %v9043
        %v9062 = vpack.c.b16 %v9046, %v9045
        %v9079 = vunpack.c.l.b16 %v8023
        %v9080 = vunpack.c.l.b16 %v8024
        %v9081 = vunpack.c.l.b16 %v8025
        %v9082 = vunpack.c.l.b16 %v8026
        %v9083 = vunpack.c.l.b16 %v8027
        %v9084 = vunpack.c.l.b16 %v8028
        %v9085 = vunpack.c.l.b16 %v8029
        %v9086 = vunpack.c.l.b16 %v8030
        %v9087 = vunpack.c.l.b16 %v8031
        %v9088 = vunpack.c.l.b16 %v8032
        %v9089 = vunpack.c.l.b16 %v8033
        %v9090 = vunpack.c.l.b16 %v8034
        %v9091 = vunpack.c.l.b16 %v8035
        %v9092 = vunpack.c.l.b16 %v8036
        %v9093 = vunpack.c.l.b16 %v8037
        %v9094 = vunpack.c.l.b16 %v8038
        %v9095 = vpack.c.b16 %v9079, %v9079
        %v9096 = vpack.c.b16 %v9080, %v9080
        %v9097 = vpack.c.b16 %v9081, %v9081
        %v9098 = vpack.c.b16 %v9082, %v9082
        %v9099 = vpack.c.b16 %v9083, %v9083
        %v9100 = vpack.c.b16 %v9084, %v9084
        %v9101 = vpack.c.b16 %v9085, %v9085
        %v9102 = vpack.c.b16 %v9086, %v9086
        %v9103 = vpack.c.b16 %v9087, %v9087
        %v9104 = vpack.c.b16 %v9088, %v9088
        %v9105 = vpack.c.b16 %v9089, %v9089
        %v9106 = vpack.c.b16 %v9090, %v9090
        %v9107 = vpack.c.b16 %v9091, %v9091
        %v9108 = vpack.c.b16 %v9092, %v9092
        %v9109 = vpack.c.b16 %v9093, %v9093
        %v9110 = vpack.c.b16 %v9094, %v9094
        %v9112 = vshrl.u32 %v9047, 16
        %v9114 = vshll.u32 %v9047, 16
        %v9116 = vrot.slane %v9114, 1
        %v9117 = vor.u32 %v9112, %v9116
        %v9119 = vshll.u32 %v9095, 16
        %v9121 = vrot.slane %v9119, 1
        %v9122 = vsel %vm1232, %v9117, %v9121
        %v9124 = vshrl.u32 %v9048, 16
        %v9126 = vshll.u32 %v9048, 16
        %v9128 = vrot.slane %v9126, 1
        %v9129 = vor.u32 %v9124, %v9128
        %v9131 = vshll.u32 %v9096, 16
        %v9133 = vrot.slane %v9131, 1
        %v9134 = vsel %vm1232, %v9129, %v9133
        %v9136 = vshrl.u32 %v9049, 16
        %v9138 = vshll.u32 %v9049, 16
        %v9140 = vrot.slane %v9138, 1
        %v9141 = vor.u32 %v9136, %v9140
        %v9143 = vshll.u32 %v9097, 16
        %v9145 = vrot.slane %v9143, 1
        %v9146 = vsel %vm1232, %v9141, %v9145
        %v9148 = vshrl.u32 %v9050, 16
        %v9150 = vshll.u32 %v9050, 16
        %v9152 = vrot.slane %v9150, 1
        %v9153 = vor.u32 %v9148, %v9152
        %v9155 = vshll.u32 %v9098, 16
        %v9157 = vrot.slane %v9155, 1
        %v9158 = vsel %vm1232, %v9153, %v9157
        %v9160 = vshrl.u32 %v9051, 16
        %v9162 = vshll.u32 %v9051, 16
        %v9164 = vrot.slane %v9162, 1
        %v9165 = vor.u32 %v9160, %v9164
        %v9167 = vshll.u32 %v9099, 16
        %v9169 = vrot.slane %v9167, 1
        %v9170 = vsel %vm1232, %v9165, %v9169
        %v9172 = vshrl.u32 %v9052, 16
        %v9174 = vshll.u32 %v9052, 16
        %v9176 = vrot.slane %v9174, 1
        %v9177 = vor.u32 %v9172, %v9176
        %v9179 = vshll.u32 %v9100, 16
        %v9181 = vrot.slane %v9179, 1
        %v9182 = vsel %vm1232, %v9177, %v9181
        %v9184 = vshrl.u32 %v9053, 16
        %v9186 = vshll.u32 %v9053, 16
        %v9188 = vrot.slane %v9186, 1
        %v9189 = vor.u32 %v9184, %v9188
        %v9191 = vshll.u32 %v9101, 16
        %v9193 = vrot.slane %v9191, 1
        %v9194 = vsel %vm1232, %v9189, %v9193
        %v9196 = vshrl.u32 %v9054, 16
        %v9198 = vshll.u32 %v9054, 16
        %v9200 = vrot.slane %v9198, 1
        %v9201 = vor.u32 %v9196, %v9200
        %v9203 = vshll.u32 %v9102, 16
        %v9205 = vrot.slane %v9203, 1
        %v9206 = vsel %vm1232, %v9201, %v9205
        %v9208 = vshrl.u32 %v9055, 16
        %v9210 = vshll.u32 %v9055, 16
        %v9212 = vrot.slane %v9210, 1
        %v9213 = vor.u32 %v9208, %v9212
        %v9215 = vshll.u32 %v9103, 16
        %v9217 = vrot.slane %v9215, 1
        %v9218 = vsel %vm1232, %v9213, %v9217
        %v9220 = vshrl.u32 %v9056, 16
        %v9222 = vshll.u32 %v9056, 16
        %v9224 = vrot.slane %v9222, 1
        %v9225 = vor.u32 %v9220, %v9224
        %v9227 = vshll.u32 %v9104, 16
        %v9229 = vrot.slane %v9227, 1
        %v9230 = vsel %vm1232, %v9225, %v9229
        %v9232 = vshrl.u32 %v9057, 16
        %v9234 = vshll.u32 %v9057, 16
        %v9236 = vrot.slane %v9234, 1
        %v9237 = vor.u32 %v9232, %v9236
        %v9239 = vshll.u32 %v9105, 16
        %v9241 = vrot.slane %v9239, 1
        %v9242 = vsel %vm1232, %v9237, %v9241
        %v9244 = vshrl.u32 %v9058, 16
        %v9246 = vshll.u32 %v9058, 16
        %v9248 = vrot.slane %v9246, 1
        %v9249 = vor.u32 %v9244, %v9248
        %v9251 = vshll.u32 %v9106, 16
        %v9253 = vrot.slane %v9251, 1
        %v9254 = vsel %vm1232, %v9249, %v9253
        %v9256 = vshrl.u32 %v9059, 16
        %v9258 = vshll.u32 %v9059, 16
        %v9260 = vrot.slane %v9258, 1
        %v9261 = vor.u32 %v9256, %v9260
        %v9263 = vshll.u32 %v9107, 16
        %v9265 = vrot.slane %v9263, 1
        %v9266 = vsel %vm1232, %v9261, %v9265
        %v9268 = vshrl.u32 %v9060, 16
        %v9270 = vshll.u32 %v9060, 16
        %v9272 = vrot.slane %v9270, 1
        %v9273 = vor.u32 %v9268, %v9272
        %v9275 = vshll.u32 %v9108, 16
        %v9277 = vrot.slane %v9275, 1
        %v9278 = vsel %vm1232, %v9273, %v9277
        %v9280 = vshrl.u32 %v9061, 16
        %v9282 = vshll.u32 %v9061, 16
        %v9284 = vrot.slane %v9282, 1
        %v9285 = vor.u32 %v9280, %v9284
        %v9287 = vshll.u32 %v9109, 16
        %v9289 = vrot.slane %v9287, 1
        %v9290 = vsel %vm1232, %v9285, %v9289
        %v9292 = vshrl.u32 %v9062, 16
        %v9294 = vshll.u32 %v9062, 16
        %v9296 = vrot.slane %v9294, 1
        %v9297 = vor.u32 %v9292, %v9296
        %v9299 = vshll.u32 %v9110, 16
        %v9301 = vrot.slane %v9299, 1
        %v9302 = vsel %vm1232, %v9297, %v9301
        %9303 = vrot.lane.b32.xlu0 %v9122, 64
        %v9304 = vpop.permute.xlu0 %9303
        %9305 = vrot.lane.b32.xlu0 %v9134, 64
        %v9306 = vpop.permute.xlu0 %9305
        %9307 = vrot.lane.b32.xlu0 %v9146, 64
        %v9308 = vpop.permute.xlu0 %9307
        %9309 = vrot.lane.b32.xlu0 %v9158, 64
        %v9310 = vpop.permute.xlu0 %9309
        %9311 = vrot.lane.b32.xlu0 %v9170, 64
        %v9312 = vpop.permute.xlu0 %9311
        %9313 = vrot.lane.b32.xlu0 %v9182, 64
        %v9314 = vpop.permute.xlu0 %9313
        %9315 = vrot.lane.b32.xlu0 %v9194, 64
        %v9316 = vpop.permute.xlu0 %9315
        %9317 = vrot.lane.b32.xlu0 %v9206, 64
        %v9318 = vpop.permute.xlu0 %9317
        %9319 = vrot.lane.b32.xlu0 %v9218, 64
        %v9320 = vpop.permute.xlu0 %9319
        %9321 = vrot.lane.b32.xlu0 %v9230, 64
        %v9322 = vpop.permute.xlu0 %9321
        %9323 = vrot.lane.b32.xlu0 %v9242, 64
        %v9324 = vpop.permute.xlu0 %9323
        %9325 = vrot.lane.b32.xlu0 %v9254, 64
        %v9326 = vpop.permute.xlu0 %9325
        %9327 = vrot.lane.b32.xlu0 %v9266, 64
        %v9328 = vpop.permute.xlu0 %9327
        %9329 = vrot.lane.b32.xlu0 %v9278, 64
        %v9330 = vpop.permute.xlu0 %9329
        %9331 = vrot.lane.b32.xlu0 %v9290, 64
        %v9332 = vpop.permute.xlu0 %9331
        %9333 = vrot.lane.b32.xlu0 %v9302, 64
        %v9334 = vpop.permute.xlu0 %9333
        %v9351 = vunpack.c.l.b16 %v8039
        %v9352 = vunpack.c.l.b16 %v8040
        %v9353 = vunpack.c.l.b16 %v8041
        %v9354 = vunpack.c.l.b16 %v8042
        %v9355 = vunpack.c.l.b16 %v8043
        %v9356 = vunpack.c.l.b16 %v8044
        %v9357 = vunpack.c.l.b16 %v8045
        %v9358 = vunpack.c.l.b16 %v8046
        %v9359 = vunpack.c.l.b16 %v8047
        %v9360 = vunpack.c.l.b16 %v8048
        %v9361 = vunpack.c.l.b16 %v8049
        %v9362 = vunpack.c.l.b16 %v8050
        %v9363 = vunpack.c.l.b16 %v8051
        %v9364 = vunpack.c.l.b16 %v8052
        %v9365 = vunpack.c.l.b16 %v8053
        %v9366 = vunpack.c.l.b16 %v8054
        %v9367 = vpack.c.b16 %v9016, %v9351
        %v9368 = vpack.c.b16 %v9018, %v9352
        %v9369 = vpack.c.b16 %v9020, %v9353
        %v9370 = vpack.c.b16 %v9022, %v9354
        %v9371 = vpack.c.b16 %v9024, %v9355
        %v9372 = vpack.c.b16 %v9026, %v9356
        %v9373 = vpack.c.b16 %v9028, %v9357
        %v9374 = vpack.c.b16 %v9030, %v9358
        %v9375 = vpack.c.b16 %v9032, %v9359
        %v9376 = vpack.c.b16 %v9034, %v9360
        %v9377 = vpack.c.b16 %v9036, %v9361
        %v9378 = vpack.c.b16 %v9038, %v9362
        %v9379 = vpack.c.b16 %v9040, %v9363
        %v9380 = vpack.c.b16 %v9042, %v9364
        %v9381 = vpack.c.b16 %v9044, %v9365
        %v9382 = vpack.c.b16 %v9046, %v9366
        %v9383 = vrot.slane %v9367, 1
        %v9384 = vrot.slane %v9095, 1
        %v9385 = vsel %vm1505, %v9383, %v9384
        %v9386 = vrot.slane %v9368, 1
        %v9387 = vrot.slane %v9096, 1
        %v9388 = vsel %vm1505, %v9386, %v9387
        %v9389 = vrot.slane %v9369, 1
        %v9390 = vrot.slane %v9097, 1
        %v9391 = vsel %vm1505, %v9389, %v9390
        %v9392 = vrot.slane %v9370, 1
        %v9393 = vrot.slane %v9098, 1
        %v9394 = vsel %vm1505, %v9392, %v9393
        %v9395 = vrot.slane %v9371, 1
        %v9396 = vrot.slane %v9099, 1
        %v9397 = vsel %vm1505, %v9395, %v9396
        %v9398 = vrot.slane %v9372, 1
        %v9399 = vrot.slane %v9100, 1
        %v9400 = vsel %vm1505, %v9398, %v9399
        %v9401 = vrot.slane %v9373, 1
        %v9402 = vrot.slane %v9101, 1
        %v9403 = vsel %vm1505, %v9401, %v9402
        %v9404 = vrot.slane %v9374, 1
        %v9405 = vrot.slane %v9102, 1
        %v9406 = vsel %vm1505, %v9404, %v9405
        %v9407 = vrot.slane %v9375, 1
        %v9408 = vrot.slane %v9103, 1
        %v9409 = vsel %vm1505, %v9407, %v9408
        %v9410 = vrot.slane %v9376, 1
        %v9411 = vrot.slane %v9104, 1
        %v9412 = vsel %vm1505, %v9410, %v9411
        %v9413 = vrot.slane %v9377, 1
        %v9414 = vrot.slane %v9105, 1
        %v9415 = vsel %vm1505, %v9413, %v9414
        %v9416 = vrot.slane %v9378, 1
        %v9417 = vrot.slane %v9106, 1
        %v9418 = vsel %vm1505, %v9416, %v9417
        %v9419 = vrot.slane %v9379, 1
        %v9420 = vrot.slane %v9107, 1
        %v9421 = vsel %vm1505, %v9419, %v9420
        %v9422 = vrot.slane %v9380, 1
        %v9423 = vrot.slane %v9108, 1
        %v9424 = vsel %vm1505, %v9422, %v9423
        %v9425 = vrot.slane %v9381, 1
        %v9426 = vrot.slane %v9109, 1
        %v9427 = vsel %vm1505, %v9425, %v9426
        %v9428 = vrot.slane %v9382, 1
        %v9429 = vrot.slane %v9110, 1
        %v9430 = vsel %vm1505, %v9428, %v9429
        %v9432 = vsel %vm2482, %v8119, %v8376
        %v9435 = vsel %vm2482, %v8120, %v8378
        %v9438 = vsel %vm2482, %v8121, %v8380
        %v9441 = vsel %vm2482, %v8122, %v8382
        %v9444 = vsel %vm2482, %v8123, %v8384
        %v9447 = vsel %vm2482, %v8124, %v8386
        %v9450 = vsel %vm2482, %v8125, %v8388
        %v9453 = vsel %vm2482, %v8126, %v8390
        %v9456 = vsel %vm2482, %v8127, %v8392
        %v9459 = vsel %vm2482, %v8128, %v8394
        %v9462 = vsel %vm2482, %v8129, %v8396
        %v9465 = vsel %vm2482, %v8130, %v8398
        %v9468 = vsel %vm2482, %v8131, %v8400
        %v9471 = vsel %vm2482, %v8132, %v8402
        %v9474 = vsel %vm2482, %v8133, %v8404
        %v9477 = vsel %vm2482, %v8134, %v8406
        %v9481 = vsel %vm2482, %v8457, %v8584
        %v9485 = vsel %vm2482, %v8460, %v8586
        %v9489 = vsel %vm2482, %v8463, %v8588
        %v9493 = vsel %vm2482, %v8466, %v8590
        %v9497 = vsel %vm2482, %v8469, %v8592
        %v9501 = vsel %vm2482, %v8472, %v8594
        %v9505 = vsel %vm2482, %v8475, %v8596
        %v9509 = vsel %vm2482, %v8478, %v8598
        %v9513 = vsel %vm2482, %v8481, %v8600
        %v9517 = vsel %vm2482, %v8484, %v8602
        %v9521 = vsel %vm2482, %v8487, %v8604
        %v9525 = vsel %vm2482, %v8490, %v8606
        %v9529 = vsel %vm2482, %v8493, %v8608
        %v9533 = vsel %vm2482, %v8496, %v8610
        %v9537 = vsel %vm2482, %v8499, %v8612
        %v9541 = vsel %vm2482, %v8502, %v8614
        %v9545 = vsel %vm2482, %v8674, %v8952
        %v9549 = vsel %vm2482, %v8686, %v8954
        %v9553 = vsel %vm2482, %v8698, %v8956
        %v9557 = vsel %vm2482, %v8710, %v8958
        %v9561 = vsel %vm2482, %v8722, %v8960
        %v9565 = vsel %vm2482, %v8734, %v8962
        %v9569 = vsel %vm2482, %v8746, %v8964
        %v9573 = vsel %vm2482, %v8758, %v8966
        %v9577 = vsel %vm2482, %v8770, %v8968
        %v9581 = vsel %vm2482, %v8782, %v8970
        %v9585 = vsel %vm2482, %v8794, %v8972
        %v9589 = vsel %vm2482, %v8806, %v8974
        %v9593 = vsel %vm2482, %v8818, %v8976
        %v9597 = vsel %vm2482, %v8830, %v8978
        %v9601 = vsel %vm2482, %v8842, %v8980
        %v9605 = vsel %vm2482, %v8854, %v8982
        %v9608 = vsel %vm2482, %v9047, %v9304
        %v9611 = vsel %vm2482, %v9048, %v9306
        %v9614 = vsel %vm2482, %v9049, %v9308
        %v9617 = vsel %vm2482, %v9050, %v9310
        %v9620 = vsel %vm2482, %v9051, %v9312
        %v9623 = vsel %vm2482, %v9052, %v9314
        %v9626 = vsel %vm2482, %v9053, %v9316
        %v9629 = vsel %vm2482, %v9054, %v9318
        %v9632 = vsel %vm2482, %v9055, %v9320
        %v9635 = vsel %vm2482, %v9056, %v9322
        %v9638 = vsel %vm2482, %v9057, %v9324
        %v9641 = vsel %vm2482, %v9058, %v9326
        %v9644 = vsel %vm2482, %v9059, %v9328
        %v9647 = vsel %vm2482, %v9060, %v9330
        %v9650 = vsel %vm2482, %v9061, %v9332
        %v9653 = vsel %vm2482, %v9062, %v9334
        %v9655 = vld [vmem:[%s3] sm:$0xf]
        %v9656 = vld [vmem:[%s3 + $0x4] sm:$0xf]
        %v9657 = vld [vmem:[%s3 + $0x8] sm:$0xf]
        %v9658 = vld [vmem:[%s3 + $0xc] sm:$0xf]
        %v9659 = vld [vmem:[%s3 + $0x10] sm:$0xf]
        %v9660 = vld [vmem:[%s3 + $0x14] sm:$0xf]
        %v9661 = vld [vmem:[%s3 + $0x18] sm:$0xf]
        %v9662 = vld [vmem:[%s3 + $0x1c] sm:$0xf]
        %v9663 = vld [vmem:[%s3 + $0x20] sm:$0xf]
        %v9664 = vld [vmem:[%s3 + $0x24] sm:$0xf]
        %v9665 = vld [vmem:[%s3 + $0x28] sm:$0xf]
        %v9666 = vld [vmem:[%s3 + $0x2c] sm:$0xf]
        %v9667 = vld [vmem:[%s3 + $0x30] sm:$0xf]
        %v9668 = vld [vmem:[%s3 + $0x34] sm:$0xf]
        %v9669 = vld [vmem:[%s3 + $0x38] sm:$0xf]
        %v9670 = vld [vmem:[%s3 + $0x3c] sm:$0xf]
        %v9671 = vld [vmem:[%s3 + $0x40] sm:$0xf]
        %v9672 = vld [vmem:[%s3 + $0x44] sm:$0xf]
        %v9673 = vld [vmem:[%s3 + $0x48] sm:$0xf]
        %v9674 = vld [vmem:[%s3 + $0x4c] sm:$0xf]
        %v9675 = vld [vmem:[%s3 + $0x50] sm:$0xf]
        %v9676 = vld [vmem:[%s3 + $0x54] sm:$0xf]
        %v9677 = vld [vmem:[%s3 + $0x58] sm:$0xf]
        %v9678 = vld [vmem:[%s3 + $0x5c] sm:$0xf]
        %v9679 = vld [vmem:[%s3 + $0x60] sm:$0xf]
        %v9680 = vld [vmem:[%s3 + $0x64] sm:$0xf]
        %v9681 = vld [vmem:[%s3 + $0x68] sm:$0xf]
        %v9682 = vld [vmem:[%s3 + $0x6c] sm:$0xf]
        %v9683 = vld [vmem:[%s3 + $0x70] sm:$0xf]
        %v9684 = vld [vmem:[%s3 + $0x74] sm:$0xf]
        %v9685 = vld [vmem:[%s3 + $0x78] sm:$0xf]
        %v9686 = vld [vmem:[%s3 + $0x7c] sm:$0xf]
        %v9687 = vld [vmem:[%s3 + $0x80] sm:$0xf]
        %v9688 = vld [vmem:[%s3 + $0x84] sm:$0xf]
        %v9689 = vld [vmem:[%s3 + $0x88] sm:$0xf]
        %v9690 = vld [vmem:[%s3 + $0x8c] sm:$0xf]
        %v9691 = vld [vmem:[%s3 + $0x90] sm:$0xf]
        %v9692 = vld [vmem:[%s3 + $0x94] sm:$0xf]
        %v9693 = vld [vmem:[%s3 + $0x98] sm:$0xf]
        %v9694 = vld [vmem:[%s3 + $0x9c] sm:$0xf]
        %v9695 = vld [vmem:[%s3 + $0xa0] sm:$0xf]
        %v9696 = vld [vmem:[%s3 + $0xa4] sm:$0xf]
        %v9697 = vld [vmem:[%s3 + $0xa8] sm:$0xf]
        %v9698 = vld [vmem:[%s3 + $0xac] sm:$0xf]
        %v9699 = vld [vmem:[%s3 + $0xb0] sm:$0xf]
        %v9700 = vld [vmem:[%s3 + $0xb4] sm:$0xf]
        %v9701 = vld [vmem:[%s3 + $0xb8] sm:$0xf]
        %v9702 = vld [vmem:[%s3 + $0xbc] sm:$0xf]
        %v9703 = vld [vmem:[%s3 + $0xc0] sm:$0xf]
        %v9704 = vld [vmem:[%s3 + $0xc4] sm:$0xf]
        %v9705 = vld [vmem:[%s3 + $0xc8] sm:$0xf]
        %v9706 = vld [vmem:[%s3 + $0xcc] sm:$0xf]
        %v9707 = vld [vmem:[%s3 + $0xd0] sm:$0xf]
        %v9708 = vld [vmem:[%s3 + $0xd4] sm:$0xf]
        %v9709 = vld [vmem:[%s3 + $0xd8] sm:$0xf]
        %v9710 = vld [vmem:[%s3 + $0xdc] sm:$0xf]
        %v9711 = vld [vmem:[%s3 + $0xe0] sm:$0xf]
        %v9712 = vld [vmem:[%s3 + $0xe4] sm:$0xf]
        %v9713 = vld [vmem:[%s3 + $0xe8] sm:$0xf]
        %v9714 = vld [vmem:[%s3 + $0xec] sm:$0xf]
        %v9715 = vld [vmem:[%s3 + $0xf0] sm:$0xf]
        %v9716 = vld [vmem:[%s3 + $0xf4] sm:$0xf]
        %v9717 = vld [vmem:[%s3 + $0xf8] sm:$0xf]
        %v9718 = vld [vmem:[%s3 + $0xfc] sm:$0xf]
        %v9719 = vld [vmem:[%s3 + $0x100] sm:$0xf]
        %v9720 = vld [vmem:[%s3 + $0x104] sm:$0xf]
        %v9721 = vld [vmem:[%s3 + $0x108] sm:$0xf]
        %v9722 = vld [vmem:[%s3 + $0x10c] sm:$0xf]
        %v9723 = vld [vmem:[%s3 + $0x110] sm:$0xf]
        %v9724 = vld [vmem:[%s3 + $0x114] sm:$0xf]
        %v9725 = vld [vmem:[%s3 + $0x118] sm:$0xf]
        %v9726 = vld [vmem:[%s3 + $0x11c] sm:$0xf]
        %v9727 = vld [vmem:[%s4] sm:$0x1]
        %v9729 = vlaneseq
        %v9730 = vshrl.u32 %v9729, 7
        %v9731 = vsub.s32 0, %v9730
        %v9732 = vrot.slane %v9727, %v9731
        %v9806 = vunpack.c.l.b16 %v9655
        %v9807 = vunpack.c.l.b16 %v9656
        %v9808 = vunpack.c.l.b16 %v9657
        %v9809 = vunpack.c.l.b16 %v9658
        %v9810 = vunpack.c.l.b16 %v9659
        %v9811 = vunpack.c.l.b16 %v9660
        %v9812 = vunpack.c.l.b16 %v9661
        %v9813 = vunpack.c.l.b16 %v9662
        %v9814 = vunpack.c.l.b16 %v9663
        %v9815 = vunpack.c.l.b16 %v9664
        %v9816 = vunpack.c.l.b16 %v9665
        %v9817 = vunpack.c.l.b16 %v9666
        %v9818 = vunpack.c.l.b16 %v9667
        %v9819 = vunpack.c.l.b16 %v9668
        %v9820 = vunpack.c.l.b16 %v9669
        %v9821 = vunpack.c.l.b16 %v9670
        %v9822 = vunpack.c.l.b16 %v9671
        %v9823 = vunpack.c.l.b16 %v9672
        %v9824 = vunpack.c.l.b16 %v9673
        %v9825 = vunpack.c.l.b16 %v9674
        %v9826 = vunpack.c.l.b16 %v9675
        %v9827 = vunpack.c.l.b16 %v9676
        %v9828 = vunpack.c.l.b16 %v9677
        %v9829 = vunpack.c.l.b16 %v9678
        %v9830 = vunpack.c.l.b16 %v9679
        %v9831 = vunpack.c.l.b16 %v9680
        %v9832 = vunpack.c.l.b16 %v9681
        %v9833 = vunpack.c.l.b16 %v9682
        %v9834 = vunpack.c.l.b16 %v9683
        %v9835 = vunpack.c.l.b16 %v9684
        %v9836 = vunpack.c.l.b16 %v9685
        %v9837 = vunpack.c.l.b16 %v9686
        %v9838 = vunpack.c.l.b16 %v9687
        %v9839 = vunpack.c.l.b16 %v9688
        %v9840 = vunpack.c.l.b16 %v9689
        %v9841 = vunpack.c.l.b16 %v9690
        %v9842 = vunpack.c.l.b16 %v9691
        %v9843 = vunpack.c.l.b16 %v9692
        %v9844 = vunpack.c.l.b16 %v9693
        %v9845 = vunpack.c.l.b16 %v9694
        %v9846 = vunpack.c.l.b16 %v9695
        %v9847 = vunpack.c.l.b16 %v9696
        %v9848 = vunpack.c.l.b16 %v9697
        %v9849 = vunpack.c.l.b16 %v9698
        %v9850 = vunpack.c.l.b16 %v9699
        %v9851 = vunpack.c.l.b16 %v9700
        %v9852 = vunpack.c.l.b16 %v9701
        %v9853 = vunpack.c.l.b16 %v9702
        %v9854 = vunpack.c.l.b16 %v9703
        %v9855 = vunpack.c.l.b16 %v9704
        %v9856 = vunpack.c.l.b16 %v9705
        %v9857 = vunpack.c.l.b16 %v9706
        %v9858 = vunpack.c.l.b16 %v9707
        %v9859 = vunpack.c.l.b16 %v9708
        %v9860 = vunpack.c.l.b16 %v9709
        %v9861 = vunpack.c.l.b16 %v9710
        %v9862 = vunpack.c.l.b16 %v9711
        %v9863 = vunpack.c.l.b16 %v9712
        %v9864 = vunpack.c.l.b16 %v9713
        %v9865 = vunpack.c.l.b16 %v9714
        %v9866 = vunpack.c.l.b16 %v9715
        %v9867 = vunpack.c.l.b16 %v9716
        %v9868 = vunpack.c.l.b16 %v9717
        %v9869 = vunpack.c.l.b16 %v9718
        %v9870 = vunpack.c.l.b16 %v9719
        %v9871 = vunpack.c.l.b16 %v9720
        %v9872 = vunpack.c.l.b16 %v9721
        %v9873 = vunpack.c.l.b16 %v9722
        %v9874 = vunpack.c.l.b16 %v9723
        %v9875 = vunpack.c.l.b16 %v9724
        %v9876 = vunpack.c.l.b16 %v9725
        %v9877 = vunpack.c.l.b16 %v9726
        %v9878 = vpack.c.b16 %v9807, %v9806
        %v9879 = vpack.c.b16 %v9809, %v9808
        %v9880 = vpack.c.b16 %v9811, %v9810
        %v9881 = vpack.c.b16 %v9813, %v9812
        %v9882 = vpack.c.b16 %v9815, %v9814
        %v9883 = vpack.c.b16 %v9817, %v9816
        %v9884 = vpack.c.b16 %v9819, %v9818
        %v9885 = vpack.c.b16 %v9821, %v9820
        %v9886 = vpack.c.b16 %v9823, %v9822
        %v9887 = vpack.c.b16 %v9825, %v9824
        %v9888 = vpack.c.b16 %v9827, %v9826
        %v9889 = vpack.c.b16 %v9829, %v9828
        %v9890 = vpack.c.b16 %v9831, %v9830
        %v9891 = vpack.c.b16 %v9833, %v9832
        %v9892 = vpack.c.b16 %v9835, %v9834
        %v9893 = vpack.c.b16 %v9837, %v9836
        %v9894 = vpack.c.b16 %v9839, %v9838
        %v9895 = vpack.c.b16 %v9841, %v9840
        %v9896 = vpack.c.b16 %v9843, %v9842
        %v9897 = vpack.c.b16 %v9845, %v9844
        %v9898 = vpack.c.b16 %v9847, %v9846
        %v9899 = vpack.c.b16 %v9849, %v9848
        %v9900 = vpack.c.b16 %v9851, %v9850
        %v9901 = vpack.c.b16 %v9853, %v9852
        %v9902 = vpack.c.b16 %v9855, %v9854
        %v9903 = vpack.c.b16 %v9857, %v9856
        %v9904 = vpack.c.b16 %v9859, %v9858
        %v9905 = vpack.c.b16 %v9861, %v9860
        %v9906 = vpack.c.b16 %v9863, %v9862
        %v9907 = vpack.c.b16 %v9865, %v9864
        %v9908 = vpack.c.b16 %v9867, %v9866
        %v9909 = vpack.c.b16 %v9869, %v9868
        %v9910 = vpack.c.b16 %v9871, %v9870
        %v9911 = vpack.c.b16 %v9873, %v9872
        %v9912 = vpack.c.b16 %v9875, %v9874
        %v9913 = vpack.c.b16 %v9877, %v9876
        %v9951 = vsel %vm2482, %v9385, 0
        %v9954 = vsel %vm2482, %v9388, 0
        %v9957 = vsel %vm2482, %v9391, 0
        %v9960 = vsel %vm2482, %v9394, 0
        %v9963 = vsel %vm2482, %v9397, 0
        %v9966 = vsel %vm2482, %v9400, 0
        %v9969 = vsel %vm2482, %v9403, 0
        %v9972 = vsel %vm2482, %v9406, 0
        %v9975 = vsel %vm2482, %v9409, 0
        %v9978 = vsel %vm2482, %v9412, 0
        %v9981 = vsel %vm2482, %v9415, 0
        %v9984 = vsel %vm2482, %v9418, 0
        %v9987 = vsel %vm2482, %v9421, 0
        %v9990 = vsel %vm2482, %v9424, 0
        %v9993 = vsel %vm2482, %v9427, 0
        %v9996 = vsel %vm2482, %v9430, 0
        %9998 = vmatprep.subr.bf16.mxu0 0
        %9999 = vmatpush1.bf16.msra.mxu0 %v9878
        %10000 = vmatprep.subr.bf16.mxu0 0
        %10001 = vmatpush1.bf16.msra.mxu0 %v9879
        %10002 = vmatprep.subr.bf16.mxu0 0
        %10003 = vmatpush1.bf16.msra.mxu0 %v9880
        %10004 = vmatprep.subr.bf16.mxu0 0
        %10005 = vmatpush1.bf16.msra.mxu0 %v9881
        %10006 = vmatprep.subr.bf16.mxu0 0
        %10007 = vmatpush1.bf16.msra.mxu0 %v9882
        %10008 = vmatprep.subr.bf16.mxu0 0
        %10009 = vmatpush1.bf16.msra.mxu0 %v9883
        %10010 = vmatprep.subr.bf16.mxu0 0
        %10011 = vmatpush1.bf16.msra.mxu0 %v9884
        %10012 = vmatprep.subr.bf16.mxu0 0
        %10013 = vmatpush1.bf16.msra.mxu0 %v9885
        %10014 = vmatprep.subr.bf16.mxu0 0
        %10015 = vmatpush1.bf16.msra.mxu0 %v9886
        %10016 = vmatprep.subr.bf16.mxu0 0
        %10017 = vmatpush1.bf16.msra.mxu0 %v9887
        %10018 = vmatprep.subr.bf16.mxu0 0
        %10019 = vmatpush1.bf16.msra.mxu0 %v9888
        %10020 = vmatprep.subr.bf16.mxu0 0
        %10021 = vmatpush1.bf16.msra.mxu0 %v9889
        %10022 = vmatprep.subr.bf16.mxu0 0
        %10023 = vmatpush1.bf16.msra.mxu0 %v9890
        %10024 = vmatprep.subr.bf16.mxu0 0
        %10025 = vmatpush1.bf16.msra.mxu0 %v9891
        %10026 = vmatprep.subr.bf16.mxu0 0
        %10027 = vmatpush1.bf16.msra.mxu0 %v9892
        %10028 = vmatprep.subr.bf16.mxu0 0
        %10029 = vmatpush1.bf16.msra.mxu0 %v9893
        %10030 = vmatprep.mubr.bf16.mxu0 %v9481
        %10031 = vmatmul.mubr.bf16.gmra.mrb[0].mxu0 %v9432
        %v10032 = vpop.f32.mrb[0].mxu0
        %v10033 = vadd.f32 %v9732, %v10032
        %v10034 = vpop.f32.mrb[0].mxu0
        %v10035 = vpop.f32.mrb[0].mxu0
        %v10036 = vadd.f32 %v9732, %v10035
        %v10037 = vpop.f32.mrb[0].mxu0
        %10038 = vmatprep.mubr.bf16.mxu0 %v9485
        %10039 = vmatmul.mubr.bf16.gmra.mrb[0].mxu0 %v9435
        %v10040 = vpop.f32.mrb[0].mxu0
        %v10041 = vadd.f32 %v9732, %v10040
        %v10042 = vpop.f32.mrb[0].mxu0
        %v10043 = vpop.f32.mrb[0].mxu0
        %v10044 = vadd.f32 %v9732, %v10043
        %v10045 = vpop.f32.mrb[0].mxu0
        %10046 = vmatprep.mubr.bf16.mxu0 %v9489
        %10047 = vmatmul.mubr.bf16.gmra.mrb[0].mxu0 %v9438
        %v10048 = vpop.f32.mrb[0].mxu0
        %v10049 = vadd.f32 %v9732, %v10048
        %v10050 = vpop.f32.mrb[0].mxu0
        %v10051 = vpop.f32.mrb[0].mxu0
        %v10052 = vadd.f32 %v9732, %v10051
        %v10053 = vpop.f32.mrb[0].mxu0
        %10054 = vmatprep.mubr.bf16.mxu0 %v9493
        %10055 = vmatmul.mubr.bf16.gmra.mrb[0].mxu0 %v9441
        %v10056 = vpop.f32.mrb[0].mxu0
        %v10057 = vadd.f32 %v9732, %v10056
        %v10058 = vpop.f32.mrb[0].mxu0
        %v10059 = vpop.f32.mrb[0].mxu0
        %v10060 = vadd.f32 %v9732, %v10059
        %v10061 = vpop.f32.mrb[0].mxu0
        %10062 = vmatprep.mubr.bf16.mxu0 %v9497
        %10063 = vmatmul.mubr.bf16.gmra.mrb[0].mxu0 %v9444
        %v10064 = vpop.f32.mrb[0].mxu0
        %v10065 = vadd.f32 %v9732, %v10064
        %v10066 = vpop.f32.mrb[0].mxu0
        %v10067 = vpop.f32.mrb[0].mxu0
        %v10068 = vadd.f32 %v9732, %v10067
        %v10069 = vpop.f32.mrb[0].mxu0
        %10070 = vmatprep.mubr.bf16.mxu0 %v9501
        %10071 = vmatmul.mubr.bf16.gmra.mrb[0].mxu0 %v9447
        %v10072 = vpop.f32.mrb[0].mxu0
        %v10073 = vadd.f32 %v9732, %v10072
        %v10074 = vpop.f32.mrb[0].mxu0
        %v10075 = vpop.f32.mrb[0].mxu0
        %v10076 = vadd.f32 %v9732, %v10075
        %v10077 = vpop.f32.mrb[0].mxu0
        %10078 = vmatprep.mubr.bf16.mxu0 %v9505
        %10079 = vmatmul.mubr.bf16.gmra.mrb[0].mxu0 %v9450
        %v10080 = vpop.f32.mrb[0].mxu0
        %v10081 = vadd.f32 %v9732, %v10080
        %v10082 = vpop.f32.mrb[0].mxu0
        %v10083 = vpop.f32.mrb[0].mxu0
        %v10084 = vadd.f32 %v9732, %v10083
        %v10085 = vpop.f32.mrb[0].mxu0
        %10086 = vmatprep.mubr.bf16.mxu0 %v9509
        %10087 = vmatmul.mubr.bf16.gmra.mrb[0].mxu0 %v9453
        %v10088 = vpop.f32.mrb[0].mxu0
        %v10089 = vadd.f32 %v9732, %v10088
        %v10090 = vpop.f32.mrb[0].mxu0
        %v10091 = vpop.f32.mrb[0].mxu0
        %v10092 = vadd.f32 %v9732, %v10091
        %v10093 = vpop.f32.mrb[0].mxu0
        %10094 = vmatprep.mubr.bf16.mxu0 %v9513
        %10095 = vmatmul.mubr.bf16.gmra.mrb[0].mxu0 %v9456
        %v10096 = vpop.f32.mrb[0].mxu0
        %v10097 = vadd.f32 %v9732, %v10096
        %v10098 = vpop.f32.mrb[0].mxu0
        %v10099 = vpop.f32.mrb[0].mxu0
        %v10100 = vadd.f32 %v9732, %v10099
        %v10101 = vpop.f32.mrb[0].mxu0
        %10102 = vmatprep.mubr.bf16.mxu0 %v9517
        %10103 = vmatmul.mubr.bf16.gmra.mrb[0].mxu0 %v9459
        %v10104 = vpop.f32.mrb[0].mxu0
        %v10105 = vadd.f32 %v9732, %v10104
        %v10106 = vpop.f32.mrb[0].mxu0
        %v10107 = vpop.f32.mrb[0].mxu0
        %v10108 = vadd.f32 %v9732, %v10107
        %v10109 = vpop.f32.mrb[0].mxu0
        %10110 = vmatprep.mubr.bf16.mxu0 %v9521
        %10111 = vmatmul.mubr.bf16.gmra.mrb[0].mxu0 %v9462
        %v10112 = vpop.f32.mrb[0].mxu0
        %v10113 = vadd.f32 %v9732, %v10112
        %v10114 = vpop.f32.mrb[0].mxu0
        %v10115 = vpop.f32.mrb[0].mxu0
        %v10116 = vadd.f32 %v9732, %v10115
        %v10117 = vpop.f32.mrb[0].mxu0
        %10118 = vmatprep.mubr.bf16.mxu0 %v9525
        %10119 = vmatmul.mubr.bf16.gmra.mrb[0].mxu0 %v9465
        %v10120 = vpop.f32.mrb[0].mxu0
        %v10121 = vadd.f32 %v9732, %v10120
        %v10122 = vpop.f32.mrb[0].mxu0
        %v10123 = vpop.f32.mrb[0].mxu0
        %v10124 = vadd.f32 %v9732, %v10123
        %v10125 = vpop.f32.mrb[0].mxu0
        %10126 = vmatprep.mubr.bf16.mxu0 %v9529
        %10127 = vmatmul.mubr.bf16.gmra.mrb[0].mxu0 %v9468
        %v10128 = vpop.f32.mrb[0].mxu0
        %v10129 = vadd.f32 %v9732, %v10128
        %v10130 = vpop.f32.mrb[0].mxu0
        %v10131 = vpop.f32.mrb[0].mxu0
        %v10132 = vadd.f32 %v9732, %v10131
        %v10133 = vpop.f32.mrb[0].mxu0
        %10134 = vmatprep.mubr.bf16.mxu0 %v9533
        %10135 = vmatmul.mubr.bf16.gmra.mrb[0].mxu0 %v9471
        %v10136 = vpop.f32.mrb[0].mxu0
        %v10137 = vadd.f32 %v9732, %v10136
        %v10138 = vpop.f32.mrb[0].mxu0
        %v10139 = vpop.f32.mrb[0].mxu0
        %v10140 = vadd.f32 %v9732, %v10139
        %v10141 = vpop.f32.mrb[0].mxu0
        %10142 = vmatprep.mubr.bf16.mxu0 %v9537
        %10143 = vmatmul.mubr.bf16.gmra.mrb[0].mxu0 %v9474
        %v10144 = vpop.f32.mrb[0].mxu0
        %v10145 = vadd.f32 %v9732, %v10144
        %v10146 = vpop.f32.mrb[0].mxu0
        %v10147 = vpop.f32.mrb[0].mxu0
        %v10148 = vadd.f32 %v9732, %v10147
        %v10149 = vpop.f32.mrb[0].mxu0
        %10150 = vmatprep.mubr.bf16.mxu0 %v9541
        %10151 = vmatmul.mubr.bf16.gmra.mrb[0].mxu0 %v9477
        %v10152 = vpop.f32.mrb[0].mxu0
        %v10153 = vadd.f32 %v9732, %v10152
        %v10154 = vpop.f32.mrb[0].mxu0
        %v10155 = vpop.f32.mrb[0].mxu0
        %v10156 = vadd.f32 %v9732, %v10155
        %v10157 = vpop.f32.mrb[0].mxu0
        %10158 = vdwg.mxu0
        %10159 = vmatprep.subr.bf16.mxu0 0
        %10160 = vmatpush1.bf16.msra.mxu0 %v9894
        %10161 = vmatprep.subr.bf16.mxu0 0
        %10162 = vmatpush1.bf16.msra.mxu0 %v9895
        %10163 = vmatprep.subr.bf16.mxu0 0
        %10164 = vmatpush1.bf16.msra.mxu0 %v9896
        %10165 = vmatprep.subr.bf16.mxu0 0
        %10166 = vmatpush1.bf16.msra.mxu0 %v9897
        %10167 = vmatprep.subr.bf16.mxu0 0
        %10168 = vmatpush1.bf16.msra.mxu0 %v9898
        %10169 = vmatprep.subr.bf16.mxu0 0
        %10170 = vmatpush1.bf16.msra.mxu0 %v9899
        %10171 = vmatprep.subr.bf16.mxu0 0
        %10172 = vmatpush1.bf16.msra.mxu0 %v9900
        %10173 = vmatprep.subr.bf16.mxu0 0
        %10174 = vmatpush1.bf16.msra.mxu0 %v9901
        %10175 = vmatprep.subr.bf16.mxu0 0
        %10176 = vmatpush1.bf16.msra.mxu0 %v9902
        %10177 = vmatprep.subr.bf16.mxu0 0
        %10178 = vmatpush1.bf16.msra.mxu0 %v9903
        %10179 = vmatprep.subr.bf16.mxu0 0
        %10180 = vmatpush1.bf16.msra.mxu0 %v9904
        %10181 = vmatprep.subr.bf16.mxu0 0
        %10182 = vmatpush1.bf16.msra.mxu0 %v9905
        %10183 = vmatprep.subr.bf16.mxu0 0
        %10184 = vmatpush1.bf16.msra.mxu0 %v9906
        %10185 = vmatprep.subr.bf16.mxu0 0
        %10186 = vmatpush1.bf16.msra.mxu0 %v9907
        %10187 = vmatprep.subr.bf16.mxu0 0
        %10188 = vmatpush1.bf16.msra.mxu0 %v9908
        %10189 = vmatprep.subr.bf16.mxu0 0
        %10190 = vmatpush1.bf16.msra.mxu0 %v9909
        %10191 = vmatprep.mubr.bf16.mxu0 %v9608
        %10192 = vmatmul.mubr.bf16.gmra.mrb[0].mxu0 %v9545
        %v10193 = vpop.f32.mrb[0].mxu0
        %v10194 = vadd.f32 %v10033, %v10193
        %v10195 = vpop.f32.mrb[0].mxu0
        %v10196 = vpop.f32.mrb[0].mxu0
        %v10197 = vadd.f32 %v10036, %v10196
        %v10198 = vpop.f32.mrb[0].mxu0
        %10199 = vmatprep.mubr.bf16.mxu0 %v9611
        %10200 = vmatmul.mubr.bf16.gmra.mrb[0].mxu0 %v9549
        %v10201 = vpop.f32.mrb[0].mxu0
        %v10202 = vadd.f32 %v10041, %v10201
        %v10203 = vpop.f32.mrb[0].mxu0
        %v10204 = vpop.f32.mrb[0].mxu0
        %v10205 = vadd.f32 %v10044, %v10204
        %v10206 = vpop.f32.mrb[0].mxu0
        %10207 = vmatprep.mubr.bf16.mxu0 %v9614
        %10208 = vmatmul.mubr.bf16.gmra.mrb[0].mxu0 %v9553
        %v10209 = vpop.f32.mrb[0].mxu0
        %v10210 = vadd.f32 %v10049, %v10209
        %v10211 = vpop.f32.mrb[0].mxu0
        %v10212 = vpop.f32.mrb[0].mxu0
        %v10213 = vadd.f32 %v10052, %v10212
        %v10214 = vpop.f32.mrb[0].mxu0
        %10215 = vmatprep.mubr.bf16.mxu0 %v9617
        %10216 = vmatmul.mubr.bf16.gmra.mrb[0].mxu0 %v9557
        %v10217 = vpop.f32.mrb[0].mxu0
        %v10218 = vadd.f32 %v10057, %v10217
        %v10219 = vpop.f32.mrb[0].mxu0
        %v10220 = vpop.f32.mrb[0].mxu0
        %v10221 = vadd.f32 %v10060, %v10220
        %v10222 = vpop.f32.mrb[0].mxu0
        %10223 = vmatprep.mubr.bf16.mxu0 %v9620
        %10224 = vmatmul.mubr.bf16.gmra.mrb[0].mxu0 %v9561
        %v10225 = vpop.f32.mrb[0].mxu0
        %v10226 = vadd.f32 %v10065, %v10225
        %v10227 = vpop.f32.mrb[0].mxu0
        %v10228 = vpop.f32.mrb[0].mxu0
        %v10229 = vadd.f32 %v10068, %v10228
        %v10230 = vpop.f32.mrb[0].mxu0
        %10231 = vmatprep.mubr.bf16.mxu0 %v9623
        %10232 = vmatmul.mubr.bf16.gmra.mrb[0].mxu0 %v9565
        %v10233 = vpop.f32.mrb[0].mxu0
        %v10234 = vadd.f32 %v10073, %v10233
        %v10235 = vpop.f32.mrb[0].mxu0
        %v10236 = vpop.f32.mrb[0].mxu0
        %v10237 = vadd.f32 %v10076, %v10236
        %v10238 = vpop.f32.mrb[0].mxu0
        %10239 = vmatprep.mubr.bf16.mxu0 %v9626
        %10240 = vmatmul.mubr.bf16.gmra.mrb[0].mxu0 %v9569
        %v10241 = vpop.f32.mrb[0].mxu0
        %v10242 = vadd.f32 %v10081, %v10241
        %v10243 = vpop.f32.mrb[0].mxu0
        %v10244 = vpop.f32.mrb[0].mxu0
        %v10245 = vadd.f32 %v10084, %v10244
        %v10246 = vpop.f32.mrb[0].mxu0
        %10247 = vmatprep.mubr.bf16.mxu0 %v9629
        %10248 = vmatmul.mubr.bf16.gmra.mrb[0].mxu0 %v9573
        %v10249 = vpop.f32.mrb[0].mxu0
        %v10250 = vadd.f32 %v10089, %v10249
        %v10251 = vpop.f32.mrb[0].mxu0
        %v10252 = vpop.f32.mrb[0].mxu0
        %v10253 = vadd.f32 %v10092, %v10252
        %v10254 = vpop.f32.mrb[0].mxu0
        %10255 = vmatprep.mubr.bf16.mxu0 %v9632
        %10256 = vmatmul.mubr.bf16.gmra.mrb[0].mxu0 %v9577
        %v10257 = vpop.f32.mrb[0].mxu0
        %v10258 = vadd.f32 %v10097, %v10257
        %v10259 = vpop.f32.mrb[0].mxu0
        %v10260 = vpop.f32.mrb[0].mxu0
        %v10261 = vadd.f32 %v10100, %v10260
        %v10262 = vpop.f32.mrb[0].mxu0
        %10263 = vmatprep.mubr.bf16.mxu0 %v9635
        %10264 = vmatmul.mubr.bf16.gmra.mrb[0].mxu0 %v9581
        %v10265 = vpop.f32.mrb[0].mxu0
        %v10266 = vadd.f32 %v10105, %v10265
        %v10267 = vpop.f32.mrb[0].mxu0
        %v10268 = vpop.f32.mrb[0].mxu0
        %v10269 = vadd.f32 %v10108, %v10268
        %v10270 = vpop.f32.mrb[0].mxu0
        %10271 = vmatprep.mubr.bf16.mxu0 %v9638
        %10272 = vmatmul.mubr.bf16.gmra.mrb[0].mxu0 %v9585
        %v10273 = vpop.f32.mrb[0].mxu0
        %v10274 = vadd.f32 %v10113, %v10273
        %v10275 = vpop.f32.mrb[0].mxu0
        %v10276 = vpop.f32.mrb[0].mxu0
        %v10277 = vadd.f32 %v10116, %v10276
        %v10278 = vpop.f32.mrb[0].mxu0
        %10279 = vmatprep.mubr.bf16.mxu0 %v9641
        %10280 = vmatmul.mubr.bf16.gmra.mrb[0].mxu0 %v9589
        %v10281 = vpop.f32.mrb[0].mxu0
        %v10282 = vadd.f32 %v10121, %v10281
        %v10283 = vpop.f32.mrb[0].mxu0
        %v10284 = vpop.f32.mrb[0].mxu0
        %v10285 = vadd.f32 %v10124, %v10284
        %v10286 = vpop.f32.mrb[0].mxu0
        %10287 = vmatprep.mubr.bf16.mxu0 %v9644
        %10288 = vmatmul.mubr.bf16.gmra.mrb[0].mxu0 %v9593
        %v10289 = vpop.f32.mrb[0].mxu0
        %v10290 = vadd.f32 %v10129, %v10289
        %v10291 = vpop.f32.mrb[0].mxu0
        %v10292 = vpop.f32.mrb[0].mxu0
        %v10293 = vadd.f32 %v10132, %v10292
        %v10294 = vpop.f32.mrb[0].mxu0
        %10295 = vmatprep.mubr.bf16.mxu0 %v9647
        %10296 = vmatmul.mubr.bf16.gmra.mrb[0].mxu0 %v9597
        %v10297 = vpop.f32.mrb[0].mxu0
        %v10298 = vadd.f32 %v10137, %v10297
        %v10299 = vpop.f32.mrb[0].mxu0
        %v10300 = vpop.f32.mrb[0].mxu0
        %v10301 = vadd.f32 %v10140, %v10300
        %v10302 = vpop.f32.mrb[0].mxu0
        %10303 = vmatprep.mubr.bf16.mxu0 %v9650
        %10304 = vmatmul.mubr.bf16.gmra.mrb[0].mxu0 %v9601
        %v10305 = vpop.f32.mrb[0].mxu0
        %v10306 = vadd.f32 %v10145, %v10305
        %v10307 = vpop.f32.mrb[0].mxu0
        %v10308 = vpop.f32.mrb[0].mxu0
        %v10309 = vadd.f32 %v10148, %v10308
        %v10310 = vpop.f32.mrb[0].mxu0
        %10311 = vmatprep.mubr.bf16.mxu0 %v9653
        %10312 = vmatmul.mubr.bf16.gmra.mrb[0].mxu0 %v9605
        %v10313 = vpop.f32.mrb[0].mxu0
        %v10314 = vadd.f32 %v10153, %v10313
        %v10315 = vpop.f32.mrb[0].mxu0
        %v10316 = vpop.f32.mrb[0].mxu0
        %v10317 = vadd.f32 %v10156, %v10316
        %v10318 = vpop.f32.mrb[0].mxu0
        %10319 = vdwg.mxu0
        %10320 = vmatprep.subr.bf16.mxu0 0
        %10321 = vmatpush1.bf16.msra.mxu0 %v9910
        %10322 = vmatprep.subr.bf16.mxu0 0
        %10323 = vmatpush1.bf16.msra.mxu0 %v9911
        %10324 = vmatprep.subr.bf16.mxu0 0
        %10325 = vmatpush1.bf16.msra.mxu0 %v9912
        %10326 = vmatprep.subr.bf16.mxu0 0
        %10327 = vmatpush1.bf16.msra.mxu0 %v9913
        %10328 = vmatprep.subr.bf16.mxu0 0
        %10329 = vmatpush1.bf16.msra.mxu0 0
        %10330 = vmatprep.subr.bf16.mxu0 0
        %10331 = vmatpush1.bf16.msra.mxu0 0
        %10332 = vmatprep.subr.bf16.mxu0 0
        %10333 = vmatpush1.bf16.msra.mxu0 0
        %10334 = vmatprep.subr.bf16.mxu0 0
        %10335 = vmatpush1.bf16.msra.mxu0 0
        %10336 = vmatprep.subr.bf16.mxu0 0
        %10337 = vmatpush1.bf16.msra.mxu0 0
        %10338 = vmatprep.subr.bf16.mxu0 0
        %10339 = vmatpush1.bf16.msra.mxu0 0
        %10340 = vmatprep.subr.bf16.mxu0 0
        %10341 = vmatpush1.bf16.msra.mxu0 0
        %10342 = vmatprep.subr.bf16.mxu0 0
        %10343 = vmatpush1.bf16.msra.mxu0 0
        %10344 = vmatprep.subr.bf16.mxu0 0
        %10345 = vmatpush1.bf16.msra.mxu0 0
        %10346 = vmatprep.subr.bf16.mxu0 0
        %10347 = vmatpush1.bf16.msra.mxu0 0
        %10348 = vmatprep.subr.bf16.mxu0 0
        %10349 = vmatpush1.bf16.msra.mxu0 0
        %10350 = vmatprep.subr.bf16.mxu0 0
        %10351 = vmatpush1.bf16.msra.mxu0 0
        %10352 = vmatprep.mubr.bf16.mxu0 0
        %10353 = vmatmul.mubr.bf16.gmra.mrb[0].mxu0 %v9951
        %v10354 = vpop.f32.mrb[0].mxu0
        %v10355 = vadd.f32 %v10194, %v10354
        %v10356 = vpop.f32.mrb[0].mxu0
        %v10357 = vpop.f32.mrb[0].mxu0
        %v10358 = vadd.f32 %v10197, %v10357
        %v10359 = vpop.f32.mrb[0].mxu0
        %10360 = vmatprep.mubr.bf16.mxu0 0
        %10361 = vmatmul.mubr.bf16.gmra.mrb[0].mxu0 %v9954
        %v10362 = vpop.f32.mrb[0].mxu0
        %v10363 = vadd.f32 %v10202, %v10362
        %v10364 = vpop.f32.mrb[0].mxu0
        %v10365 = vpop.f32.mrb[0].mxu0
        %v10366 = vadd.f32 %v10205, %v10365
        %v10367 = vpop.f32.mrb[0].mxu0
        %10368 = vmatprep.mubr.bf16.mxu0 0
        %10369 = vmatmul.mubr.bf16.gmra.mrb[0].mxu0 %v9957
        %v10370 = vpop.f32.mrb[0].mxu0
        %v10371 = vadd.f32 %v10210, %v10370
        %v10372 = vpop.f32.mrb[0].mxu0
        %v10373 = vpop.f32.mrb[0].mxu0
        %v10374 = vadd.f32 %v10213, %v10373
        %v10375 = vpop.f32.mrb[0].mxu0
        %10376 = vmatprep.mubr.bf16.mxu0 0
        %10377 = vmatmul.mubr.bf16.gmra.mrb[0].mxu0 %v9960
        %v10378 = vpop.f32.mrb[0].mxu0
        %v10379 = vadd.f32 %v10218, %v10378
        %v10380 = vpop.f32.mrb[0].mxu0
        %v10381 = vpop.f32.mrb[0].mxu0
        %v10382 = vadd.f32 %v10221, %v10381
        %v10383 = vpop.f32.mrb[0].mxu0
        %10384 = vmatprep.mubr.bf16.mxu0 0
        %10385 = vmatmul.mubr.bf16.gmra.mrb[0].mxu0 %v9963
        %v10386 = vpop.f32.mrb[0].mxu0
        %v10387 = vadd.f32 %v10226, %v10386
        %v10388 = vpop.f32.mrb[0].mxu0
        %v10389 = vpop.f32.mrb[0].mxu0
        %v10390 = vadd.f32 %v10229, %v10389
        %v10391 = vpop.f32.mrb[0].mxu0
        %10392 = vmatprep.mubr.bf16.mxu0 0
        %10393 = vmatmul.mubr.bf16.gmra.mrb[0].mxu0 %v9966
        %v10394 = vpop.f32.mrb[0].mxu0
        %v10395 = vadd.f32 %v10234, %v10394
        %v10396 = vpop.f32.mrb[0].mxu0
        %v10397 = vpop.f32.mrb[0].mxu0
        %v10398 = vadd.f32 %v10237, %v10397
        %v10399 = vpop.f32.mrb[0].mxu0
        %10400 = vmatprep.mubr.bf16.mxu0 0
        %10401 = vmatmul.mubr.bf16.gmra.mrb[0].mxu0 %v9969
        %v10402 = vpop.f32.mrb[0].mxu0
        %v10403 = vadd.f32 %v10242, %v10402
        %v10404 = vpop.f32.mrb[0].mxu0
        %v10405 = vpop.f32.mrb[0].mxu0
        %v10406 = vadd.f32 %v10245, %v10405
        %v10407 = vpop.f32.mrb[0].mxu0
        %10408 = vmatprep.mubr.bf16.mxu0 0
        %10409 = vmatmul.mubr.bf16.gmra.mrb[0].mxu0 %v9972
        %v10410 = vpop.f32.mrb[0].mxu0
        %v10411 = vadd.f32 %v10250, %v10410
        %v10412 = vpop.f32.mrb[0].mxu0
        %v10413 = vpop.f32.mrb[0].mxu0
        %v10414 = vadd.f32 %v10253, %v10413
        %v10415 = vpop.f32.mrb[0].mxu0
        %10416 = vmatprep.mubr.bf16.mxu0 0
        %10417 = vmatmul.mubr.bf16.gmra.mrb[0].mxu0 %v9975
        %v10418 = vpop.f32.mrb[0].mxu0
        %v10419 = vadd.f32 %v10258, %v10418
        %v10420 = vpop.f32.mrb[0].mxu0
        %v10421 = vpop.f32.mrb[0].mxu0
        %v10422 = vadd.f32 %v10261, %v10421
        %v10423 = vpop.f32.mrb[0].mxu0
        %10424 = vmatprep.mubr.bf16.mxu0 0
        %10425 = vmatmul.mubr.bf16.gmra.mrb[0].mxu0 %v9978
        %v10426 = vpop.f32.mrb[0].mxu0
        %v10427 = vadd.f32 %v10266, %v10426
        %v10428 = vpop.f32.mrb[0].mxu0
        %v10429 = vpop.f32.mrb[0].mxu0
        %v10430 = vadd.f32 %v10269, %v10429
        %v10431 = vpop.f32.mrb[0].mxu0
        %10432 = vmatprep.mubr.bf16.mxu0 0
        %10433 = vmatmul.mubr.bf16.gmra.mrb[0].mxu0 %v9981
        %v10434 = vpop.f32.mrb[0].mxu0
        %v10435 = vadd.f32 %v10274, %v10434
        %v10436 = vpop.f32.mrb[0].mxu0
        %v10437 = vpop.f32.mrb[0].mxu0
        %v10438 = vadd.f32 %v10277, %v10437
        %v10439 = vpop.f32.mrb[0].mxu0
        %10440 = vmatprep.mubr.bf16.mxu0 0
        %10441 = vmatmul.mubr.bf16.gmra.mrb[0].mxu0 %v9984
        %v10442 = vpop.f32.mrb[0].mxu0
        %v10443 = vadd.f32 %v10282, %v10442
        %v10444 = vpop.f32.mrb[0].mxu0
        %v10445 = vpop.f32.mrb[0].mxu0
        %v10446 = vadd.f32 %v10285, %v10445
        %v10447 = vpop.f32.mrb[0].mxu0
        %10448 = vmatprep.mubr.bf16.mxu0 0
        %10449 = vmatmul.mubr.bf16.gmra.mrb[0].mxu0 %v9987
        %v10450 = vpop.f32.mrb[0].mxu0
        %v10451 = vadd.f32 %v10290, %v10450
        %v10452 = vpop.f32.mrb[0].mxu0
        %v10453 = vpop.f32.mrb[0].mxu0
        %v10454 = vadd.f32 %v10293, %v10453
        %v10455 = vpop.f32.mrb[0].mxu0
        %10456 = vmatprep.mubr.bf16.mxu0 0
        %10457 = vmatmul.mubr.bf16.gmra.mrb[0].mxu0 %v9990
        %v10458 = vpop.f32.mrb[0].mxu0
        %v10459 = vadd.f32 %v10298, %v10458
        %v10460 = vpop.f32.mrb[0].mxu0
        %v10461 = vpop.f32.mrb[0].mxu0
        %v10462 = vadd.f32 %v10301, %v10461
        %v10463 = vpop.f32.mrb[0].mxu0
        %10464 = vmatprep.mubr.bf16.mxu0 0
        %10465 = vmatmul.mubr.bf16.gmra.mrb[0].mxu0 %v9993
        %v10466 = vpop.f32.mrb[0].mxu0
        %v10467 = vadd.f32 %v10306, %v10466
        %v10468 = vpop.f32.mrb[0].mxu0
        %v10469 = vpop.f32.mrb[0].mxu0
        %v10470 = vadd.f32 %v10309, %v10469
        %v10471 = vpop.f32.mrb[0].mxu0
        %10472 = vmatprep.mubr.bf16.mxu0 0
        %10473 = vmatmul.mubr.bf16.gmra.mrb[0].mxu0 %v9996
        %v10474 = vpop.f32.mrb[0].mxu0
        %v10475 = vadd.f32 %v10314, %v10474
        %v10476 = vpop.f32.mrb[0].mxu0
        %v10477 = vpop.f32.mrb[0].mxu0
        %v10478 = vadd.f32 %v10317, %v10477
        %v10479 = vpop.f32.mrb[0].mxu0
        %10480 = vdwg.mxu0
        %v10481 = vadd.f32 %v10355, %v346
        %v10482 = vadd.f32 %v10358, %v347
        %v10483 = vadd.f32 %v10363, %v348
        %v10484 = vadd.f32 %v10366, %v349
        %v10485 = vadd.f32 %v10371, %v350
        %v10486 = vadd.f32 %v10374, %v351
        %v10487 = vadd.f32 %v10379, %v352
        %v10488 = vadd.f32 %v10382, %v353
        %v10489 = vadd.f32 %v10387, %v354
        %v10490 = vadd.f32 %v10390, %v355
        %v10491 = vadd.f32 %v10395, %v356
        %v10492 = vadd.f32 %v10398, %v357
        %v10493 = vadd.f32 %v10403, %v358
        %v10494 = vadd.f32 %v10406, %v359
        %v10495 = vadd.f32 %v10411, %v360
        %v10496 = vadd.f32 %v10414, %v361
        %v10497 = vadd.f32 %v10419, %v362
        %v10498 = vadd.f32 %v10422, %v363
        %v10499 = vadd.f32 %v10427, %v364
        %v10500 = vadd.f32 %v10430, %v365
        %v10501 = vadd.f32 %v10435, %v366
        %v10502 = vadd.f32 %v10438, %v367
        %v10503 = vadd.f32 %v10443, %v368
        %v10504 = vadd.f32 %v10446, %v369
        %v10505 = vadd.f32 %v10451, %v370
        %v10506 = vadd.f32 %v10454, %v371
        %v10507 = vadd.f32 %v10459, %v372
        %v10508 = vadd.f32 %v10462, %v373
        %v10509 = vadd.f32 %v10467, %v374
        %v10510 = vadd.f32 %v10470, %v375
        %v10511 = vadd.f32 %v10475, %v376
        %v10512 = vadd.f32 %v10478, %v377
        %vm10513 = vcmp.ge.f32.partialorder %v10481, 0.0
        %vm10514 = vcmp.ge.f32.partialorder %v10482, 0.0
        %vm10515 = vcmp.ge.f32.partialorder %v10483, 0.0
        %vm10516 = vcmp.ge.f32.partialorder %v10484, 0.0
        %vm10517 = vcmp.ge.f32.partialorder %v10485, 0.0
        %vm10518 = vcmp.ge.f32.partialorder %v10486, 0.0
        %vm10519 = vcmp.ge.f32.partialorder %v10487, 0.0
        %vm10520 = vcmp.ge.f32.partialorder %v10488, 0.0
        %vm10521 = vcmp.ge.f32.partialorder %v10489, 0.0
        %vm10522 = vcmp.ge.f32.partialorder %v10490, 0.0
        %vm10523 = vcmp.ge.f32.partialorder %v10491, 0.0
        %vm10524 = vcmp.ge.f32.partialorder %v10492, 0.0
        %vm10525 = vcmp.ge.f32.partialorder %v10493, 0.0
        %vm10526 = vcmp.ge.f32.partialorder %v10494, 0.0
        %vm10527 = vcmp.ge.f32.partialorder %v10495, 0.0
        %vm10528 = vcmp.ge.f32.partialorder %v10496, 0.0
        %vm10529 = vcmp.ge.f32.partialorder %v10497, 0.0
        %vm10530 = vcmp.ge.f32.partialorder %v10498, 0.0
        %vm10531 = vcmp.ge.f32.partialorder %v10499, 0.0
        %vm10532 = vcmp.ge.f32.partialorder %v10500, 0.0
        %vm10533 = vcmp.ge.f32.partialorder %v10501, 0.0
        %vm10534 = vcmp.ge.f32.partialorder %v10502, 0.0
        %vm10535 = vcmp.ge.f32.partialorder %v10503, 0.0
        %vm10536 = vcmp.ge.f32.partialorder %v10504, 0.0
        %vm10537 = vcmp.ge.f32.partialorder %v10505, 0.0
        %vm10538 = vcmp.ge.f32.partialorder %v10506, 0.0
        %vm10539 = vcmp.ge.f32.partialorder %v10507, 0.0
        %vm10540 = vcmp.ge.f32.partialorder %v10508, 0.0
        %vm10541 = vcmp.ge.f32.partialorder %v10509, 0.0
        %vm10542 = vcmp.ge.f32.partialorder %v10510, 0.0
        %vm10543 = vcmp.ge.f32.partialorder %v10511, 0.0
        %vm10544 = vcmp.ge.f32.partialorder %v10512, 0.0
        %v10545 = vmul.f32 %v10481, 0.01
        %v10546 = vmul.f32 %v10482, 0.01
        %v10547 = vmul.f32 %v10483, 0.01
        %v10548 = vmul.f32 %v10484, 0.01
        %v10549 = vmul.f32 %v10485, 0.01
        %v10550 = vmul.f32 %v10486, 0.01
        %v10551 = vmul.f32 %v10487, 0.01
        %v10552 = vmul.f32 %v10488, 0.01
        %v10553 = vmul.f32 %v10489, 0.01
        %v10554 = vmul.f32 %v10490, 0.01
        %v10555 = vmul.f32 %v10491, 0.01
        %v10556 = vmul.f32 %v10492, 0.01
        %v10557 = vmul.f32 %v10493, 0.01
        %v10558 = vmul.f32 %v10494, 0.01
        %v10559 = vmul.f32 %v10495, 0.01
        %v10560 = vmul.f32 %v10496, 0.01
        %v10561 = vmul.f32 %v10497, 0.01
        %v10562 = vmul.f32 %v10498, 0.01
        %v10563 = vmul.f32 %v10499, 0.01
        %v10564 = vmul.f32 %v10500, 0.01
        %v10565 = vmul.f32 %v10501, 0.01
        %v10566 = vmul.f32 %v10502, 0.01
        %v10567 = vmul.f32 %v10503, 0.01
        %v10568 = vmul.f32 %v10504, 0.01
        %v10569 = vmul.f32 %v10505, 0.01
        %v10570 = vmul.f32 %v10506, 0.01
        %v10571 = vmul.f32 %v10507, 0.01
        %v10572 = vmul.f32 %v10508, 0.01
        %v10573 = vmul.f32 %v10509, 0.01
        %v10574 = vmul.f32 %v10510, 0.01
        %v10575 = vmul.f32 %v10511, 0.01
        %v10576 = vmul.f32 %v10512, 0.01
        %v10577 = vsel %vm10513, %v10481, %v10545
        %v10578 = vsel %vm10514, %v10482, %v10546
        %v10579 = vsel %vm10515, %v10483, %v10547
        %v10580 = vsel %vm10516, %v10484, %v10548
        %v10581 = vsel %vm10517, %v10485, %v10549
        %v10582 = vsel %vm10518, %v10486, %v10550
        %v10583 = vsel %vm10519, %v10487, %v10551
        %v10584 = vsel %vm10520, %v10488, %v10552
        %v10585 = vsel %vm10521, %v10489, %v10553
        %v10586 = vsel %vm10522, %v10490, %v10554
        %v10587 = vsel %vm10523, %v10491, %v10555
        %v10588 = vsel %vm10524, %v10492, %v10556
        %v10589 = vsel %vm10525, %v10493, %v10557
        %v10590 = vsel %vm10526, %v10494, %v10558
        %v10591 = vsel %vm10527, %v10495, %v10559
        %v10592 = vsel %vm10528, %v10496, %v10560
        %v10593 = vsel %vm10529, %v10497, %v10561
        %v10594 = vsel %vm10530, %v10498, %v10562
        %v10595 = vsel %vm10531, %v10499, %v10563
        %v10596 = vsel %vm10532, %v10500, %v10564
        %v10597 = vsel %vm10533, %v10501, %v10565
        %v10598 = vsel %vm10534, %v10502, %v10566
        %v10599 = vsel %vm10535, %v10503, %v10567
        %v10600 = vsel %vm10536, %v10504, %v10568
        %v10601 = vsel %vm10537, %v10505, %v10569
        %v10602 = vsel %vm10538, %v10506, %v10570
        %v10603 = vsel %vm10539, %v10507, %v10571
        %v10604 = vsel %vm10540, %v10508, %v10572
        %v10605 = vsel %vm10541, %v10509, %v10573
        %v10606 = vsel %vm10542, %v10510, %v10574
        %v10607 = vsel %vm10543, %v10511, %v10575
        %v10608 = vsel %vm10544, %v10512, %v10576
        %10609 = vst.msk [vmem:[%s217] sm:$0xff] %vm2482, %v10577
        %10610 = vst.msk [vmem:[%s217 + $0x8] sm:$0xff] %vm2482, %v10578
        %10611 = vst.msk [vmem:[%s217 + $0x10] sm:$0xff] %vm2482, %v10579
        %10612 = vst.msk [vmem:[%s217 + $0x18] sm:$0xff] %vm2482, %v10580
        %10613 = vst.msk [vmem:[%s217 + $0x20] sm:$0xff] %vm2482, %v10581
        %10614 = vst.msk [vmem:[%s217 + $0x28] sm:$0xff] %vm2482, %v10582
        %10615 = vst.msk [vmem:[%s217 + $0x30] sm:$0xff] %vm2482, %v10583
        %10616 = vst.msk [vmem:[%s217 + $0x38] sm:$0xff] %vm2482, %v10584
        %10617 = vst.msk [vmem:[%s217 + $0x40] sm:$0xff] %vm2482, %v10585
        %10618 = vst.msk [vmem:[%s217 + $0x48] sm:$0xff] %vm2482, %v10586
        %10619 = vst.msk [vmem:[%s217 + $0x50] sm:$0xff] %vm2482, %v10587
        %10620 = vst.msk [vmem:[%s217 + $0x58] sm:$0xff] %vm2482, %v10588
        %10621 = vst.msk [vmem:[%s217 + $0x60] sm:$0xff] %vm2482, %v10589
        %10622 = vst.msk [vmem:[%s217 + $0x68] sm:$0xff] %vm2482, %v10590
        %10623 = vst.msk [vmem:[%s217 + $0x70] sm:$0xff] %vm2482, %v10591
        %10624 = vst.msk [vmem:[%s217 + $0x78] sm:$0xff] %vm2482, %v10592
        %10625 = vst.msk [vmem:[%s217 + $0x80] sm:$0xff] %vm2482, %v10593
        %10626 = vst.msk [vmem:[%s217 + $0x88] sm:$0xff] %vm2482, %v10594
        %10627 = vst.msk [vmem:[%s217 + $0x90] sm:$0xff] %vm2482, %v10595
        %10628 = vst.msk [vmem:[%s217 + $0x98] sm:$0xff] %vm2482, %v10596
        %10629 = vst.msk [vmem:[%s217 + $0xa0] sm:$0xff] %vm2482, %v10597
        %10630 = vst.msk [vmem:[%s217 + $0xa8] sm:$0xff] %vm2482, %v10598
        %10631 = vst.msk [vmem:[%s217 + $0xb0] sm:$0xff] %vm2482, %v10599
        %10632 = vst.msk [vmem:[%s217 + $0xb8] sm:$0xff] %vm2482, %v10600
        %10633 = vst.msk [vmem:[%s217 + $0xc0] sm:$0xff] %vm2482, %v10601
        %10634 = vst.msk [vmem:[%s217 + $0xc8] sm:$0xff] %vm2482, %v10602
        %10635 = vst.msk [vmem:[%s217 + $0xd0] sm:$0xff] %vm2482, %v10603
        %10636 = vst.msk [vmem:[%s217 + $0xd8] sm:$0xff] %vm2482, %v10604
        %10637 = vst.msk [vmem:[%s217 + $0xe0] sm:$0xff] %vm2482, %v10605
        %10638 = vst.msk [vmem:[%s217 + $0xe8] sm:$0xff] %vm2482, %v10606
        %10639 = vst.msk [vmem:[%s217 + $0xf0] sm:$0xff] %vm2482, %v10607
        %10640 = vst.msk [vmem:[%s217 + $0xf8] sm:$0xff] %vm2482, %v10608
        %s10641 = sand.u32 %s137, 1
        %s10642 = scalar_lea.sflag [#allocation4], %s10641
        %s10643 = sand.u32 %s137, 1
        %s10644 = smul.addr %s10643, 256
        %s10645 = scalar_lea.vmem [#allocation3], %s10644
        // Predicated region
        $region41: #{tpu_custom_call.1} parent=39 // pred_check
          %p10646 = pneg %p147
        $region42: #{tpu_custom_call.1} parent=39 // pred_check_branch
          %10648 = sbr.rel (%p10646) target = $region44
        $region43: #{tpu_custom_call.1} parent=39 // pred_region
          %s10650 = ssub.s32 4096, 4096
          %10651 = vsyncadd %s10642, %s10650
          %s10652 = smul.addr %s19, 32
          %s10653 = smul.addr %s10652, 128
          %s10654 = scalar_lea.hbm %s5, %s10653
          %s10655 = sshll.u32 %s10645, 4
          %s10656 = int_to_ptr.vmem [resolvable:$true] %s10655
          %10661 = dma.vmem_to_hbm [thread:$0]  %s10656, 4096, %s10654, %s10642, 128, 128, 8
        $region44: #{tpu_custom_call.1} parent=39 // pred_fallthru
          _
      $region40: #{tpu_custom_call.1} parent=5 // pred_fallthru
        _
      %p10662 = scmp.le.s32.totalorder 2, %s14
      // Predicated region
      $region45: #{tpu_custom_call.1} parent=5 // pred_check
        %p10663 = pneg %p10662
      $region46: #{tpu_custom_call.1} parent=5 // pred_check_branch
        %10665 = sbr.rel (%p10663) target = $region48
      $region47: #{tpu_custom_call.1} parent=5 // pred_region
        %s10666 = ssub.s32 %s14, 2
        // Predicated region
        $region49: #{tpu_custom_call.1} parent=47 // pred_check
          %p10667 = pneg %p153
        $region50: #{tpu_custom_call.1} parent=47 // pred_check_branch
          %10669 = sbr.rel (%p10667) target = $region52
        $region51: #{tpu_custom_call.1} parent=47 // pred_region
          %s10670 = sand.u32 %s138, 1
          %s10671 = scalar_lea.sflag [#allocation4], %s10670
          %s10672 = sand.u32 %s138, 1
          %s10673 = smul.addr %s10672, 256
          %s10674 = scalar_lea.vmem [#allocation3], %s10673
          %10675 = dma.done %s10671, 4096
        $region52: #{tpu_custom_call.1} parent=47 // pred_fallthru
          _
      $region48: #{tpu_custom_call.1} parent=5 // pred_fallthru
        _
    $region6: #{tpu_custom_call.1} parent=1 // loop_footer
      %s18 = sadd.s32 1, %s14
    $region7: #{tpu_custom_call.1} parent=1 // loop_footer_branch
      %13 = sbr.rel target = $region3
    $region8: #{tpu_custom_call.1} parent=1 // loop_exit
      _
    %10676 = vsyncpa [#allocation4], 1
    %s10677 = scalar_lea.sflag [#allocation4], 1
    %10678 = vsyncpa %s10677, 1

</llo_original>
